<compile_context>
chip_gen: v5e
topology: v5e:2x2
jax: 0.10.0
libtpu: 0.0.40
codegen_flags: <defaults>
</compile_context>

<pallas_src>
import functools

import jax
import jax.numpy as jnp
from jax import lax
from jax.experimental import pallas as pl
from jax.experimental.pallas import tpu as pltpu


# ----------------------------------------------------------------------------
# Pallas kernel: fused {matmul + bias + activation} for one batch element
# ----------------------------------------------------------------------------
def _matmul_bias_act_kernel(x_ref, w_ref, b_ref, o_ref, *, act):
    """x_ref : (K, M)     bf16  channel-major full k*k im2col of one batch elem
       w_ref : (Cout, K)  bf16  BN-folded weight (VMEM-resident, fetched once)
       b_ref : (Cout, 1)  f32   folded bias / BN shift
       o_ref : (Cout, M)        lane-dense output block
    """
    y = jnp.dot(w_ref[...], x_ref[...], preferred_element_type=jnp.float32)
    y = y + b_ref[...]
    if act == "relu":
        y = jnp.maximum(y, 0.0)
    else:  # "tanh"
        y = jnp.tanh(y)
    o_ref[...] = y.astype(o_ref.dtype)


def fused_conv_layer(x, w_lhs, bias, *, k, pad, act, out_dtype):
    """Fused {(transposed) conv + folded BN + bias + activation} layer.

    x     : (B, Cin, H, W) bf16, channel-major (NCHW)
    w_lhs : (Cout, k*k*Cin) bf16, (c, i, j)-packed, BN pre-folded
    bias  : (Cout, 1) f32
    pad   : (lo, hi, interior) applied to both spatial dims (interior = s-1
            zero insertion of the transposed conv; 0 for a plain conv)
    """
    B, Cin, H, W = x.shape
    lo, hi, interior = pad
    Cout, K = w_lhs.shape
    assert K == k * k * Cin

    # Zero-dilate + pad (this is the whole "transposed conv" trick) -- one op.
    xp = lax.pad(x, jnp.array(0, x.dtype),
                 ((0, 0, 0), (0, 0, 0),
                  (lo, hi, interior), (lo, hi, interior)))
    Hp, Wp = xp.shape[2], xp.shape[3]
    Ho, Wo = Hp - k + 1, Wp - k + 1
    m = Ho * Wo

    # Full k*k im2col, channel-major (c, i, j) ordering (matches w_lhs packing):
    #   xt[b, c*k*k + i*k + j, h*Wo + w] = xp[b, c, h + i, w + j]
    cols = [xp[:, :, i:i + Ho, j:j + Wo].reshape(B, Cin, 1, m)
            for i in range(k) for j in range(k)]
    xt = jnp.concatenate(cols, axis=2).reshape(B, K, m)

    kernel = functools.partial(_matmul_bias_act_kernel, act=act)
    out = pl.pallas_call(
        kernel,
        out_shape=jax.ShapeDtypeStruct((B, Cout, m), out_dtype),
        grid_spec=pltpu.PrefetchScalarGridSpec(
            num_scalar_prefetch=0,
            grid=(B,),
            in_specs=[
                pl.BlockSpec((None, K, m), lambda b: (b, 0, 0)),
                pl.BlockSpec((Cout, K), lambda b: (0, 0)),   # weight: 1 block, VMEM resident
                pl.BlockSpec((Cout, 1), lambda b: (0, 0)),
            ],
            out_specs=pl.BlockSpec((None, Cout, m), lambda b: (b, 0, 0)),
        ),
        compiler_params=pltpu.CompilerParams(
            dimension_semantics=("parallel",)),   # v7x: one batch elem per TC
    )(xt, w_lhs, bias)
    return out.reshape(B, Cout, Ho, Wo)


# ----------------------------------------------------------------------------
# Decoder forward (NCHW in / NCHW out; channel-major + bf16 internally)
# ----------------------------------------------------------------------------
_LAYER_CFG = (
    # deconv1: k=3, s=2, p=1, op=0  -> lo=hi=k-1-p=1, interior=s-1=1
    dict(k=3, pad=(1, 1, 1), act="relu", out_dtype=jnp.bfloat16),
    # deconv2: k=3, s=2, p=0, op=1  -> lo=2, hi=3, interior=1
    dict(k=3, pad=(2, 3, 1), act="relu", out_dtype=jnp.bfloat16),
    # conv4:   k=7, s=1, SAME pad 3
    dict(k=7, pad=(3, 3, 0), act="tanh", out_dtype=jnp.float32),
)

_NUM_OUT_CHANNELS = 3  # final layer Cout is zero-padded to 8 inside the kernel


def decoder_forward(x_nchw, weights):
    x = x_nchw.astype(jnp.bfloat16)
    for (w, b), cfg in zip(weights, _LAYER_CFG):
        x = fused_conv_layer(x, w, b, **cfg)
    return x[:, :_NUM_OUT_CHANNELS]   # drop the padded rows of the final layer


# ----------------------------------------------------------------------------
# Parameter preparation (runs once, outside jit): deconv->conv transform,
# BN folding, bf16 cast, (Cout, k*k*Cin) packing, final-layer row padding.
# ----------------------------------------------------------------------------
def prepare_weights(params):
    def bn_fold(conv_bias, bn):
        scale = bn["gamma"] / jnp.sqrt(bn["var"] + bn["eps"])
        shift = bn["beta"] + scale * (conv_bias - bn["mean"])
        return scale, shift

    def deconv_lhs(wt):
        # ConvTranspose2d weight (Cin, Cout, kh, kw) -> matmul LHS
        # (Cout, Cin*kh*kw) of the equivalent stride-1 conv on the dilated,
        # padded input: flip spatially, swap in/out axes, (c, i, j) packing.
        f = jnp.flip(wt, (2, 3))
        return jnp.transpose(f, (1, 0, 2, 3)).reshape(wt.shape[1], -1)

    def conv_lhs(w):
        # Conv2d weight (Cout, Cin, kh, kw) -> (Cout, Cin*kh*kw), (c,i,j) pack.
        return w.reshape(w.shape[0], -1)

    def pack(w, scale, shift, pad_rows=0):
        w = w * scale[:, None]
        b = shift[:, None]
        if pad_rows:
            w = jnp.pad(w, ((0, pad_rows), (0, 0)))
            b = jnp.pad(b, ((0, pad_rows), (0, 0)))
        return w.astype(jnp.bfloat16), b.astype(jnp.float32)

    s4, t4 = bn_fold(params["deconv1_b"], params["bn4"])
    s5, t5 = bn_fold(params["deconv2_b"], params["bn5"])
    l1 = pack(deconv_lhs(params["deconv1_w"]), s4, t4)
    l2 = pack(deconv_lhs(params["deconv2_w"]), s5, t5)
    # Final layer: pad Cout 3 -> 8 so the (8, Ho*Wo) store is sublane-unmasked.
    l3 = pack(conv_lhs(params["conv4_w"]),
              jnp.ones_like(params["conv4_b"]), params["conv4_b"], pad_rows=5)
    return (l1, l2, l3)


# ----------------------------------------------------------------------------
# Deterministic synthetic parameters (PyTorch layouts)
# ----------------------------------------------------------------------------
def init_params(key):
    ks = iter(jax.random.split(key, 16))

    def w(shape):
        return 0.05 * jax.random.normal(next(ks), shape, jnp.float32)

    def bn(c):
        return dict(
            gamma=1.0 + 0.1 * jax.random.normal(next(ks), (c,), jnp.float32),
            beta=0.1 * jax.random.normal(next(ks), (c,), jnp.float32),
            mean=0.1 * jax.random.normal(next(ks), (c,), jnp.float32),
            var=1.0 + 0.1 * jax.random.uniform(next(ks), (c,), jnp.float32),
            eps=jnp.float32(1e-3),
        )

    return dict(
        deconv1_w=w((64, 64, 3, 3)),   # ConvTranspose2d: (Cin, Cout, kh, kw)
        deconv1_b=w((64,)),
        bn4=bn(64),
        deconv2_w=w((64, 32, 3, 3)),
        deconv2_b=w((32,)),
        bn5=bn(32),
        conv4_w=w((3, 32, 7, 7)),      # Conv2d: (Cout, Cin, kh, kw)
        conv4_b=w((3,)),
    )


# ----------------------------------------------------------------------------
# Pure-XLA f32 reference (unfused, unfolded BN) for numerical validation
# ----------------------------------------------------------------------------
def reference_forward(x_nchw, params):
    x = jnp.transpose(x_nchw, (0, 2, 3, 1)).astype(jnp.float32)

    def conv(x, wc, lo, hi, dil):
        return lax.conv_general_dilated(
            x, wc, window_strides=(1, 1),
            padding=((lo, hi), (lo, hi)),
            lhs_dilation=(dil, dil),
            dimension_numbers=("NHWC", "HWIO", "NHWC"))

    def bn(z, p):
        return (z - p["mean"]) * (p["gamma"] / jnp.sqrt(p["var"] + p["eps"])) + p["beta"]

    wc1 = jnp.transpose(jnp.flip(params["deconv1_w"], (2, 3)), (2, 3, 0, 1))
    wc2 = jnp.transpose(jnp.flip(params["deconv2_w"], (2, 3)), (2, 3, 0, 1))
    wc3 = jnp.transpose(params["conv4_w"], (2, 3, 1, 0))

    z = conv(x, wc1, 1, 1, 2) + params["deconv1_b"]
    x = jax.nn.relu(bn(z, params["bn4"]))
    z = conv(x, wc2, 2, 3, 2) + params["deconv2_b"]
    x = jax.nn.relu(bn(z, params["bn5"]))
    z = conv(x, wc3, 3, 3, 1) + params["conv4_b"]
    return jnp.transpose(jnp.tanh(z), (0, 3, 1, 2))


if __name__ == "__main__":
    key = jax.random.PRNGKey(0)
    pkey, xkey = jax.random.split(key)
    params = init_params(pkey)
    weights = prepare_weights(params)

    # Decoder input: encoder bottleneck features (64 channels, 8x8 spatial).
    x = jax.random.normal(xkey, (2, 64, 8, 8), jnp.float32)

    fwd = jax.jit(decoder_forward)
    out = fwd(x, weights)
    jax.block_until_ready(out)

    # 8 -> 15 (deconv1) -> 32 (deconv2) -> 32 (conv4, SAME), 3 output channels.
    assert out.shape == (2, 3, 32, 32), out.shape
    assert bool(jnp.all(jnp.isfinite(out)))

    # Validate against the pure-XLA f32 reference (bf16 kernel path -> loose tol).
    ref = reference_forward(x, params)
    err = float(jnp.max(jnp.abs(out.astype(jnp.float32) - ref)))
    assert err < 0.2, f"max abs error vs reference: {err}"

    print("KERNEL_OK")
</pallas_src>

<mosaic_0001>
module attributes {stable_mosaic.version = 11 : i64} {
  func.func @_matmul_bias_act_kernel(%arg0: i32, %arg1: memref<1x576x225xbf16, #tpu.memory_space<vmem>>, %arg2: memref<64x576xbf16, #tpu.memory_space<vmem>>, %arg3: memref<64x1xf32, #tpu.memory_space<vmem>>, %arg4: memref<1x64x225xbf16, #tpu.memory_space<vmem>>) attributes {dimension_semantics = [#tpu.dimension_semantics<parallel>], iteration_bounds = array<i64: 2>, scalar_prefetch = 0 : i64, scratch_operands = 0 : i64, tpu.core_type = #tpu.core_type<tc>, window_params = [{transform_indices = @transform_0, window_bounds = array<i64: 1, 576, 225>}, {pipeline_mode = #tpu.pipeline_mode<synchronous>, transform_indices = @transform_1, window_bounds = array<i64: 64, 576>}, {pipeline_mode = #tpu.pipeline_mode<synchronous>, transform_indices = @transform_2, window_bounds = array<i64: 64, 1>}, {transform_indices = @transform_3, window_bounds = array<i64: 1, 64, 225>}]} {
    %c0 = arith.constant 0 : index
    %c0_0 = arith.constant 0 : index
    %0 = vector.load %arg2[%c0, %c0_0] : memref<64x576xbf16, #tpu.memory_space<vmem>>, vector<64x576xbf16>
    %c0_1 = arith.constant 0 : index
    %c0_2 = arith.constant 0 : index
    %c0_3 = arith.constant 0 : index
    %1 = vector.load %arg1[%c0_1, %c0_2, %c0_3] : memref<1x576x225xbf16, #tpu.memory_space<vmem>>, vector<1x576x225xbf16>
    %2 = vector.shape_cast %1 : vector<1x576x225xbf16> to vector<576x225xbf16>
    %cst = arith.constant dense<0.000000e+00> : vector<64x225xf32>
    %3 = tpu.matmul %0, %2, %cst {dimension_numbers = #tpu.dot_dimension_numbers<[1], [0], [0], [1], [0, 0, 1, 1], [], []>} : vector<64x576xbf16>, vector<576x225xbf16>, vector<64x225xf32> -> vector<64x225xf32>
    %c0_4 = arith.constant 0 : index
    %c0_5 = arith.constant 0 : index
    %4 = vector.load %arg3[%c0_4, %c0_5] : memref<64x1xf32, #tpu.memory_space<vmem>>, vector<64x1xf32>
    %5 = vector.broadcast %4 : vector<64x1xf32> to vector<64x225xf32>
    %6 = arith.addf %3, %5 : vector<64x225xf32>
    %cst_6 = arith.constant 0.000000e+00 : f32
    %7 = vector.broadcast %cst_6 : f32 to vector<64x225xf32>
    %8 = arith.maximumf %6, %7 : vector<64x225xf32>
    %9 = arith.truncf %8 : vector<64x225xf32> to vector<64x225xbf16>
    %c0_7 = arith.constant 0 : index
    %c0_8 = arith.constant 0 : index
    %c0_9 = arith.constant 0 : index
    %10 = vector.load %arg4[%c0_7, %c0_8, %c0_9] : memref<1x64x225xbf16, #tpu.memory_space<vmem>>, vector<1x64x225xbf16>
    %11 = vector.shape_cast %10 : vector<1x64x225xbf16> to vector<64x225xbf16>
    %12 = vector.shape_cast %9 : vector<64x225xbf16> to vector<1x64x225xbf16>
    tpu.vector_store %arg4[%c0_7, %c0_8, %c0_9], %12 {strides = array<i32>} : memref<1x64x225xbf16, #tpu.memory_space<vmem>>, vector<1x64x225xbf16>,
    return
  }
  func.func @transform_0(%arg0: i32) -> (i32, i32, i32) {
    %c0_i32 = arith.constant 0 : i32
    %c0_i32_0 = arith.constant 0 : i32
    %c0_i32_1 = arith.constant 0 : i32
    return %arg0, %c0_i32, %c0_i32_0 : i32, i32, i32
  }
  func.func @transform_1(%arg0: i32) -> (i32, i32) {
    %c0_i32 = arith.constant 0 : i32
    %c0_i32_0 = arith.constant 0 : i32
    %c0_i32_1 = arith.constant 0 : i32
    return %c0_i32, %c0_i32_0 : i32, i32
  }
  func.func @transform_2(%arg0: i32) -> (i32, i32) {
    %c0_i32 = arith.constant 0 : i32
    %c0_i32_0 = arith.constant 0 : i32
    %c0_i32_1 = arith.constant 0 : i32
    return %c0_i32, %c0_i32_0 : i32, i32
  }
  func.func @transform_3(%arg0: i32) -> (i32, i32, i32) {
    %c0_i32 = arith.constant 0 : i32
    %c0_i32_0 = arith.constant 0 : i32
    %c0_i32_1 = arith.constant 0 : i32
    return %arg0, %c0_i32, %c0_i32_0 : i32, i32, i32
  }
}

module attributes {stable_mosaic.version = 11 : i64} {
  func.func @_matmul_bias_act_kernel(%arg0: i32, %arg1: memref<1x576x1024xbf16, #tpu.memory_space<vmem>>, %arg2: memref<32x576xbf16, #tpu.memory_space<vmem>>, %arg3: memref<32x1xf32, #tpu.memory_space<vmem>>, %arg4: memref<1x32x1024xbf16, #tpu.memory_space<vmem>>) attributes {dimension_semantics = [#tpu.dimension_semantics<parallel>], iteration_bounds = array<i64: 2>, scalar_prefetch = 0 : i64, scratch_operands = 0 : i64, tpu.core_type = #tpu.core_type<tc>, window_params = [{transform_indices = @transform_0, window_bounds = array<i64: 1, 576, 1024>}, {pipeline_mode = #tpu.pipeline_mode<synchronous>, transform_indices = @transform_1, window_bounds = array<i64: 32, 576>}, {pipeline_mode = #tpu.pipeline_mode<synchronous>, transform_indices = @transform_2, window_bounds = array<i64: 32, 1>}, {transform_indices = @transform_3, window_bounds = array<i64: 1, 32, 1024>}]} {
    %c0 = arith.constant 0 : index
    %c0_0 = arith.constant 0 : index
    %0 = vector.load %arg2[%c0, %c0_0] : memref<32x576xbf16, #tpu.memory_space<vmem>>, vector<32x576xbf16>
    %c0_1 = arith.constant 0 : index
    %c0_2 = arith.constant 0 : index
    %c0_3 = arith.constant 0 : index
    %1 = vector.load %arg1[%c0_1, %c0_2, %c0_3] : memref<1x576x1024xbf16, #tpu.memory_space<vmem>>, vector<1x576x1024xbf16>
    %2 = vector.shape_cast %1 : vector<1x576x1024xbf16> to vector<576x1024xbf16>
    %cst = arith.constant dense<0.000000e+00> : vector<32x1024xf32>
    %3 = tpu.matmul %0, %2, %cst {dimension_numbers = #tpu.dot_dimension_numbers<[1], [0], [0], [1], [0, 0, 1, 1], [], []>} : vector<32x576xbf16>, vector<576x1024xbf16>, vector<32x1024xf32> -> vector<32x1024xf32>
    %c0_4 = arith.constant 0 : index
    %c0_5 = arith.constant 0 : index
    %4 = vector.load %arg3[%c0_4, %c0_5] : memref<32x1xf32, #tpu.memory_space<vmem>>, vector<32x1xf32>
    %5 = vector.broadcast %4 : vector<32x1xf32> to vector<32x1024xf32>
    %6 = arith.addf %3, %5 : vector<32x1024xf32>
    %cst_6 = arith.constant 0.000000e+00 : f32
    %7 = vector.broadcast %cst_6 : f32 to vector<32x1024xf32>
    %8 = arith.maximumf %6, %7 : vector<32x1024xf32>
    %9 = arith.truncf %8 : vector<32x1024xf32> to vector<32x1024xbf16>
    %c0_7 = arith.constant 0 : index
    %c0_8 = arith.constant 0 : index
    %c0_9 = arith.constant 0 : index
    %10 = vector.load %arg4[%c0_7, %c0_8, %c0_9] : memref<1x32x1024xbf16, #tpu.memory_space<vmem>>, vector<1x32x1024xbf16>
    %11 = vector.shape_cast %10 : vector<1x32x1024xbf16> to vector<32x1024xbf16>
    %12 = vector.shape_cast %9 : vector<32x1024xbf16> to vector<1x32x1024xbf16>
    tpu.vector_store %arg4[%c0_7, %c0_8, %c0_9], %12 {strides = array<i32>} : memref<1x32x1024xbf16, #tpu.memory_space<vmem>>, vector<1x32x1024xbf16>,
    return
  }
  func.func @transform_0(%arg0: i32) -> (i32, i32, i32) {
    %c0_i32 = arith.constant 0 : i32
    %c0_i32_0 = arith.constant 0 : i32
    %c0_i32_1 = arith.constant 0 : i32
    return %arg0, %c0_i32, %c0_i32_0 : i32, i32, i32
  }
  func.func @transform_1(%arg0: i32) -> (i32, i32) {
    %c0_i32 = arith.constant 0 : i32
    %c0_i32_0 = arith.constant 0 : i32
    %c0_i32_1 = arith.constant 0 : i32
    return %c0_i32, %c0_i32_0 : i32, i32
  }
  func.func @transform_2(%arg0: i32) -> (i32, i32) {
    %c0_i32 = arith.constant 0 : i32
    %c0_i32_0 = arith.constant 0 : i32
    %c0_i32_1 = arith.constant 0 : i32
    return %c0_i32, %c0_i32_0 : i32, i32
  }
  func.func @transform_3(%arg0: i32) -> (i32, i32, i32) {
    %c0_i32 = arith.constant 0 : i32
    %c0_i32_0 = arith.constant 0 : i32
    %c0_i32_1 = arith.constant 0 : i32
    return %arg0, %c0_i32, %c0_i32_0 : i32, i32, i32
  }
}

module attributes {stable_mosaic.version = 11 : i64} {
  func.func @_matmul_bias_act_kernel(%arg0: i32, %arg1: memref<1x1568x1024xbf16, #tpu.memory_space<vmem>>, %arg2: memref<8x1568xbf16, #tpu.memory_space<vmem>>, %arg3: memref<8x1xf32, #tpu.memory_space<vmem>>, %arg4: memref<1x8x1024xf32, #tpu.memory_space<vmem>>) attributes {dimension_semantics = [#tpu.dimension_semantics<parallel>], iteration_bounds = array<i64: 2>, scalar_prefetch = 0 : i64, scratch_operands = 0 : i64, tpu.core_type = #tpu.core_type<tc>, window_params = [{transform_indices = @transform_0, window_bounds = array<i64: 1, 1568, 1024>}, {pipeline_mode = #tpu.pipeline_mode<synchronous>, transform_indices = @transform_1, window_bounds = array<i64: 8, 1568>}, {pipeline_mode = #tpu.pipeline_mode<synchronous>, transform_indices = @transform_2, window_bounds = array<i64: 8, 1>}, {transform_indices = @transform_3, window_bounds = array<i64: 1, 8, 1024>}]} {
    %c0 = arith.constant 0 : index
    %c0_0 = arith.constant 0 : index
    %0 = vector.load %arg2[%c0, %c0_0] : memref<8x1568xbf16, #tpu.memory_space<vmem>>, vector<8x1568xbf16>
    %c0_1 = arith.constant 0 : index
    %c0_2 = arith.constant 0 : index
    %c0_3 = arith.constant 0 : index
    %1 = vector.load %arg1[%c0_1, %c0_2, %c0_3] : memref<1x1568x1024xbf16, #tpu.memory_space<vmem>>, vector<1x1568x1024xbf16>
    %2 = vector.shape_cast %1 : vector<1x1568x1024xbf16> to vector<1568x1024xbf16>
    %cst = arith.constant dense<0.000000e+00> : vector<8x1024xf32>
    %3 = tpu.matmul %0, %2, %cst {dimension_numbers = #tpu.dot_dimension_numbers<[1], [0], [0], [1], [0, 0, 1, 1], [], []>} : vector<8x1568xbf16>, vector<1568x1024xbf16>, vector<8x1024xf32> -> vector<8x1024xf32>
    %c0_4 = arith.constant 0 : index
    %c0_5 = arith.constant 0 : index
    %4 = vector.load %arg3[%c0_4, %c0_5] : memref<8x1xf32, #tpu.memory_space<vmem>>, vector<8x1xf32>
    %5 = vector.broadcast %4 : vector<8x1xf32> to vector<8x1024xf32>
    %6 = arith.addf %3, %5 : vector<8x1024xf32>
    %7 = math.tanh %6 : vector<8x1024xf32>
    %c0_6 = arith.constant 0 : index
    %c0_7 = arith.constant 0 : index
    %c0_8 = arith.constant 0 : index
    %8 = vector.load %arg4[%c0_6, %c0_7, %c0_8] : memref<1x8x1024xf32, #tpu.memory_space<vmem>>, vector<1x8x1024xf32>
    %9 = vector.shape_cast %8 : vector<1x8x1024xf32> to vector<8x1024xf32>
    %10 = vector.shape_cast %7 : vector<8x1024xf32> to vector<1x8x1024xf32>
    tpu.vector_store %arg4[%c0_6, %c0_7, %c0_8], %10 {strides = array<i32>} : memref<1x8x1024xf32, #tpu.memory_space<vmem>>, vector<1x8x1024xf32>,
    return
  }
  func.func @transform_0(%arg0: i32) -> (i32, i32, i32) {
    %c0_i32 = arith.constant 0 : i32
    %c0_i32_0 = arith.constant 0 : i32
    %c0_i32_1 = arith.constant 0 : i32
    return %arg0, %c0_i32, %c0_i32_0 : i32, i32, i32
  }
  func.func @transform_1(%arg0: i32) -> (i32, i32) {
    %c0_i32 = arith.constant 0 : i32
    %c0_i32_0 = arith.constant 0 : i32
    %c0_i32_1 = arith.constant 0 : i32
    return %c0_i32, %c0_i32_0 : i32, i32
  }
  func.func @transform_2(%arg0: i32) -> (i32, i32) {
    %c0_i32 = arith.constant 0 : i32
    %c0_i32_0 = arith.constant 0 : i32
    %c0_i32_1 = arith.constant 0 : i32
    return %c0_i32, %c0_i32_0 : i32, i32
  }
  func.func @transform_3(%arg0: i32) -> (i32, i32, i32) {
    %c0_i32 = arith.constant 0 : i32
    %c0_i32_0 = arith.constant 0 : i32
    %c0_i32_1 = arith.constant 0 : i32
    return %arg0, %c0_i32, %c0_i32_0 : i32, i32, i32
  }
}

</mosaic_0001>

<llo_original>
// kernel: decoder_forward.3
$region0: #{decoder_forward.3}
  #allocation0 [shape = 'u32[]', space=smem, size = 0x4, offset = 0x4, fixed_abs, tag = 'smem constant byte address 0x4 - core index']
  #allocation1 [shape = 'u32[72,128]{1,0:T(1,128)}', space=vmem, size = 0x9000, scoped, tag = 'internal scratch']
  %s0 = inlined_call_operand.vmem [shape: bf16[2,576,225], index: 0, kind: input, shape index: {}]
  %s1 = inlined_call_operand.vmem [shape: bf16[64,576], index: 1, kind: input, shape index: {}]
  %s2 = inlined_call_operand.vmem [shape: f32[64,1], index: 2, kind: input, shape index: {}]
  %s3 = inlined_call_operand.vmem [shape: bf16[2,64,225], index: 3, kind: output, shape index: {}]
  %s4 = sld [smem:[#allocation0]]
  $region45: #{decoder_forward.3} parent=0
    _
  %s6 = ssub.s32 1, %s4
  %s7 = scalar_select 0, %s6, %s4
  loop: start=0, step=1, limit=4
  $region2: #{decoder_forward.3} parent=0 // loop_pre_header
    _
  $region3: #{decoder_forward.3} parent=0 // loop_header
    %s9 = sphi 0, %s13
    %p10 = scmp.ge.s32.totalorder %s9, 4
    %s19 = sphi 0, %s21
    %s22 = sphi 0, %s19
    %s23 = sphi 0, %s22
    %s39 = sphi 0, %s23
    %s43 = sphi 0, %s43
    %s45 = sphi 0, %s43
    %s46 = sphi 0, %s45
    %s60 = sphi 0, %s46
    %s64 = sphi 0, %s64
    %s66 = sphi 0, %s64
    %s67 = sphi 0, %s66
    %s81 = sphi 0, %s67
    %s87 = sphi 0, %s89
    %s90 = sphi 0, %s87
    %s91 = sphi 0, %s90
    %s107 = sphi 0, %s91
  $region4: #{decoder_forward.3} parent=0 // loop_header_branch
    %12 = sbr.rel (%p10) target = $region8
  $region5: #{decoder_forward.3} parent=0 // loop_body
    %s14 = ssub.s32 %s9, 1
    %s15 = ssub.s32 %s9, 2
    %s16 = sadd.s32 %s9, 1
    %s17 = ssub.s32 %s9, %s16
    %p18 = scmp.eq.s32.totalorder %s17, 0
    %s20 = sadd.s32 %s19, 1
    %s21 = scalar_select %p18, %s19, %s20
    %p24 = pneg %p18
    %p25 = scmp.eq.s32.totalorder %s9, 1
    %p26 = por %p24, %p25
    %p27 = scmp.ne.s32.totalorder %s19, %s22
    %p28 = scmp.eq.s32.totalorder %s9, 0
    %p29 = por %p27, %p28
    %p30 = scmp.ne.s32.totalorder %s19, %s22
    %p31 = scmp.eq.s32.totalorder %s14, 1
    %p32 = por %p30, %p31
    %p33 = scmp.ne.s32.totalorder %s22, %s23
    %p34 = scmp.eq.s32.totalorder %s14, 0
    %p35 = por %p33, %p34
    %p36 = scmp.ne.s32.totalorder %s22, %s23
    %p37 = scmp.eq.s32.totalorder %s15, 1
    %p38 = por %p36, %p37
    %p40 = scmp.ne.s32.totalorder %s23, %s39
    %p41 = scmp.eq.s32.totalorder %s15, 0
    %p42 = por %p40, %p41
    %s44 = sadd.s32 %s43, 1
    %p47 = scmp.eq.s32.totalorder %s9, 1
    %p48 = scmp.ne.s32.totalorder %s43, %s45
    %p49 = scmp.eq.s32.totalorder %s9, 0
    %p50 = por %p48, %p49
    %p51 = scmp.ne.s32.totalorder %s43, %s45
    %p52 = scmp.eq.s32.totalorder %s14, 1
    %p53 = por %p51, %p52
    %p54 = scmp.ne.s32.totalorder %s45, %s46
    %p55 = scmp.eq.s32.totalorder %s14, 0
    %p56 = por %p54, %p55
    %p57 = scmp.ne.s32.totalorder %s45, %s46
    %p58 = scmp.eq.s32.totalorder %s15, 1
    %p59 = por %p57, %p58
    %p61 = scmp.ne.s32.totalorder %s46, %s60
    %p62 = scmp.eq.s32.totalorder %s15, 0
    %p63 = por %p61, %p62
    %s65 = sadd.s32 %s64, 1
    %p68 = scmp.eq.s32.totalorder %s9, 1
    %p69 = scmp.ne.s32.totalorder %s64, %s66
    %p70 = scmp.eq.s32.totalorder %s9, 0
    %p71 = por %p69, %p70
    %p72 = scmp.ne.s32.totalorder %s64, %s66
    %p73 = scmp.eq.s32.totalorder %s14, 1
    %p74 = por %p72, %p73
    %p75 = scmp.ne.s32.totalorder %s66, %s67
    %p76 = scmp.eq.s32.totalorder %s14, 0
    %p77 = por %p75, %p76
    %p78 = scmp.ne.s32.totalorder %s66, %s67
    %p79 = scmp.eq.s32.totalorder %s15, 1
    %p80 = por %p78, %p79
    %p82 = scmp.ne.s32.totalorder %s67, %s81
    %p83 = scmp.eq.s32.totalorder %s15, 0
    %p84 = por %p82, %p83
    %s85 = ssub.s32 %s9, %s16
    %p86 = scmp.eq.s32.totalorder %s85, 0
    %s88 = sadd.s32 %s87, 1
    %s89 = scalar_select %p86, %s87, %s88
    %p92 = pneg %p86
    %p93 = scmp.eq.s32.totalorder %s9, 1
    %p94 = por %p92, %p93
    %p95 = scmp.ne.s32.totalorder %s87, %s90
    %p96 = scmp.eq.s32.totalorder %s9, 0
    %p97 = por %p95, %p96
    %p98 = scmp.ne.s32.totalorder %s87, %s90
    %p99 = scmp.eq.s32.totalorder %s14, 1
    %p100 = por %p98, %p99
    %p101 = scmp.ne.s32.totalorder %s90, %s91
    %p102 = scmp.eq.s32.totalorder %s14, 0
    %p103 = por %p101, %p102
    %p104 = scmp.ne.s32.totalorder %s90, %s91
    %p105 = scmp.eq.s32.totalorder %s15, 1
    %p106 = por %p104, %p105
    %p108 = scmp.ne.s32.totalorder %s91, %s107
    %p109 = scmp.eq.s32.totalorder %s15, 0
    %p110 = por %p108, %p109
    %p111 = scmp.le.s32.totalorder 1, %s9
    %p112 = scmp.lt.s32.totalorder %s9, 3
    %p113 = pnand %p111, %p112
    %p114 = pneg %p113
    // Predicated region
    $region9: #{decoder_forward.3} parent=5 // pred_check
      _
    $region10: #{decoder_forward.3} parent=5 // pred_check_branch
      %116 = sbr.rel (%p113) target = $region12
    $region11: #{decoder_forward.3} parent=5 // pred_region
      %s117 = ssub.s32 %s9, 1
      // Predicated region
      $region13: #{decoder_forward.3} parent=11 // pred_check
        %p118 = pneg %p56
      $region14: #{decoder_forward.3} parent=11 // pred_check_branch
        %120 = sbr.rel (%p118) target = $region16
      $region15: #{decoder_forward.3} parent=11 // pred_region
        _
      $region16: #{decoder_forward.3} parent=11 // pred_fallthru
        _
      // Predicated region
      $region17: #{decoder_forward.3} parent=11 // pred_check
        %p121 = pneg %p77
      $region18: #{decoder_forward.3} parent=11 // pred_check_branch
        %123 = sbr.rel (%p121) target = $region20
      $region19: #{decoder_forward.3} parent=11 // pred_region
        _
      $region20: #{decoder_forward.3} parent=11 // pred_fallthru
        _
    $region12: #{decoder_forward.3} parent=5 // pred_fallthru
      _
    %p124 = scmp.lt.s32.totalorder %s9, 2
    // Predicated region
    $region21: #{decoder_forward.3} parent=5 // pred_check
      %p125 = pneg %p124
    $region22: #{decoder_forward.3} parent=5 // pred_check_branch
      %127 = sbr.rel (%p125) target = $region24
    $region23: #{decoder_forward.3} parent=5 // pred_region
      // Predicated region
      $region25: #{decoder_forward.3} parent=23 // pred_check
        %p128 = pneg %p29
      $region26: #{decoder_forward.3} parent=23 // pred_check_branch
        %130 = sbr.rel (%p128) target = $region28
      $region27: #{decoder_forward.3} parent=23 // pred_region
        %p131 = scmp.lt.s32.totalorder %s9, 1
        %s132 = scalar_select %p131, %s9, 1
        %s133 = smul.addr %s132, 144
        %s134 = smul.addr %s133, 4
        %s135 = scalar_lea.vmem %s0, %s134
      $region28: #{decoder_forward.3} parent=23 // pred_fallthru
        _
    $region24: #{decoder_forward.3} parent=5 // pred_fallthru
      _
    %p136 = scmp.le.s32.totalorder 1, %s9
    %p137 = scmp.lt.s32.totalorder %s9, 3
    %p138 = pnand %p136, %p137
    %p139 = pneg %p138
    // Predicated region
    $region29: #{decoder_forward.3} parent=5 // pred_check
      _
    $region30: #{decoder_forward.3} parent=5 // pred_check_branch
      %141 = sbr.rel (%p138) target = $region32
    $region31: #{decoder_forward.3} parent=5 // pred_region
      %s142 = ssub.s32 %s9, 1
      %p143 = scmp.lt.s32.totalorder %s14, 1
      %s144 = scalar_select %p143, %s14, 1
      %s145 = smul.addr %s144, 144
      %s146 = smul.addr %s145, 4
      %s147 = scalar_lea.vmem %s0, %s146
      %p148 = pneg %p35
      %p149 = pneg %p32
      %p150 = pneg %p56
      %p151 = pneg %p53
      %p152 = pneg %p77
      %p153 = pneg %p74
      %p154 = pneg %p103
      %p155 = pneg %p100
      %p156 = scmp.lt.s32.totalorder %s14, 1
      %s157 = scalar_select %p156, %s14, 1
      %s158 = smul.addr %s157, 16
      %s159 = smul.addr %s158, 4
      %s160 = scalar_lea.vmem %s3, %s159
      %p161 = scmp.lt.s32.totalorder %s14, 1
      %s162 = scalar_select %p161, %s14, 1
      %s163 = smul.addr %s162, 144
      %s164 = smul.addr %s163, 4
      %s165 = scalar_lea.vmem %s0, %s164
      %p166 = scmp.lt.s32.totalorder %s14, 1
      %s167 = scalar_select %p166, %s14, 1
      %s168 = smul.addr %s167, 16
      %s169 = smul.addr %s168, 4
      %s170 = scalar_lea.vmem %s3, %s169
      %v172 = vld [vmem:[%s1] sm:$0xff]
      %v173 = vld [vmem:[%s1 + $0x8] sm:$0xff]
      %v174 = vld [vmem:[%s1 + $0x10] sm:$0xf]
      %v175 = vld [vmem:[%s1 + $0x14] sm:$0xff]
      %v176 = vld [vmem:[%s1 + $0x1c] sm:$0xff]
      %v177 = vld [vmem:[%s1 + $0x24] sm:$0xf]
      %v178 = vld [vmem:[%s1 + $0x28] sm:$0xff]
      %v179 = vld [vmem:[%s1 + $0x30] sm:$0xff]
      %v180 = vld [vmem:[%s1 + $0x38] sm:$0xf]
      %v181 = vld [vmem:[%s1 + $0x3c] sm:$0xff]
      %v182 = vld [vmem:[%s1 + $0x44] sm:$0xff]
      %v183 = vld [vmem:[%s1 + $0x4c] sm:$0xf]
      %v184 = vld [vmem:[%s1 + $0x50] sm:$0xff]
      %v185 = vld [vmem:[%s1 + $0x58] sm:$0xff]
      %v186 = vld [vmem:[%s1 + $0x60] sm:$0xf]
      %v187 = vld [vmem:[%s1 + $0x64] sm:$0xff]
      %v188 = vld [vmem:[%s1 + $0x6c] sm:$0xff]
      %v189 = vld [vmem:[%s1 + $0x74] sm:$0xf]
      %v190 = vld [vmem:[%s1 + $0x78] sm:$0xff]
      %v191 = vld [vmem:[%s1 + $0x80] sm:$0xff]
      %v192 = vld [vmem:[%s1 + $0x88] sm:$0xf]
      %v193 = vld [vmem:[%s1 + $0x8c] sm:$0xff]
      %v194 = vld [vmem:[%s1 + $0x94] sm:$0xff]
      %v195 = vld [vmem:[%s1 + $0x9c] sm:$0xf]
      %v196 = vld [vmem:[%s165] sm:$0xff]
      %v197 = vld [vmem:[%s165 + $0x8] sm:$0xff]
      %v198 = vld [vmem:[%s165 + $0x10] sm:$0xff]
      %v199 = vld [vmem:[%s165 + $0x18] sm:$0xff]
      %v200 = vld [vmem:[%s165 + $0x20] sm:$0xff]
      %v201 = vld [vmem:[%s165 + $0x28] sm:$0xff]
      %v202 = vld [vmem:[%s165 + $0x30] sm:$0xff]
      %v203 = vld [vmem:[%s165 + $0x38] sm:$0xff]
      %v204 = vld [vmem:[%s165 + $0x40] sm:$0xff]
      %v205 = vld [vmem:[%s165 + $0x48] sm:$0xff]
      %v206 = vld [vmem:[%s165 + $0x50] sm:$0xff]
      %v207 = vld [vmem:[%s165 + $0x58] sm:$0xff]
      %v208 = vld [vmem:[%s165 + $0x60] sm:$0xff]
      %v209 = vld [vmem:[%s165 + $0x68] sm:$0xff]
      %v210 = vld [vmem:[%s165 + $0x70] sm:$0xff]
      %v211 = vld [vmem:[%s165 + $0x78] sm:$0xff]
      %v212 = vld [vmem:[%s165 + $0x80] sm:$0xff]
      %v213 = vld [vmem:[%s165 + $0x88] sm:$0xff]
      %v214 = vld [vmem:[%s165 + $0x90] sm:$0xff]
      %v215 = vld [vmem:[%s165 + $0x98] sm:$0xff]
      %v216 = vld [vmem:[%s165 + $0xa0] sm:$0xff]
      %v217 = vld [vmem:[%s165 + $0xa8] sm:$0xff]
      %v218 = vld [vmem:[%s165 + $0xb0] sm:$0xff]
      %v219 = vld [vmem:[%s165 + $0xb8] sm:$0xff]
      %v220 = vld [vmem:[%s165 + $0xc0] sm:$0xff]
      %v221 = vld [vmem:[%s165 + $0xc8] sm:$0xff]
      %v222 = vld [vmem:[%s165 + $0xd0] sm:$0xff]
      %v223 = vld [vmem:[%s165 + $0xd8] sm:$0xff]
      %v224 = vld [vmem:[%s165 + $0xe0] sm:$0xff]
      %v225 = vld [vmem:[%s165 + $0xe8] sm:$0xff]
      %v226 = vld [vmem:[%s165 + $0xf0] sm:$0xff]
      %v227 = vld [vmem:[%s165 + $0xf8] sm:$0xff]
      %v228 = vld [vmem:[%s165 + $0x100] sm:$0xff]
      %v229 = vld [vmem:[%s165 + $0x108] sm:$0xff]
      %v230 = vld [vmem:[%s165 + $0x110] sm:$0xff]
      %v231 = vld [vmem:[%s165 + $0x118] sm:$0xff]
      %v232 = vld [vmem:[%s165 + $0x120] sm:$0xff]
      %v233 = vld [vmem:[%s165 + $0x128] sm:$0xff]
      %v234 = vld [vmem:[%s165 + $0x130] sm:$0xff]
      %v235 = vld [vmem:[%s165 + $0x138] sm:$0xff]
      %v236 = vld [vmem:[%s165 + $0x140] sm:$0xff]
      %v237 = vld [vmem:[%s165 + $0x148] sm:$0xff]
      %v238 = vld [vmem:[%s165 + $0x150] sm:$0xff]
      %v239 = vld [vmem:[%s165 + $0x158] sm:$0xff]
      %v240 = vld [vmem:[%s165 + $0x160] sm:$0xff]
      %v241 = vld [vmem:[%s165 + $0x168] sm:$0xff]
      %v242 = vld [vmem:[%s165 + $0x170] sm:$0xff]
      %v243 = vld [vmem:[%s165 + $0x178] sm:$0xff]
      %v244 = vld [vmem:[%s165 + $0x180] sm:$0xff]
      %v245 = vld [vmem:[%s165 + $0x188] sm:$0xff]
      %v246 = vld [vmem:[%s165 + $0x190] sm:$0xff]
      %v247 = vld [vmem:[%s165 + $0x198] sm:$0xff]
      %v248 = vld [vmem:[%s165 + $0x1a0] sm:$0xff]
      %v249 = vld [vmem:[%s165 + $0x1a8] sm:$0xff]
      %v250 = vld [vmem:[%s165 + $0x1b0] sm:$0xff]
      %v251 = vld [vmem:[%s165 + $0x1b8] sm:$0xff]
      %v252 = vld [vmem:[%s165 + $0x1c0] sm:$0xff]
      %v253 = vld [vmem:[%s165 + $0x1c8] sm:$0xff]
      %v254 = vld [vmem:[%s165 + $0x1d0] sm:$0xff]
      %v255 = vld [vmem:[%s165 + $0x1d8] sm:$0xff]
      %v256 = vld [vmem:[%s165 + $0x1e0] sm:$0xff]
      %v257 = vld [vmem:[%s165 + $0x1e8] sm:$0xff]
      %v258 = vld [vmem:[%s165 + $0x1f0] sm:$0xff]
      %v259 = vld [vmem:[%s165 + $0x1f8] sm:$0xff]
      %v260 = vld [vmem:[%s165 + $0x200] sm:$0xff]
      %v261 = vld [vmem:[%s165 + $0x208] sm:$0xff]
      %v262 = vld [vmem:[%s165 + $0x210] sm:$0xff]
      %v263 = vld [vmem:[%s165 + $0x218] sm:$0xff]
      %v264 = vld [vmem:[%s165 + $0x220] sm:$0xff]
      %v265 = vld [vmem:[%s165 + $0x228] sm:$0xff]
      %v266 = vld [vmem:[%s165 + $0x230] sm:$0xff]
      %v267 = vld [vmem:[%s165 + $0x238] sm:$0xff]
      %v268 = vld [vmem:[%s2] sm:$0xff]
      %v269 = vld [vmem:[%s2 + $0x8] sm:$0xff]
      %v270 = vld [vmem:[%s2 + $0x10] sm:$0xff]
      %v271 = vld [vmem:[%s2 + $0x18] sm:$0xff]
      %v272 = vld [vmem:[%s2 + $0x20] sm:$0xff]
      %v273 = vld [vmem:[%s2 + $0x28] sm:$0xff]
      %v274 = vld [vmem:[%s2 + $0x30] sm:$0xff]
      %v275 = vld [vmem:[%s2 + $0x38] sm:$0xff]
      %277 = vset.pattern.permute.xlu0 0
      %278 = vperm.xlu0 %277, %v268
      %v279 = vpop.permute.xlu0 %278
      %282 = vset.pattern.permute.xlu0 0
      %283 = vperm.xlu0 %282, %v269
      %v284 = vpop.permute.xlu0 %283
      %287 = vset.pattern.permute.xlu0 0
      %288 = vperm.xlu0 %287, %v270
      %v289 = vpop.permute.xlu0 %288
      %292 = vset.pattern.permute.xlu0 0
      %293 = vperm.xlu0 %292, %v271
      %v294 = vpop.permute.xlu0 %293
      %297 = vset.pattern.permute.xlu0 0
      %298 = vperm.xlu0 %297, %v272
      %v299 = vpop.permute.xlu0 %298
      %302 = vset.pattern.permute.xlu0 0
      %303 = vperm.xlu0 %302, %v273
      %v304 = vpop.permute.xlu0 %303
      %307 = vset.pattern.permute.xlu0 0
      %308 = vperm.xlu0 %307, %v274
      %v309 = vpop.permute.xlu0 %308
      %312 = vset.pattern.permute.xlu0 0
      %313 = vperm.xlu0 %312, %v275
      %v314 = vpop.permute.xlu0 %313
      %v340 = vunpack.c.l.b16 %v172
      %v341 = vunpack.c.h.b16 %v172
      %v342 = vunpack.c.l.b16 %v173
      %v343 = vunpack.c.h.b16 %v173
      %v344 = vunpack.c.l.b16 %v174
      %v345 = vunpack.c.l.b16 %v175
      %v346 = vunpack.c.h.b16 %v175
      %v347 = vunpack.c.l.b16 %v176
      %v348 = vunpack.c.h.b16 %v176
      %v349 = vunpack.c.l.b16 %v177
      %v350 = vunpack.c.l.b16 %v178
      %v351 = vunpack.c.h.b16 %v178
      %v352 = vunpack.c.l.b16 %v179
      %v353 = vunpack.c.h.b16 %v179
      %v354 = vunpack.c.l.b16 %v180
      %v355 = vunpack.c.l.b16 %v181
      %v356 = vunpack.c.h.b16 %v181
      %v357 = vunpack.c.l.b16 %v182
      %v358 = vunpack.c.h.b16 %v182
      %v359 = vunpack.c.l.b16 %v183
      %v360 = vunpack.c.l.b16 %v184
      %v361 = vunpack.c.h.b16 %v184
      %v362 = vunpack.c.l.b16 %v185
      %v363 = vunpack.c.h.b16 %v185
      %v364 = vunpack.c.l.b16 %v186
      %v365 = vunpack.c.l.b16 %v187
      %v366 = vunpack.c.h.b16 %v187
      %v367 = vunpack.c.l.b16 %v188
      %v368 = vunpack.c.h.b16 %v188
      %v369 = vunpack.c.l.b16 %v189
      %v370 = vunpack.c.l.b16 %v190
      %v371 = vunpack.c.h.b16 %v190
      %v372 = vunpack.c.l.b16 %v191
      %v373 = vunpack.c.h.b16 %v191
      %v374 = vunpack.c.l.b16 %v192
      %v375 = vunpack.c.l.b16 %v193
      %v376 = vunpack.c.h.b16 %v193
      %v377 = vunpack.c.l.b16 %v194
      %v378 = vunpack.c.h.b16 %v194
      %v379 = vunpack.c.l.b16 %v195
      %v380 = vpack.c.b16 %v345, %v340
      %v381 = vpack.c.b16 %v346, %v341
      %v382 = vpack.c.b16 %v347, %v342
      %v383 = vpack.c.b16 %v348, %v343
      %v384 = vpack.c.b16 %v349, %v344
      %v385 = vpack.c.b16 %v355, %v350
      %v386 = vpack.c.b16 %v356, %v351
      %v387 = vpack.c.b16 %v357, %v352
      %v388 = vpack.c.b16 %v358, %v353
      %v389 = vpack.c.b16 %v359, %v354
      %v390 = vpack.c.b16 %v365, %v360
      %v391 = vpack.c.b16 %v366, %v361
      %v392 = vpack.c.b16 %v367, %v362
      %v393 = vpack.c.b16 %v368, %v363
      %v394 = vpack.c.b16 %v369, %v364
      %v395 = vpack.c.b16 %v375, %v370
      %v396 = vpack.c.b16 %v376, %v371
      %v397 = vpack.c.b16 %v377, %v372
      %v398 = vpack.c.b16 %v378, %v373
      %v399 = vpack.c.b16 %v379, %v374
      %v488 = vunpack.c.l.b16 %v196
      %v489 = vunpack.c.h.b16 %v196
      %v490 = vunpack.c.l.b16 %v197
      %v491 = vunpack.c.h.b16 %v197
      %v492 = vunpack.c.l.b16 %v198
      %v493 = vunpack.c.h.b16 %v198
      %v494 = vunpack.c.l.b16 %v199
      %v495 = vunpack.c.h.b16 %v199
      %v496 = vunpack.c.l.b16 %v200
      %v497 = vunpack.c.h.b16 %v200
      %v498 = vunpack.c.l.b16 %v201
      %v499 = vunpack.c.h.b16 %v201
      %v500 = vunpack.c.l.b16 %v202
      %v501 = vunpack.c.h.b16 %v202
      %v502 = vunpack.c.l.b16 %v203
      %v503 = vunpack.c.h.b16 %v203
      %v504 = vunpack.c.l.b16 %v204
      %v505 = vunpack.c.h.b16 %v204
      %v506 = vunpack.c.l.b16 %v205
      %v507 = vunpack.c.h.b16 %v205
      %v508 = vunpack.c.l.b16 %v206
      %v509 = vunpack.c.h.b16 %v206
      %v510 = vunpack.c.l.b16 %v207
      %v511 = vunpack.c.h.b16 %v207
      %v512 = vunpack.c.l.b16 %v208
      %v513 = vunpack.c.h.b16 %v208
      %v514 = vunpack.c.l.b16 %v209
      %v515 = vunpack.c.h.b16 %v209
      %v516 = vunpack.c.l.b16 %v210
      %v517 = vunpack.c.h.b16 %v210
      %v518 = vunpack.c.l.b16 %v211
      %v519 = vunpack.c.h.b16 %v211
      %v520 = vunpack.c.l.b16 %v212
      %v521 = vunpack.c.h.b16 %v212
      %v522 = vunpack.c.l.b16 %v213
      %v523 = vunpack.c.h.b16 %v213
      %v524 = vunpack.c.l.b16 %v214
      %v525 = vunpack.c.h.b16 %v214
      %v526 = vunpack.c.l.b16 %v215
      %v527 = vunpack.c.h.b16 %v215
      %v528 = vunpack.c.l.b16 %v216
      %v529 = vunpack.c.h.b16 %v216
      %v530 = vunpack.c.l.b16 %v217
      %v531 = vunpack.c.h.b16 %v217
      %v532 = vunpack.c.l.b16 %v218
      %v533 = vunpack.c.h.b16 %v218
      %v534 = vunpack.c.l.b16 %v219
      %v535 = vunpack.c.h.b16 %v219
      %v536 = vunpack.c.l.b16 %v220
      %v537 = vunpack.c.h.b16 %v220
      %v538 = vunpack.c.l.b16 %v221
      %v539 = vunpack.c.h.b16 %v221
      %v540 = vunpack.c.l.b16 %v222
      %v541 = vunpack.c.h.b16 %v222
      %v542 = vunpack.c.l.b16 %v223
      %v543 = vunpack.c.h.b16 %v223
      %v544 = vunpack.c.l.b16 %v224
      %v545 = vunpack.c.h.b16 %v224
      %v546 = vunpack.c.l.b16 %v225
      %v547 = vunpack.c.h.b16 %v225
      %v548 = vunpack.c.l.b16 %v226
      %v549 = vunpack.c.h.b16 %v226
      %v550 = vunpack.c.l.b16 %v227
      %v551 = vunpack.c.h.b16 %v227
      %v552 = vunpack.c.l.b16 %v228
      %v553 = vunpack.c.h.b16 %v228
      %v554 = vunpack.c.l.b16 %v229
      %v555 = vunpack.c.h.b16 %v229
      %v556 = vunpack.c.l.b16 %v230
      %v557 = vunpack.c.h.b16 %v230
      %v558 = vunpack.c.l.b16 %v231
      %v559 = vunpack.c.h.b16 %v231
      %v560 = vunpack.c.l.b16 %v232
      %v561 = vunpack.c.h.b16 %v232
      %v562 = vunpack.c.l.b16 %v233
      %v563 = vunpack.c.h.b16 %v233
      %v564 = vunpack.c.l.b16 %v234
      %v565 = vunpack.c.h.b16 %v234
      %v566 = vunpack.c.l.b16 %v235
      %v567 = vunpack.c.h.b16 %v235
      %v568 = vunpack.c.l.b16 %v236
      %v569 = vunpack.c.h.b16 %v236
      %v570 = vunpack.c.l.b16 %v237
      %v571 = vunpack.c.h.b16 %v237
      %v572 = vunpack.c.l.b16 %v238
      %v573 = vunpack.c.h.b16 %v238
      %v574 = vunpack.c.l.b16 %v239
      %v575 = vunpack.c.h.b16 %v239
      %v576 = vunpack.c.l.b16 %v240
      %v577 = vunpack.c.h.b16 %v240
      %v578 = vunpack.c.l.b16 %v241
      %v579 = vunpack.c.h.b16 %v241
      %v580 = vunpack.c.l.b16 %v242
      %v581 = vunpack.c.h.b16 %v242
      %v582 = vunpack.c.l.b16 %v243
      %v583 = vunpack.c.h.b16 %v243
      %v584 = vunpack.c.l.b16 %v244
      %v585 = vunpack.c.h.b16 %v244
      %v586 = vunpack.c.l.b16 %v245
      %v587 = vunpack.c.h.b16 %v245
      %v588 = vunpack.c.l.b16 %v246
      %v589 = vunpack.c.h.b16 %v246
      %v590 = vunpack.c.l.b16 %v247
      %v591 = vunpack.c.h.b16 %v247
      %v592 = vunpack.c.l.b16 %v248
      %v593 = vunpack.c.h.b16 %v248
      %v594 = vunpack.c.l.b16 %v249
      %v595 = vunpack.c.h.b16 %v249
      %v596 = vunpack.c.l.b16 %v250
      %v597 = vunpack.c.h.b16 %v250
      %v598 = vunpack.c.l.b16 %v251
      %v599 = vunpack.c.h.b16 %v251
      %v600 = vunpack.c.l.b16 %v252
      %v601 = vunpack.c.h.b16 %v252
      %v602 = vunpack.c.l.b16 %v253
      %v603 = vunpack.c.h.b16 %v253
      %v604 = vunpack.c.l.b16 %v254
      %v605 = vunpack.c.h.b16 %v254
      %v606 = vunpack.c.l.b16 %v255
      %v607 = vunpack.c.h.b16 %v255
      %v608 = vunpack.c.l.b16 %v256
      %v609 = vunpack.c.h.b16 %v256
      %v610 = vunpack.c.l.b16 %v257
      %v611 = vunpack.c.h.b16 %v257
      %v612 = vunpack.c.l.b16 %v258
      %v613 = vunpack.c.h.b16 %v258
      %v614 = vunpack.c.l.b16 %v259
      %v615 = vunpack.c.h.b16 %v259
      %v616 = vunpack.c.l.b16 %v260
      %v617 = vunpack.c.h.b16 %v260
      %v618 = vunpack.c.l.b16 %v261
      %v619 = vunpack.c.h.b16 %v261
      %v620 = vunpack.c.l.b16 %v262
      %v621 = vunpack.c.h.b16 %v262
      %v622 = vunpack.c.l.b16 %v263
      %v623 = vunpack.c.h.b16 %v263
      %v624 = vunpack.c.l.b16 %v264
      %v625 = vunpack.c.h.b16 %v264
      %v626 = vunpack.c.l.b16 %v265
      %v627 = vunpack.c.h.b16 %v265
      %v628 = vunpack.c.l.b16 %v266
      %v629 = vunpack.c.h.b16 %v266
      %v630 = vunpack.c.l.b16 %v267
      %v631 = vunpack.c.h.b16 %v267
      %v632 = vpack.c.b16 %v490, %v488
      %v633 = vpack.c.b16 %v491, %v489
      %v634 = vpack.c.b16 %v494, %v492
      %v635 = vpack.c.b16 %v495, %v493
      %v636 = vpack.c.b16 %v498, %v496
      %v637 = vpack.c.b16 %v499, %v497
      %v638 = vpack.c.b16 %v502, %v500
      %v639 = vpack.c.b16 %v503, %v501
      %v640 = vpack.c.b16 %v506, %v504
      %v641 = vpack.c.b16 %v507, %v505
      %v642 = vpack.c.b16 %v510, %v508
      %v643 = vpack.c.b16 %v511, %v509
      %v644 = vpack.c.b16 %v514, %v512
      %v645 = vpack.c.b16 %v515, %v513
      %v646 = vpack.c.b16 %v518, %v516
      %v647 = vpack.c.b16 %v519, %v517
      %v648 = vpack.c.b16 %v522, %v520
      %v649 = vpack.c.b16 %v523, %v521
      %v650 = vpack.c.b16 %v526, %v524
      %v651 = vpack.c.b16 %v527, %v525
      %v652 = vpack.c.b16 %v530, %v528
      %v653 = vpack.c.b16 %v531, %v529
      %v654 = vpack.c.b16 %v534, %v532
      %v655 = vpack.c.b16 %v535, %v533
      %v656 = vpack.c.b16 %v538, %v536
      %v657 = vpack.c.b16 %v539, %v537
      %v658 = vpack.c.b16 %v542, %v540
      %v659 = vpack.c.b16 %v543, %v541
      %v660 = vpack.c.b16 %v546, %v544
      %v661 = vpack.c.b16 %v547, %v545
      %v662 = vpack.c.b16 %v550, %v548
      %v663 = vpack.c.b16 %v551, %v549
      %v664 = vpack.c.b16 %v554, %v552
      %v665 = vpack.c.b16 %v555, %v553
      %v666 = vpack.c.b16 %v558, %v556
      %v667 = vpack.c.b16 %v559, %v557
      %v668 = vpack.c.b16 %v562, %v560
      %v669 = vpack.c.b16 %v563, %v561
      %v670 = vpack.c.b16 %v566, %v564
      %v671 = vpack.c.b16 %v567, %v565
      %v672 = vpack.c.b16 %v570, %v568
      %v673 = vpack.c.b16 %v571, %v569
      %v674 = vpack.c.b16 %v574, %v572
      %v675 = vpack.c.b16 %v575, %v573
      %v676 = vpack.c.b16 %v578, %v576
      %v677 = vpack.c.b16 %v579, %v577
      %v678 = vpack.c.b16 %v582, %v580
      %v679 = vpack.c.b16 %v583, %v581
      %v680 = vpack.c.b16 %v586, %v584
      %v681 = vpack.c.b16 %v587, %v585
      %v682 = vpack.c.b16 %v590, %v588
      %v683 = vpack.c.b16 %v591, %v589
      %v684 = vpack.c.b16 %v594, %v592
      %v685 = vpack.c.b16 %v595, %v593
      %v686 = vpack.c.b16 %v598, %v596
      %v687 = vpack.c.b16 %v599, %v597
      %v688 = vpack.c.b16 %v602, %v600
      %v689 = vpack.c.b16 %v603, %v601
      %v690 = vpack.c.b16 %v606, %v604
      %v691 = vpack.c.b16 %v607, %v605
      %v692 = vpack.c.b16 %v610, %v608
      %v693 = vpack.c.b16 %v611, %v609
      %v694 = vpack.c.b16 %v614, %v612
      %v695 = vpack.c.b16 %v615, %v613
      %v696 = vpack.c.b16 %v618, %v616
      %v697 = vpack.c.b16 %v619, %v617
      %v698 = vpack.c.b16 %v622, %v620
      %v699 = vpack.c.b16 %v623, %v621
      %v700 = vpack.c.b16 %v626, %v624
      %v701 = vpack.c.b16 %v627, %v625
      %v702 = vpack.c.b16 %v630, %v628
      %v703 = vpack.c.b16 %v631, %v629
      %vm776 = vcmask 523264
      %v778 = vsel %vm776, %v384, 0
      %v781 = vsel %vm776, %v389, 0
      %v784 = vsel %vm776, %v394, 0
      %v787 = vsel %vm776, %v399, 0
      %789 = vmatpush.bf16.msra.mxu0 %v646
      %790 = vmatpush.bf16.msra.mxu0 %v644
      %791 = vmatpush.bf16.msra.mxu0 %v642
      %792 = vmatpush.bf16.msra.mxu0 %v640
      %793 = vmatpush.bf16.msra.mxu0 %v638
      %794 = vmatpush.bf16.msra.mxu0 %v636
      %795 = vmatpush.bf16.msra.mxu0 %v634
      %796 = vmatpush.bf16.msra.mxu0 %v632
      %797 = vmatmul.bf16.gmra.mxu0 %v380
      %v798 = vpop.f32.mrf.mxu0
      %v799 = vadd.f32 %v279, %v798
      %v800 = vpop.f32.mrf.mxu0
      %v801 = vadd.f32 %v284, %v800
      %802 = vmatmul.bf16.gmra.mxu0 %v385
      %v803 = vpop.f32.mrf.mxu0
      %v804 = vadd.f32 %v289, %v803
      %v805 = vpop.f32.mrf.mxu0
      %v806 = vadd.f32 %v294, %v805
      %807 = vmatmul.bf16.gmra.mxu0 %v390
      %v808 = vpop.f32.mrf.mxu0
      %v809 = vadd.f32 %v299, %v808
      %v810 = vpop.f32.mrf.mxu0
      %v811 = vadd.f32 %v304, %v810
      %812 = vmatmul.bf16.gmra.mxu0 %v395
      %v813 = vpop.f32.mrf.mxu0
      %v814 = vadd.f32 %v309, %v813
      %v815 = vpop.f32.mrf.mxu0
      %v816 = vadd.f32 %v314, %v815
      %817 = vdwg.mxu0
      %818 = vmatpush.bf16.msra.mxu0 %v662
      %819 = vmatpush.bf16.msra.mxu0 %v660
      %820 = vmatpush.bf16.msra.mxu0 %v658
      %821 = vmatpush.bf16.msra.mxu0 %v656
      %822 = vmatpush.bf16.msra.mxu0 %v654
      %823 = vmatpush.bf16.msra.mxu0 %v652
      %824 = vmatpush.bf16.msra.mxu0 %v650
      %825 = vmatpush.bf16.msra.mxu0 %v648
      %826 = vmatmul.bf16.gmra.mxu0 %v381
      %v827 = vpop.f32.mrf.mxu0
      %v828 = vadd.f32 %v799, %v827
      %v829 = vpop.f32.mrf.mxu0
      %v830 = vadd.f32 %v801, %v829
      %831 = vmatmul.bf16.gmra.mxu0 %v386
      %v832 = vpop.f32.mrf.mxu0
      %v833 = vadd.f32 %v804, %v832
      %v834 = vpop.f32.mrf.mxu0
      %v835 = vadd.f32 %v806, %v834
      %836 = vmatmul.bf16.gmra.mxu0 %v391
      %v837 = vpop.f32.mrf.mxu0
      %v838 = vadd.f32 %v809, %v837
      %v839 = vpop.f32.mrf.mxu0
      %v840 = vadd.f32 %v811, %v839
      %841 = vmatmul.bf16.gmra.mxu0 %v396
      %v842 = vpop.f32.mrf.mxu0
      %v843 = vadd.f32 %v814, %v842
      %v844 = vpop.f32.mrf.mxu0
      %v845 = vadd.f32 %v816, %v844
      %846 = vdwg.mxu0
      %847 = vmatpush.bf16.msra.mxu0 %v678
      %848 = vmatpush.bf16.msra.mxu0 %v676
      %849 = vmatpush.bf16.msra.mxu0 %v674
      %850 = vmatpush.bf16.msra.mxu0 %v672
      %851 = vmatpush.bf16.msra.mxu0 %v670
      %852 = vmatpush.bf16.msra.mxu0 %v668
      %853 = vmatpush.bf16.msra.mxu0 %v666
      %854 = vmatpush.bf16.msra.mxu0 %v664
      %855 = vmatmul.bf16.gmra.mxu0 %v382
      %v856 = vpop.f32.mrf.mxu0
      %v857 = vadd.f32 %v828, %v856
      %v858 = vpop.f32.mrf.mxu0
      %v859 = vadd.f32 %v830, %v858
      %860 = vmatmul.bf16.gmra.mxu0 %v387
      %v861 = vpop.f32.mrf.mxu0
      %v862 = vadd.f32 %v833, %v861
      %v863 = vpop.f32.mrf.mxu0
      %v864 = vadd.f32 %v835, %v863
      %865 = vmatmul.bf16.gmra.mxu0 %v392
      %v866 = vpop.f32.mrf.mxu0
      %v867 = vadd.f32 %v838, %v866
      %v868 = vpop.f32.mrf.mxu0
      %v869 = vadd.f32 %v840, %v868
      %870 = vmatmul.bf16.gmra.mxu0 %v397
      %v871 = vpop.f32.mrf.mxu0
      %v872 = vadd.f32 %v843, %v871
      %v873 = vpop.f32.mrf.mxu0
      %v874 = vadd.f32 %v845, %v873
      %875 = vdwg.mxu0
      %876 = vmatpush.bf16.msra.mxu0 %v694
      %877 = vmatpush.bf16.msra.mxu0 %v692
      %878 = vmatpush.bf16.msra.mxu0 %v690
      %879 = vmatpush.bf16.msra.mxu0 %v688
      %880 = vmatpush.bf16.msra.mxu0 %v686
      %881 = vmatpush.bf16.msra.mxu0 %v684
      %882 = vmatpush.bf16.msra.mxu0 %v682
      %883 = vmatpush.bf16.msra.mxu0 %v680
      %884 = vmatmul.bf16.gmra.mxu0 %v383
      %v885 = vpop.f32.mrf.mxu0
      %v886 = vadd.f32 %v857, %v885
      %v887 = vpop.f32.mrf.mxu0
      %v888 = vadd.f32 %v859, %v887
      %889 = vmatmul.bf16.gmra.mxu0 %v388
      %v890 = vpop.f32.mrf.mxu0
      %v891 = vadd.f32 %v862, %v890
      %v892 = vpop.f32.mrf.mxu0
      %v893 = vadd.f32 %v864, %v892
      %894 = vmatmul.bf16.gmra.mxu0 %v393
      %v895 = vpop.f32.mrf.mxu0
      %v896 = vadd.f32 %v867, %v895
      %v897 = vpop.f32.mrf.mxu0
      %v898 = vadd.f32 %v869, %v897
      %899 = vmatmul.bf16.gmra.mxu0 %v398
      %v900 = vpop.f32.mrf.mxu0
      %v901 = vadd.f32 %v872, %v900
      %v902 = vpop.f32.mrf.mxu0
      %v903 = vadd.f32 %v874, %v902
      %904 = vdwg.mxu0
      %905 = vmatpush.bf16.msra.mxu0 0
      %906 = vmatpush.bf16.msra.mxu0 0
      %907 = vmatpush.bf16.msra.mxu0 0
      %908 = vmatpush.bf16.msra.mxu0 0
      %909 = vmatpush.bf16.msra.mxu0 %v702
      %910 = vmatpush.bf16.msra.mxu0 %v700
      %911 = vmatpush.bf16.msra.mxu0 %v698
      %912 = vmatpush.bf16.msra.mxu0 %v696
      %913 = vmatmul.bf16.gmra.mxu0 %v778
      %v914 = vpop.f32.mrf.mxu0
      %v915 = vadd.f32 %v886, %v914
      %v916 = vpop.f32.mrf.mxu0
      %v917 = vadd.f32 %v888, %v916
      %918 = vmatmul.bf16.gmra.mxu0 %v781
      %v919 = vpop.f32.mrf.mxu0
      %v920 = vadd.f32 %v891, %v919
      %v921 = vpop.f32.mrf.mxu0
      %v922 = vadd.f32 %v893, %v921
      %923 = vmatmul.bf16.gmra.mxu0 %v784
      %v924 = vpop.f32.mrf.mxu0
      %v925 = vadd.f32 %v896, %v924
      %v926 = vpop.f32.mrf.mxu0
      %v927 = vadd.f32 %v898, %v926
      %928 = vmatmul.bf16.gmra.mxu0 %v787
      %v929 = vpop.f32.mrf.mxu0
      %v930 = vadd.f32 %v901, %v929
      %v931 = vpop.f32.mrf.mxu0
      %v932 = vadd.f32 %v903, %v931
      %933 = vdwg.mxu0
      %934 = vmatpush.bf16.msra.mxu0 %v647
      %935 = vmatpush.bf16.msra.mxu0 %v645
      %936 = vmatpush.bf16.msra.mxu0 %v643
      %937 = vmatpush.bf16.msra.mxu0 %v641
      %938 = vmatpush.bf16.msra.mxu0 %v639
      %939 = vmatpush.bf16.msra.mxu0 %v637
      %940 = vmatpush.bf16.msra.mxu0 %v635
      %941 = vmatpush.bf16.msra.mxu0 %v633
      %942 = vmatmul.bf16.gmra.mxu0 %v380
      %v943 = vpop.f32.mrf.mxu0
      %v944 = vadd.f32 %v279, %v943
      %v945 = vpop.f32.mrf.mxu0
      %v946 = vadd.f32 %v284, %v945
      %947 = vmatmul.bf16.gmra.mxu0 %v385
      %v948 = vpop.f32.mrf.mxu0
      %v949 = vadd.f32 %v289, %v948
      %v950 = vpop.f32.mrf.mxu0
      %v951 = vadd.f32 %v294, %v950
      %952 = vmatmul.bf16.gmra.mxu0 %v390
      %v953 = vpop.f32.mrf.mxu0
      %v954 = vadd.f32 %v299, %v953
      %v955 = vpop.f32.mrf.mxu0
      %v956 = vadd.f32 %v304, %v955
      %957 = vmatmul.bf16.gmra.mxu0 %v395
      %v958 = vpop.f32.mrf.mxu0
      %v959 = vadd.f32 %v309, %v958
      %v960 = vpop.f32.mrf.mxu0
      %v961 = vadd.f32 %v314, %v960
      %962 = vdwg.mxu0
      %963 = vmatpush.bf16.msra.mxu0 %v663
      %964 = vmatpush.bf16.msra.mxu0 %v661
      %965 = vmatpush.bf16.msra.mxu0 %v659
      %966 = vmatpush.bf16.msra.mxu0 %v657
      %967 = vmatpush.bf16.msra.mxu0 %v655
      %968 = vmatpush.bf16.msra.mxu0 %v653
      %969 = vmatpush.bf16.msra.mxu0 %v651
      %970 = vmatpush.bf16.msra.mxu0 %v649
      %971 = vmatmul.bf16.gmra.mxu0 %v381
      %v972 = vpop.f32.mrf.mxu0
      %v973 = vadd.f32 %v944, %v972
      %v974 = vpop.f32.mrf.mxu0
      %v975 = vadd.f32 %v946, %v974
      %976 = vmatmul.bf16.gmra.mxu0 %v386
      %v977 = vpop.f32.mrf.mxu0
      %v978 = vadd.f32 %v949, %v977
      %v979 = vpop.f32.mrf.mxu0
      %v980 = vadd.f32 %v951, %v979
      %981 = vmatmul.bf16.gmra.mxu0 %v391
      %v982 = vpop.f32.mrf.mxu0
      %v983 = vadd.f32 %v954, %v982
      %v984 = vpop.f32.mrf.mxu0
      %v985 = vadd.f32 %v956, %v984
      %986 = vmatmul.bf16.gmra.mxu0 %v396
      %v987 = vpop.f32.mrf.mxu0
      %v988 = vadd.f32 %v959, %v987
      %v989 = vpop.f32.mrf.mxu0
      %v990 = vadd.f32 %v961, %v989
      %991 = vdwg.mxu0
      %992 = vmatpush.bf16.msra.mxu0 %v679
      %993 = vmatpush.bf16.msra.mxu0 %v677
      %994 = vmatpush.bf16.msra.mxu0 %v675
      %995 = vmatpush.bf16.msra.mxu0 %v673
      %996 = vmatpush.bf16.msra.mxu0 %v671
      %997 = vmatpush.bf16.msra.mxu0 %v669
      %998 = vmatpush.bf16.msra.mxu0 %v667
      %999 = vmatpush.bf16.msra.mxu0 %v665
      %1000 = vmatmul.bf16.gmra.mxu0 %v382
      %v1001 = vpop.f32.mrf.mxu0
      %v1002 = vadd.f32 %v973, %v1001
      %v1003 = vpop.f32.mrf.mxu0
      %v1004 = vadd.f32 %v975, %v1003
      %1005 = vmatmul.bf16.gmra.mxu0 %v387
      %v1006 = vpop.f32.mrf.mxu0
      %v1007 = vadd.f32 %v978, %v1006
      %v1008 = vpop.f32.mrf.mxu0
      %v1009 = vadd.f32 %v980, %v1008
      %1010 = vmatmul.bf16.gmra.mxu0 %v392
      %v1011 = vpop.f32.mrf.mxu0
      %v1012 = vadd.f32 %v983, %v1011
      %v1013 = vpop.f32.mrf.mxu0
      %v1014 = vadd.f32 %v985, %v1013
      %1015 = vmatmul.bf16.gmra.mxu0 %v397
      %v1016 = vpop.f32.mrf.mxu0
      %v1017 = vadd.f32 %v988, %v1016
      %v1018 = vpop.f32.mrf.mxu0
      %v1019 = vadd.f32 %v990, %v1018
      %1020 = vdwg.mxu0
      %1021 = vmatpush.bf16.msra.mxu0 %v695
      %1022 = vmatpush.bf16.msra.mxu0 %v693
      %1023 = vmatpush.bf16.msra.mxu0 %v691
      %1024 = vmatpush.bf16.msra.mxu0 %v689
      %1025 = vmatpush.bf16.msra.mxu0 %v687
      %1026 = vmatpush.bf16.msra.mxu0 %v685
      %1027 = vmatpush.bf16.msra.mxu0 %v683
      %1028 = vmatpush.bf16.msra.mxu0 %v681
      %1029 = vmatmul.bf16.gmra.mxu0 %v383
      %v1030 = vpop.f32.mrf.mxu0
      %v1031 = vadd.f32 %v1002, %v1030
      %v1032 = vpop.f32.mrf.mxu0
      %v1033 = vadd.f32 %v1004, %v1032
      %1034 = vmatmul.bf16.gmra.mxu0 %v388
      %v1035 = vpop.f32.mrf.mxu0
      %v1036 = vadd.f32 %v1007, %v1035
      %v1037 = vpop.f32.mrf.mxu0
      %v1038 = vadd.f32 %v1009, %v1037
      %1039 = vmatmul.bf16.gmra.mxu0 %v393
      %v1040 = vpop.f32.mrf.mxu0
      %v1041 = vadd.f32 %v1012, %v1040
      %v1042 = vpop.f32.mrf.mxu0
      %v1043 = vadd.f32 %v1014, %v1042
      %1044 = vmatmul.bf16.gmra.mxu0 %v398
      %v1045 = vpop.f32.mrf.mxu0
      %v1046 = vadd.f32 %v1017, %v1045
      %v1047 = vpop.f32.mrf.mxu0
      %v1048 = vadd.f32 %v1019, %v1047
      %1049 = vdwg.mxu0
      %1050 = vmatpush.bf16.msra.mxu0 0
      %1051 = vmatpush.bf16.msra.mxu0 0
      %1052 = vmatpush.bf16.msra.mxu0 0
      %1053 = vmatpush.bf16.msra.mxu0 0
      %1054 = vmatpush.bf16.msra.mxu0 %v703
      %1055 = vmatpush.bf16.msra.mxu0 %v701
      %1056 = vmatpush.bf16.msra.mxu0 %v699
      %1057 = vmatpush.bf16.msra.mxu0 %v697
      %1058 = vmatmul.bf16.gmra.mxu0 %v778
      %v1059 = vpop.f32.mrf.mxu0
      %v1060 = vadd.f32 %v1031, %v1059
      %v1061 = vpop.f32.mrf.mxu0
      %v1062 = vadd.f32 %v1033, %v1061
      %1063 = vmatmul.bf16.gmra.mxu0 %v781
      %v1064 = vpop.f32.mrf.mxu0
      %v1065 = vadd.f32 %v1036, %v1064
      %v1066 = vpop.f32.mrf.mxu0
      %v1067 = vadd.f32 %v1038, %v1066
      %1068 = vmatmul.bf16.gmra.mxu0 %v784
      %v1069 = vpop.f32.mrf.mxu0
      %v1070 = vadd.f32 %v1041, %v1069
      %v1071 = vpop.f32.mrf.mxu0
      %v1072 = vadd.f32 %v1043, %v1071
      %1073 = vmatmul.bf16.gmra.mxu0 %v787
      %v1074 = vpop.f32.mrf.mxu0
      %v1075 = vadd.f32 %v1046, %v1074
      %v1076 = vpop.f32.mrf.mxu0
      %v1077 = vadd.f32 %v1048, %v1076
      %1078 = vdwg.mxu0
      %v1079 = vmax.f32 %v915, 0.0
      %v1080 = vmax.f32 %v1060, 0.0
      %v1081 = vmax.f32 %v917, 0.0
      %v1082 = vmax.f32 %v1062, 0.0
      %v1083 = vmax.f32 %v920, 0.0
      %v1084 = vmax.f32 %v1065, 0.0
      %v1085 = vmax.f32 %v922, 0.0
      %v1086 = vmax.f32 %v1067, 0.0
      %v1087 = vmax.f32 %v925, 0.0
      %v1088 = vmax.f32 %v1070, 0.0
      %v1089 = vmax.f32 %v927, 0.0
      %v1090 = vmax.f32 %v1072, 0.0
      %v1091 = vmax.f32 %v930, 0.0
      %v1092 = vmax.f32 %v1075, 0.0
      %v1093 = vmax.f32 %v932, 0.0
      %v1094 = vmax.f32 %v1077, 0.0
      %v1095 = vpack.c.bf16 %v1080, %v1079
      %v1096 = vpack.c.bf16 %v1082, %v1081
      %v1097 = vpack.c.bf16 %v1084, %v1083
      %v1098 = vpack.c.bf16 %v1086, %v1085
      %v1099 = vpack.c.bf16 %v1088, %v1087
      %v1100 = vpack.c.bf16 %v1090, %v1089
      %v1101 = vpack.c.bf16 %v1092, %v1091
      %v1102 = vpack.c.bf16 %v1094, %v1093
      %vm1103 = vcmask 1043456
      %vm1104 = vcmask 793604
      %vm1105 = vmor %vm1104, %vm1103
      %1106 = vst.msk [vmem:[%s170] sm:$0xff] %vm1105, %v1095
      %1107 = vst.msk [vmem:[%s170 + $0x8] sm:$0xff] %vm1105, %v1096
      %1108 = vst.msk [vmem:[%s170 + $0x10] sm:$0xff] %vm1105, %v1097
      %1109 = vst.msk [vmem:[%s170 + $0x18] sm:$0xff] %vm1105, %v1098
      %1110 = vst.msk [vmem:[%s170 + $0x20] sm:$0xff] %vm1105, %v1099
      %1111 = vst.msk [vmem:[%s170 + $0x28] sm:$0xff] %vm1105, %v1100
      %1112 = vst.msk [vmem:[%s170 + $0x30] sm:$0xff] %vm1105, %v1101
      %1113 = vst.msk [vmem:[%s170 + $0x38] sm:$0xff] %vm1105, %v1102
      %p1114 = scmp.lt.s32.totalorder %s14, 1
      %s1115 = scalar_select %p1114, %s14, 1
      %s1116 = smul.addr %s1115, 16
      %s1117 = smul.addr %s1116, 4
      %s1118 = scalar_lea.vmem %s3, %s1117
      // Predicated region
      $region33: #{decoder_forward.3} parent=31 // pred_check
        %p1119 = pneg %p100
      $region34: #{decoder_forward.3} parent=31 // pred_check_branch
        %1121 = sbr.rel (%p1119) target = $region36
      $region35: #{decoder_forward.3} parent=31 // pred_region
        _
      $region36: #{decoder_forward.3} parent=31 // pred_fallthru
        _
    $region32: #{decoder_forward.3} parent=5 // pred_fallthru
      _
    %p1122 = scmp.le.s32.totalorder 2, %s9
    // Predicated region
    $region37: #{decoder_forward.3} parent=5 // pred_check
      %p1123 = pneg %p1122
    $region38: #{decoder_forward.3} parent=5 // pred_check_branch
      %1125 = sbr.rel (%p1123) target = $region40
    $region39: #{decoder_forward.3} parent=5 // pred_region
      %s1126 = ssub.s32 %s9, 2
      // Predicated region
      $region41: #{decoder_forward.3} parent=39 // pred_check
        %p1127 = pneg %p106
      $region42: #{decoder_forward.3} parent=39 // pred_check_branch
        %1129 = sbr.rel (%p1127) target = $region44
      $region43: #{decoder_forward.3} parent=39 // pred_region
        %p1130 = scmp.lt.s32.totalorder %s15, 1
        %s1131 = scalar_select %p1130, %s15, 1
        %s1132 = smul.addr %s1131, 16
        %s1133 = smul.addr %s1132, 4
        %s1134 = scalar_lea.vmem %s3, %s1133
      $region44: #{decoder_forward.3} parent=39 // pred_fallthru
        _
    $region40: #{decoder_forward.3} parent=5 // pred_fallthru
      _
  $region6: #{decoder_forward.3} parent=0 // loop_footer
    %s13 = sadd.s32 1, %s9
  $region7: #{decoder_forward.3} parent=0 // loop_footer_branch
    %8 = sbr.rel target = $region3
  $region8: #{decoder_forward.3} parent=0 // loop_exit
    _

// kernel: decoder_forward.4
$region0: #{decoder_forward.4}
  #allocation0 [shape = 'u32[]', space=smem, size = 0x4, offset = 0x4, fixed_abs, tag = 'smem constant byte address 0x4 - core index']
  #allocation1 [shape = 'u32[72,128]{1,0:T(1,128)}', space=vmem, size = 0x9000, scoped, tag = 'internal scratch']
  %s0 = inlined_call_operand.vmem [shape: bf16[2,576,1024], index: 0, kind: input, shape index: {}]
  %s1 = inlined_call_operand.vmem [shape: bf16[32,576], index: 1, kind: input, shape index: {}]
  %s2 = inlined_call_operand.vmem [shape: f32[32,1], index: 2, kind: input, shape index: {}]
  %s3 = inlined_call_operand.vmem [shape: bf16[2,32,1024], index: 3, kind: output, shape index: {}]
  %s4 = sld [smem:[#allocation0]]
  $region45: #{decoder_forward.4} parent=0
    _
  %s6 = ssub.s32 1, %s4
  %s7 = scalar_select 0, %s6, %s4
  loop: start=0, step=1, limit=4
  $region2: #{decoder_forward.4} parent=0 // loop_pre_header
    _
  $region3: #{decoder_forward.4} parent=0 // loop_header
    %s9 = sphi 0, %s13
    %p10 = scmp.ge.s32.totalorder %s9, 4
    %s19 = sphi 0, %s21
    %s22 = sphi 0, %s19
    %s23 = sphi 0, %s22
    %s39 = sphi 0, %s23
    %s43 = sphi 0, %s43
    %s45 = sphi 0, %s43
    %s46 = sphi 0, %s45
    %s60 = sphi 0, %s46
    %s64 = sphi 0, %s64
    %s66 = sphi 0, %s64
    %s67 = sphi 0, %s66
    %s81 = sphi 0, %s67
    %s87 = sphi 0, %s89
    %s90 = sphi 0, %s87
    %s91 = sphi 0, %s90
    %s107 = sphi 0, %s91
  $region4: #{decoder_forward.4} parent=0 // loop_header_branch
    %12 = sbr.rel (%p10) target = $region8
  $region5: #{decoder_forward.4} parent=0 // loop_body
    %s14 = ssub.s32 %s9, 1
    %s15 = ssub.s32 %s9, 2
    %s16 = sadd.s32 %s9, 1
    %s17 = ssub.s32 %s9, %s16
    %p18 = scmp.eq.s32.totalorder %s17, 0
    %s20 = sadd.s32 %s19, 1
    %s21 = scalar_select %p18, %s19, %s20
    %p24 = pneg %p18
    %p25 = scmp.eq.s32.totalorder %s9, 1
    %p26 = por %p24, %p25
    %p27 = scmp.ne.s32.totalorder %s19, %s22
    %p28 = scmp.eq.s32.totalorder %s9, 0
    %p29 = por %p27, %p28
    %p30 = scmp.ne.s32.totalorder %s19, %s22
    %p31 = scmp.eq.s32.totalorder %s14, 1
    %p32 = por %p30, %p31
    %p33 = scmp.ne.s32.totalorder %s22, %s23
    %p34 = scmp.eq.s32.totalorder %s14, 0
    %p35 = por %p33, %p34
    %p36 = scmp.ne.s32.totalorder %s22, %s23
    %p37 = scmp.eq.s32.totalorder %s15, 1
    %p38 = por %p36, %p37
    %p40 = scmp.ne.s32.totalorder %s23, %s39
    %p41 = scmp.eq.s32.totalorder %s15, 0
    %p42 = por %p40, %p41
    %s44 = sadd.s32 %s43, 1
    %p47 = scmp.eq.s32.totalorder %s9, 1
    %p48 = scmp.ne.s32.totalorder %s43, %s45
    %p49 = scmp.eq.s32.totalorder %s9, 0
    %p50 = por %p48, %p49
    %p51 = scmp.ne.s32.totalorder %s43, %s45
    %p52 = scmp.eq.s32.totalorder %s14, 1
    %p53 = por %p51, %p52
    %p54 = scmp.ne.s32.totalorder %s45, %s46
    %p55 = scmp.eq.s32.totalorder %s14, 0
    %p56 = por %p54, %p55
    %p57 = scmp.ne.s32.totalorder %s45, %s46
    %p58 = scmp.eq.s32.totalorder %s15, 1
    %p59 = por %p57, %p58
    %p61 = scmp.ne.s32.totalorder %s46, %s60
    %p62 = scmp.eq.s32.totalorder %s15, 0
    %p63 = por %p61, %p62
    %s65 = sadd.s32 %s64, 1
    %p68 = scmp.eq.s32.totalorder %s9, 1
    %p69 = scmp.ne.s32.totalorder %s64, %s66
    %p70 = scmp.eq.s32.totalorder %s9, 0
    %p71 = por %p69, %p70
    %p72 = scmp.ne.s32.totalorder %s64, %s66
    %p73 = scmp.eq.s32.totalorder %s14, 1
    %p74 = por %p72, %p73
    %p75 = scmp.ne.s32.totalorder %s66, %s67
    %p76 = scmp.eq.s32.totalorder %s14, 0
    %p77 = por %p75, %p76
    %p78 = scmp.ne.s32.totalorder %s66, %s67
    %p79 = scmp.eq.s32.totalorder %s15, 1
    %p80 = por %p78, %p79
    %p82 = scmp.ne.s32.totalorder %s67, %s81
    %p83 = scmp.eq.s32.totalorder %s15, 0
    %p84 = por %p82, %p83
    %s85 = ssub.s32 %s9, %s16
    %p86 = scmp.eq.s32.totalorder %s85, 0
    %s88 = sadd.s32 %s87, 1
    %s89 = scalar_select %p86, %s87, %s88
    %p92 = pneg %p86
    %p93 = scmp.eq.s32.totalorder %s9, 1
    %p94 = por %p92, %p93
    %p95 = scmp.ne.s32.totalorder %s87, %s90
    %p96 = scmp.eq.s32.totalorder %s9, 0
    %p97 = por %p95, %p96
    %p98 = scmp.ne.s32.totalorder %s87, %s90
    %p99 = scmp.eq.s32.totalorder %s14, 1
    %p100 = por %p98, %p99
    %p101 = scmp.ne.s32.totalorder %s90, %s91
    %p102 = scmp.eq.s32.totalorder %s14, 0
    %p103 = por %p101, %p102
    %p104 = scmp.ne.s32.totalorder %s90, %s91
    %p105 = scmp.eq.s32.totalorder %s15, 1
    %p106 = por %p104, %p105
    %p108 = scmp.ne.s32.totalorder %s91, %s107
    %p109 = scmp.eq.s32.totalorder %s15, 0
    %p110 = por %p108, %p109
    %p111 = scmp.le.s32.totalorder 1, %s9
    %p112 = scmp.lt.s32.totalorder %s9, 3
    %p113 = pnand %p111, %p112
    %p114 = pneg %p113
    // Predicated region
    $region9: #{decoder_forward.4} parent=5 // pred_check
      _
    $region10: #{decoder_forward.4} parent=5 // pred_check_branch
      %116 = sbr.rel (%p113) target = $region12
    $region11: #{decoder_forward.4} parent=5 // pred_region
      %s117 = ssub.s32 %s9, 1
      // Predicated region
      $region13: #{decoder_forward.4} parent=11 // pred_check
        %p118 = pneg %p56
      $region14: #{decoder_forward.4} parent=11 // pred_check_branch
        %120 = sbr.rel (%p118) target = $region16
      $region15: #{decoder_forward.4} parent=11 // pred_region
        _
      $region16: #{decoder_forward.4} parent=11 // pred_fallthru
        _
      // Predicated region
      $region17: #{decoder_forward.4} parent=11 // pred_check
        %p121 = pneg %p77
      $region18: #{decoder_forward.4} parent=11 // pred_check_branch
        %123 = sbr.rel (%p121) target = $region20
      $region19: #{decoder_forward.4} parent=11 // pred_region
        _
      $region20: #{decoder_forward.4} parent=11 // pred_fallthru
        _
    $region12: #{decoder_forward.4} parent=5 // pred_fallthru
      _
    %p124 = scmp.lt.s32.totalorder %s9, 2
    // Predicated region
    $region21: #{decoder_forward.4} parent=5 // pred_check
      %p125 = pneg %p124
    $region22: #{decoder_forward.4} parent=5 // pred_check_branch
      %127 = sbr.rel (%p125) target = $region24
    $region23: #{decoder_forward.4} parent=5 // pred_region
      // Predicated region
      $region25: #{decoder_forward.4} parent=23 // pred_check
        %p128 = pneg %p29
      $region26: #{decoder_forward.4} parent=23 // pred_check_branch
        %130 = sbr.rel (%p128) target = $region28
      $region27: #{decoder_forward.4} parent=23 // pred_region
        %p131 = scmp.lt.s32.totalorder %s9, 1
        %s132 = scalar_select %p131, %s9, 1
        %s133 = smul.addr %s132, 576
        %s134 = smul.addr %s133, 4
        %s135 = scalar_lea.vmem %s0, %s134
      $region28: #{decoder_forward.4} parent=23 // pred_fallthru
        _
    $region24: #{decoder_forward.4} parent=5 // pred_fallthru
      _
    %p136 = scmp.le.s32.totalorder 1, %s9
    %p137 = scmp.lt.s32.totalorder %s9, 3
    %p138 = pnand %p136, %p137
    %p139 = pneg %p138
    // Predicated region
    $region29: #{decoder_forward.4} parent=5 // pred_check
      _
    $region30: #{decoder_forward.4} parent=5 // pred_check_branch
      %141 = sbr.rel (%p138) target = $region32
    $region31: #{decoder_forward.4} parent=5 // pred_region
      %s142 = ssub.s32 %s9, 1
      %p143 = scmp.lt.s32.totalorder %s14, 1
      %s144 = scalar_select %p143, %s14, 1
      %s145 = smul.addr %s144, 576
      %s146 = smul.addr %s145, 4
      %s147 = scalar_lea.vmem %s0, %s146
      %p148 = pneg %p35
      %p149 = pneg %p32
      %p150 = pneg %p56
      %p151 = pneg %p53
      %p152 = pneg %p77
      %p153 = pneg %p74
      %p154 = pneg %p103
      %p155 = pneg %p100
      %p156 = scmp.lt.s32.totalorder %s14, 1
      %s157 = scalar_select %p156, %s14, 1
      %s158 = smul.addr %s157, 32
      %s159 = smul.addr %s158, 4
      %s160 = scalar_lea.vmem %s3, %s159
      %p161 = scmp.lt.s32.totalorder %s14, 1
      %s162 = scalar_select %p161, %s14, 1
      %s163 = smul.addr %s162, 576
      %s164 = smul.addr %s163, 4
      %s165 = scalar_lea.vmem %s0, %s164
      %p166 = scmp.lt.s32.totalorder %s14, 1
      %s167 = scalar_select %p166, %s14, 1
      %s168 = smul.addr %s167, 32
      %s169 = smul.addr %s168, 4
      %s170 = scalar_lea.vmem %s3, %s169
      %v172 = vld [vmem:[%s1] sm:$0xff]
      %v173 = vld [vmem:[%s1 + $0x8] sm:$0xff]
      %v174 = vld [vmem:[%s1 + $0x10] sm:$0xf]
      %v175 = vld [vmem:[%s1 + $0x14] sm:$0xff]
      %v176 = vld [vmem:[%s1 + $0x1c] sm:$0xff]
      %v177 = vld [vmem:[%s1 + $0x24] sm:$0xf]
      %v178 = vld [vmem:[%s1 + $0x28] sm:$0xff]
      %v179 = vld [vmem:[%s1 + $0x30] sm:$0xff]
      %v180 = vld [vmem:[%s1 + $0x38] sm:$0xf]
      %v181 = vld [vmem:[%s1 + $0x3c] sm:$0xff]
      %v182 = vld [vmem:[%s1 + $0x44] sm:$0xff]
      %v183 = vld [vmem:[%s1 + $0x4c] sm:$0xf]
      %v184 = vld [vmem:[%s165] sm:$0xff]
      %v185 = vld [vmem:[%s165 + $0x8] sm:$0xff]
      %v186 = vld [vmem:[%s165 + $0x10] sm:$0xff]
      %v187 = vld [vmem:[%s165 + $0x18] sm:$0xff]
      %v188 = vld [vmem:[%s165 + $0x20] sm:$0xff]
      %v189 = vld [vmem:[%s165 + $0x28] sm:$0xff]
      %v190 = vld [vmem:[%s165 + $0x30] sm:$0xff]
      %v191 = vld [vmem:[%s165 + $0x38] sm:$0xff]
      %v192 = vld [vmem:[%s165 + $0x40] sm:$0xff]
      %v193 = vld [vmem:[%s165 + $0x48] sm:$0xff]
      %v194 = vld [vmem:[%s165 + $0x50] sm:$0xff]
      %v195 = vld [vmem:[%s165 + $0x58] sm:$0xff]
      %v196 = vld [vmem:[%s165 + $0x60] sm:$0xff]
      %v197 = vld [vmem:[%s165 + $0x68] sm:$0xff]
      %v198 = vld [vmem:[%s165 + $0x70] sm:$0xff]
      %v199 = vld [vmem:[%s165 + $0x78] sm:$0xff]
      %v200 = vld [vmem:[%s165 + $0x80] sm:$0xff]
      %v201 = vld [vmem:[%s165 + $0x88] sm:$0xff]
      %v202 = vld [vmem:[%s165 + $0x90] sm:$0xff]
      %v203 = vld [vmem:[%s165 + $0x98] sm:$0xff]
      %v204 = vld [vmem:[%s165 + $0xa0] sm:$0xff]
      %v205 = vld [vmem:[%s165 + $0xa8] sm:$0xff]
      %v206 = vld [vmem:[%s165 + $0xb0] sm:$0xff]
      %v207 = vld [vmem:[%s165 + $0xb8] sm:$0xff]
      %v208 = vld [vmem:[%s165 + $0xc0] sm:$0xff]
      %v209 = vld [vmem:[%s165 + $0xc8] sm:$0xff]
      %v210 = vld [vmem:[%s165 + $0xd0] sm:$0xff]
      %v211 = vld [vmem:[%s165 + $0xd8] sm:$0xff]
      %v212 = vld [vmem:[%s165 + $0xe0] sm:$0xff]
      %v213 = vld [vmem:[%s165 + $0xe8] sm:$0xff]
      %v214 = vld [vmem:[%s165 + $0xf0] sm:$0xff]
      %v215 = vld [vmem:[%s165 + $0xf8] sm:$0xff]
      %v216 = vld [vmem:[%s165 + $0x100] sm:$0xff]
      %v217 = vld [vmem:[%s165 + $0x108] sm:$0xff]
      %v218 = vld [vmem:[%s165 + $0x110] sm:$0xff]
      %v219 = vld [vmem:[%s165 + $0x118] sm:$0xff]
      %v220 = vld [vmem:[%s165 + $0x120] sm:$0xff]
      %v221 = vld [vmem:[%s165 + $0x128] sm:$0xff]
      %v222 = vld [vmem:[%s165 + $0x130] sm:$0xff]
      %v223 = vld [vmem:[%s165 + $0x138] sm:$0xff]
      %v224 = vld [vmem:[%s165 + $0x140] sm:$0xff]
      %v225 = vld [vmem:[%s165 + $0x148] sm:$0xff]
      %v226 = vld [vmem:[%s165 + $0x150] sm:$0xff]
      %v227 = vld [vmem:[%s165 + $0x158] sm:$0xff]
      %v228 = vld [vmem:[%s165 + $0x160] sm:$0xff]
      %v229 = vld [vmem:[%s165 + $0x168] sm:$0xff]
      %v230 = vld [vmem:[%s165 + $0x170] sm:$0xff]
      %v231 = vld [vmem:[%s165 + $0x178] sm:$0xff]
      %v232 = vld [vmem:[%s165 + $0x180] sm:$0xff]
      %v233 = vld [vmem:[%s165 + $0x188] sm:$0xff]
      %v234 = vld [vmem:[%s165 + $0x190] sm:$0xff]
      %v235 = vld [vmem:[%s165 + $0x198] sm:$0xff]
      %v236 = vld [vmem:[%s165 + $0x1a0] sm:$0xff]
      %v237 = vld [vmem:[%s165 + $0x1a8] sm:$0xff]
      %v238 = vld [vmem:[%s165 + $0x1b0] sm:$0xff]
      %v239 = vld [vmem:[%s165 + $0x1b8] sm:$0xff]
      %v240 = vld [vmem:[%s165 + $0x1c0] sm:$0xff]
      %v241 = vld [vmem:[%s165 + $0x1c8] sm:$0xff]
      %v242 = vld [vmem:[%s165 + $0x1d0] sm:$0xff]
      %v243 = vld [vmem:[%s165 + $0x1d8] sm:$0xff]
      %v244 = vld [vmem:[%s165 + $0x1e0] sm:$0xff]
      %v245 = vld [vmem:[%s165 + $0x1e8] sm:$0xff]
      %v246 = vld [vmem:[%s165 + $0x1f0] sm:$0xff]
      %v247 = vld [vmem:[%s165 + $0x1f8] sm:$0xff]
      %v248 = vld [vmem:[%s165 + $0x200] sm:$0xff]
      %v249 = vld [vmem:[%s165 + $0x208] sm:$0xff]
      %v250 = vld [vmem:[%s165 + $0x210] sm:$0xff]
      %v251 = vld [vmem:[%s165 + $0x218] sm:$0xff]
      %v252 = vld [vmem:[%s165 + $0x220] sm:$0xff]
      %v253 = vld [vmem:[%s165 + $0x228] sm:$0xff]
      %v254 = vld [vmem:[%s165 + $0x230] sm:$0xff]
      %v255 = vld [vmem:[%s165 + $0x238] sm:$0xff]
      %v256 = vld [vmem:[%s165 + $0x240] sm:$0xff]
      %v257 = vld [vmem:[%s165 + $0x248] sm:$0xff]
      %v258 = vld [vmem:[%s165 + $0x250] sm:$0xff]
      %v259 = vld [vmem:[%s165 + $0x258] sm:$0xff]
      %v260 = vld [vmem:[%s165 + $0x260] sm:$0xff]
      %v261 = vld [vmem:[%s165 + $0x268] sm:$0xff]
      %v262 = vld [vmem:[%s165 + $0x270] sm:$0xff]
      %v263 = vld [vmem:[%s165 + $0x278] sm:$0xff]
      %v264 = vld [vmem:[%s165 + $0x280] sm:$0xff]
      %v265 = vld [vmem:[%s165 + $0x288] sm:$0xff]
      %v266 = vld [vmem:[%s165 + $0x290] sm:$0xff]
      %v267 = vld [vmem:[%s165 + $0x298] sm:$0xff]
      %v268 = vld [vmem:[%s165 + $0x2a0] sm:$0xff]
      %v269 = vld [vmem:[%s165 + $0x2a8] sm:$0xff]
      %v270 = vld [vmem:[%s165 + $0x2b0] sm:$0xff]
      %v271 = vld [vmem:[%s165 + $0x2b8] sm:$0xff]
      %v272 = vld [vmem:[%s165 + $0x2c0] sm:$0xff]
      %v273 = vld [vmem:[%s165 + $0x2c8] sm:$0xff]
      %v274 = vld [vmem:[%s165 + $0x2d0] sm:$0xff]
      %v275 = vld [vmem:[%s165 + $0x2d8] sm:$0xff]
      %v276 = vld [vmem:[%s165 + $0x2e0] sm:$0xff]
      %v277 = vld [vmem:[%s165 + $0x2e8] sm:$0xff]
      %v278 = vld [vmem:[%s165 + $0x2f0] sm:$0xff]
      %v279 = vld [vmem:[%s165 + $0x2f8] sm:$0xff]
      %v280 = vld [vmem:[%s165 + $0x300] sm:$0xff]
      %v281 = vld [vmem:[%s165 + $0x308] sm:$0xff]
      %v282 = vld [vmem:[%s165 + $0x310] sm:$0xff]
      %v283 = vld [vmem:[%s165 + $0x318] sm:$0xff]
      %v284 = vld [vmem:[%s165 + $0x320] sm:$0xff]
      %v285 = vld [vmem:[%s165 + $0x328] sm:$0xff]
      %v286 = vld [vmem:[%s165 + $0x330] sm:$0xff]
      %v287 = vld [vmem:[%s165 + $0x338] sm:$0xff]
      %v288 = vld [vmem:[%s165 + $0x340] sm:$0xff]
      %v289 = vld [vmem:[%s165 + $0x348] sm:$0xff]
      %v290 = vld [vmem:[%s165 + $0x350] sm:$0xff]
      %v291 = vld [vmem:[%s165 + $0x358] sm:$0xff]
      %v292 = vld [vmem:[%s165 + $0x360] sm:$0xff]
      %v293 = vld [vmem:[%s165 + $0x368] sm:$0xff]
      %v294 = vld [vmem:[%s165 + $0x370] sm:$0xff]
      %v295 = vld [vmem:[%s165 + $0x378] sm:$0xff]
      %v296 = vld [vmem:[%s165 + $0x380] sm:$0xff]
      %v297 = vld [vmem:[%s165 + $0x388] sm:$0xff]
      %v298 = vld [vmem:[%s165 + $0x390] sm:$0xff]
      %v299 = vld [vmem:[%s165 + $0x398] sm:$0xff]
      %v300 = vld [vmem:[%s165 + $0x3a0] sm:$0xff]
      %v301 = vld [vmem:[%s165 + $0x3a8] sm:$0xff]
      %v302 = vld [vmem:[%s165 + $0x3b0] sm:$0xff]
      %v303 = vld [vmem:[%s165 + $0x3b8] sm:$0xff]
      %v304 = vld [vmem:[%s165 + $0x3c0] sm:$0xff]
      %v305 = vld [vmem:[%s165 + $0x3c8] sm:$0xff]
      %v306 = vld [vmem:[%s165 + $0x3d0] sm:$0xff]
      %v307 = vld [vmem:[%s165 + $0x3d8] sm:$0xff]
      %v308 = vld [vmem:[%s165 + $0x3e0] sm:$0xff]
      %v309 = vld [vmem:[%s165 + $0x3e8] sm:$0xff]
      %v310 = vld [vmem:[%s165 + $0x3f0] sm:$0xff]
      %v311 = vld [vmem:[%s165 + $0x3f8] sm:$0xff]
      %v312 = vld [vmem:[%s165 + $0x400] sm:$0xff]
      %v313 = vld [vmem:[%s165 + $0x408] sm:$0xff]
      %v314 = vld [vmem:[%s165 + $0x410] sm:$0xff]
      %v315 = vld [vmem:[%s165 + $0x418] sm:$0xff]
      %v316 = vld [vmem:[%s165 + $0x420] sm:$0xff]
      %v317 = vld [vmem:[%s165 + $0x428] sm:$0xff]
      %v318 = vld [vmem:[%s165 + $0x430] sm:$0xff]
      %v319 = vld [vmem:[%s165 + $0x438] sm:$0xff]
      %v320 = vld [vmem:[%s165 + $0x440] sm:$0xff]
      %v321 = vld [vmem:[%s165 + $0x448] sm:$0xff]
      %v322 = vld [vmem:[%s165 + $0x450] sm:$0xff]
      %v323 = vld [vmem:[%s165 + $0x458] sm:$0xff]
      %v324 = vld [vmem:[%s165 + $0x460] sm:$0xff]
      %v325 = vld [vmem:[%s165 + $0x468] sm:$0xff]
      %v326 = vld [vmem:[%s165 + $0x470] sm:$0xff]
      %v327 = vld [vmem:[%s165 + $0x478] sm:$0xff]
      %v328 = vld [vmem:[%s165 + $0x480] sm:$0xff]
      %v329 = vld [vmem:[%s165 + $0x488] sm:$0xff]
      %v330 = vld [vmem:[%s165 + $0x490] sm:$0xff]
      %v331 = vld [vmem:[%s165 + $0x498] sm:$0xff]
      %v332 = vld [vmem:[%s165 + $0x4a0] sm:$0xff]
      %v333 = vld [vmem:[%s165 + $0x4a8] sm:$0xff]
      %v334 = vld [vmem:[%s165 + $0x4b0] sm:$0xff]
      %v335 = vld [vmem:[%s165 + $0x4b8] sm:$0xff]
      %v336 = vld [vmem:[%s165 + $0x4c0] sm:$0xff]
      %v337 = vld [vmem:[%s165 + $0x4c8] sm:$0xff]
      %v338 = vld [vmem:[%s165 + $0x4d0] sm:$0xff]
      %v339 = vld [vmem:[%s165 + $0x4d8] sm:$0xff]
      %v340 = vld [vmem:[%s165 + $0x4e0] sm:$0xff]
      %v341 = vld [vmem:[%s165 + $0x4e8] sm:$0xff]
      %v342 = vld [vmem:[%s165 + $0x4f0] sm:$0xff]
      %v343 = vld [vmem:[%s165 + $0x4f8] sm:$0xff]
      %v344 = vld [vmem:[%s165 + $0x500] sm:$0xff]
      %v345 = vld [vmem:[%s165 + $0x508] sm:$0xff]
      %v346 = vld [vmem:[%s165 + $0x510] sm:$0xff]
      %v347 = vld [vmem:[%s165 + $0x518] sm:$0xff]
      %v348 = vld [vmem:[%s165 + $0x520] sm:$0xff]
      %v349 = vld [vmem:[%s165 + $0x528] sm:$0xff]
      %v350 = vld [vmem:[%s165 + $0x530] sm:$0xff]
      %v351 = vld [vmem:[%s165 + $0x538] sm:$0xff]
      %v352 = vld [vmem:[%s165 + $0x540] sm:$0xff]
      %v353 = vld [vmem:[%s165 + $0x548] sm:$0xff]
      %v354 = vld [vmem:[%s165 + $0x550] sm:$0xff]
      %v355 = vld [vmem:[%s165 + $0x558] sm:$0xff]
      %v356 = vld [vmem:[%s165 + $0x560] sm:$0xff]
      %v357 = vld [vmem:[%s165 + $0x568] sm:$0xff]
      %v358 = vld [vmem:[%s165 + $0x570] sm:$0xff]
      %v359 = vld [vmem:[%s165 + $0x578] sm:$0xff]
      %v360 = vld [vmem:[%s165 + $0x580] sm:$0xff]
      %v361 = vld [vmem:[%s165 + $0x588] sm:$0xff]
      %v362 = vld [vmem:[%s165 + $0x590] sm:$0xff]
      %v363 = vld [vmem:[%s165 + $0x598] sm:$0xff]
      %v364 = vld [vmem:[%s165 + $0x5a0] sm:$0xff]
      %v365 = vld [vmem:[%s165 + $0x5a8] sm:$0xff]
      %v366 = vld [vmem:[%s165 + $0x5b0] sm:$0xff]
      %v367 = vld [vmem:[%s165 + $0x5b8] sm:$0xff]
      %v368 = vld [vmem:[%s165 + $0x5c0] sm:$0xff]
      %v369 = vld [vmem:[%s165 + $0x5c8] sm:$0xff]
      %v370 = vld [vmem:[%s165 + $0x5d0] sm:$0xff]
      %v371 = vld [vmem:[%s165 + $0x5d8] sm:$0xff]
      %v372 = vld [vmem:[%s165 + $0x5e0] sm:$0xff]
      %v373 = vld [vmem:[%s165 + $0x5e8] sm:$0xff]
      %v374 = vld [vmem:[%s165 + $0x5f0] sm:$0xff]
      %v375 = vld [vmem:[%s165 + $0x5f8] sm:$0xff]
      %v376 = vld [vmem:[%s165 + $0x600] sm:$0xff]
      %v377 = vld [vmem:[%s165 + $0x608] sm:$0xff]
      %v378 = vld [vmem:[%s165 + $0x610] sm:$0xff]
      %v379 = vld [vmem:[%s165 + $0x618] sm:$0xff]
      %v380 = vld [vmem:[%s165 + $0x620] sm:$0xff]
      %v381 = vld [vmem:[%s165 + $0x628] sm:$0xff]
      %v382 = vld [vmem:[%s165 + $0x630] sm:$0xff]
      %v383 = vld [vmem:[%s165 + $0x638] sm:$0xff]
      %v384 = vld [vmem:[%s165 + $0x640] sm:$0xff]
      %v385 = vld [vmem:[%s165 + $0x648] sm:$0xff]
      %v386 = vld [vmem:[%s165 + $0x650] sm:$0xff]
      %v387 = vld [vmem:[%s165 + $0x658] sm:$0xff]
      %v388 = vld [vmem:[%s165 + $0x660] sm:$0xff]
      %v389 = vld [vmem:[%s165 + $0x668] sm:$0xff]
      %v390 = vld [vmem:[%s165 + $0x670] sm:$0xff]
      %v391 = vld [vmem:[%s165 + $0x678] sm:$0xff]
      %v392 = vld [vmem:[%s165 + $0x680] sm:$0xff]
      %v393 = vld [vmem:[%s165 + $0x688] sm:$0xff]
      %v394 = vld [vmem:[%s165 + $0x690] sm:$0xff]
      %v395 = vld [vmem:[%s165 + $0x698] sm:$0xff]
      %v396 = vld [vmem:[%s165 + $0x6a0] sm:$0xff]
      %v397 = vld [vmem:[%s165 + $0x6a8] sm:$0xff]
      %v398 = vld [vmem:[%s165 + $0x6b0] sm:$0xff]
      %v399 = vld [vmem:[%s165 + $0x6b8] sm:$0xff]
      %v400 = vld [vmem:[%s165 + $0x6c0] sm:$0xff]
      %v401 = vld [vmem:[%s165 + $0x6c8] sm:$0xff]
      %v402 = vld [vmem:[%s165 + $0x6d0] sm:$0xff]
      %v403 = vld [vmem:[%s165 + $0x6d8] sm:$0xff]
      %v404 = vld [vmem:[%s165 + $0x6e0] sm:$0xff]
      %v405 = vld [vmem:[%s165 + $0x6e8] sm:$0xff]
      %v406 = vld [vmem:[%s165 + $0x6f0] sm:$0xff]
      %v407 = vld [vmem:[%s165 + $0x6f8] sm:$0xff]
      %v408 = vld [vmem:[%s165 + $0x700] sm:$0xff]
      %v409 = vld [vmem:[%s165 + $0x708] sm:$0xff]
      %v410 = vld [vmem:[%s165 + $0x710] sm:$0xff]
      %v411 = vld [vmem:[%s165 + $0x718] sm:$0xff]
      %v412 = vld [vmem:[%s165 + $0x720] sm:$0xff]
      %v413 = vld [vmem:[%s165 + $0x728] sm:$0xff]
      %v414 = vld [vmem:[%s165 + $0x730] sm:$0xff]
      %v415 = vld [vmem:[%s165 + $0x738] sm:$0xff]
      %v416 = vld [vmem:[%s165 + $0x740] sm:$0xff]
      %v417 = vld [vmem:[%s165 + $0x748] sm:$0xff]
      %v418 = vld [vmem:[%s165 + $0x750] sm:$0xff]
      %v419 = vld [vmem:[%s165 + $0x758] sm:$0xff]
      %v420 = vld [vmem:[%s165 + $0x760] sm:$0xff]
      %v421 = vld [vmem:[%s165 + $0x768] sm:$0xff]
      %v422 = vld [vmem:[%s165 + $0x770] sm:$0xff]
      %v423 = vld [vmem:[%s165 + $0x778] sm:$0xff]
      %v424 = vld [vmem:[%s165 + $0x780] sm:$0xff]
      %v425 = vld [vmem:[%s165 + $0x788] sm:$0xff]
      %v426 = vld [vmem:[%s165 + $0x790] sm:$0xff]
      %v427 = vld [vmem:[%s165 + $0x798] sm:$0xff]
      %v428 = vld [vmem:[%s165 + $0x7a0] sm:$0xff]
      %v429 = vld [vmem:[%s165 + $0x7a8] sm:$0xff]
      %v430 = vld [vmem:[%s165 + $0x7b0] sm:$0xff]
      %v431 = vld [vmem:[%s165 + $0x7b8] sm:$0xff]
      %v432 = vld [vmem:[%s165 + $0x7c0] sm:$0xff]
      %v433 = vld [vmem:[%s165 + $0x7c8] sm:$0xff]
      %v434 = vld [vmem:[%s165 + $0x7d0] sm:$0xff]
      %v435 = vld [vmem:[%s165 + $0x7d8] sm:$0xff]
      %v436 = vld [vmem:[%s165 + $0x7e0] sm:$0xff]
      %v437 = vld [vmem:[%s165 + $0x7e8] sm:$0xff]
      %v438 = vld [vmem:[%s165 + $0x7f0] sm:$0xff]
      %v439 = vld [vmem:[%s165 + $0x7f8] sm:$0xff]
      %v440 = vld [vmem:[%s165 + $0x800] sm:$0xff]
      %v441 = vld [vmem:[%s165 + $0x808] sm:$0xff]
      %v442 = vld [vmem:[%s165 + $0x810] sm:$0xff]
      %v443 = vld [vmem:[%s165 + $0x818] sm:$0xff]
      %v444 = vld [vmem:[%s165 + $0x820] sm:$0xff]
      %v445 = vld [vmem:[%s165 + $0x828] sm:$0xff]
      %v446 = vld [vmem:[%s165 + $0x830] sm:$0xff]
      %v447 = vld [vmem:[%s165 + $0x838] sm:$0xff]
      %v448 = vld [vmem:[%s165 + $0x840] sm:$0xff]
      %v449 = vld [vmem:[%s165 + $0x848] sm:$0xff]
      %v450 = vld [vmem:[%s165 + $0x850] sm:$0xff]
      %v451 = vld [vmem:[%s165 + $0x858] sm:$0xff]
      %v452 = vld [vmem:[%s165 + $0x860] sm:$0xff]
      %v453 = vld [vmem:[%s165 + $0x868] sm:$0xff]
      %v454 = vld [vmem:[%s165 + $0x870] sm:$0xff]
      %v455 = vld [vmem:[%s165 + $0x878] sm:$0xff]
      %v456 = vld [vmem:[%s165 + $0x880] sm:$0xff]
      %v457 = vld [vmem:[%s165 + $0x888] sm:$0xff]
      %v458 = vld [vmem:[%s165 + $0x890] sm:$0xff]
      %v459 = vld [vmem:[%s165 + $0x898] sm:$0xff]
      %v460 = vld [vmem:[%s165 + $0x8a0] sm:$0xff]
      %v461 = vld [vmem:[%s165 + $0x8a8] sm:$0xff]
      %v462 = vld [vmem:[%s165 + $0x8b0] sm:$0xff]
      %v463 = vld [vmem:[%s165 + $0x8b8] sm:$0xff]
      %v464 = vld [vmem:[%s165 + $0x8c0] sm:$0xff]
      %v465 = vld [vmem:[%s165 + $0x8c8] sm:$0xff]
      %v466 = vld [vmem:[%s165 + $0x8d0] sm:$0xff]
      %v467 = vld [vmem:[%s165 + $0x8d8] sm:$0xff]
      %v468 = vld [vmem:[%s165 + $0x8e0] sm:$0xff]
      %v469 = vld [vmem:[%s165 + $0x8e8] sm:$0xff]
      %v470 = vld [vmem:[%s165 + $0x8f0] sm:$0xff]
      %v471 = vld [vmem:[%s165 + $0x8f8] sm:$0xff]
      %v472 = vld [vmem:[%s2] sm:$0xff]
      %v473 = vld [vmem:[%s2 + $0x8] sm:$0xff]
      %v474 = vld [vmem:[%s2 + $0x10] sm:$0xff]
      %v475 = vld [vmem:[%s2 + $0x18] sm:$0xff]
      %477 = vset.pattern.permute.xlu0 0
      %478 = vperm.xlu0 %477, %v472
      %v479 = vpop.permute.xlu0 %478
      %482 = vset.pattern.permute.xlu0 0
      %483 = vperm.xlu0 %482, %v473
      %v484 = vpop.permute.xlu0 %483
      %487 = vset.pattern.permute.xlu0 0
      %488 = vperm.xlu0 %487, %v474
      %v489 = vpop.permute.xlu0 %488
      %492 = vset.pattern.permute.xlu0 0
      %493 = vperm.xlu0 %492, %v475
      %v494 = vpop.permute.xlu0 %493
      %v508 = vunpack.c.l.b16 %v172
      %v509 = vunpack.c.h.b16 %v172
      %v510 = vunpack.c.l.b16 %v173
      %v511 = vunpack.c.h.b16 %v173
      %v512 = vunpack.c.l.b16 %v174
      %v513 = vunpack.c.l.b16 %v175
      %v514 = vunpack.c.h.b16 %v175
      %v515 = vunpack.c.l.b16 %v176
      %v516 = vunpack.c.h.b16 %v176
      %v517 = vunpack.c.l.b16 %v177
      %v518 = vunpack.c.l.b16 %v178
      %v519 = vunpack.c.h.b16 %v178
      %v520 = vunpack.c.l.b16 %v179
      %v521 = vunpack.c.h.b16 %v179
      %v522 = vunpack.c.l.b16 %v180
      %v523 = vunpack.c.l.b16 %v181
      %v524 = vunpack.c.h.b16 %v181
      %v525 = vunpack.c.l.b16 %v182
      %v526 = vunpack.c.h.b16 %v182
      %v527 = vunpack.c.l.b16 %v183
      %v528 = vpack.c.b16 %v513, %v508
      %v529 = vpack.c.b16 %v514, %v509
      %v530 = vpack.c.b16 %v515, %v510
      %v531 = vpack.c.b16 %v516, %v511
      %v532 = vpack.c.b16 %v517, %v512
      %v533 = vpack.c.b16 %v523, %v518
      %v534 = vpack.c.b16 %v524, %v519
      %v535 = vpack.c.b16 %v525, %v520
      %v536 = vpack.c.b16 %v526, %v521
      %v537 = vpack.c.b16 %v527, %v522
      %v834 = vunpack.c.l.b16 %v184
      %v835 = vunpack.c.h.b16 %v184
      %v836 = vunpack.c.l.b16 %v185
      %v837 = vunpack.c.h.b16 %v185
      %v838 = vunpack.c.l.b16 %v186
      %v839 = vunpack.c.h.b16 %v186
      %v840 = vunpack.c.l.b16 %v187
      %v841 = vunpack.c.h.b16 %v187
      %v842 = vunpack.c.l.b16 %v188
      %v843 = vunpack.c.h.b16 %v188
      %v844 = vunpack.c.l.b16 %v189
      %v845 = vunpack.c.h.b16 %v189
      %v846 = vunpack.c.l.b16 %v190
      %v847 = vunpack.c.h.b16 %v190
      %v848 = vunpack.c.l.b16 %v191
      %v849 = vunpack.c.h.b16 %v191
      %v850 = vunpack.c.l.b16 %v192
      %v851 = vunpack.c.h.b16 %v192
      %v852 = vunpack.c.l.b16 %v193
      %v853 = vunpack.c.h.b16 %v193
      %v854 = vunpack.c.l.b16 %v194
      %v855 = vunpack.c.h.b16 %v194
      %v856 = vunpack.c.l.b16 %v195
      %v857 = vunpack.c.h.b16 %v195
      %v858 = vunpack.c.l.b16 %v196
      %v859 = vunpack.c.h.b16 %v196
      %v860 = vunpack.c.l.b16 %v197
      %v861 = vunpack.c.h.b16 %v197
      %v862 = vunpack.c.l.b16 %v198
      %v863 = vunpack.c.h.b16 %v198
      %v864 = vunpack.c.l.b16 %v199
      %v865 = vunpack.c.h.b16 %v199
      %v866 = vunpack.c.l.b16 %v200
      %v867 = vunpack.c.h.b16 %v200
      %v868 = vunpack.c.l.b16 %v201
      %v869 = vunpack.c.h.b16 %v201
      %v870 = vunpack.c.l.b16 %v202
      %v871 = vunpack.c.h.b16 %v202
      %v872 = vunpack.c.l.b16 %v203
      %v873 = vunpack.c.h.b16 %v203
      %v874 = vunpack.c.l.b16 %v204
      %v875 = vunpack.c.h.b16 %v204
      %v876 = vunpack.c.l.b16 %v205
      %v877 = vunpack.c.h.b16 %v205
      %v878 = vunpack.c.l.b16 %v206
      %v879 = vunpack.c.h.b16 %v206
      %v880 = vunpack.c.l.b16 %v207
      %v881 = vunpack.c.h.b16 %v207
      %v882 = vunpack.c.l.b16 %v208
      %v883 = vunpack.c.h.b16 %v208
      %v884 = vunpack.c.l.b16 %v209
      %v885 = vunpack.c.h.b16 %v209
      %v886 = vunpack.c.l.b16 %v210
      %v887 = vunpack.c.h.b16 %v210
      %v888 = vunpack.c.l.b16 %v211
      %v889 = vunpack.c.h.b16 %v211
      %v890 = vunpack.c.l.b16 %v212
      %v891 = vunpack.c.h.b16 %v212
      %v892 = vunpack.c.l.b16 %v213
      %v893 = vunpack.c.h.b16 %v213
      %v894 = vunpack.c.l.b16 %v214
      %v895 = vunpack.c.h.b16 %v214
      %v896 = vunpack.c.l.b16 %v215
      %v897 = vunpack.c.h.b16 %v215
      %v898 = vunpack.c.l.b16 %v216
      %v899 = vunpack.c.h.b16 %v216
      %v900 = vunpack.c.l.b16 %v217
      %v901 = vunpack.c.h.b16 %v217
      %v902 = vunpack.c.l.b16 %v218
      %v903 = vunpack.c.h.b16 %v218
      %v904 = vunpack.c.l.b16 %v219
      %v905 = vunpack.c.h.b16 %v219
      %v906 = vunpack.c.l.b16 %v220
      %v907 = vunpack.c.h.b16 %v220
      %v908 = vunpack.c.l.b16 %v221
      %v909 = vunpack.c.h.b16 %v221
      %v910 = vunpack.c.l.b16 %v222
      %v911 = vunpack.c.h.b16 %v222
      %v912 = vunpack.c.l.b16 %v223
      %v913 = vunpack.c.h.b16 %v223
      %v914 = vunpack.c.l.b16 %v224
      %v915 = vunpack.c.h.b16 %v224
      %v916 = vunpack.c.l.b16 %v225
      %v917 = vunpack.c.h.b16 %v225
      %v918 = vunpack.c.l.b16 %v226
      %v919 = vunpack.c.h.b16 %v226
      %v920 = vunpack.c.l.b16 %v227
      %v921 = vunpack.c.h.b16 %v227
      %v922 = vunpack.c.l.b16 %v228
      %v923 = vunpack.c.h.b16 %v228
      %v924 = vunpack.c.l.b16 %v229
      %v925 = vunpack.c.h.b16 %v229
      %v926 = vunpack.c.l.b16 %v230
      %v927 = vunpack.c.h.b16 %v230
      %v928 = vunpack.c.l.b16 %v231
      %v929 = vunpack.c.h.b16 %v231
      %v930 = vunpack.c.l.b16 %v232
      %v931 = vunpack.c.h.b16 %v232
      %v932 = vunpack.c.l.b16 %v233
      %v933 = vunpack.c.h.b16 %v233
      %v934 = vunpack.c.l.b16 %v234
      %v935 = vunpack.c.h.b16 %v234
      %v936 = vunpack.c.l.b16 %v235
      %v937 = vunpack.c.h.b16 %v235
      %v938 = vunpack.c.l.b16 %v236
      %v939 = vunpack.c.h.b16 %v236
      %v940 = vunpack.c.l.b16 %v237
      %v941 = vunpack.c.h.b16 %v237
      %v942 = vunpack.c.l.b16 %v238
      %v943 = vunpack.c.h.b16 %v238
      %v944 = vunpack.c.l.b16 %v239
      %v945 = vunpack.c.h.b16 %v239
      %v946 = vunpack.c.l.b16 %v240
      %v947 = vunpack.c.h.b16 %v240
      %v948 = vunpack.c.l.b16 %v241
      %v949 = vunpack.c.h.b16 %v241
      %v950 = vunpack.c.l.b16 %v242
      %v951 = vunpack.c.h.b16 %v242
      %v952 = vunpack.c.l.b16 %v243
      %v953 = vunpack.c.h.b16 %v243
      %v954 = vunpack.c.l.b16 %v244
      %v955 = vunpack.c.h.b16 %v244
      %v956 = vunpack.c.l.b16 %v245
      %v957 = vunpack.c.h.b16 %v245
      %v958 = vunpack.c.l.b16 %v246
      %v959 = vunpack.c.h.b16 %v246
      %v960 = vunpack.c.l.b16 %v247
      %v961 = vunpack.c.h.b16 %v247
      %v962 = vunpack.c.l.b16 %v248
      %v963 = vunpack.c.h.b16 %v248
      %v964 = vunpack.c.l.b16 %v249
      %v965 = vunpack.c.h.b16 %v249
      %v966 = vunpack.c.l.b16 %v250
      %v967 = vunpack.c.h.b16 %v250
      %v968 = vunpack.c.l.b16 %v251
      %v969 = vunpack.c.h.b16 %v251
      %v970 = vunpack.c.l.b16 %v252
      %v971 = vunpack.c.h.b16 %v252
      %v972 = vunpack.c.l.b16 %v253
      %v973 = vunpack.c.h.b16 %v253
      %v974 = vunpack.c.l.b16 %v254
      %v975 = vunpack.c.h.b16 %v254
      %v976 = vunpack.c.l.b16 %v255
      %v977 = vunpack.c.h.b16 %v255
      %v978 = vunpack.c.l.b16 %v256
      %v979 = vunpack.c.h.b16 %v256
      %v980 = vunpack.c.l.b16 %v257
      %v981 = vunpack.c.h.b16 %v257
      %v982 = vunpack.c.l.b16 %v258
      %v983 = vunpack.c.h.b16 %v258
      %v984 = vunpack.c.l.b16 %v259
      %v985 = vunpack.c.h.b16 %v259
      %v986 = vunpack.c.l.b16 %v260
      %v987 = vunpack.c.h.b16 %v260
      %v988 = vunpack.c.l.b16 %v261
      %v989 = vunpack.c.h.b16 %v261
      %v990 = vunpack.c.l.b16 %v262
      %v991 = vunpack.c.h.b16 %v262
      %v992 = vunpack.c.l.b16 %v263
      %v993 = vunpack.c.h.b16 %v263
      %v994 = vunpack.c.l.b16 %v264
      %v995 = vunpack.c.h.b16 %v264
      %v996 = vunpack.c.l.b16 %v265
      %v997 = vunpack.c.h.b16 %v265
      %v998 = vunpack.c.l.b16 %v266
      %v999 = vunpack.c.h.b16 %v266
      %v1000 = vunpack.c.l.b16 %v267
      %v1001 = vunpack.c.h.b16 %v267
      %v1002 = vunpack.c.l.b16 %v268
      %v1003 = vunpack.c.h.b16 %v268
      %v1004 = vunpack.c.l.b16 %v269
      %v1005 = vunpack.c.h.b16 %v269
      %v1006 = vunpack.c.l.b16 %v270
      %v1007 = vunpack.c.h.b16 %v270
      %v1008 = vunpack.c.l.b16 %v271
      %v1009 = vunpack.c.h.b16 %v271
      %v1010 = vunpack.c.l.b16 %v272
      %v1011 = vunpack.c.h.b16 %v272
      %v1012 = vunpack.c.l.b16 %v273
      %v1013 = vunpack.c.h.b16 %v273
      %v1014 = vunpack.c.l.b16 %v274
      %v1015 = vunpack.c.h.b16 %v274
      %v1016 = vunpack.c.l.b16 %v275
      %v1017 = vunpack.c.h.b16 %v275
      %v1018 = vunpack.c.l.b16 %v276
      %v1019 = vunpack.c.h.b16 %v276
      %v1020 = vunpack.c.l.b16 %v277
      %v1021 = vunpack.c.h.b16 %v277
      %v1022 = vunpack.c.l.b16 %v278
      %v1023 = vunpack.c.h.b16 %v278
      %v1024 = vunpack.c.l.b16 %v279
      %v1025 = vunpack.c.h.b16 %v279
      %v1026 = vunpack.c.l.b16 %v280
      %v1027 = vunpack.c.h.b16 %v280
      %v1028 = vunpack.c.l.b16 %v281
      %v1029 = vunpack.c.h.b16 %v281
      %v1030 = vunpack.c.l.b16 %v282
      %v1031 = vunpack.c.h.b16 %v282
      %v1032 = vunpack.c.l.b16 %v283
      %v1033 = vunpack.c.h.b16 %v283
      %v1034 = vunpack.c.l.b16 %v284
      %v1035 = vunpack.c.h.b16 %v284
      %v1036 = vunpack.c.l.b16 %v285
      %v1037 = vunpack.c.h.b16 %v285
      %v1038 = vunpack.c.l.b16 %v286
      %v1039 = vunpack.c.h.b16 %v286
      %v1040 = vunpack.c.l.b16 %v287
      %v1041 = vunpack.c.h.b16 %v287
      %v1042 = vunpack.c.l.b16 %v288
      %v1043 = vunpack.c.h.b16 %v288
      %v1044 = vunpack.c.l.b16 %v289
      %v1045 = vunpack.c.h.b16 %v289
      %v1046 = vunpack.c.l.b16 %v290
      %v1047 = vunpack.c.h.b16 %v290
      %v1048 = vunpack.c.l.b16 %v291
      %v1049 = vunpack.c.h.b16 %v291
      %v1050 = vunpack.c.l.b16 %v292
      %v1051 = vunpack.c.h.b16 %v292
      %v1052 = vunpack.c.l.b16 %v293
      %v1053 = vunpack.c.h.b16 %v293
      %v1054 = vunpack.c.l.b16 %v294
      %v1055 = vunpack.c.h.b16 %v294
      %v1056 = vunpack.c.l.b16 %v295
      %v1057 = vunpack.c.h.b16 %v295
      %v1058 = vunpack.c.l.b16 %v296
      %v1059 = vunpack.c.h.b16 %v296
      %v1060 = vunpack.c.l.b16 %v297
      %v1061 = vunpack.c.h.b16 %v297
      %v1062 = vunpack.c.l.b16 %v298
      %v1063 = vunpack.c.h.b16 %v298
      %v1064 = vunpack.c.l.b16 %v299
      %v1065 = vunpack.c.h.b16 %v299
      %v1066 = vunpack.c.l.b16 %v300
      %v1067 = vunpack.c.h.b16 %v300
      %v1068 = vunpack.c.l.b16 %v301
      %v1069 = vunpack.c.h.b16 %v301
      %v1070 = vunpack.c.l.b16 %v302
      %v1071 = vunpack.c.h.b16 %v302
      %v1072 = vunpack.c.l.b16 %v303
      %v1073 = vunpack.c.h.b16 %v303
      %v1074 = vunpack.c.l.b16 %v304
      %v1075 = vunpack.c.h.b16 %v304
      %v1076 = vunpack.c.l.b16 %v305
      %v1077 = vunpack.c.h.b16 %v305
      %v1078 = vunpack.c.l.b16 %v306
      %v1079 = vunpack.c.h.b16 %v306
      %v1080 = vunpack.c.l.b16 %v307
      %v1081 = vunpack.c.h.b16 %v307
      %v1082 = vunpack.c.l.b16 %v308
      %v1083 = vunpack.c.h.b16 %v308
      %v1084 = vunpack.c.l.b16 %v309
      %v1085 = vunpack.c.h.b16 %v309
      %v1086 = vunpack.c.l.b16 %v310
      %v1087 = vunpack.c.h.b16 %v310
      %v1088 = vunpack.c.l.b16 %v311
      %v1089 = vunpack.c.h.b16 %v311
      %v1090 = vunpack.c.l.b16 %v312
      %v1091 = vunpack.c.h.b16 %v312
      %v1092 = vunpack.c.l.b16 %v313
      %v1093 = vunpack.c.h.b16 %v313
      %v1094 = vunpack.c.l.b16 %v314
      %v1095 = vunpack.c.h.b16 %v314
      %v1096 = vunpack.c.l.b16 %v315
      %v1097 = vunpack.c.h.b16 %v315
      %v1098 = vunpack.c.l.b16 %v316
      %v1099 = vunpack.c.h.b16 %v316
      %v1100 = vunpack.c.l.b16 %v317
      %v1101 = vunpack.c.h.b16 %v317
      %v1102 = vunpack.c.l.b16 %v318
      %v1103 = vunpack.c.h.b16 %v318
      %v1104 = vunpack.c.l.b16 %v319
      %v1105 = vunpack.c.h.b16 %v319
      %v1106 = vunpack.c.l.b16 %v320
      %v1107 = vunpack.c.h.b16 %v320
      %v1108 = vunpack.c.l.b16 %v321
      %v1109 = vunpack.c.h.b16 %v321
      %v1110 = vunpack.c.l.b16 %v322
      %v1111 = vunpack.c.h.b16 %v322
      %v1112 = vunpack.c.l.b16 %v323
      %v1113 = vunpack.c.h.b16 %v323
      %v1114 = vunpack.c.l.b16 %v324
      %v1115 = vunpack.c.h.b16 %v324
      %v1116 = vunpack.c.l.b16 %v325
      %v1117 = vunpack.c.h.b16 %v325
      %v1118 = vunpack.c.l.b16 %v326
      %v1119 = vunpack.c.h.b16 %v326
      %v1120 = vunpack.c.l.b16 %v327
      %v1121 = vunpack.c.h.b16 %v327
      %v1122 = vunpack.c.l.b16 %v328
      %v1123 = vunpack.c.h.b16 %v328
      %v1124 = vunpack.c.l.b16 %v329
      %v1125 = vunpack.c.h.b16 %v329
      %v1126 = vunpack.c.l.b16 %v330
      %v1127 = vunpack.c.h.b16 %v330
      %v1128 = vunpack.c.l.b16 %v331
      %v1129 = vunpack.c.h.b16 %v331
      %v1130 = vunpack.c.l.b16 %v332
      %v1131 = vunpack.c.h.b16 %v332
      %v1132 = vunpack.c.l.b16 %v333
      %v1133 = vunpack.c.h.b16 %v333
      %v1134 = vunpack.c.l.b16 %v334
      %v1135 = vunpack.c.h.b16 %v334
      %v1136 = vunpack.c.l.b16 %v335
      %v1137 = vunpack.c.h.b16 %v335
      %v1138 = vunpack.c.l.b16 %v336
      %v1139 = vunpack.c.h.b16 %v336
      %v1140 = vunpack.c.l.b16 %v337
      %v1141 = vunpack.c.h.b16 %v337
      %v1142 = vunpack.c.l.b16 %v338
      %v1143 = vunpack.c.h.b16 %v338
      %v1144 = vunpack.c.l.b16 %v339
      %v1145 = vunpack.c.h.b16 %v339
      %v1146 = vunpack.c.l.b16 %v340
      %v1147 = vunpack.c.h.b16 %v340
      %v1148 = vunpack.c.l.b16 %v341
      %v1149 = vunpack.c.h.b16 %v341
      %v1150 = vunpack.c.l.b16 %v342
      %v1151 = vunpack.c.h.b16 %v342
      %v1152 = vunpack.c.l.b16 %v343
      %v1153 = vunpack.c.h.b16 %v343
      %v1154 = vunpack.c.l.b16 %v344
      %v1155 = vunpack.c.h.b16 %v344
      %v1156 = vunpack.c.l.b16 %v345
      %v1157 = vunpack.c.h.b16 %v345
      %v1158 = vunpack.c.l.b16 %v346
      %v1159 = vunpack.c.h.b16 %v346
      %v1160 = vunpack.c.l.b16 %v347
      %v1161 = vunpack.c.h.b16 %v347
      %v1162 = vunpack.c.l.b16 %v348
      %v1163 = vunpack.c.h.b16 %v348
      %v1164 = vunpack.c.l.b16 %v349
      %v1165 = vunpack.c.h.b16 %v349
      %v1166 = vunpack.c.l.b16 %v350
      %v1167 = vunpack.c.h.b16 %v350
      %v1168 = vunpack.c.l.b16 %v351
      %v1169 = vunpack.c.h.b16 %v351
      %v1170 = vunpack.c.l.b16 %v352
      %v1171 = vunpack.c.h.b16 %v352
      %v1172 = vunpack.c.l.b16 %v353
      %v1173 = vunpack.c.h.b16 %v353
      %v1174 = vunpack.c.l.b16 %v354
      %v1175 = vunpack.c.h.b16 %v354
      %v1176 = vunpack.c.l.b16 %v355
      %v1177 = vunpack.c.h.b16 %v355
      %v1178 = vunpack.c.l.b16 %v356
      %v1179 = vunpack.c.h.b16 %v356
      %v1180 = vunpack.c.l.b16 %v357
      %v1181 = vunpack.c.h.b16 %v357
      %v1182 = vunpack.c.l.b16 %v358
      %v1183 = vunpack.c.h.b16 %v358
      %v1184 = vunpack.c.l.b16 %v359
      %v1185 = vunpack.c.h.b16 %v359
      %v1186 = vunpack.c.l.b16 %v360
      %v1187 = vunpack.c.h.b16 %v360
      %v1188 = vunpack.c.l.b16 %v361
      %v1189 = vunpack.c.h.b16 %v361
      %v1190 = vunpack.c.l.b16 %v362
      %v1191 = vunpack.c.h.b16 %v362
      %v1192 = vunpack.c.l.b16 %v363
      %v1193 = vunpack.c.h.b16 %v363
      %v1194 = vunpack.c.l.b16 %v364
      %v1195 = vunpack.c.h.b16 %v364
      %v1196 = vunpack.c.l.b16 %v365
      %v1197 = vunpack.c.h.b16 %v365
      %v1198 = vunpack.c.l.b16 %v366
      %v1199 = vunpack.c.h.b16 %v366
      %v1200 = vunpack.c.l.b16 %v367
      %v1201 = vunpack.c.h.b16 %v367
      %v1202 = vunpack.c.l.b16 %v368
      %v1203 = vunpack.c.h.b16 %v368
      %v1204 = vunpack.c.l.b16 %v369
      %v1205 = vunpack.c.h.b16 %v369
      %v1206 = vunpack.c.l.b16 %v370
      %v1207 = vunpack.c.h.b16 %v370
      %v1208 = vunpack.c.l.b16 %v371
      %v1209 = vunpack.c.h.b16 %v371
      %v1210 = vunpack.c.l.b16 %v372
      %v1211 = vunpack.c.h.b16 %v372
      %v1212 = vunpack.c.l.b16 %v373
      %v1213 = vunpack.c.h.b16 %v373
      %v1214 = vunpack.c.l.b16 %v374
      %v1215 = vunpack.c.h.b16 %v374
      %v1216 = vunpack.c.l.b16 %v375
      %v1217 = vunpack.c.h.b16 %v375
      %v1218 = vunpack.c.l.b16 %v376
      %v1219 = vunpack.c.h.b16 %v376
      %v1220 = vunpack.c.l.b16 %v377
      %v1221 = vunpack.c.h.b16 %v377
      %v1222 = vunpack.c.l.b16 %v378
      %v1223 = vunpack.c.h.b16 %v378
      %v1224 = vunpack.c.l.b16 %v379
      %v1225 = vunpack.c.h.b16 %v379
      %v1226 = vunpack.c.l.b16 %v380
      %v1227 = vunpack.c.h.b16 %v380
      %v1228 = vunpack.c.l.b16 %v381
      %v1229 = vunpack.c.h.b16 %v381
      %v1230 = vunpack.c.l.b16 %v382
      %v1231 = vunpack.c.h.b16 %v382
      %v1232 = vunpack.c.l.b16 %v383
      %v1233 = vunpack.c.h.b16 %v383
      %v1234 = vunpack.c.l.b16 %v384
      %v1235 = vunpack.c.h.b16 %v384
      %v1236 = vunpack.c.l.b16 %v385
      %v1237 = vunpack.c.h.b16 %v385
      %v1238 = vunpack.c.l.b16 %v386
      %v1239 = vunpack.c.h.b16 %v386
      %v1240 = vunpack.c.l.b16 %v387
      %v1241 = vunpack.c.h.b16 %v387
      %v1242 = vunpack.c.l.b16 %v388
      %v1243 = vunpack.c.h.b16 %v388
      %v1244 = vunpack.c.l.b16 %v389
      %v1245 = vunpack.c.h.b16 %v389
      %v1246 = vunpack.c.l.b16 %v390
      %v1247 = vunpack.c.h.b16 %v390
      %v1248 = vunpack.c.l.b16 %v391
      %v1249 = vunpack.c.h.b16 %v391
      %v1250 = vunpack.c.l.b16 %v392
      %v1251 = vunpack.c.h.b16 %v392
      %v1252 = vunpack.c.l.b16 %v393
      %v1253 = vunpack.c.h.b16 %v393
      %v1254 = vunpack.c.l.b16 %v394
      %v1255 = vunpack.c.h.b16 %v394
      %v1256 = vunpack.c.l.b16 %v395
      %v1257 = vunpack.c.h.b16 %v395
      %v1258 = vunpack.c.l.b16 %v396
      %v1259 = vunpack.c.h.b16 %v396
      %v1260 = vunpack.c.l.b16 %v397
      %v1261 = vunpack.c.h.b16 %v397
      %v1262 = vunpack.c.l.b16 %v398
      %v1263 = vunpack.c.h.b16 %v398
      %v1264 = vunpack.c.l.b16 %v399
      %v1265 = vunpack.c.h.b16 %v399
      %v1266 = vunpack.c.l.b16 %v400
      %v1267 = vunpack.c.h.b16 %v400
      %v1268 = vunpack.c.l.b16 %v401
      %v1269 = vunpack.c.h.b16 %v401
      %v1270 = vunpack.c.l.b16 %v402
      %v1271 = vunpack.c.h.b16 %v402
      %v1272 = vunpack.c.l.b16 %v403
      %v1273 = vunpack.c.h.b16 %v403
      %v1274 = vunpack.c.l.b16 %v404
      %v1275 = vunpack.c.h.b16 %v404
      %v1276 = vunpack.c.l.b16 %v405
      %v1277 = vunpack.c.h.b16 %v405
      %v1278 = vunpack.c.l.b16 %v406
      %v1279 = vunpack.c.h.b16 %v406
      %v1280 = vunpack.c.l.b16 %v407
      %v1281 = vunpack.c.h.b16 %v407
      %v1282 = vunpack.c.l.b16 %v408
      %v1283 = vunpack.c.h.b16 %v408
      %v1284 = vunpack.c.l.b16 %v409
      %v1285 = vunpack.c.h.b16 %v409
      %v1286 = vunpack.c.l.b16 %v410
      %v1287 = vunpack.c.h.b16 %v410
      %v1288 = vunpack.c.l.b16 %v411
      %v1289 = vunpack.c.h.b16 %v411
      %v1290 = vunpack.c.l.b16 %v412
      %v1291 = vunpack.c.h.b16 %v412
      %v1292 = vunpack.c.l.b16 %v413
      %v1293 = vunpack.c.h.b16 %v413
      %v1294 = vunpack.c.l.b16 %v414
      %v1295 = vunpack.c.h.b16 %v414
      %v1296 = vunpack.c.l.b16 %v415
      %v1297 = vunpack.c.h.b16 %v415
      %v1298 = vunpack.c.l.b16 %v416
      %v1299 = vunpack.c.h.b16 %v416
      %v1300 = vunpack.c.l.b16 %v417
      %v1301 = vunpack.c.h.b16 %v417
      %v1302 = vunpack.c.l.b16 %v418
      %v1303 = vunpack.c.h.b16 %v418
      %v1304 = vunpack.c.l.b16 %v419
      %v1305 = vunpack.c.h.b16 %v419
      %v1306 = vunpack.c.l.b16 %v420
      %v1307 = vunpack.c.h.b16 %v420
      %v1308 = vunpack.c.l.b16 %v421
      %v1309 = vunpack.c.h.b16 %v421
      %v1310 = vunpack.c.l.b16 %v422
      %v1311 = vunpack.c.h.b16 %v422
      %v1312 = vunpack.c.l.b16 %v423
      %v1313 = vunpack.c.h.b16 %v423
      %v1314 = vunpack.c.l.b16 %v424
      %v1315 = vunpack.c.h.b16 %v424
      %v1316 = vunpack.c.l.b16 %v425
      %v1317 = vunpack.c.h.b16 %v425
      %v1318 = vunpack.c.l.b16 %v426
      %v1319 = vunpack.c.h.b16 %v426
      %v1320 = vunpack.c.l.b16 %v427
      %v1321 = vunpack.c.h.b16 %v427
      %v1322 = vunpack.c.l.b16 %v428
      %v1323 = vunpack.c.h.b16 %v428
      %v1324 = vunpack.c.l.b16 %v429
      %v1325 = vunpack.c.h.b16 %v429
      %v1326 = vunpack.c.l.b16 %v430
      %v1327 = vunpack.c.h.b16 %v430
      %v1328 = vunpack.c.l.b16 %v431
      %v1329 = vunpack.c.h.b16 %v431
      %v1330 = vunpack.c.l.b16 %v432
      %v1331 = vunpack.c.h.b16 %v432
      %v1332 = vunpack.c.l.b16 %v433
      %v1333 = vunpack.c.h.b16 %v433
      %v1334 = vunpack.c.l.b16 %v434
      %v1335 = vunpack.c.h.b16 %v434
      %v1336 = vunpack.c.l.b16 %v435
      %v1337 = vunpack.c.h.b16 %v435
      %v1338 = vunpack.c.l.b16 %v436
      %v1339 = vunpack.c.h.b16 %v436
      %v1340 = vunpack.c.l.b16 %v437
      %v1341 = vunpack.c.h.b16 %v437
      %v1342 = vunpack.c.l.b16 %v438
      %v1343 = vunpack.c.h.b16 %v438
      %v1344 = vunpack.c.l.b16 %v439
      %v1345 = vunpack.c.h.b16 %v439
      %v1346 = vunpack.c.l.b16 %v440
      %v1347 = vunpack.c.h.b16 %v440
      %v1348 = vunpack.c.l.b16 %v441
      %v1349 = vunpack.c.h.b16 %v441
      %v1350 = vunpack.c.l.b16 %v442
      %v1351 = vunpack.c.h.b16 %v442
      %v1352 = vunpack.c.l.b16 %v443
      %v1353 = vunpack.c.h.b16 %v443
      %v1354 = vunpack.c.l.b16 %v444
      %v1355 = vunpack.c.h.b16 %v444
      %v1356 = vunpack.c.l.b16 %v445
      %v1357 = vunpack.c.h.b16 %v445
      %v1358 = vunpack.c.l.b16 %v446
      %v1359 = vunpack.c.h.b16 %v446
      %v1360 = vunpack.c.l.b16 %v447
      %v1361 = vunpack.c.h.b16 %v447
      %v1362 = vunpack.c.l.b16 %v448
      %v1363 = vunpack.c.h.b16 %v448
      %v1364 = vunpack.c.l.b16 %v449
      %v1365 = vunpack.c.h.b16 %v449
      %v1366 = vunpack.c.l.b16 %v450
      %v1367 = vunpack.c.h.b16 %v450
      %v1368 = vunpack.c.l.b16 %v451
      %v1369 = vunpack.c.h.b16 %v451
      %v1370 = vunpack.c.l.b16 %v452
      %v1371 = vunpack.c.h.b16 %v452
      %v1372 = vunpack.c.l.b16 %v453
      %v1373 = vunpack.c.h.b16 %v453
      %v1374 = vunpack.c.l.b16 %v454
      %v1375 = vunpack.c.h.b16 %v454
      %v1376 = vunpack.c.l.b16 %v455
      %v1377 = vunpack.c.h.b16 %v455
      %v1378 = vunpack.c.l.b16 %v456
      %v1379 = vunpack.c.h.b16 %v456
      %v1380 = vunpack.c.l.b16 %v457
      %v1381 = vunpack.c.h.b16 %v457
      %v1382 = vunpack.c.l.b16 %v458
      %v1383 = vunpack.c.h.b16 %v458
      %v1384 = vunpack.c.l.b16 %v459
      %v1385 = vunpack.c.h.b16 %v459
      %v1386 = vunpack.c.l.b16 %v460
      %v1387 = vunpack.c.h.b16 %v460
      %v1388 = vunpack.c.l.b16 %v461
      %v1389 = vunpack.c.h.b16 %v461
      %v1390 = vunpack.c.l.b16 %v462
      %v1391 = vunpack.c.h.b16 %v462
      %v1392 = vunpack.c.l.b16 %v463
      %v1393 = vunpack.c.h.b16 %v463
      %v1394 = vunpack.c.l.b16 %v464
      %v1395 = vunpack.c.h.b16 %v464
      %v1396 = vunpack.c.l.b16 %v465
      %v1397 = vunpack.c.h.b16 %v465
      %v1398 = vunpack.c.l.b16 %v466
      %v1399 = vunpack.c.h.b16 %v466
      %v1400 = vunpack.c.l.b16 %v467
      %v1401 = vunpack.c.h.b16 %v467
      %v1402 = vunpack.c.l.b16 %v468
      %v1403 = vunpack.c.h.b16 %v468
      %v1404 = vunpack.c.l.b16 %v469
      %v1405 = vunpack.c.h.b16 %v469
      %v1406 = vunpack.c.l.b16 %v470
      %v1407 = vunpack.c.h.b16 %v470
      %v1408 = vunpack.c.l.b16 %v471
      %v1409 = vunpack.c.h.b16 %v471
      %v1410 = vpack.c.b16 %v842, %v834
      %v1411 = vpack.c.b16 %v843, %v835
      %v1412 = vpack.c.b16 %v844, %v836
      %v1413 = vpack.c.b16 %v845, %v837
      %v1414 = vpack.c.b16 %v846, %v838
      %v1415 = vpack.c.b16 %v847, %v839
      %v1416 = vpack.c.b16 %v848, %v840
      %v1417 = vpack.c.b16 %v849, %v841
      %v1418 = vpack.c.b16 %v858, %v850
      %v1419 = vpack.c.b16 %v859, %v851
      %v1420 = vpack.c.b16 %v860, %v852
      %v1421 = vpack.c.b16 %v861, %v853
      %v1422 = vpack.c.b16 %v862, %v854
      %v1423 = vpack.c.b16 %v863, %v855
      %v1424 = vpack.c.b16 %v864, %v856
      %v1425 = vpack.c.b16 %v865, %v857
      %v1426 = vpack.c.b16 %v874, %v866
      %v1427 = vpack.c.b16 %v875, %v867
      %v1428 = vpack.c.b16 %v876, %v868
      %v1429 = vpack.c.b16 %v877, %v869
      %v1430 = vpack.c.b16 %v878, %v870
      %v1431 = vpack.c.b16 %v879, %v871
      %v1432 = vpack.c.b16 %v880, %v872
      %v1433 = vpack.c.b16 %v881, %v873
      %v1434 = vpack.c.b16 %v890, %v882
      %v1435 = vpack.c.b16 %v891, %v883
      %v1436 = vpack.c.b16 %v892, %v884
      %v1437 = vpack.c.b16 %v893, %v885
      %v1438 = vpack.c.b16 %v894, %v886
      %v1439 = vpack.c.b16 %v895, %v887
      %v1440 = vpack.c.b16 %v896, %v888
      %v1441 = vpack.c.b16 %v897, %v889
      %v1442 = vpack.c.b16 %v906, %v898
      %v1443 = vpack.c.b16 %v907, %v899
      %v1444 = vpack.c.b16 %v908, %v900
      %v1445 = vpack.c.b16 %v909, %v901
      %v1446 = vpack.c.b16 %v910, %v902
      %v1447 = vpack.c.b16 %v911, %v903
      %v1448 = vpack.c.b16 %v912, %v904
      %v1449 = vpack.c.b16 %v913, %v905
      %v1450 = vpack.c.b16 %v922, %v914
      %v1451 = vpack.c.b16 %v923, %v915
      %v1452 = vpack.c.b16 %v924, %v916
      %v1453 = vpack.c.b16 %v925, %v917
      %v1454 = vpack.c.b16 %v926, %v918
      %v1455 = vpack.c.b16 %v927, %v919
      %v1456 = vpack.c.b16 %v928, %v920
      %v1457 = vpack.c.b16 %v929, %v921
      %v1458 = vpack.c.b16 %v938, %v930
      %v1459 = vpack.c.b16 %v939, %v931
      %v1460 = vpack.c.b16 %v940, %v932
      %v1461 = vpack.c.b16 %v941, %v933
      %v1462 = vpack.c.b16 %v942, %v934
      %v1463 = vpack.c.b16 %v943, %v935
      %v1464 = vpack.c.b16 %v944, %v936
      %v1465 = vpack.c.b16 %v945, %v937
      %v1466 = vpack.c.b16 %v954, %v946
      %v1467 = vpack.c.b16 %v955, %v947
      %v1468 = vpack.c.b16 %v956, %v948
      %v1469 = vpack.c.b16 %v957, %v949
      %v1470 = vpack.c.b16 %v958, %v950
      %v1471 = vpack.c.b16 %v959, %v951
      %v1472 = vpack.c.b16 %v960, %v952
      %v1473 = vpack.c.b16 %v961, %v953
      %v1474 = vpack.c.b16 %v970, %v962
      %v1475 = vpack.c.b16 %v971, %v963
      %v1476 = vpack.c.b16 %v972, %v964
      %v1477 = vpack.c.b16 %v973, %v965
      %v1478 = vpack.c.b16 %v974, %v966
      %v1479 = vpack.c.b16 %v975, %v967
      %v1480 = vpack.c.b16 %v976, %v968
      %v1481 = vpack.c.b16 %v977, %v969
      %v1482 = vpack.c.b16 %v986, %v978
      %v1483 = vpack.c.b16 %v987, %v979
      %v1484 = vpack.c.b16 %v988, %v980
      %v1485 = vpack.c.b16 %v989, %v981
      %v1486 = vpack.c.b16 %v990, %v982
      %v1487 = vpack.c.b16 %v991, %v983
      %v1488 = vpack.c.b16 %v992, %v984
      %v1489 = vpack.c.b16 %v993, %v985
      %v1490 = vpack.c.b16 %v1002, %v994
      %v1491 = vpack.c.b16 %v1003, %v995
      %v1492 = vpack.c.b16 %v1004, %v996
      %v1493 = vpack.c.b16 %v1005, %v997
      %v1494 = vpack.c.b16 %v1006, %v998
      %v1495 = vpack.c.b16 %v1007, %v999
      %v1496 = vpack.c.b16 %v1008, %v1000
      %v1497 = vpack.c.b16 %v1009, %v1001
      %v1498 = vpack.c.b16 %v1018, %v1010
      %v1499 = vpack.c.b16 %v1019, %v1011
      %v1500 = vpack.c.b16 %v1020, %v1012
      %v1501 = vpack.c.b16 %v1021, %v1013
      %v1502 = vpack.c.b16 %v1022, %v1014
      %v1503 = vpack.c.b16 %v1023, %v1015
      %v1504 = vpack.c.b16 %v1024, %v1016
      %v1505 = vpack.c.b16 %v1025, %v1017
      %v1506 = vpack.c.b16 %v1034, %v1026
      %v1507 = vpack.c.b16 %v1035, %v1027
      %v1508 = vpack.c.b16 %v1036, %v1028
      %v1509 = vpack.c.b16 %v1037, %v1029
      %v1510 = vpack.c.b16 %v1038, %v1030
      %v1511 = vpack.c.b16 %v1039, %v1031
      %v1512 = vpack.c.b16 %v1040, %v1032
      %v1513 = vpack.c.b16 %v1041, %v1033
      %v1514 = vpack.c.b16 %v1050, %v1042
      %v1515 = vpack.c.b16 %v1051, %v1043
      %v1516 = vpack.c.b16 %v1052, %v1044
      %v1517 = vpack.c.b16 %v1053, %v1045
      %v1518 = vpack.c.b16 %v1054, %v1046
      %v1519 = vpack.c.b16 %v1055, %v1047
      %v1520 = vpack.c.b16 %v1056, %v1048
      %v1521 = vpack.c.b16 %v1057, %v1049
      %v1522 = vpack.c.b16 %v1066, %v1058
      %v1523 = vpack.c.b16 %v1067, %v1059
      %v1524 = vpack.c.b16 %v1068, %v1060
      %v1525 = vpack.c.b16 %v1069, %v1061
      %v1526 = vpack.c.b16 %v1070, %v1062
      %v1527 = vpack.c.b16 %v1071, %v1063
      %v1528 = vpack.c.b16 %v1072, %v1064
      %v1529 = vpack.c.b16 %v1073, %v1065
      %v1530 = vpack.c.b16 %v1082, %v1074
      %v1531 = vpack.c.b16 %v1083, %v1075
      %v1532 = vpack.c.b16 %v1084, %v1076
      %v1533 = vpack.c.b16 %v1085, %v1077
      %v1534 = vpack.c.b16 %v1086, %v1078
      %v1535 = vpack.c.b16 %v1087, %v1079
      %v1536 = vpack.c.b16 %v1088, %v1080
      %v1537 = vpack.c.b16 %v1089, %v1081
      %v1538 = vpack.c.b16 %v1098, %v1090
      %v1539 = vpack.c.b16 %v1099, %v1091
      %v1540 = vpack.c.b16 %v1100, %v1092
      %v1541 = vpack.c.b16 %v1101, %v1093
      %v1542 = vpack.c.b16 %v1102, %v1094
      %v1543 = vpack.c.b16 %v1103, %v1095
      %v1544 = vpack.c.b16 %v1104, %v1096
      %v1545 = vpack.c.b16 %v1105, %v1097
      %v1546 = vpack.c.b16 %v1114, %v1106
      %v1547 = vpack.c.b16 %v1115, %v1107
      %v1548 = vpack.c.b16 %v1116, %v1108
      %v1549 = vpack.c.b16 %v1117, %v1109
      %v1550 = vpack.c.b16 %v1118, %v1110
      %v1551 = vpack.c.b16 %v1119, %v1111
      %v1552 = vpack.c.b16 %v1120, %v1112
      %v1553 = vpack.c.b16 %v1121, %v1113
      %v1554 = vpack.c.b16 %v1130, %v1122
      %v1555 = vpack.c.b16 %v1131, %v1123
      %v1556 = vpack.c.b16 %v1132, %v1124
      %v1557 = vpack.c.b16 %v1133, %v1125
      %v1558 = vpack.c.b16 %v1134, %v1126
      %v1559 = vpack.c.b16 %v1135, %v1127
      %v1560 = vpack.c.b16 %v1136, %v1128
      %v1561 = vpack.c.b16 %v1137, %v1129
      %v1562 = vpack.c.b16 %v1146, %v1138
      %v1563 = vpack.c.b16 %v1147, %v1139
      %v1564 = vpack.c.b16 %v1148, %v1140
      %v1565 = vpack.c.b16 %v1149, %v1141
      %v1566 = vpack.c.b16 %v1150, %v1142
      %v1567 = vpack.c.b16 %v1151, %v1143
      %v1568 = vpack.c.b16 %v1152, %v1144
      %v1569 = vpack.c.b16 %v1153, %v1145
      %v1570 = vpack.c.b16 %v1162, %v1154
      %v1571 = vpack.c.b16 %v1163, %v1155
      %v1572 = vpack.c.b16 %v1164, %v1156
      %v1573 = vpack.c.b16 %v1165, %v1157
      %v1574 = vpack.c.b16 %v1166, %v1158
      %v1575 = vpack.c.b16 %v1167, %v1159
      %v1576 = vpack.c.b16 %v1168, %v1160
      %v1577 = vpack.c.b16 %v1169, %v1161
      %v1578 = vpack.c.b16 %v1178, %v1170
      %v1579 = vpack.c.b16 %v1179, %v1171
      %v1580 = vpack.c.b16 %v1180, %v1172
      %v1581 = vpack.c.b16 %v1181, %v1173
      %v1582 = vpack.c.b16 %v1182, %v1174
      %v1583 = vpack.c.b16 %v1183, %v1175
      %v1584 = vpack.c.b16 %v1184, %v1176
      %v1585 = vpack.c.b16 %v1185, %v1177
      %v1586 = vpack.c.b16 %v1194, %v1186
      %v1587 = vpack.c.b16 %v1195, %v1187
      %v1588 = vpack.c.b16 %v1196, %v1188
      %v1589 = vpack.c.b16 %v1197, %v1189
      %v1590 = vpack.c.b16 %v1198, %v1190
      %v1591 = vpack.c.b16 %v1199, %v1191
      %v1592 = vpack.c.b16 %v1200, %v1192
      %v1593 = vpack.c.b16 %v1201, %v1193
      %v1594 = vpack.c.b16 %v1210, %v1202
      %v1595 = vpack.c.b16 %v1211, %v1203
      %v1596 = vpack.c.b16 %v1212, %v1204
      %v1597 = vpack.c.b16 %v1213, %v1205
      %v1598 = vpack.c.b16 %v1214, %v1206
      %v1599 = vpack.c.b16 %v1215, %v1207
      %v1600 = vpack.c.b16 %v1216, %v1208
      %v1601 = vpack.c.b16 %v1217, %v1209
      %v1602 = vpack.c.b16 %v1226, %v1218
      %v1603 = vpack.c.b16 %v1227, %v1219
      %v1604 = vpack.c.b16 %v1228, %v1220
      %v1605 = vpack.c.b16 %v1229, %v1221
      %v1606 = vpack.c.b16 %v1230, %v1222
      %v1607 = vpack.c.b16 %v1231, %v1223
      %v1608 = vpack.c.b16 %v1232, %v1224
      %v1609 = vpack.c.b16 %v1233, %v1225
      %v1610 = vpack.c.b16 %v1242, %v1234
      %v1611 = vpack.c.b16 %v1243, %v1235
      %v1612 = vpack.c.b16 %v1244, %v1236
      %v1613 = vpack.c.b16 %v1245, %v1237
      %v1614 = vpack.c.b16 %v1246, %v1238
      %v1615 = vpack.c.b16 %v1247, %v1239
      %v1616 = vpack.c.b16 %v1248, %v1240
      %v1617 = vpack.c.b16 %v1249, %v1241
      %v1618 = vpack.c.b16 %v1258, %v1250
      %v1619 = vpack.c.b16 %v1259, %v1251
      %v1620 = vpack.c.b16 %v1260, %v1252
      %v1621 = vpack.c.b16 %v1261, %v1253
      %v1622 = vpack.c.b16 %v1262, %v1254
      %v1623 = vpack.c.b16 %v1263, %v1255
      %v1624 = vpack.c.b16 %v1264, %v1256
      %v1625 = vpack.c.b16 %v1265, %v1257
      %v1626 = vpack.c.b16 %v1274, %v1266
      %v1627 = vpack.c.b16 %v1275, %v1267
      %v1628 = vpack.c.b16 %v1276, %v1268
      %v1629 = vpack.c.b16 %v1277, %v1269
      %v1630 = vpack.c.b16 %v1278, %v1270
      %v1631 = vpack.c.b16 %v1279, %v1271
      %v1632 = vpack.c.b16 %v1280, %v1272
      %v1633 = vpack.c.b16 %v1281, %v1273
      %v1634 = vpack.c.b16 %v1290, %v1282
      %v1635 = vpack.c.b16 %v1291, %v1283
      %v1636 = vpack.c.b16 %v1292, %v1284
      %v1637 = vpack.c.b16 %v1293, %v1285
      %v1638 = vpack.c.b16 %v1294, %v1286
      %v1639 = vpack.c.b16 %v1295, %v1287
      %v1640 = vpack.c.b16 %v1296, %v1288
      %v1641 = vpack.c.b16 %v1297, %v1289
      %v1642 = vpack.c.b16 %v1306, %v1298
      %v1643 = vpack.c.b16 %v1307, %v1299
      %v1644 = vpack.c.b16 %v1308, %v1300
      %v1645 = vpack.c.b16 %v1309, %v1301
      %v1646 = vpack.c.b16 %v1310, %v1302
      %v1647 = vpack.c.b16 %v1311, %v1303
      %v1648 = vpack.c.b16 %v1312, %v1304
      %v1649 = vpack.c.b16 %v1313, %v1305
      %v1650 = vpack.c.b16 %v1322, %v1314
      %v1651 = vpack.c.b16 %v1323, %v1315
      %v1652 = vpack.c.b16 %v1324, %v1316
      %v1653 = vpack.c.b16 %v1325, %v1317
      %v1654 = vpack.c.b16 %v1326, %v1318
      %v1655 = vpack.c.b16 %v1327, %v1319
      %v1656 = vpack.c.b16 %v1328, %v1320
      %v1657 = vpack.c.b16 %v1329, %v1321
      %v1658 = vpack.c.b16 %v1338, %v1330
      %v1659 = vpack.c.b16 %v1339, %v1331
      %v1660 = vpack.c.b16 %v1340, %v1332
      %v1661 = vpack.c.b16 %v1341, %v1333
      %v1662 = vpack.c.b16 %v1342, %v1334
      %v1663 = vpack.c.b16 %v1343, %v1335
      %v1664 = vpack.c.b16 %v1344, %v1336
      %v1665 = vpack.c.b16 %v1345, %v1337
      %v1666 = vpack.c.b16 %v1354, %v1346
      %v1667 = vpack.c.b16 %v1355, %v1347
      %v1668 = vpack.c.b16 %v1356, %v1348
      %v1669 = vpack.c.b16 %v1357, %v1349
      %v1670 = vpack.c.b16 %v1358, %v1350
      %v1671 = vpack.c.b16 %v1359, %v1351
      %v1672 = vpack.c.b16 %v1360, %v1352
      %v1673 = vpack.c.b16 %v1361, %v1353
      %v1674 = vpack.c.b16 %v1370, %v1362
      %v1675 = vpack.c.b16 %v1371, %v1363
      %v1676 = vpack.c.b16 %v1372, %v1364
      %v1677 = vpack.c.b16 %v1373, %v1365
      %v1678 = vpack.c.b16 %v1374, %v1366
      %v1679 = vpack.c.b16 %v1375, %v1367
      %v1680 = vpack.c.b16 %v1376, %v1368
      %v1681 = vpack.c.b16 %v1377, %v1369
      %v1682 = vpack.c.b16 %v1386, %v1378
      %v1683 = vpack.c.b16 %v1387, %v1379
      %v1684 = vpack.c.b16 %v1388, %v1380
      %v1685 = vpack.c.b16 %v1389, %v1381
      %v1686 = vpack.c.b16 %v1390, %v1382
      %v1687 = vpack.c.b16 %v1391, %v1383
      %v1688 = vpack.c.b16 %v1392, %v1384
      %v1689 = vpack.c.b16 %v1393, %v1385
      %v1690 = vpack.c.b16 %v1402, %v1394
      %v1691 = vpack.c.b16 %v1403, %v1395
      %v1692 = vpack.c.b16 %v1404, %v1396
      %v1693 = vpack.c.b16 %v1405, %v1397
      %v1694 = vpack.c.b16 %v1406, %v1398
      %v1695 = vpack.c.b16 %v1407, %v1399
      %v1696 = vpack.c.b16 %v1408, %v1400
      %v1697 = vpack.c.b16 %v1409, %v1401
      %vm1986 = vcmask 523264
      %v1988 = vsel %vm1986, %v532, 0
      %v1991 = vsel %vm1986, %v537, 0
      %1993 = vmatpush.bf16.msra.mxu0 %v1466
      %1994 = vmatpush.bf16.msra.mxu0 %v1458
      %1995 = vmatpush.bf16.msra.mxu0 %v1450
      %1996 = vmatpush.bf16.msra.mxu0 %v1442
      %1997 = vmatpush.bf16.msra.mxu0 %v1434
      %1998 = vmatpush.bf16.msra.mxu0 %v1426
      %1999 = vmatpush.bf16.msra.mxu0 %v1418
      %2000 = vmatpush.bf16.msra.mxu0 %v1410
      %2001 = vmatmul.bf16.gmra.mxu0 %v528
      %v2002 = vpop.f32.mrf.mxu0
      %v2003 = vadd.f32 %v479, %v2002
      %v2004 = vpop.f32.mrf.mxu0
      %v2005 = vadd.f32 %v484, %v2004
      %2006 = vmatmul.bf16.gmra.mxu0 %v533
      %v2007 = vpop.f32.mrf.mxu0
      %v2008 = vadd.f32 %v489, %v2007
      %v2009 = vpop.f32.mrf.mxu0
      %v2010 = vadd.f32 %v494, %v2009
      %2011 = vdwg.mxu0
      %2012 = vmatpush.bf16.msra.mxu0 %v1530
      %2013 = vmatpush.bf16.msra.mxu0 %v1522
      %2014 = vmatpush.bf16.msra.mxu0 %v1514
      %2015 = vmatpush.bf16.msra.mxu0 %v1506
      %2016 = vmatpush.bf16.msra.mxu0 %v1498
      %2017 = vmatpush.bf16.msra.mxu0 %v1490
      %2018 = vmatpush.bf16.msra.mxu0 %v1482
      %2019 = vmatpush.bf16.msra.mxu0 %v1474
      %2020 = vmatmul.bf16.gmra.mxu0 %v529
      %v2021 = vpop.f32.mrf.mxu0
      %v2022 = vadd.f32 %v2003, %v2021
      %v2023 = vpop.f32.mrf.mxu0
      %v2024 = vadd.f32 %v2005, %v2023
      %2025 = vmatmul.bf16.gmra.mxu0 %v534
      %v2026 = vpop.f32.mrf.mxu0
      %v2027 = vadd.f32 %v2008, %v2026
      %v2028 = vpop.f32.mrf.mxu0
      %v2029 = vadd.f32 %v2010, %v2028
      %2030 = vdwg.mxu0
      %2031 = vmatpush.bf16.msra.mxu0 %v1594
      %2032 = vmatpush.bf16.msra.mxu0 %v1586
      %2033 = vmatpush.bf16.msra.mxu0 %v1578
      %2034 = vmatpush.bf16.msra.mxu0 %v1570
      %2035 = vmatpush.bf16.msra.mxu0 %v1562
      %2036 = vmatpush.bf16.msra.mxu0 %v1554
      %2037 = vmatpush.bf16.msra.mxu0 %v1546
      %2038 = vmatpush.bf16.msra.mxu0 %v1538
      %2039 = vmatmul.bf16.gmra.mxu0 %v530
      %v2040 = vpop.f32.mrf.mxu0
      %v2041 = vadd.f32 %v2022, %v2040
      %v2042 = vpop.f32.mrf.mxu0
      %v2043 = vadd.f32 %v2024, %v2042
      %2044 = vmatmul.bf16.gmra.mxu0 %v535
      %v2045 = vpop.f32.mrf.mxu0
      %v2046 = vadd.f32 %v2027, %v2045
      %v2047 = vpop.f32.mrf.mxu0
      %v2048 = vadd.f32 %v2029, %v2047
      %2049 = vdwg.mxu0
      %2050 = vmatpush.bf16.msra.mxu0 %v1658
      %2051 = vmatpush.bf16.msra.mxu0 %v1650
      %2052 = vmatpush.bf16.msra.mxu0 %v1642
      %2053 = vmatpush.bf16.msra.mxu0 %v1634
      %2054 = vmatpush.bf16.msra.mxu0 %v1626
      %2055 = vmatpush.bf16.msra.mxu0 %v1618
      %2056 = vmatpush.bf16.msra.mxu0 %v1610
      %2057 = vmatpush.bf16.msra.mxu0 %v1602
      %2058 = vmatmul.bf16.gmra.mxu0 %v531
      %v2059 = vpop.f32.mrf.mxu0
      %v2060 = vadd.f32 %v2041, %v2059
      %v2061 = vpop.f32.mrf.mxu0
      %v2062 = vadd.f32 %v2043, %v2061
      %2063 = vmatmul.bf16.gmra.mxu0 %v536
      %v2064 = vpop.f32.mrf.mxu0
      %v2065 = vadd.f32 %v2046, %v2064
      %v2066 = vpop.f32.mrf.mxu0
      %v2067 = vadd.f32 %v2048, %v2066
      %2068 = vdwg.mxu0
      %2069 = vmatpush.bf16.msra.mxu0 0
      %2070 = vmatpush.bf16.msra.mxu0 0
      %2071 = vmatpush.bf16.msra.mxu0 0
      %2072 = vmatpush.bf16.msra.mxu0 0
      %2073 = vmatpush.bf16.msra.mxu0 %v1690
      %2074 = vmatpush.bf16.msra.mxu0 %v1682
      %2075 = vmatpush.bf16.msra.mxu0 %v1674
      %2076 = vmatpush.bf16.msra.mxu0 %v1666
      %2077 = vmatmul.bf16.gmra.mxu0 %v1988
      %v2078 = vpop.f32.mrf.mxu0
      %v2079 = vadd.f32 %v2060, %v2078
      %v2080 = vpop.f32.mrf.mxu0
      %v2081 = vadd.f32 %v2062, %v2080
      %2082 = vmatmul.bf16.gmra.mxu0 %v1991
      %v2083 = vpop.f32.mrf.mxu0
      %v2084 = vadd.f32 %v2065, %v2083
      %v2085 = vpop.f32.mrf.mxu0
      %v2086 = vadd.f32 %v2067, %v2085
      %2087 = vdwg.mxu0
      %2088 = vmatpush.bf16.msra.mxu0 %v1467
      %2089 = vmatpush.bf16.msra.mxu0 %v1459
      %2090 = vmatpush.bf16.msra.mxu0 %v1451
      %2091 = vmatpush.bf16.msra.mxu0 %v1443
      %2092 = vmatpush.bf16.msra.mxu0 %v1435
      %2093 = vmatpush.bf16.msra.mxu0 %v1427
      %2094 = vmatpush.bf16.msra.mxu0 %v1419
      %2095 = vmatpush.bf16.msra.mxu0 %v1411
      %2096 = vmatmul.bf16.gmra.mxu0 %v528
      %v2097 = vpop.f32.mrf.mxu0
      %v2098 = vadd.f32 %v479, %v2097
      %v2099 = vpop.f32.mrf.mxu0
      %v2100 = vadd.f32 %v484, %v2099
      %2101 = vmatmul.bf16.gmra.mxu0 %v533
      %v2102 = vpop.f32.mrf.mxu0
      %v2103 = vadd.f32 %v489, %v2102
      %v2104 = vpop.f32.mrf.mxu0
      %v2105 = vadd.f32 %v494, %v2104
      %2106 = vdwg.mxu0
      %2107 = vmatpush.bf16.msra.mxu0 %v1531
      %2108 = vmatpush.bf16.msra.mxu0 %v1523
      %2109 = vmatpush.bf16.msra.mxu0 %v1515
      %2110 = vmatpush.bf16.msra.mxu0 %v1507
      %2111 = vmatpush.bf16.msra.mxu0 %v1499
      %2112 = vmatpush.bf16.msra.mxu0 %v1491
      %2113 = vmatpush.bf16.msra.mxu0 %v1483
      %2114 = vmatpush.bf16.msra.mxu0 %v1475
      %2115 = vmatmul.bf16.gmra.mxu0 %v529
      %v2116 = vpop.f32.mrf.mxu0
      %v2117 = vadd.f32 %v2098, %v2116
      %v2118 = vpop.f32.mrf.mxu0
      %v2119 = vadd.f32 %v2100, %v2118
      %2120 = vmatmul.bf16.gmra.mxu0 %v534
      %v2121 = vpop.f32.mrf.mxu0
      %v2122 = vadd.f32 %v2103, %v2121
      %v2123 = vpop.f32.mrf.mxu0
      %v2124 = vadd.f32 %v2105, %v2123
      %2125 = vdwg.mxu0
      %2126 = vmatpush.bf16.msra.mxu0 %v1595
      %2127 = vmatpush.bf16.msra.mxu0 %v1587
      %2128 = vmatpush.bf16.msra.mxu0 %v1579
      %2129 = vmatpush.bf16.msra.mxu0 %v1571
      %2130 = vmatpush.bf16.msra.mxu0 %v1563
      %2131 = vmatpush.bf16.msra.mxu0 %v1555
      %2132 = vmatpush.bf16.msra.mxu0 %v1547
      %2133 = vmatpush.bf16.msra.mxu0 %v1539
      %2134 = vmatmul.bf16.gmra.mxu0 %v530
      %v2135 = vpop.f32.mrf.mxu0
      %v2136 = vadd.f32 %v2117, %v2135
      %v2137 = vpop.f32.mrf.mxu0
      %v2138 = vadd.f32 %v2119, %v2137
      %2139 = vmatmul.bf16.gmra.mxu0 %v535
      %v2140 = vpop.f32.mrf.mxu0
      %v2141 = vadd.f32 %v2122, %v2140
      %v2142 = vpop.f32.mrf.mxu0
      %v2143 = vadd.f32 %v2124, %v2142
      %2144 = vdwg.mxu0
      %2145 = vmatpush.bf16.msra.mxu0 %v1659
      %2146 = vmatpush.bf16.msra.mxu0 %v1651
      %2147 = vmatpush.bf16.msra.mxu0 %v1643
      %2148 = vmatpush.bf16.msra.mxu0 %v1635
      %2149 = vmatpush.bf16.msra.mxu0 %v1627
      %2150 = vmatpush.bf16.msra.mxu0 %v1619
      %2151 = vmatpush.bf16.msra.mxu0 %v1611
      %2152 = vmatpush.bf16.msra.mxu0 %v1603
      %2153 = vmatmul.bf16.gmra.mxu0 %v531
      %v2154 = vpop.f32.mrf.mxu0
      %v2155 = vadd.f32 %v2136, %v2154
      %v2156 = vpop.f32.mrf.mxu0
      %v2157 = vadd.f32 %v2138, %v2156
      %2158 = vmatmul.bf16.gmra.mxu0 %v536
      %v2159 = vpop.f32.mrf.mxu0
      %v2160 = vadd.f32 %v2141, %v2159
      %v2161 = vpop.f32.mrf.mxu0
      %v2162 = vadd.f32 %v2143, %v2161
      %2163 = vdwg.mxu0
      %2164 = vmatpush.bf16.msra.mxu0 0
      %2165 = vmatpush.bf16.msra.mxu0 0
      %2166 = vmatpush.bf16.msra.mxu0 0
      %2167 = vmatpush.bf16.msra.mxu0 0
      %2168 = vmatpush.bf16.msra.mxu0 %v1691
      %2169 = vmatpush.bf16.msra.mxu0 %v1683
      %2170 = vmatpush.bf16.msra.mxu0 %v1675
      %2171 = vmatpush.bf16.msra.mxu0 %v1667
      %2172 = vmatmul.bf16.gmra.mxu0 %v1988
      %v2173 = vpop.f32.mrf.mxu0
      %v2174 = vadd.f32 %v2155, %v2173
      %v2175 = vpop.f32.mrf.mxu0
      %v2176 = vadd.f32 %v2157, %v2175
      %2177 = vmatmul.bf16.gmra.mxu0 %v1991
      %v2178 = vpop.f32.mrf.mxu0
      %v2179 = vadd.f32 %v2160, %v2178
      %v2180 = vpop.f32.mrf.mxu0
      %v2181 = vadd.f32 %v2162, %v2180
      %2182 = vdwg.mxu0
      %2183 = vmatpush.bf16.msra.mxu0 %v1468
      %2184 = vmatpush.bf16.msra.mxu0 %v1460
      %2185 = vmatpush.bf16.msra.mxu0 %v1452
      %2186 = vmatpush.bf16.msra.mxu0 %v1444
      %2187 = vmatpush.bf16.msra.mxu0 %v1436
      %2188 = vmatpush.bf16.msra.mxu0 %v1428
      %2189 = vmatpush.bf16.msra.mxu0 %v1420
      %2190 = vmatpush.bf16.msra.mxu0 %v1412
      %2191 = vmatmul.bf16.gmra.mxu0 %v528
      %v2192 = vpop.f32.mrf.mxu0
      %v2193 = vadd.f32 %v479, %v2192
      %v2194 = vpop.f32.mrf.mxu0
      %v2195 = vadd.f32 %v484, %v2194
      %2196 = vmatmul.bf16.gmra.mxu0 %v533
      %v2197 = vpop.f32.mrf.mxu0
      %v2198 = vadd.f32 %v489, %v2197
      %v2199 = vpop.f32.mrf.mxu0
      %v2200 = vadd.f32 %v494, %v2199
      %2201 = vdwg.mxu0
      %2202 = vmatpush.bf16.msra.mxu0 %v1532
      %2203 = vmatpush.bf16.msra.mxu0 %v1524
      %2204 = vmatpush.bf16.msra.mxu0 %v1516
      %2205 = vmatpush.bf16.msra.mxu0 %v1508
      %2206 = vmatpush.bf16.msra.mxu0 %v1500
      %2207 = vmatpush.bf16.msra.mxu0 %v1492
      %2208 = vmatpush.bf16.msra.mxu0 %v1484
      %2209 = vmatpush.bf16.msra.mxu0 %v1476
      %2210 = vmatmul.bf16.gmra.mxu0 %v529
      %v2211 = vpop.f32.mrf.mxu0
      %v2212 = vadd.f32 %v2193, %v2211
      %v2213 = vpop.f32.mrf.mxu0
      %v2214 = vadd.f32 %v2195, %v2213
      %2215 = vmatmul.bf16.gmra.mxu0 %v534
      %v2216 = vpop.f32.mrf.mxu0
      %v2217 = vadd.f32 %v2198, %v2216
      %v2218 = vpop.f32.mrf.mxu0
      %v2219 = vadd.f32 %v2200, %v2218
      %2220 = vdwg.mxu0
      %2221 = vmatpush.bf16.msra.mxu0 %v1596
      %2222 = vmatpush.bf16.msra.mxu0 %v1588
      %2223 = vmatpush.bf16.msra.mxu0 %v1580
      %2224 = vmatpush.bf16.msra.mxu0 %v1572
      %2225 = vmatpush.bf16.msra.mxu0 %v1564
      %2226 = vmatpush.bf16.msra.mxu0 %v1556
      %2227 = vmatpush.bf16.msra.mxu0 %v1548
      %2228 = vmatpush.bf16.msra.mxu0 %v1540
      %2229 = vmatmul.bf16.gmra.mxu0 %v530
      %v2230 = vpop.f32.mrf.mxu0
      %v2231 = vadd.f32 %v2212, %v2230
      %v2232 = vpop.f32.mrf.mxu0
      %v2233 = vadd.f32 %v2214, %v2232
      %2234 = vmatmul.bf16.gmra.mxu0 %v535
      %v2235 = vpop.f32.mrf.mxu0
      %v2236 = vadd.f32 %v2217, %v2235
      %v2237 = vpop.f32.mrf.mxu0
      %v2238 = vadd.f32 %v2219, %v2237
      %2239 = vdwg.mxu0
      %2240 = vmatpush.bf16.msra.mxu0 %v1660
      %2241 = vmatpush.bf16.msra.mxu0 %v1652
      %2242 = vmatpush.bf16.msra.mxu0 %v1644
      %2243 = vmatpush.bf16.msra.mxu0 %v1636
      %2244 = vmatpush.bf16.msra.mxu0 %v1628
      %2245 = vmatpush.bf16.msra.mxu0 %v1620
      %2246 = vmatpush.bf16.msra.mxu0 %v1612
      %2247 = vmatpush.bf16.msra.mxu0 %v1604
      %2248 = vmatmul.bf16.gmra.mxu0 %v531
      %v2249 = vpop.f32.mrf.mxu0
      %v2250 = vadd.f32 %v2231, %v2249
      %v2251 = vpop.f32.mrf.mxu0
      %v2252 = vadd.f32 %v2233, %v2251
      %2253 = vmatmul.bf16.gmra.mxu0 %v536
      %v2254 = vpop.f32.mrf.mxu0
      %v2255 = vadd.f32 %v2236, %v2254
      %v2256 = vpop.f32.mrf.mxu0
      %v2257 = vadd.f32 %v2238, %v2256
      %2258 = vdwg.mxu0
      %2259 = vmatpush.bf16.msra.mxu0 0
      %2260 = vmatpush.bf16.msra.mxu0 0
      %2261 = vmatpush.bf16.msra.mxu0 0
      %2262 = vmatpush.bf16.msra.mxu0 0
      %2263 = vmatpush.bf16.msra.mxu0 %v1692
      %2264 = vmatpush.bf16.msra.mxu0 %v1684
      %2265 = vmatpush.bf16.msra.mxu0 %v1676
      %2266 = vmatpush.bf16.msra.mxu0 %v1668
      %2267 = vmatmul.bf16.gmra.mxu0 %v1988
      %v2268 = vpop.f32.mrf.mxu0
      %v2269 = vadd.f32 %v2250, %v2268
      %v2270 = vpop.f32.mrf.mxu0
      %v2271 = vadd.f32 %v2252, %v2270
      %2272 = vmatmul.bf16.gmra.mxu0 %v1991
      %v2273 = vpop.f32.mrf.mxu0
      %v2274 = vadd.f32 %v2255, %v2273
      %v2275 = vpop.f32.mrf.mxu0
      %v2276 = vadd.f32 %v2257, %v2275
      %2277 = vdwg.mxu0
      %2278 = vmatpush.bf16.msra.mxu0 %v1469
      %2279 = vmatpush.bf16.msra.mxu0 %v1461
      %2280 = vmatpush.bf16.msra.mxu0 %v1453
      %2281 = vmatpush.bf16.msra.mxu0 %v1445
      %2282 = vmatpush.bf16.msra.mxu0 %v1437
      %2283 = vmatpush.bf16.msra.mxu0 %v1429
      %2284 = vmatpush.bf16.msra.mxu0 %v1421
      %2285 = vmatpush.bf16.msra.mxu0 %v1413
      %2286 = vmatmul.bf16.gmra.mxu0 %v528
      %v2287 = vpop.f32.mrf.mxu0
      %v2288 = vadd.f32 %v479, %v2287
      %v2289 = vpop.f32.mrf.mxu0
      %v2290 = vadd.f32 %v484, %v2289
      %2291 = vmatmul.bf16.gmra.mxu0 %v533
      %v2292 = vpop.f32.mrf.mxu0
      %v2293 = vadd.f32 %v489, %v2292
      %v2294 = vpop.f32.mrf.mxu0
      %v2295 = vadd.f32 %v494, %v2294
      %2296 = vdwg.mxu0
      %2297 = vmatpush.bf16.msra.mxu0 %v1533
      %2298 = vmatpush.bf16.msra.mxu0 %v1525
      %2299 = vmatpush.bf16.msra.mxu0 %v1517
      %2300 = vmatpush.bf16.msra.mxu0 %v1509
      %2301 = vmatpush.bf16.msra.mxu0 %v1501
      %2302 = vmatpush.bf16.msra.mxu0 %v1493
      %2303 = vmatpush.bf16.msra.mxu0 %v1485
      %2304 = vmatpush.bf16.msra.mxu0 %v1477
      %2305 = vmatmul.bf16.gmra.mxu0 %v529
      %v2306 = vpop.f32.mrf.mxu0
      %v2307 = vadd.f32 %v2288, %v2306
      %v2308 = vpop.f32.mrf.mxu0
      %v2309 = vadd.f32 %v2290, %v2308
      %2310 = vmatmul.bf16.gmra.mxu0 %v534
      %v2311 = vpop.f32.mrf.mxu0
      %v2312 = vadd.f32 %v2293, %v2311
      %v2313 = vpop.f32.mrf.mxu0
      %v2314 = vadd.f32 %v2295, %v2313
      %2315 = vdwg.mxu0
      %2316 = vmatpush.bf16.msra.mxu0 %v1597
      %2317 = vmatpush.bf16.msra.mxu0 %v1589
      %2318 = vmatpush.bf16.msra.mxu0 %v1581
      %2319 = vmatpush.bf16.msra.mxu0 %v1573
      %2320 = vmatpush.bf16.msra.mxu0 %v1565
      %2321 = vmatpush.bf16.msra.mxu0 %v1557
      %2322 = vmatpush.bf16.msra.mxu0 %v1549
      %2323 = vmatpush.bf16.msra.mxu0 %v1541
      %2324 = vmatmul.bf16.gmra.mxu0 %v530
      %v2325 = vpop.f32.mrf.mxu0
      %v2326 = vadd.f32 %v2307, %v2325
      %v2327 = vpop.f32.mrf.mxu0
      %v2328 = vadd.f32 %v2309, %v2327
      %2329 = vmatmul.bf16.gmra.mxu0 %v535
      %v2330 = vpop.f32.mrf.mxu0
      %v2331 = vadd.f32 %v2312, %v2330
      %v2332 = vpop.f32.mrf.mxu0
      %v2333 = vadd.f32 %v2314, %v2332
      %2334 = vdwg.mxu0
      %2335 = vmatpush.bf16.msra.mxu0 %v1661
      %2336 = vmatpush.bf16.msra.mxu0 %v1653
      %2337 = vmatpush.bf16.msra.mxu0 %v1645
      %2338 = vmatpush.bf16.msra.mxu0 %v1637
      %2339 = vmatpush.bf16.msra.mxu0 %v1629
      %2340 = vmatpush.bf16.msra.mxu0 %v1621
      %2341 = vmatpush.bf16.msra.mxu0 %v1613
      %2342 = vmatpush.bf16.msra.mxu0 %v1605
      %2343 = vmatmul.bf16.gmra.mxu0 %v531
      %v2344 = vpop.f32.mrf.mxu0
      %v2345 = vadd.f32 %v2326, %v2344
      %v2346 = vpop.f32.mrf.mxu0
      %v2347 = vadd.f32 %v2328, %v2346
      %2348 = vmatmul.bf16.gmra.mxu0 %v536
      %v2349 = vpop.f32.mrf.mxu0
      %v2350 = vadd.f32 %v2331, %v2349
      %v2351 = vpop.f32.mrf.mxu0
      %v2352 = vadd.f32 %v2333, %v2351
      %2353 = vdwg.mxu0
      %2354 = vmatpush.bf16.msra.mxu0 0
      %2355 = vmatpush.bf16.msra.mxu0 0
      %2356 = vmatpush.bf16.msra.mxu0 0
      %2357 = vmatpush.bf16.msra.mxu0 0
      %2358 = vmatpush.bf16.msra.mxu0 %v1693
      %2359 = vmatpush.bf16.msra.mxu0 %v1685
      %2360 = vmatpush.bf16.msra.mxu0 %v1677
      %2361 = vmatpush.bf16.msra.mxu0 %v1669
      %2362 = vmatmul.bf16.gmra.mxu0 %v1988
      %v2363 = vpop.f32.mrf.mxu0
      %v2364 = vadd.f32 %v2345, %v2363
      %v2365 = vpop.f32.mrf.mxu0
      %v2366 = vadd.f32 %v2347, %v2365
      %2367 = vmatmul.bf16.gmra.mxu0 %v1991
      %v2368 = vpop.f32.mrf.mxu0
      %v2369 = vadd.f32 %v2350, %v2368
      %v2370 = vpop.f32.mrf.mxu0
      %v2371 = vadd.f32 %v2352, %v2370
      %2372 = vdwg.mxu0
      %2373 = vmatpush.bf16.msra.mxu0 %v1470
      %2374 = vmatpush.bf16.msra.mxu0 %v1462
      %2375 = vmatpush.bf16.msra.mxu0 %v1454
      %2376 = vmatpush.bf16.msra.mxu0 %v1446
      %2377 = vmatpush.bf16.msra.mxu0 %v1438
      %2378 = vmatpush.bf16.msra.mxu0 %v1430
      %2379 = vmatpush.bf16.msra.mxu0 %v1422
      %2380 = vmatpush.bf16.msra.mxu0 %v1414
      %2381 = vmatmul.bf16.gmra.mxu0 %v528
      %v2382 = vpop.f32.mrf.mxu0
      %v2383 = vadd.f32 %v479, %v2382
      %v2384 = vpop.f32.mrf.mxu0
      %v2385 = vadd.f32 %v484, %v2384
      %2386 = vmatmul.bf16.gmra.mxu0 %v533
      %v2387 = vpop.f32.mrf.mxu0
      %v2388 = vadd.f32 %v489, %v2387
      %v2389 = vpop.f32.mrf.mxu0
      %v2390 = vadd.f32 %v494, %v2389
      %2391 = vdwg.mxu0
      %2392 = vmatpush.bf16.msra.mxu0 %v1534
      %2393 = vmatpush.bf16.msra.mxu0 %v1526
      %2394 = vmatpush.bf16.msra.mxu0 %v1518
      %2395 = vmatpush.bf16.msra.mxu0 %v1510
      %2396 = vmatpush.bf16.msra.mxu0 %v1502
      %2397 = vmatpush.bf16.msra.mxu0 %v1494
      %2398 = vmatpush.bf16.msra.mxu0 %v1486
      %2399 = vmatpush.bf16.msra.mxu0 %v1478
      %2400 = vmatmul.bf16.gmra.mxu0 %v529
      %v2401 = vpop.f32.mrf.mxu0
      %v2402 = vadd.f32 %v2383, %v2401
      %v2403 = vpop.f32.mrf.mxu0
      %v2404 = vadd.f32 %v2385, %v2403
      %2405 = vmatmul.bf16.gmra.mxu0 %v534
      %v2406 = vpop.f32.mrf.mxu0
      %v2407 = vadd.f32 %v2388, %v2406
      %v2408 = vpop.f32.mrf.mxu0
      %v2409 = vadd.f32 %v2390, %v2408
      %2410 = vdwg.mxu0
      %2411 = vmatpush.bf16.msra.mxu0 %v1598
      %2412 = vmatpush.bf16.msra.mxu0 %v1590
      %2413 = vmatpush.bf16.msra.mxu0 %v1582
      %2414 = vmatpush.bf16.msra.mxu0 %v1574
      %2415 = vmatpush.bf16.msra.mxu0 %v1566
      %2416 = vmatpush.bf16.msra.mxu0 %v1558
      %2417 = vmatpush.bf16.msra.mxu0 %v1550
      %2418 = vmatpush.bf16.msra.mxu0 %v1542
      %2419 = vmatmul.bf16.gmra.mxu0 %v530
      %v2420 = vpop.f32.mrf.mxu0
      %v2421 = vadd.f32 %v2402, %v2420
      %v2422 = vpop.f32.mrf.mxu0
      %v2423 = vadd.f32 %v2404, %v2422
      %2424 = vmatmul.bf16.gmra.mxu0 %v535
      %v2425 = vpop.f32.mrf.mxu0
      %v2426 = vadd.f32 %v2407, %v2425
      %v2427 = vpop.f32.mrf.mxu0
      %v2428 = vadd.f32 %v2409, %v2427
      %2429 = vdwg.mxu0
      %2430 = vmatpush.bf16.msra.mxu0 %v1662
      %2431 = vmatpush.bf16.msra.mxu0 %v1654
      %2432 = vmatpush.bf16.msra.mxu0 %v1646
      %2433 = vmatpush.bf16.msra.mxu0 %v1638
      %2434 = vmatpush.bf16.msra.mxu0 %v1630
      %2435 = vmatpush.bf16.msra.mxu0 %v1622
      %2436 = vmatpush.bf16.msra.mxu0 %v1614
      %2437 = vmatpush.bf16.msra.mxu0 %v1606
      %2438 = vmatmul.bf16.gmra.mxu0 %v531
      %v2439 = vpop.f32.mrf.mxu0
      %v2440 = vadd.f32 %v2421, %v2439
      %v2441 = vpop.f32.mrf.mxu0
      %v2442 = vadd.f32 %v2423, %v2441
      %2443 = vmatmul.bf16.gmra.mxu0 %v536
      %v2444 = vpop.f32.mrf.mxu0
      %v2445 = vadd.f32 %v2426, %v2444
      %v2446 = vpop.f32.mrf.mxu0
      %v2447 = vadd.f32 %v2428, %v2446
      %2448 = vdwg.mxu0
      %2449 = vmatpush.bf16.msra.mxu0 0
      %2450 = vmatpush.bf16.msra.mxu0 0
      %2451 = vmatpush.bf16.msra.mxu0 0
      %2452 = vmatpush.bf16.msra.mxu0 0
      %2453 = vmatpush.bf16.msra.mxu0 %v1694
      %2454 = vmatpush.bf16.msra.mxu0 %v1686
      %2455 = vmatpush.bf16.msra.mxu0 %v1678
      %2456 = vmatpush.bf16.msra.mxu0 %v1670
      %2457 = vmatmul.bf16.gmra.mxu0 %v1988
      %v2458 = vpop.f32.mrf.mxu0
      %v2459 = vadd.f32 %v2440, %v2458
      %v2460 = vpop.f32.mrf.mxu0
      %v2461 = vadd.f32 %v2442, %v2460
      %2462 = vmatmul.bf16.gmra.mxu0 %v1991
      %v2463 = vpop.f32.mrf.mxu0
      %v2464 = vadd.f32 %v2445, %v2463
      %v2465 = vpop.f32.mrf.mxu0
      %v2466 = vadd.f32 %v2447, %v2465
      %2467 = vdwg.mxu0
      %2468 = vmatpush.bf16.msra.mxu0 %v1471
      %2469 = vmatpush.bf16.msra.mxu0 %v1463
      %2470 = vmatpush.bf16.msra.mxu0 %v1455
      %2471 = vmatpush.bf16.msra.mxu0 %v1447
      %2472 = vmatpush.bf16.msra.mxu0 %v1439
      %2473 = vmatpush.bf16.msra.mxu0 %v1431
      %2474 = vmatpush.bf16.msra.mxu0 %v1423
      %2475 = vmatpush.bf16.msra.mxu0 %v1415
      %2476 = vmatmul.bf16.gmra.mxu0 %v528
      %v2477 = vpop.f32.mrf.mxu0
      %v2478 = vadd.f32 %v479, %v2477
      %v2479 = vpop.f32.mrf.mxu0
      %v2480 = vadd.f32 %v484, %v2479
      %2481 = vmatmul.bf16.gmra.mxu0 %v533
      %v2482 = vpop.f32.mrf.mxu0
      %v2483 = vadd.f32 %v489, %v2482
      %v2484 = vpop.f32.mrf.mxu0
      %v2485 = vadd.f32 %v494, %v2484
      %2486 = vdwg.mxu0
      %2487 = vmatpush.bf16.msra.mxu0 %v1535
      %2488 = vmatpush.bf16.msra.mxu0 %v1527
      %2489 = vmatpush.bf16.msra.mxu0 %v1519
      %2490 = vmatpush.bf16.msra.mxu0 %v1511
      %2491 = vmatpush.bf16.msra.mxu0 %v1503
      %2492 = vmatpush.bf16.msra.mxu0 %v1495
      %2493 = vmatpush.bf16.msra.mxu0 %v1487
      %2494 = vmatpush.bf16.msra.mxu0 %v1479
      %2495 = vmatmul.bf16.gmra.mxu0 %v529
      %v2496 = vpop.f32.mrf.mxu0
      %v2497 = vadd.f32 %v2478, %v2496
      %v2498 = vpop.f32.mrf.mxu0
      %v2499 = vadd.f32 %v2480, %v2498
      %2500 = vmatmul.bf16.gmra.mxu0 %v534
      %v2501 = vpop.f32.mrf.mxu0
      %v2502 = vadd.f32 %v2483, %v2501
      %v2503 = vpop.f32.mrf.mxu0
      %v2504 = vadd.f32 %v2485, %v2503
      %2505 = vdwg.mxu0
      %2506 = vmatpush.bf16.msra.mxu0 %v1599
      %2507 = vmatpush.bf16.msra.mxu0 %v1591
      %2508 = vmatpush.bf16.msra.mxu0 %v1583
      %2509 = vmatpush.bf16.msra.mxu0 %v1575
      %2510 = vmatpush.bf16.msra.mxu0 %v1567
      %2511 = vmatpush.bf16.msra.mxu0 %v1559
      %2512 = vmatpush.bf16.msra.mxu0 %v1551
      %2513 = vmatpush.bf16.msra.mxu0 %v1543
      %2514 = vmatmul.bf16.gmra.mxu0 %v530
      %v2515 = vpop.f32.mrf.mxu0
      %v2516 = vadd.f32 %v2497, %v2515
      %v2517 = vpop.f32.mrf.mxu0
      %v2518 = vadd.f32 %v2499, %v2517
      %2519 = vmatmul.bf16.gmra.mxu0 %v535
      %v2520 = vpop.f32.mrf.mxu0
      %v2521 = vadd.f32 %v2502, %v2520
      %v2522 = vpop.f32.mrf.mxu0
      %v2523 = vadd.f32 %v2504, %v2522
      %2524 = vdwg.mxu0
      %2525 = vmatpush.bf16.msra.mxu0 %v1663
      %2526 = vmatpush.bf16.msra.mxu0 %v1655
      %2527 = vmatpush.bf16.msra.mxu0 %v1647
      %2528 = vmatpush.bf16.msra.mxu0 %v1639
      %2529 = vmatpush.bf16.msra.mxu0 %v1631
      %2530 = vmatpush.bf16.msra.mxu0 %v1623
      %2531 = vmatpush.bf16.msra.mxu0 %v1615
      %2532 = vmatpush.bf16.msra.mxu0 %v1607
      %2533 = vmatmul.bf16.gmra.mxu0 %v531
      %v2534 = vpop.f32.mrf.mxu0
      %v2535 = vadd.f32 %v2516, %v2534
      %v2536 = vpop.f32.mrf.mxu0
      %v2537 = vadd.f32 %v2518, %v2536
      %2538 = vmatmul.bf16.gmra.mxu0 %v536
      %v2539 = vpop.f32.mrf.mxu0
      %v2540 = vadd.f32 %v2521, %v2539
      %v2541 = vpop.f32.mrf.mxu0
      %v2542 = vadd.f32 %v2523, %v2541
      %2543 = vdwg.mxu0
      %2544 = vmatpush.bf16.msra.mxu0 0
      %2545 = vmatpush.bf16.msra.mxu0 0
      %2546 = vmatpush.bf16.msra.mxu0 0
      %2547 = vmatpush.bf16.msra.mxu0 0
      %2548 = vmatpush.bf16.msra.mxu0 %v1695
      %2549 = vmatpush.bf16.msra.mxu0 %v1687
      %2550 = vmatpush.bf16.msra.mxu0 %v1679
      %2551 = vmatpush.bf16.msra.mxu0 %v1671
      %2552 = vmatmul.bf16.gmra.mxu0 %v1988
      %v2553 = vpop.f32.mrf.mxu0
      %v2554 = vadd.f32 %v2535, %v2553
      %v2555 = vpop.f32.mrf.mxu0
      %v2556 = vadd.f32 %v2537, %v2555
      %2557 = vmatmul.bf16.gmra.mxu0 %v1991
      %v2558 = vpop.f32.mrf.mxu0
      %v2559 = vadd.f32 %v2540, %v2558
      %v2560 = vpop.f32.mrf.mxu0
      %v2561 = vadd.f32 %v2542, %v2560
      %2562 = vdwg.mxu0
      %2563 = vmatpush.bf16.msra.mxu0 %v1472
      %2564 = vmatpush.bf16.msra.mxu0 %v1464
      %2565 = vmatpush.bf16.msra.mxu0 %v1456
      %2566 = vmatpush.bf16.msra.mxu0 %v1448
      %2567 = vmatpush.bf16.msra.mxu0 %v1440
      %2568 = vmatpush.bf16.msra.mxu0 %v1432
      %2569 = vmatpush.bf16.msra.mxu0 %v1424
      %2570 = vmatpush.bf16.msra.mxu0 %v1416
      %2571 = vmatmul.bf16.gmra.mxu0 %v528
      %v2572 = vpop.f32.mrf.mxu0
      %v2573 = vadd.f32 %v479, %v2572
      %v2574 = vpop.f32.mrf.mxu0
      %v2575 = vadd.f32 %v484, %v2574
      %2576 = vmatmul.bf16.gmra.mxu0 %v533
      %v2577 = vpop.f32.mrf.mxu0
      %v2578 = vadd.f32 %v489, %v2577
      %v2579 = vpop.f32.mrf.mxu0
      %v2580 = vadd.f32 %v494, %v2579
      %2581 = vdwg.mxu0
      %2582 = vmatpush.bf16.msra.mxu0 %v1536
      %2583 = vmatpush.bf16.msra.mxu0 %v1528
      %2584 = vmatpush.bf16.msra.mxu0 %v1520
      %2585 = vmatpush.bf16.msra.mxu0 %v1512
      %2586 = vmatpush.bf16.msra.mxu0 %v1504
      %2587 = vmatpush.bf16.msra.mxu0 %v1496
      %2588 = vmatpush.bf16.msra.mxu0 %v1488
      %2589 = vmatpush.bf16.msra.mxu0 %v1480
      %2590 = vmatmul.bf16.gmra.mxu0 %v529
      %v2591 = vpop.f32.mrf.mxu0
      %v2592 = vadd.f32 %v2573, %v2591
      %v2593 = vpop.f32.mrf.mxu0
      %v2594 = vadd.f32 %v2575, %v2593
      %2595 = vmatmul.bf16.gmra.mxu0 %v534
      %v2596 = vpop.f32.mrf.mxu0
      %v2597 = vadd.f32 %v2578, %v2596
      %v2598 = vpop.f32.mrf.mxu0
      %v2599 = vadd.f32 %v2580, %v2598
      %2600 = vdwg.mxu0
      %2601 = vmatpush.bf16.msra.mxu0 %v1600
      %2602 = vmatpush.bf16.msra.mxu0 %v1592
      %2603 = vmatpush.bf16.msra.mxu0 %v1584
      %2604 = vmatpush.bf16.msra.mxu0 %v1576
      %2605 = vmatpush.bf16.msra.mxu0 %v1568
      %2606 = vmatpush.bf16.msra.mxu0 %v1560
      %2607 = vmatpush.bf16.msra.mxu0 %v1552
      %2608 = vmatpush.bf16.msra.mxu0 %v1544
      %2609 = vmatmul.bf16.gmra.mxu0 %v530
      %v2610 = vpop.f32.mrf.mxu0
      %v2611 = vadd.f32 %v2592, %v2610
      %v2612 = vpop.f32.mrf.mxu0
      %v2613 = vadd.f32 %v2594, %v2612
      %2614 = vmatmul.bf16.gmra.mxu0 %v535
      %v2615 = vpop.f32.mrf.mxu0
      %v2616 = vadd.f32 %v2597, %v2615
      %v2617 = vpop.f32.mrf.mxu0
      %v2618 = vadd.f32 %v2599, %v2617
      %2619 = vdwg.mxu0
      %2620 = vmatpush.bf16.msra.mxu0 %v1664
      %2621 = vmatpush.bf16.msra.mxu0 %v1656
      %2622 = vmatpush.bf16.msra.mxu0 %v1648
      %2623 = vmatpush.bf16.msra.mxu0 %v1640
      %2624 = vmatpush.bf16.msra.mxu0 %v1632
      %2625 = vmatpush.bf16.msra.mxu0 %v1624
      %2626 = vmatpush.bf16.msra.mxu0 %v1616
      %2627 = vmatpush.bf16.msra.mxu0 %v1608
      %2628 = vmatmul.bf16.gmra.mxu0 %v531
      %v2629 = vpop.f32.mrf.mxu0
      %v2630 = vadd.f32 %v2611, %v2629
      %v2631 = vpop.f32.mrf.mxu0
      %v2632 = vadd.f32 %v2613, %v2631
      %2633 = vmatmul.bf16.gmra.mxu0 %v536
      %v2634 = vpop.f32.mrf.mxu0
      %v2635 = vadd.f32 %v2616, %v2634
      %v2636 = vpop.f32.mrf.mxu0
      %v2637 = vadd.f32 %v2618, %v2636
      %2638 = vdwg.mxu0
      %2639 = vmatpush.bf16.msra.mxu0 0
      %2640 = vmatpush.bf16.msra.mxu0 0
      %2641 = vmatpush.bf16.msra.mxu0 0
      %2642 = vmatpush.bf16.msra.mxu0 0
      %2643 = vmatpush.bf16.msra.mxu0 %v1696
      %2644 = vmatpush.bf16.msra.mxu0 %v1688
      %2645 = vmatpush.bf16.msra.mxu0 %v1680
      %2646 = vmatpush.bf16.msra.mxu0 %v1672
      %2647 = vmatmul.bf16.gmra.mxu0 %v1988
      %v2648 = vpop.f32.mrf.mxu0
      %v2649 = vadd.f32 %v2630, %v2648
      %v2650 = vpop.f32.mrf.mxu0
      %v2651 = vadd.f32 %v2632, %v2650
      %2652 = vmatmul.bf16.gmra.mxu0 %v1991
      %v2653 = vpop.f32.mrf.mxu0
      %v2654 = vadd.f32 %v2635, %v2653
      %v2655 = vpop.f32.mrf.mxu0
      %v2656 = vadd.f32 %v2637, %v2655
      %2657 = vdwg.mxu0
      %2658 = vmatpush.bf16.msra.mxu0 %v1473
      %2659 = vmatpush.bf16.msra.mxu0 %v1465
      %2660 = vmatpush.bf16.msra.mxu0 %v1457
      %2661 = vmatpush.bf16.msra.mxu0 %v1449
      %2662 = vmatpush.bf16.msra.mxu0 %v1441
      %2663 = vmatpush.bf16.msra.mxu0 %v1433
      %2664 = vmatpush.bf16.msra.mxu0 %v1425
      %2665 = vmatpush.bf16.msra.mxu0 %v1417
      %2666 = vmatmul.bf16.gmra.mxu0 %v528
      %v2667 = vpop.f32.mrf.mxu0
      %v2668 = vadd.f32 %v479, %v2667
      %v2669 = vpop.f32.mrf.mxu0
      %v2670 = vadd.f32 %v484, %v2669
      %2671 = vmatmul.bf16.gmra.mxu0 %v533
      %v2672 = vpop.f32.mrf.mxu0
      %v2673 = vadd.f32 %v489, %v2672
      %v2674 = vpop.f32.mrf.mxu0
      %v2675 = vadd.f32 %v494, %v2674
      %2676 = vdwg.mxu0
      %2677 = vmatpush.bf16.msra.mxu0 %v1537
      %2678 = vmatpush.bf16.msra.mxu0 %v1529
      %2679 = vmatpush.bf16.msra.mxu0 %v1521
      %2680 = vmatpush.bf16.msra.mxu0 %v1513
      %2681 = vmatpush.bf16.msra.mxu0 %v1505
      %2682 = vmatpush.bf16.msra.mxu0 %v1497
      %2683 = vmatpush.bf16.msra.mxu0 %v1489
      %2684 = vmatpush.bf16.msra.mxu0 %v1481
      %2685 = vmatmul.bf16.gmra.mxu0 %v529
      %v2686 = vpop.f32.mrf.mxu0
      %v2687 = vadd.f32 %v2668, %v2686
      %v2688 = vpop.f32.mrf.mxu0
      %v2689 = vadd.f32 %v2670, %v2688
      %2690 = vmatmul.bf16.gmra.mxu0 %v534
      %v2691 = vpop.f32.mrf.mxu0
      %v2692 = vadd.f32 %v2673, %v2691
      %v2693 = vpop.f32.mrf.mxu0
      %v2694 = vadd.f32 %v2675, %v2693
      %2695 = vdwg.mxu0
      %2696 = vmatpush.bf16.msra.mxu0 %v1601
      %2697 = vmatpush.bf16.msra.mxu0 %v1593
      %2698 = vmatpush.bf16.msra.mxu0 %v1585
      %2699 = vmatpush.bf16.msra.mxu0 %v1577
      %2700 = vmatpush.bf16.msra.mxu0 %v1569
      %2701 = vmatpush.bf16.msra.mxu0 %v1561
      %2702 = vmatpush.bf16.msra.mxu0 %v1553
      %2703 = vmatpush.bf16.msra.mxu0 %v1545
      %2704 = vmatmul.bf16.gmra.mxu0 %v530
      %v2705 = vpop.f32.mrf.mxu0
      %v2706 = vadd.f32 %v2687, %v2705
      %v2707 = vpop.f32.mrf.mxu0
      %v2708 = vadd.f32 %v2689, %v2707
      %2709 = vmatmul.bf16.gmra.mxu0 %v535
      %v2710 = vpop.f32.mrf.mxu0
      %v2711 = vadd.f32 %v2692, %v2710
      %v2712 = vpop.f32.mrf.mxu0
      %v2713 = vadd.f32 %v2694, %v2712
      %2714 = vdwg.mxu0
      %2715 = vmatpush.bf16.msra.mxu0 %v1665
      %2716 = vmatpush.bf16.msra.mxu0 %v1657
      %2717 = vmatpush.bf16.msra.mxu0 %v1649
      %2718 = vmatpush.bf16.msra.mxu0 %v1641
      %2719 = vmatpush.bf16.msra.mxu0 %v1633
      %2720 = vmatpush.bf16.msra.mxu0 %v1625
      %2721 = vmatpush.bf16.msra.mxu0 %v1617
      %2722 = vmatpush.bf16.msra.mxu0 %v1609
      %2723 = vmatmul.bf16.gmra.mxu0 %v531
      %v2724 = vpop.f32.mrf.mxu0
      %v2725 = vadd.f32 %v2706, %v2724
      %v2726 = vpop.f32.mrf.mxu0
      %v2727 = vadd.f32 %v2708, %v2726
      %2728 = vmatmul.bf16.gmra.mxu0 %v536
      %v2729 = vpop.f32.mrf.mxu0
      %v2730 = vadd.f32 %v2711, %v2729
      %v2731 = vpop.f32.mrf.mxu0
      %v2732 = vadd.f32 %v2713, %v2731
      %2733 = vdwg.mxu0
      %2734 = vmatpush.bf16.msra.mxu0 0
      %2735 = vmatpush.bf16.msra.mxu0 0
      %2736 = vmatpush.bf16.msra.mxu0 0
      %2737 = vmatpush.bf16.msra.mxu0 0
      %2738 = vmatpush.bf16.msra.mxu0 %v1697
      %2739 = vmatpush.bf16.msra.mxu0 %v1689
      %2740 = vmatpush.bf16.msra.mxu0 %v1681
      %2741 = vmatpush.bf16.msra.mxu0 %v1673
      %2742 = vmatmul.bf16.gmra.mxu0 %v1988
      %v2743 = vpop.f32.mrf.mxu0
      %v2744 = vadd.f32 %v2725, %v2743
      %v2745 = vpop.f32.mrf.mxu0
      %v2746 = vadd.f32 %v2727, %v2745
      %2747 = vmatmul.bf16.gmra.mxu0 %v1991
      %v2748 = vpop.f32.mrf.mxu0
      %v2749 = vadd.f32 %v2730, %v2748
      %v2750 = vpop.f32.mrf.mxu0
      %v2751 = vadd.f32 %v2732, %v2750
      %2752 = vdwg.mxu0
      %v2753 = vmax.f32 %v2079, 0.0
      %v2754 = vmax.f32 %v2174, 0.0
      %v2755 = vmax.f32 %v2269, 0.0
      %v2756 = vmax.f32 %v2364, 0.0
      %v2757 = vmax.f32 %v2459, 0.0
      %v2758 = vmax.f32 %v2554, 0.0
      %v2759 = vmax.f32 %v2649, 0.0
      %v2760 = vmax.f32 %v2744, 0.0
      %v2761 = vmax.f32 %v2081, 0.0
      %v2762 = vmax.f32 %v2176, 0.0
      %v2763 = vmax.f32 %v2271, 0.0
      %v2764 = vmax.f32 %v2366, 0.0
      %v2765 = vmax.f32 %v2461, 0.0
      %v2766 = vmax.f32 %v2556, 0.0
      %v2767 = vmax.f32 %v2651, 0.0
      %v2768 = vmax.f32 %v2746, 0.0
      %v2769 = vmax.f32 %v2084, 0.0
      %v2770 = vmax.f32 %v2179, 0.0
      %v2771 = vmax.f32 %v2274, 0.0
      %v2772 = vmax.f32 %v2369, 0.0
      %v2773 = vmax.f32 %v2464, 0.0
      %v2774 = vmax.f32 %v2559, 0.0
      %v2775 = vmax.f32 %v2654, 0.0
      %v2776 = vmax.f32 %v2749, 0.0
      %v2777 = vmax.f32 %v2086, 0.0
      %v2778 = vmax.f32 %v2181, 0.0
      %v2779 = vmax.f32 %v2276, 0.0
      %v2780 = vmax.f32 %v2371, 0.0
      %v2781 = vmax.f32 %v2466, 0.0
      %v2782 = vmax.f32 %v2561, 0.0
      %v2783 = vmax.f32 %v2656, 0.0
      %v2784 = vmax.f32 %v2751, 0.0
      %v2785 = vpack.c.bf16 %v2754, %v2753
      %v2786 = vpack.c.bf16 %v2756, %v2755
      %v2787 = vpack.c.bf16 %v2758, %v2757
      %v2788 = vpack.c.bf16 %v2760, %v2759
      %v2789 = vpack.c.bf16 %v2762, %v2761
      %v2790 = vpack.c.bf16 %v2764, %v2763
      %v2791 = vpack.c.bf16 %v2766, %v2765
      %v2792 = vpack.c.bf16 %v2768, %v2767
      %v2793 = vpack.c.bf16 %v2770, %v2769
      %v2794 = vpack.c.bf16 %v2772, %v2771
      %v2795 = vpack.c.bf16 %v2774, %v2773
      %v2796 = vpack.c.bf16 %v2776, %v2775
      %v2797 = vpack.c.bf16 %v2778, %v2777
      %v2798 = vpack.c.bf16 %v2780, %v2779
      %v2799 = vpack.c.bf16 %v2782, %v2781
      %v2800 = vpack.c.bf16 %v2784, %v2783
      %2801 = vst [vmem:[%s170] sm:$0xff] %v2785
      %2802 = vst [vmem:[%s170 + $0x8] sm:$0xff] %v2786
      %2803 = vst [vmem:[%s170 + $0x10] sm:$0xff] %v2787
      %2804 = vst [vmem:[%s170 + $0x18] sm:$0xff] %v2788
      %2805 = vst [vmem:[%s170 + $0x20] sm:$0xff] %v2789
      %2806 = vst [vmem:[%s170 + $0x28] sm:$0xff] %v2790
      %2807 = vst [vmem:[%s170 + $0x30] sm:$0xff] %v2791
      %2808 = vst [vmem:[%s170 + $0x38] sm:$0xff] %v2792
      %2809 = vst [vmem:[%s170 + $0x40] sm:$0xff] %v2793
      %2810 = vst [vmem:[%s170 + $0x48] sm:$0xff] %v2794
      %2811 = vst [vmem:[%s170 + $0x50] sm:$0xff] %v2795
      %2812 = vst [vmem:[%s170 + $0x58] sm:$0xff] %v2796
      %2813 = vst [vmem:[%s170 + $0x60] sm:$0xff] %v2797
      %2814 = vst [vmem:[%s170 + $0x68] sm:$0xff] %v2798
      %2815 = vst [vmem:[%s170 + $0x70] sm:$0xff] %v2799
      %2816 = vst [vmem:[%s170 + $0x78] sm:$0xff] %v2800
      %p2817 = scmp.lt.s32.totalorder %s14, 1
      %s2818 = scalar_select %p2817, %s14, 1
      %s2819 = smul.addr %s2818, 32
      %s2820 = smul.addr %s2819, 4
      %s2821 = scalar_lea.vmem %s3, %s2820
      // Predicated region
      $region33: #{decoder_forward.4} parent=31 // pred_check
        %p2822 = pneg %p100
      $region34: #{decoder_forward.4} parent=31 // pred_check_branch
        %2824 = sbr.rel (%p2822) target = $region36
      $region35: #{decoder_forward.4} parent=31 // pred_region
        _
      $region36: #{decoder_forward.4} parent=31 // pred_fallthru
        _
    $region32: #{decoder_forward.4} parent=5 // pred_fallthru
      _
    %p2825 = scmp.le.s32.totalorder 2, %s9
    // Predicated region
    $region37: #{decoder_forward.4} parent=5 // pred_check
      %p2826 = pneg %p2825
    $region38: #{decoder_forward.4} parent=5 // pred_check_branch
      %2828 = sbr.rel (%p2826) target = $region40
    $region39: #{decoder_forward.4} parent=5 // pred_region
      %s2829 = ssub.s32 %s9, 2
      // Predicated region
      $region41: #{decoder_forward.4} parent=39 // pred_check
        %p2830 = pneg %p106
      $region42: #{decoder_forward.4} parent=39 // pred_check_branch
        %2832 = sbr.rel (%p2830) target = $region44
      $region43: #{decoder_forward.4} parent=39 // pred_region
        %p2833 = scmp.lt.s32.totalorder %s15, 1
        %s2834 = scalar_select %p2833, %s15, 1
        %s2835 = smul.addr %s2834, 32
        %s2836 = smul.addr %s2835, 4
        %s2837 = scalar_lea.vmem %s3, %s2836
      $region44: #{decoder_forward.4} parent=39 // pred_fallthru
        _
    $region40: #{decoder_forward.4} parent=5 // pred_fallthru
      _
  $region6: #{decoder_forward.4} parent=0 // loop_footer
    %s13 = sadd.s32 1, %s9
  $region7: #{decoder_forward.4} parent=0 // loop_footer_branch
    %8 = sbr.rel target = $region3
  $region8: #{decoder_forward.4} parent=0 // loop_exit
    _

// kernel: decoder_forward.5
$region0: #{decoder_forward.5}
  #allocation0 [shape = 'u32[]', space=smem, size = 0x4, offset = 0x4, fixed_abs, tag = 'smem constant byte address 0x4 - core index']
  #allocation1 [shape = 'u32[72,128]{1,0:T(1,128)}', space=vmem, size = 0x9000, scoped, tag = 'internal scratch']
  %s0 = inlined_call_operand.vmem [shape: bf16[2,1568,1024], index: 0, kind: input, shape index: {}]
  %s1 = inlined_call_operand.vmem [shape: bf16[8,1568], index: 1, kind: input, shape index: {}]
  %s2 = inlined_call_operand.vmem [shape: f32[8,1], index: 2, kind: input, shape index: {}]
  %s3 = inlined_call_operand.vmem [shape: f32[2,8,1024], index: 3, kind: output, shape index: {}]
  %s4 = sld [smem:[#allocation0]]
  $region45: #{decoder_forward.5} parent=0
    _
  %s6 = ssub.s32 1, %s4
  %s7 = scalar_select 0, %s6, %s4
  loop: start=0, step=1, limit=4
  $region2: #{decoder_forward.5} parent=0 // loop_pre_header
    _
  $region3: #{decoder_forward.5} parent=0 // loop_header
    %s9 = sphi 0, %s13
    %p10 = scmp.ge.s32.totalorder %s9, 4
    %s19 = sphi 0, %s21
    %s22 = sphi 0, %s19
    %s23 = sphi 0, %s22
    %s39 = sphi 0, %s23
    %s43 = sphi 0, %s43
    %s45 = sphi 0, %s43
    %s46 = sphi 0, %s45
    %s60 = sphi 0, %s46
    %s64 = sphi 0, %s64
    %s66 = sphi 0, %s64
    %s67 = sphi 0, %s66
    %s81 = sphi 0, %s67
    %s87 = sphi 0, %s89
    %s90 = sphi 0, %s87
    %s91 = sphi 0, %s90
    %s107 = sphi 0, %s91
  $region4: #{decoder_forward.5} parent=0 // loop_header_branch
    %12 = sbr.rel (%p10) target = $region8
  $region5: #{decoder_forward.5} parent=0 // loop_body
    %s14 = ssub.s32 %s9, 1
    %s15 = ssub.s32 %s9, 2
    %s16 = sadd.s32 %s9, 1
    %s17 = ssub.s32 %s9, %s16
    %p18 = scmp.eq.s32.totalorder %s17, 0
    %s20 = sadd.s32 %s19, 1
    %s21 = scalar_select %p18, %s19, %s20
    %p24 = pneg %p18
    %p25 = scmp.eq.s32.totalorder %s9, 1
    %p26 = por %p24, %p25
    %p27 = scmp.ne.s32.totalorder %s19, %s22
    %p28 = scmp.eq.s32.totalorder %s9, 0
    %p29 = por %p27, %p28
    %p30 = scmp.ne.s32.totalorder %s19, %s22
    %p31 = scmp.eq.s32.totalorder %s14, 1
    %p32 = por %p30, %p31
    %p33 = scmp.ne.s32.totalorder %s22, %s23
    %p34 = scmp.eq.s32.totalorder %s14, 0
    %p35 = por %p33, %p34
    %p36 = scmp.ne.s32.totalorder %s22, %s23
    %p37 = scmp.eq.s32.totalorder %s15, 1
    %p38 = por %p36, %p37
    %p40 = scmp.ne.s32.totalorder %s23, %s39
    %p41 = scmp.eq.s32.totalorder %s15, 0
    %p42 = por %p40, %p41
    %s44 = sadd.s32 %s43, 1
    %p47 = scmp.eq.s32.totalorder %s9, 1
    %p48 = scmp.ne.s32.totalorder %s43, %s45
    %p49 = scmp.eq.s32.totalorder %s9, 0
    %p50 = por %p48, %p49
    %p51 = scmp.ne.s32.totalorder %s43, %s45
    %p52 = scmp.eq.s32.totalorder %s14, 1
    %p53 = por %p51, %p52
    %p54 = scmp.ne.s32.totalorder %s45, %s46
    %p55 = scmp.eq.s32.totalorder %s14, 0
    %p56 = por %p54, %p55
    %p57 = scmp.ne.s32.totalorder %s45, %s46
    %p58 = scmp.eq.s32.totalorder %s15, 1
    %p59 = por %p57, %p58
    %p61 = scmp.ne.s32.totalorder %s46, %s60
    %p62 = scmp.eq.s32.totalorder %s15, 0
    %p63 = por %p61, %p62
    %s65 = sadd.s32 %s64, 1
    %p68 = scmp.eq.s32.totalorder %s9, 1
    %p69 = scmp.ne.s32.totalorder %s64, %s66
    %p70 = scmp.eq.s32.totalorder %s9, 0
    %p71 = por %p69, %p70
    %p72 = scmp.ne.s32.totalorder %s64, %s66
    %p73 = scmp.eq.s32.totalorder %s14, 1
    %p74 = por %p72, %p73
    %p75 = scmp.ne.s32.totalorder %s66, %s67
    %p76 = scmp.eq.s32.totalorder %s14, 0
    %p77 = por %p75, %p76
    %p78 = scmp.ne.s32.totalorder %s66, %s67
    %p79 = scmp.eq.s32.totalorder %s15, 1
    %p80 = por %p78, %p79
    %p82 = scmp.ne.s32.totalorder %s67, %s81
    %p83 = scmp.eq.s32.totalorder %s15, 0
    %p84 = por %p82, %p83
    %s85 = ssub.s32 %s9, %s16
    %p86 = scmp.eq.s32.totalorder %s85, 0
    %s88 = sadd.s32 %s87, 1
    %s89 = scalar_select %p86, %s87, %s88
    %p92 = pneg %p86
    %p93 = scmp.eq.s32.totalorder %s9, 1
    %p94 = por %p92, %p93
    %p95 = scmp.ne.s32.totalorder %s87, %s90
    %p96 = scmp.eq.s32.totalorder %s9, 0
    %p97 = por %p95, %p96
    %p98 = scmp.ne.s32.totalorder %s87, %s90
    %p99 = scmp.eq.s32.totalorder %s14, 1
    %p100 = por %p98, %p99
    %p101 = scmp.ne.s32.totalorder %s90, %s91
    %p102 = scmp.eq.s32.totalorder %s14, 0
    %p103 = por %p101, %p102
    %p104 = scmp.ne.s32.totalorder %s90, %s91
    %p105 = scmp.eq.s32.totalorder %s15, 1
    %p106 = por %p104, %p105
    %p108 = scmp.ne.s32.totalorder %s91, %s107
    %p109 = scmp.eq.s32.totalorder %s15, 0
    %p110 = por %p108, %p109
    %p111 = scmp.le.s32.totalorder 1, %s9
    %p112 = scmp.lt.s32.totalorder %s9, 3
    %p113 = pnand %p111, %p112
    %p114 = pneg %p113
    // Predicated region
    $region9: #{decoder_forward.5} parent=5 // pred_check
      _
    $region10: #{decoder_forward.5} parent=5 // pred_check_branch
      %116 = sbr.rel (%p113) target = $region12
    $region11: #{decoder_forward.5} parent=5 // pred_region
      %s117 = ssub.s32 %s9, 1
      // Predicated region
      $region13: #{decoder_forward.5} parent=11 // pred_check
        %p118 = pneg %p56
      $region14: #{decoder_forward.5} parent=11 // pred_check_branch
        %120 = sbr.rel (%p118) target = $region16
      $region15: #{decoder_forward.5} parent=11 // pred_region
        _
      $region16: #{decoder_forward.5} parent=11 // pred_fallthru
        _
      // Predicated region
      $region17: #{decoder_forward.5} parent=11 // pred_check
        %p121 = pneg %p77
      $region18: #{decoder_forward.5} parent=11 // pred_check_branch
        %123 = sbr.rel (%p121) target = $region20
      $region19: #{decoder_forward.5} parent=11 // pred_region
        _
      $region20: #{decoder_forward.5} parent=11 // pred_fallthru
        _
    $region12: #{decoder_forward.5} parent=5 // pred_fallthru
      _
    %p124 = scmp.lt.s32.totalorder %s9, 2
    // Predicated region
    $region21: #{decoder_forward.5} parent=5 // pred_check
      %p125 = pneg %p124
    $region22: #{decoder_forward.5} parent=5 // pred_check_branch
      %127 = sbr.rel (%p125) target = $region24
    $region23: #{decoder_forward.5} parent=5 // pred_region
      // Predicated region
      $region25: #{decoder_forward.5} parent=23 // pred_check
        %p128 = pneg %p29
      $region26: #{decoder_forward.5} parent=23 // pred_check_branch
        %130 = sbr.rel (%p128) target = $region28
      $region27: #{decoder_forward.5} parent=23 // pred_region
        %p131 = scmp.lt.s32.totalorder %s9, 1
        %s132 = scalar_select %p131, %s9, 1
        %s133 = smul.addr %s132, 1568
        %s134 = smul.addr %s133, 4
        %s135 = scalar_lea.vmem %s0, %s134
      $region28: #{decoder_forward.5} parent=23 // pred_fallthru
        _
    $region24: #{decoder_forward.5} parent=5 // pred_fallthru
      _
    %p136 = scmp.le.s32.totalorder 1, %s9
    %p137 = scmp.lt.s32.totalorder %s9, 3
    %p138 = pnand %p136, %p137
    %p139 = pneg %p138
    // Predicated region
    $region29: #{decoder_forward.5} parent=5 // pred_check
      _
    $region30: #{decoder_forward.5} parent=5 // pred_check_branch
      %141 = sbr.rel (%p138) target = $region32
    $region31: #{decoder_forward.5} parent=5 // pred_region
      %s142 = ssub.s32 %s9, 1
      %p143 = scmp.lt.s32.totalorder %s14, 1
      %s144 = scalar_select %p143, %s14, 1
      %s145 = smul.addr %s144, 1568
      %s146 = smul.addr %s145, 4
      %s147 = scalar_lea.vmem %s0, %s146
      %p148 = pneg %p35
      %p149 = pneg %p32
      %p150 = pneg %p56
      %p151 = pneg %p53
      %p152 = pneg %p77
      %p153 = pneg %p74
      %p154 = pneg %p103
      %p155 = pneg %p100
      %p156 = scmp.lt.s32.totalorder %s14, 1
      %s157 = scalar_select %p156, %s14, 1
      %s158 = smul.addr %s157, 8
      %s159 = smul.addr %s158, 8
      %s160 = scalar_lea.vmem %s3, %s159
      %p161 = scmp.lt.s32.totalorder %s14, 1
      %s162 = scalar_select %p161, %s14, 1
      %s163 = smul.addr %s162, 1568
      %s164 = smul.addr %s163, 4
      %s165 = scalar_lea.vmem %s0, %s164
      %p166 = scmp.lt.s32.totalorder %s14, 1
      %s167 = scalar_select %p166, %s14, 1
      %s168 = smul.addr %s167, 8
      %s169 = smul.addr %s168, 8
      %s170 = scalar_lea.vmem %s3, %s169
      %v172 = vld [vmem:[%s1] sm:$0xff]
      %v173 = vld [vmem:[%s1 + $0x8] sm:$0xff]
      %v174 = vld [vmem:[%s1 + $0x10] sm:$0xff]
      %v175 = vld [vmem:[%s1 + $0x18] sm:$0xff]
      %v176 = vld [vmem:[%s1 + $0x20] sm:$0xff]
      %v177 = vld [vmem:[%s1 + $0x28] sm:$0xff]
      %v178 = vld [vmem:[%s1 + $0x30] sm:$0xf]
      %v179 = vld [vmem:[%s165] sm:$0xff]
      %v180 = vld [vmem:[%s165 + $0x8] sm:$0xff]
      %v181 = vld [vmem:[%s165 + $0x10] sm:$0xff]
      %v182 = vld [vmem:[%s165 + $0x18] sm:$0xff]
      %v183 = vld [vmem:[%s165 + $0x20] sm:$0xff]
      %v184 = vld [vmem:[%s165 + $0x28] sm:$0xff]
      %v185 = vld [vmem:[%s165 + $0x30] sm:$0xff]
      %v186 = vld [vmem:[%s165 + $0x38] sm:$0xff]
      %v187 = vld [vmem:[%s165 + $0x40] sm:$0xff]
      %v188 = vld [vmem:[%s165 + $0x48] sm:$0xff]
      %v189 = vld [vmem:[%s165 + $0x50] sm:$0xff]
      %v190 = vld [vmem:[%s165 + $0x58] sm:$0xff]
      %v191 = vld [vmem:[%s165 + $0x60] sm:$0xff]
      %v192 = vld [vmem:[%s165 + $0x68] sm:$0xff]
      %v193 = vld [vmem:[%s165 + $0x70] sm:$0xff]
      %v194 = vld [vmem:[%s165 + $0x78] sm:$0xff]
      %v195 = vld [vmem:[%s165 + $0x80] sm:$0xff]
      %v196 = vld [vmem:[%s165 + $0x88] sm:$0xff]
      %v197 = vld [vmem:[%s165 + $0x90] sm:$0xff]
      %v198 = vld [vmem:[%s165 + $0x98] sm:$0xff]
      %v199 = vld [vmem:[%s165 + $0xa0] sm:$0xff]
      %v200 = vld [vmem:[%s165 + $0xa8] sm:$0xff]
      %v201 = vld [vmem:[%s165 + $0xb0] sm:$0xff]
      %v202 = vld [vmem:[%s165 + $0xb8] sm:$0xff]
      %v203 = vld [vmem:[%s165 + $0xc0] sm:$0xff]
      %v204 = vld [vmem:[%s165 + $0xc8] sm:$0xff]
      %v205 = vld [vmem:[%s165 + $0xd0] sm:$0xff]
      %v206 = vld [vmem:[%s165 + $0xd8] sm:$0xff]
      %v207 = vld [vmem:[%s165 + $0xe0] sm:$0xff]
      %v208 = vld [vmem:[%s165 + $0xe8] sm:$0xff]
      %v209 = vld [vmem:[%s165 + $0xf0] sm:$0xff]
      %v210 = vld [vmem:[%s165 + $0xf8] sm:$0xff]
      %v211 = vld [vmem:[%s165 + $0x100] sm:$0xff]
      %v212 = vld [vmem:[%s165 + $0x108] sm:$0xff]
      %v213 = vld [vmem:[%s165 + $0x110] sm:$0xff]
      %v214 = vld [vmem:[%s165 + $0x118] sm:$0xff]
      %v215 = vld [vmem:[%s165 + $0x120] sm:$0xff]
      %v216 = vld [vmem:[%s165 + $0x128] sm:$0xff]
      %v217 = vld [vmem:[%s165 + $0x130] sm:$0xff]
      %v218 = vld [vmem:[%s165 + $0x138] sm:$0xff]
      %v219 = vld [vmem:[%s165 + $0x140] sm:$0xff]
      %v220 = vld [vmem:[%s165 + $0x148] sm:$0xff]
      %v221 = vld [vmem:[%s165 + $0x150] sm:$0xff]
      %v222 = vld [vmem:[%s165 + $0x158] sm:$0xff]
      %v223 = vld [vmem:[%s165 + $0x160] sm:$0xff]
      %v224 = vld [vmem:[%s165 + $0x168] sm:$0xff]
      %v225 = vld [vmem:[%s165 + $0x170] sm:$0xff]
      %v226 = vld [vmem:[%s165 + $0x178] sm:$0xff]
      %v227 = vld [vmem:[%s165 + $0x180] sm:$0xff]
      %v228 = vld [vmem:[%s165 + $0x188] sm:$0xff]
      %v229 = vld [vmem:[%s165 + $0x190] sm:$0xff]
      %v230 = vld [vmem:[%s165 + $0x198] sm:$0xff]
      %v231 = vld [vmem:[%s165 + $0x1a0] sm:$0xff]
      %v232 = vld [vmem:[%s165 + $0x1a8] sm:$0xff]
      %v233 = vld [vmem:[%s165 + $0x1b0] sm:$0xff]
      %v234 = vld [vmem:[%s165 + $0x1b8] sm:$0xff]
      %v235 = vld [vmem:[%s165 + $0x1c0] sm:$0xff]
      %v236 = vld [vmem:[%s165 + $0x1c8] sm:$0xff]
      %v237 = vld [vmem:[%s165 + $0x1d0] sm:$0xff]
      %v238 = vld [vmem:[%s165 + $0x1d8] sm:$0xff]
      %v239 = vld [vmem:[%s165 + $0x1e0] sm:$0xff]
      %v240 = vld [vmem:[%s165 + $0x1e8] sm:$0xff]
      %v241 = vld [vmem:[%s165 + $0x1f0] sm:$0xff]
      %v242 = vld [vmem:[%s165 + $0x1f8] sm:$0xff]
      %v243 = vld [vmem:[%s165 + $0x200] sm:$0xff]
      %v244 = vld [vmem:[%s165 + $0x208] sm:$0xff]
      %v245 = vld [vmem:[%s165 + $0x210] sm:$0xff]
      %v246 = vld [vmem:[%s165 + $0x218] sm:$0xff]
      %v247 = vld [vmem:[%s165 + $0x220] sm:$0xff]
      %v248 = vld [vmem:[%s165 + $0x228] sm:$0xff]
      %v249 = vld [vmem:[%s165 + $0x230] sm:$0xff]
      %v250 = vld [vmem:[%s165 + $0x238] sm:$0xff]
      %v251 = vld [vmem:[%s165 + $0x240] sm:$0xff]
      %v252 = vld [vmem:[%s165 + $0x248] sm:$0xff]
      %v253 = vld [vmem:[%s165 + $0x250] sm:$0xff]
      %v254 = vld [vmem:[%s165 + $0x258] sm:$0xff]
      %v255 = vld [vmem:[%s165 + $0x260] sm:$0xff]
      %v256 = vld [vmem:[%s165 + $0x268] sm:$0xff]
      %v257 = vld [vmem:[%s165 + $0x270] sm:$0xff]
      %v258 = vld [vmem:[%s165 + $0x278] sm:$0xff]
      %v259 = vld [vmem:[%s165 + $0x280] sm:$0xff]
      %v260 = vld [vmem:[%s165 + $0x288] sm:$0xff]
      %v261 = vld [vmem:[%s165 + $0x290] sm:$0xff]
      %v262 = vld [vmem:[%s165 + $0x298] sm:$0xff]
      %v263 = vld [vmem:[%s165 + $0x2a0] sm:$0xff]
      %v264 = vld [vmem:[%s165 + $0x2a8] sm:$0xff]
      %v265 = vld [vmem:[%s165 + $0x2b0] sm:$0xff]
      %v266 = vld [vmem:[%s165 + $0x2b8] sm:$0xff]
      %v267 = vld [vmem:[%s165 + $0x2c0] sm:$0xff]
      %v268 = vld [vmem:[%s165 + $0x2c8] sm:$0xff]
      %v269 = vld [vmem:[%s165 + $0x2d0] sm:$0xff]
      %v270 = vld [vmem:[%s165 + $0x2d8] sm:$0xff]
      %v271 = vld [vmem:[%s165 + $0x2e0] sm:$0xff]
      %v272 = vld [vmem:[%s165 + $0x2e8] sm:$0xff]
      %v273 = vld [vmem:[%s165 + $0x2f0] sm:$0xff]
      %v274 = vld [vmem:[%s165 + $0x2f8] sm:$0xff]
      %v275 = vld [vmem:[%s165 + $0x300] sm:$0xff]
      %v276 = vld [vmem:[%s165 + $0x308] sm:$0xff]
      %v277 = vld [vmem:[%s165 + $0x310] sm:$0xff]
      %v278 = vld [vmem:[%s165 + $0x318] sm:$0xff]
      %v279 = vld [vmem:[%s165 + $0x320] sm:$0xff]
      %v280 = vld [vmem:[%s165 + $0x328] sm:$0xff]
      %v281 = vld [vmem:[%s165 + $0x330] sm:$0xff]
      %v282 = vld [vmem:[%s165 + $0x338] sm:$0xff]
      %v283 = vld [vmem:[%s165 + $0x340] sm:$0xff]
      %v284 = vld [vmem:[%s165 + $0x348] sm:$0xff]
      %v285 = vld [vmem:[%s165 + $0x350] sm:$0xff]
      %v286 = vld [vmem:[%s165 + $0x358] sm:$0xff]
      %v287 = vld [vmem:[%s165 + $0x360] sm:$0xff]
      %v288 = vld [vmem:[%s165 + $0x368] sm:$0xff]
      %v289 = vld [vmem:[%s165 + $0x370] sm:$0xff]
      %v290 = vld [vmem:[%s165 + $0x378] sm:$0xff]
      %v291 = vld [vmem:[%s165 + $0x380] sm:$0xff]
      %v292 = vld [vmem:[%s165 + $0x388] sm:$0xff]
      %v293 = vld [vmem:[%s165 + $0x390] sm:$0xff]
      %v294 = vld [vmem:[%s165 + $0x398] sm:$0xff]
      %v295 = vld [vmem:[%s165 + $0x3a0] sm:$0xff]
      %v296 = vld [vmem:[%s165 + $0x3a8] sm:$0xff]
      %v297 = vld [vmem:[%s165 + $0x3b0] sm:$0xff]
      %v298 = vld [vmem:[%s165 + $0x3b8] sm:$0xff]
      %v299 = vld [vmem:[%s165 + $0x3c0] sm:$0xff]
      %v300 = vld [vmem:[%s165 + $0x3c8] sm:$0xff]
      %v301 = vld [vmem:[%s165 + $0x3d0] sm:$0xff]
      %v302 = vld [vmem:[%s165 + $0x3d8] sm:$0xff]
      %v303 = vld [vmem:[%s165 + $0x3e0] sm:$0xff]
      %v304 = vld [vmem:[%s165 + $0x3e8] sm:$0xff]
      %v305 = vld [vmem:[%s165 + $0x3f0] sm:$0xff]
      %v306 = vld [vmem:[%s165 + $0x3f8] sm:$0xff]
      %v307 = vld [vmem:[%s165 + $0x400] sm:$0xff]
      %v308 = vld [vmem:[%s165 + $0x408] sm:$0xff]
      %v309 = vld [vmem:[%s165 + $0x410] sm:$0xff]
      %v310 = vld [vmem:[%s165 + $0x418] sm:$0xff]
      %v311 = vld [vmem:[%s165 + $0x420] sm:$0xff]
      %v312 = vld [vmem:[%s165 + $0x428] sm:$0xff]
      %v313 = vld [vmem:[%s165 + $0x430] sm:$0xff]
      %v314 = vld [vmem:[%s165 + $0x438] sm:$0xff]
      %v315 = vld [vmem:[%s165 + $0x440] sm:$0xff]
      %v316 = vld [vmem:[%s165 + $0x448] sm:$0xff]
      %v317 = vld [vmem:[%s165 + $0x450] sm:$0xff]
      %v318 = vld [vmem:[%s165 + $0x458] sm:$0xff]
      %v319 = vld [vmem:[%s165 + $0x460] sm:$0xff]
      %v320 = vld [vmem:[%s165 + $0x468] sm:$0xff]
      %v321 = vld [vmem:[%s165 + $0x470] sm:$0xff]
      %v322 = vld [vmem:[%s165 + $0x478] sm:$0xff]
      %v323 = vld [vmem:[%s165 + $0x480] sm:$0xff]
      %v324 = vld [vmem:[%s165 + $0x488] sm:$0xff]
      %v325 = vld [vmem:[%s165 + $0x490] sm:$0xff]
      %v326 = vld [vmem:[%s165 + $0x498] sm:$0xff]
      %v327 = vld [vmem:[%s165 + $0x4a0] sm:$0xff]
      %v328 = vld [vmem:[%s165 + $0x4a8] sm:$0xff]
      %v329 = vld [vmem:[%s165 + $0x4b0] sm:$0xff]
      %v330 = vld [vmem:[%s165 + $0x4b8] sm:$0xff]
      %v331 = vld [vmem:[%s165 + $0x4c0] sm:$0xff]
      %v332 = vld [vmem:[%s165 + $0x4c8] sm:$0xff]
      %v333 = vld [vmem:[%s165 + $0x4d0] sm:$0xff]
      %v334 = vld [vmem:[%s165 + $0x4d8] sm:$0xff]
      %v335 = vld [vmem:[%s165 + $0x4e0] sm:$0xff]
      %v336 = vld [vmem:[%s165 + $0x4e8] sm:$0xff]
      %v337 = vld [vmem:[%s165 + $0x4f0] sm:$0xff]
      %v338 = vld [vmem:[%s165 + $0x4f8] sm:$0xff]
      %v339 = vld [vmem:[%s165 + $0x500] sm:$0xff]
      %v340 = vld [vmem:[%s165 + $0x508] sm:$0xff]
      %v341 = vld [vmem:[%s165 + $0x510] sm:$0xff]
      %v342 = vld [vmem:[%s165 + $0x518] sm:$0xff]
      %v343 = vld [vmem:[%s165 + $0x520] sm:$0xff]
      %v344 = vld [vmem:[%s165 + $0x528] sm:$0xff]
      %v345 = vld [vmem:[%s165 + $0x530] sm:$0xff]
      %v346 = vld [vmem:[%s165 + $0x538] sm:$0xff]
      %v347 = vld [vmem:[%s165 + $0x540] sm:$0xff]
      %v348 = vld [vmem:[%s165 + $0x548] sm:$0xff]
      %v349 = vld [vmem:[%s165 + $0x550] sm:$0xff]
      %v350 = vld [vmem:[%s165 + $0x558] sm:$0xff]
      %v351 = vld [vmem:[%s165 + $0x560] sm:$0xff]
      %v352 = vld [vmem:[%s165 + $0x568] sm:$0xff]
      %v353 = vld [vmem:[%s165 + $0x570] sm:$0xff]
      %v354 = vld [vmem:[%s165 + $0x578] sm:$0xff]
      %v355 = vld [vmem:[%s165 + $0x580] sm:$0xff]
      %v356 = vld [vmem:[%s165 + $0x588] sm:$0xff]
      %v357 = vld [vmem:[%s165 + $0x590] sm:$0xff]
      %v358 = vld [vmem:[%s165 + $0x598] sm:$0xff]
      %v359 = vld [vmem:[%s165 + $0x5a0] sm:$0xff]
      %v360 = vld [vmem:[%s165 + $0x5a8] sm:$0xff]
      %v361 = vld [vmem:[%s165 + $0x5b0] sm:$0xff]
      %v362 = vld [vmem:[%s165 + $0x5b8] sm:$0xff]
      %v363 = vld [vmem:[%s165 + $0x5c0] sm:$0xff]
      %v364 = vld [vmem:[%s165 + $0x5c8] sm:$0xff]
      %v365 = vld [vmem:[%s165 + $0x5d0] sm:$0xff]
      %v366 = vld [vmem:[%s165 + $0x5d8] sm:$0xff]
      %v367 = vld [vmem:[%s165 + $0x5e0] sm:$0xff]
      %v368 = vld [vmem:[%s165 + $0x5e8] sm:$0xff]
      %v369 = vld [vmem:[%s165 + $0x5f0] sm:$0xff]
      %v370 = vld [vmem:[%s165 + $0x5f8] sm:$0xff]
      %v371 = vld [vmem:[%s165 + $0x600] sm:$0xff]
      %v372 = vld [vmem:[%s165 + $0x608] sm:$0xff]
      %v373 = vld [vmem:[%s165 + $0x610] sm:$0xff]
      %v374 = vld [vmem:[%s165 + $0x618] sm:$0xff]
      %v375 = vld [vmem:[%s165 + $0x620] sm:$0xff]
      %v376 = vld [vmem:[%s165 + $0x628] sm:$0xff]
      %v377 = vld [vmem:[%s165 + $0x630] sm:$0xff]
      %v378 = vld [vmem:[%s165 + $0x638] sm:$0xff]
      %v379 = vld [vmem:[%s165 + $0x640] sm:$0xff]
      %v380 = vld [vmem:[%s165 + $0x648] sm:$0xff]
      %v381 = vld [vmem:[%s165 + $0x650] sm:$0xff]
      %v382 = vld [vmem:[%s165 + $0x658] sm:$0xff]
      %v383 = vld [vmem:[%s165 + $0x660] sm:$0xff]
      %v384 = vld [vmem:[%s165 + $0x668] sm:$0xff]
      %v385 = vld [vmem:[%s165 + $0x670] sm:$0xff]
      %v386 = vld [vmem:[%s165 + $0x678] sm:$0xff]
      %v387 = vld [vmem:[%s165 + $0x680] sm:$0xff]
      %v388 = vld [vmem:[%s165 + $0x688] sm:$0xff]
      %v389 = vld [vmem:[%s165 + $0x690] sm:$0xff]
      %v390 = vld [vmem:[%s165 + $0x698] sm:$0xff]
      %v391 = vld [vmem:[%s165 + $0x6a0] sm:$0xff]
      %v392 = vld [vmem:[%s165 + $0x6a8] sm:$0xff]
      %v393 = vld [vmem:[%s165 + $0x6b0] sm:$0xff]
      %v394 = vld [vmem:[%s165 + $0x6b8] sm:$0xff]
      %v395 = vld [vmem:[%s165 + $0x6c0] sm:$0xff]
      %v396 = vld [vmem:[%s165 + $0x6c8] sm:$0xff]
      %v397 = vld [vmem:[%s165 + $0x6d0] sm:$0xff]
      %v398 = vld [vmem:[%s165 + $0x6d8] sm:$0xff]
      %v399 = vld [vmem:[%s165 + $0x6e0] sm:$0xff]
      %v400 = vld [vmem:[%s165 + $0x6e8] sm:$0xff]
      %v401 = vld [vmem:[%s165 + $0x6f0] sm:$0xff]
      %v402 = vld [vmem:[%s165 + $0x6f8] sm:$0xff]
      %v403 = vld [vmem:[%s165 + $0x700] sm:$0xff]
      %v404 = vld [vmem:[%s165 + $0x708] sm:$0xff]
      %v405 = vld [vmem:[%s165 + $0x710] sm:$0xff]
      %v406 = vld [vmem:[%s165 + $0x718] sm:$0xff]
      %v407 = vld [vmem:[%s165 + $0x720] sm:$0xff]
      %v408 = vld [vmem:[%s165 + $0x728] sm:$0xff]
      %v409 = vld [vmem:[%s165 + $0x730] sm:$0xff]
      %v410 = vld [vmem:[%s165 + $0x738] sm:$0xff]
      %v411 = vld [vmem:[%s165 + $0x740] sm:$0xff]
      %v412 = vld [vmem:[%s165 + $0x748] sm:$0xff]
      %v413 = vld [vmem:[%s165 + $0x750] sm:$0xff]
      %v414 = vld [vmem:[%s165 + $0x758] sm:$0xff]
      %v415 = vld [vmem:[%s165 + $0x760] sm:$0xff]
      %v416 = vld [vmem:[%s165 + $0x768] sm:$0xff]
      %v417 = vld [vmem:[%s165 + $0x770] sm:$0xff]
      %v418 = vld [vmem:[%s165 + $0x778] sm:$0xff]
      %v419 = vld [vmem:[%s165 + $0x780] sm:$0xff]
      %v420 = vld [vmem:[%s165 + $0x788] sm:$0xff]
      %v421 = vld [vmem:[%s165 + $0x790] sm:$0xff]
      %v422 = vld [vmem:[%s165 + $0x798] sm:$0xff]
      %v423 = vld [vmem:[%s165 + $0x7a0] sm:$0xff]
      %v424 = vld [vmem:[%s165 + $0x7a8] sm:$0xff]
      %v425 = vld [vmem:[%s165 + $0x7b0] sm:$0xff]
      %v426 = vld [vmem:[%s165 + $0x7b8] sm:$0xff]
      %v427 = vld [vmem:[%s165 + $0x7c0] sm:$0xff]
      %v428 = vld [vmem:[%s165 + $0x7c8] sm:$0xff]
      %v429 = vld [vmem:[%s165 + $0x7d0] sm:$0xff]
      %v430 = vld [vmem:[%s165 + $0x7d8] sm:$0xff]
      %v431 = vld [vmem:[%s165 + $0x7e0] sm:$0xff]
      %v432 = vld [vmem:[%s165 + $0x7e8] sm:$0xff]
      %v433 = vld [vmem:[%s165 + $0x7f0] sm:$0xff]
      %v434 = vld [vmem:[%s165 + $0x7f8] sm:$0xff]
      %v435 = vld [vmem:[%s165 + $0x800] sm:$0xff]
      %v436 = vld [vmem:[%s165 + $0x808] sm:$0xff]
      %v437 = vld [vmem:[%s165 + $0x810] sm:$0xff]
      %v438 = vld [vmem:[%s165 + $0x818] sm:$0xff]
      %v439 = vld [vmem:[%s165 + $0x820] sm:$0xff]
      %v440 = vld [vmem:[%s165 + $0x828] sm:$0xff]
      %v441 = vld [vmem:[%s165 + $0x830] sm:$0xff]
      %v442 = vld [vmem:[%s165 + $0x838] sm:$0xff]
      %v443 = vld [vmem:[%s165 + $0x840] sm:$0xff]
      %v444 = vld [vmem:[%s165 + $0x848] sm:$0xff]
      %v445 = vld [vmem:[%s165 + $0x850] sm:$0xff]
      %v446 = vld [vmem:[%s165 + $0x858] sm:$0xff]
      %v447 = vld [vmem:[%s165 + $0x860] sm:$0xff]
      %v448 = vld [vmem:[%s165 + $0x868] sm:$0xff]
      %v449 = vld [vmem:[%s165 + $0x870] sm:$0xff]
      %v450 = vld [vmem:[%s165 + $0x878] sm:$0xff]
      %v451 = vld [vmem:[%s165 + $0x880] sm:$0xff]
      %v452 = vld [vmem:[%s165 + $0x888] sm:$0xff]
      %v453 = vld [vmem:[%s165 + $0x890] sm:$0xff]
      %v454 = vld [vmem:[%s165 + $0x898] sm:$0xff]
      %v455 = vld [vmem:[%s165 + $0x8a0] sm:$0xff]
      %v456 = vld [vmem:[%s165 + $0x8a8] sm:$0xff]
      %v457 = vld [vmem:[%s165 + $0x8b0] sm:$0xff]
      %v458 = vld [vmem:[%s165 + $0x8b8] sm:$0xff]
      %v459 = vld [vmem:[%s165 + $0x8c0] sm:$0xff]
      %v460 = vld [vmem:[%s165 + $0x8c8] sm:$0xff]
      %v461 = vld [vmem:[%s165 + $0x8d0] sm:$0xff]
      %v462 = vld [vmem:[%s165 + $0x8d8] sm:$0xff]
      %v463 = vld [vmem:[%s165 + $0x8e0] sm:$0xff]
      %v464 = vld [vmem:[%s165 + $0x8e8] sm:$0xff]
      %v465 = vld [vmem:[%s165 + $0x8f0] sm:$0xff]
      %v466 = vld [vmem:[%s165 + $0x8f8] sm:$0xff]
      %v467 = vld [vmem:[%s165 + $0x900] sm:$0xff]
      %v468 = vld [vmem:[%s165 + $0x908] sm:$0xff]
      %v469 = vld [vmem:[%s165 + $0x910] sm:$0xff]
      %v470 = vld [vmem:[%s165 + $0x918] sm:$0xff]
      %v471 = vld [vmem:[%s165 + $0x920] sm:$0xff]
      %v472 = vld [vmem:[%s165 + $0x928] sm:$0xff]
      %v473 = vld [vmem:[%s165 + $0x930] sm:$0xff]
      %v474 = vld [vmem:[%s165 + $0x938] sm:$0xff]
      %v475 = vld [vmem:[%s165 + $0x940] sm:$0xff]
      %v476 = vld [vmem:[%s165 + $0x948] sm:$0xff]
      %v477 = vld [vmem:[%s165 + $0x950] sm:$0xff]
      %v478 = vld [vmem:[%s165 + $0x958] sm:$0xff]
      %v479 = vld [vmem:[%s165 + $0x960] sm:$0xff]
      %v480 = vld [vmem:[%s165 + $0x968] sm:$0xff]
      %v481 = vld [vmem:[%s165 + $0x970] sm:$0xff]
      %v482 = vld [vmem:[%s165 + $0x978] sm:$0xff]
      %v483 = vld [vmem:[%s165 + $0x980] sm:$0xff]
      %v484 = vld [vmem:[%s165 + $0x988] sm:$0xff]
      %v485 = vld [vmem:[%s165 + $0x990] sm:$0xff]
      %v486 = vld [vmem:[%s165 + $0x998] sm:$0xff]
      %v487 = vld [vmem:[%s165 + $0x9a0] sm:$0xff]
      %v488 = vld [vmem:[%s165 + $0x9a8] sm:$0xff]
      %v489 = vld [vmem:[%s165 + $0x9b0] sm:$0xff]
      %v490 = vld [vmem:[%s165 + $0x9b8] sm:$0xff]
      %v491 = vld [vmem:[%s165 + $0x9c0] sm:$0xff]
      %v492 = vld [vmem:[%s165 + $0x9c8] sm:$0xff]
      %v493 = vld [vmem:[%s165 + $0x9d0] sm:$0xff]
      %v494 = vld [vmem:[%s165 + $0x9d8] sm:$0xff]
      %v495 = vld [vmem:[%s165 + $0x9e0] sm:$0xff]
      %v496 = vld [vmem:[%s165 + $0x9e8] sm:$0xff]
      %v497 = vld [vmem:[%s165 + $0x9f0] sm:$0xff]
      %v498 = vld [vmem:[%s165 + $0x9f8] sm:$0xff]
      %v499 = vld [vmem:[%s165 + $0xa00] sm:$0xff]
      %v500 = vld [vmem:[%s165 + $0xa08] sm:$0xff]
      %v501 = vld [vmem:[%s165 + $0xa10] sm:$0xff]
      %v502 = vld [vmem:[%s165 + $0xa18] sm:$0xff]
      %v503 = vld [vmem:[%s165 + $0xa20] sm:$0xff]
      %v504 = vld [vmem:[%s165 + $0xa28] sm:$0xff]
      %v505 = vld [vmem:[%s165 + $0xa30] sm:$0xff]
      %v506 = vld [vmem:[%s165 + $0xa38] sm:$0xff]
      %v507 = vld [vmem:[%s165 + $0xa40] sm:$0xff]
      %v508 = vld [vmem:[%s165 + $0xa48] sm:$0xff]
      %v509 = vld [vmem:[%s165 + $0xa50] sm:$0xff]
      %v510 = vld [vmem:[%s165 + $0xa58] sm:$0xff]
      %v511 = vld [vmem:[%s165 + $0xa60] sm:$0xff]
      %v512 = vld [vmem:[%s165 + $0xa68] sm:$0xff]
      %v513 = vld [vmem:[%s165 + $0xa70] sm:$0xff]
      %v514 = vld [vmem:[%s165 + $0xa78] sm:$0xff]
      %v515 = vld [vmem:[%s165 + $0xa80] sm:$0xff]
      %v516 = vld [vmem:[%s165 + $0xa88] sm:$0xff]
      %v517 = vld [vmem:[%s165 + $0xa90] sm:$0xff]
      %v518 = vld [vmem:[%s165 + $0xa98] sm:$0xff]
      %v519 = vld [vmem:[%s165 + $0xaa0] sm:$0xff]
      %v520 = vld [vmem:[%s165 + $0xaa8] sm:$0xff]
      %v521 = vld [vmem:[%s165 + $0xab0] sm:$0xff]
      %v522 = vld [vmem:[%s165 + $0xab8] sm:$0xff]
      %v523 = vld [vmem:[%s165 + $0xac0] sm:$0xff]
      %v524 = vld [vmem:[%s165 + $0xac8] sm:$0xff]
      %v525 = vld [vmem:[%s165 + $0xad0] sm:$0xff]
      %v526 = vld [vmem:[%s165 + $0xad8] sm:$0xff]
      %v527 = vld [vmem:[%s165 + $0xae0] sm:$0xff]
      %v528 = vld [vmem:[%s165 + $0xae8] sm:$0xff]
      %v529 = vld [vmem:[%s165 + $0xaf0] sm:$0xff]
      %v530 = vld [vmem:[%s165 + $0xaf8] sm:$0xff]
      %v531 = vld [vmem:[%s165 + $0xb00] sm:$0xff]
      %v532 = vld [vmem:[%s165 + $0xb08] sm:$0xff]
      %v533 = vld [vmem:[%s165 + $0xb10] sm:$0xff]
      %v534 = vld [vmem:[%s165 + $0xb18] sm:$0xff]
      %v535 = vld [vmem:[%s165 + $0xb20] sm:$0xff]
      %v536 = vld [vmem:[%s165 + $0xb28] sm:$0xff]
      %v537 = vld [vmem:[%s165 + $0xb30] sm:$0xff]
      %v538 = vld [vmem:[%s165 + $0xb38] sm:$0xff]
      %v539 = vld [vmem:[%s165 + $0xb40] sm:$0xff]
      %v540 = vld [vmem:[%s165 + $0xb48] sm:$0xff]
      %v541 = vld [vmem:[%s165 + $0xb50] sm:$0xff]
      %v542 = vld [vmem:[%s165 + $0xb58] sm:$0xff]
      %v543 = vld [vmem:[%s165 + $0xb60] sm:$0xff]
      %v544 = vld [vmem:[%s165 + $0xb68] sm:$0xff]
      %v545 = vld [vmem:[%s165 + $0xb70] sm:$0xff]
      %v546 = vld [vmem:[%s165 + $0xb78] sm:$0xff]
      %v547 = vld [vmem:[%s165 + $0xb80] sm:$0xff]
      %v548 = vld [vmem:[%s165 + $0xb88] sm:$0xff]
      %v549 = vld [vmem:[%s165 + $0xb90] sm:$0xff]
      %v550 = vld [vmem:[%s165 + $0xb98] sm:$0xff]
      %v551 = vld [vmem:[%s165 + $0xba0] sm:$0xff]
      %v552 = vld [vmem:[%s165 + $0xba8] sm:$0xff]
      %v553 = vld [vmem:[%s165 + $0xbb0] sm:$0xff]
      %v554 = vld [vmem:[%s165 + $0xbb8] sm:$0xff]
      %v555 = vld [vmem:[%s165 + $0xbc0] sm:$0xff]
      %v556 = vld [vmem:[%s165 + $0xbc8] sm:$0xff]
      %v557 = vld [vmem:[%s165 + $0xbd0] sm:$0xff]
      %v558 = vld [vmem:[%s165 + $0xbd8] sm:$0xff]
      %v559 = vld [vmem:[%s165 + $0xbe0] sm:$0xff]
      %v560 = vld [vmem:[%s165 + $0xbe8] sm:$0xff]
      %v561 = vld [vmem:[%s165 + $0xbf0] sm:$0xff]
      %v562 = vld [vmem:[%s165 + $0xbf8] sm:$0xff]
      %v563 = vld [vmem:[%s165 + $0xc00] sm:$0xff]
      %v564 = vld [vmem:[%s165 + $0xc08] sm:$0xff]
      %v565 = vld [vmem:[%s165 + $0xc10] sm:$0xff]
      %v566 = vld [vmem:[%s165 + $0xc18] sm:$0xff]
      %v567 = vld [vmem:[%s165 + $0xc20] sm:$0xff]
      %v568 = vld [vmem:[%s165 + $0xc28] sm:$0xff]
      %v569 = vld [vmem:[%s165 + $0xc30] sm:$0xff]
      %v570 = vld [vmem:[%s165 + $0xc38] sm:$0xff]
      %v571 = vld [vmem:[%s165 + $0xc40] sm:$0xff]
      %v572 = vld [vmem:[%s165 + $0xc48] sm:$0xff]
      %v573 = vld [vmem:[%s165 + $0xc50] sm:$0xff]
      %v574 = vld [vmem:[%s165 + $0xc58] sm:$0xff]
      %v575 = vld [vmem:[%s165 + $0xc60] sm:$0xff]
      %v576 = vld [vmem:[%s165 + $0xc68] sm:$0xff]
      %v577 = vld [vmem:[%s165 + $0xc70] sm:$0xff]
      %v578 = vld [vmem:[%s165 + $0xc78] sm:$0xff]
      %v579 = vld [vmem:[%s165 + $0xc80] sm:$0xff]
      %v580 = vld [vmem:[%s165 + $0xc88] sm:$0xff]
      %v581 = vld [vmem:[%s165 + $0xc90] sm:$0xff]
      %v582 = vld [vmem:[%s165 + $0xc98] sm:$0xff]
      %v583 = vld [vmem:[%s165 + $0xca0] sm:$0xff]
      %v584 = vld [vmem:[%s165 + $0xca8] sm:$0xff]
      %v585 = vld [vmem:[%s165 + $0xcb0] sm:$0xff]
      %v586 = vld [vmem:[%s165 + $0xcb8] sm:$0xff]
      %v587 = vld [vmem:[%s165 + $0xcc0] sm:$0xff]
      %v588 = vld [vmem:[%s165 + $0xcc8] sm:$0xff]
      %v589 = vld [vmem:[%s165 + $0xcd0] sm:$0xff]
      %v590 = vld [vmem:[%s165 + $0xcd8] sm:$0xff]
      %v591 = vld [vmem:[%s165 + $0xce0] sm:$0xff]
      %v592 = vld [vmem:[%s165 + $0xce8] sm:$0xff]
      %v593 = vld [vmem:[%s165 + $0xcf0] sm:$0xff]
      %v594 = vld [vmem:[%s165 + $0xcf8] sm:$0xff]
      %v595 = vld [vmem:[%s165 + $0xd00] sm:$0xff]
      %v596 = vld [vmem:[%s165 + $0xd08] sm:$0xff]
      %v597 = vld [vmem:[%s165 + $0xd10] sm:$0xff]
      %v598 = vld [vmem:[%s165 + $0xd18] sm:$0xff]
      %v599 = vld [vmem:[%s165 + $0xd20] sm:$0xff]
      %v600 = vld [vmem:[%s165 + $0xd28] sm:$0xff]
      %v601 = vld [vmem:[%s165 + $0xd30] sm:$0xff]
      %v602 = vld [vmem:[%s165 + $0xd38] sm:$0xff]
      %v603 = vld [vmem:[%s165 + $0xd40] sm:$0xff]
      %v604 = vld [vmem:[%s165 + $0xd48] sm:$0xff]
      %v605 = vld [vmem:[%s165 + $0xd50] sm:$0xff]
      %v606 = vld [vmem:[%s165 + $0xd58] sm:$0xff]
      %v607 = vld [vmem:[%s165 + $0xd60] sm:$0xff]
      %v608 = vld [vmem:[%s165 + $0xd68] sm:$0xff]
      %v609 = vld [vmem:[%s165 + $0xd70] sm:$0xff]
      %v610 = vld [vmem:[%s165 + $0xd78] sm:$0xff]
      %v611 = vld [vmem:[%s165 + $0xd80] sm:$0xff]
      %v612 = vld [vmem:[%s165 + $0xd88] sm:$0xff]
      %v613 = vld [vmem:[%s165 + $0xd90] sm:$0xff]
      %v614 = vld [vmem:[%s165 + $0xd98] sm:$0xff]
      %v615 = vld [vmem:[%s165 + $0xda0] sm:$0xff]
      %v616 = vld [vmem:[%s165 + $0xda8] sm:$0xff]
      %v617 = vld [vmem:[%s165 + $0xdb0] sm:$0xff]
      %v618 = vld [vmem:[%s165 + $0xdb8] sm:$0xff]
      %v619 = vld [vmem:[%s165 + $0xdc0] sm:$0xff]
      %v620 = vld [vmem:[%s165 + $0xdc8] sm:$0xff]
      %v621 = vld [vmem:[%s165 + $0xdd0] sm:$0xff]
      %v622 = vld [vmem:[%s165 + $0xdd8] sm:$0xff]
      %v623 = vld [vmem:[%s165 + $0xde0] sm:$0xff]
      %v624 = vld [vmem:[%s165 + $0xde8] sm:$0xff]
      %v625 = vld [vmem:[%s165 + $0xdf0] sm:$0xff]
      %v626 = vld [vmem:[%s165 + $0xdf8] sm:$0xff]
      %v627 = vld [vmem:[%s165 + $0xe00] sm:$0xff]
      %v628 = vld [vmem:[%s165 + $0xe08] sm:$0xff]
      %v629 = vld [vmem:[%s165 + $0xe10] sm:$0xff]
      %v630 = vld [vmem:[%s165 + $0xe18] sm:$0xff]
      %v631 = vld [vmem:[%s165 + $0xe20] sm:$0xff]
      %v632 = vld [vmem:[%s165 + $0xe28] sm:$0xff]
      %v633 = vld [vmem:[%s165 + $0xe30] sm:$0xff]
      %v634 = vld [vmem:[%s165 + $0xe38] sm:$0xff]
      %v635 = vld [vmem:[%s165 + $0xe40] sm:$0xff]
      %v636 = vld [vmem:[%s165 + $0xe48] sm:$0xff]
      %v637 = vld [vmem:[%s165 + $0xe50] sm:$0xff]
      %v638 = vld [vmem:[%s165 + $0xe58] sm:$0xff]
      %v639 = vld [vmem:[%s165 + $0xe60] sm:$0xff]
      %v640 = vld [vmem:[%s165 + $0xe68] sm:$0xff]
      %v641 = vld [vmem:[%s165 + $0xe70] sm:$0xff]
      %v642 = vld [vmem:[%s165 + $0xe78] sm:$0xff]
      %v643 = vld [vmem:[%s165 + $0xe80] sm:$0xff]
      %v644 = vld [vmem:[%s165 + $0xe88] sm:$0xff]
      %v645 = vld [vmem:[%s165 + $0xe90] sm:$0xff]
      %v646 = vld [vmem:[%s165 + $0xe98] sm:$0xff]
      %v647 = vld [vmem:[%s165 + $0xea0] sm:$0xff]
      %v648 = vld [vmem:[%s165 + $0xea8] sm:$0xff]
      %v649 = vld [vmem:[%s165 + $0xeb0] sm:$0xff]
      %v650 = vld [vmem:[%s165 + $0xeb8] sm:$0xff]
      %v651 = vld [vmem:[%s165 + $0xec0] sm:$0xff]
      %v652 = vld [vmem:[%s165 + $0xec8] sm:$0xff]
      %v653 = vld [vmem:[%s165 + $0xed0] sm:$0xff]
      %v654 = vld [vmem:[%s165 + $0xed8] sm:$0xff]
      %v655 = vld [vmem:[%s165 + $0xee0] sm:$0xff]
      %v656 = vld [vmem:[%s165 + $0xee8] sm:$0xff]
      %v657 = vld [vmem:[%s165 + $0xef0] sm:$0xff]
      %v658 = vld [vmem:[%s165 + $0xef8] sm:$0xff]
      %v659 = vld [vmem:[%s165 + $0xf00] sm:$0xff]
      %v660 = vld [vmem:[%s165 + $0xf08] sm:$0xff]
      %v661 = vld [vmem:[%s165 + $0xf10] sm:$0xff]
      %v662 = vld [vmem:[%s165 + $0xf18] sm:$0xff]
      %v663 = vld [vmem:[%s165 + $0xf20] sm:$0xff]
      %v664 = vld [vmem:[%s165 + $0xf28] sm:$0xff]
      %v665 = vld [vmem:[%s165 + $0xf30] sm:$0xff]
      %v666 = vld [vmem:[%s165 + $0xf38] sm:$0xff]
      %v667 = vld [vmem:[%s165 + $0xf40] sm:$0xff]
      %v668 = vld [vmem:[%s165 + $0xf48] sm:$0xff]
      %v669 = vld [vmem:[%s165 + $0xf50] sm:$0xff]
      %v670 = vld [vmem:[%s165 + $0xf58] sm:$0xff]
      %v671 = vld [vmem:[%s165 + $0xf60] sm:$0xff]
      %v672 = vld [vmem:[%s165 + $0xf68] sm:$0xff]
      %v673 = vld [vmem:[%s165 + $0xf70] sm:$0xff]
      %v674 = vld [vmem:[%s165 + $0xf78] sm:$0xff]
      %v675 = vld [vmem:[%s165 + $0xf80] sm:$0xff]
      %v676 = vld [vmem:[%s165 + $0xf88] sm:$0xff]
      %v677 = vld [vmem:[%s165 + $0xf90] sm:$0xff]
      %v678 = vld [vmem:[%s165 + $0xf98] sm:$0xff]
      %v679 = vld [vmem:[%s165 + $0xfa0] sm:$0xff]
      %v680 = vld [vmem:[%s165 + $0xfa8] sm:$0xff]
      %v681 = vld [vmem:[%s165 + $0xfb0] sm:$0xff]
      %v682 = vld [vmem:[%s165 + $0xfb8] sm:$0xff]
      %v683 = vld [vmem:[%s165 + $0xfc0] sm:$0xff]
      %v684 = vld [vmem:[%s165 + $0xfc8] sm:$0xff]
      %v685 = vld [vmem:[%s165 + $0xfd0] sm:$0xff]
      %v686 = vld [vmem:[%s165 + $0xfd8] sm:$0xff]
      %v687 = vld [vmem:[%s165 + $0xfe0] sm:$0xff]
      %v688 = vld [vmem:[%s165 + $0xfe8] sm:$0xff]
      %v689 = vld [vmem:[%s165 + $0xff0] sm:$0xff]
      %v690 = vld [vmem:[%s165 + $0xff8] sm:$0xff]
      %v691 = vld [vmem:[%s165 + $0x1000] sm:$0xff]
      %v692 = vld [vmem:[%s165 + $0x1008] sm:$0xff]
      %v693 = vld [vmem:[%s165 + $0x1010] sm:$0xff]
      %v694 = vld [vmem:[%s165 + $0x1018] sm:$0xff]
      %v695 = vld [vmem:[%s165 + $0x1020] sm:$0xff]
      %v696 = vld [vmem:[%s165 + $0x1028] sm:$0xff]
      %v697 = vld [vmem:[%s165 + $0x1030] sm:$0xff]
      %v698 = vld [vmem:[%s165 + $0x1038] sm:$0xff]
      %v699 = vld [vmem:[%s165 + $0x1040] sm:$0xff]
      %v700 = vld [vmem:[%s165 + $0x1048] sm:$0xff]
      %v701 = vld [vmem:[%s165 + $0x1050] sm:$0xff]
      %v702 = vld [vmem:[%s165 + $0x1058] sm:$0xff]
      %v703 = vld [vmem:[%s165 + $0x1060] sm:$0xff]
      %v704 = vld [vmem:[%s165 + $0x1068] sm:$0xff]
      %v705 = vld [vmem:[%s165 + $0x1070] sm:$0xff]
      %v706 = vld [vmem:[%s165 + $0x1078] sm:$0xff]
      %v707 = vld [vmem:[%s165 + $0x1080] sm:$0xff]
      %v708 = vld [vmem:[%s165 + $0x1088] sm:$0xff]
      %v709 = vld [vmem:[%s165 + $0x1090] sm:$0xff]
      %v710 = vld [vmem:[%s165 + $0x1098] sm:$0xff]
      %v711 = vld [vmem:[%s165 + $0x10a0] sm:$0xff]
      %v712 = vld [vmem:[%s165 + $0x10a8] sm:$0xff]
      %v713 = vld [vmem:[%s165 + $0x10b0] sm:$0xff]
      %v714 = vld [vmem:[%s165 + $0x10b8] sm:$0xff]
      %v715 = vld [vmem:[%s165 + $0x10c0] sm:$0xff]
      %v716 = vld [vmem:[%s165 + $0x10c8] sm:$0xff]
      %v717 = vld [vmem:[%s165 + $0x10d0] sm:$0xff]
      %v718 = vld [vmem:[%s165 + $0x10d8] sm:$0xff]
      %v719 = vld [vmem:[%s165 + $0x10e0] sm:$0xff]
      %v720 = vld [vmem:[%s165 + $0x10e8] sm:$0xff]
      %v721 = vld [vmem:[%s165 + $0x10f0] sm:$0xff]
      %v722 = vld [vmem:[%s165 + $0x10f8] sm:$0xff]
      %v723 = vld [vmem:[%s165 + $0x1100] sm:$0xff]
      %v724 = vld [vmem:[%s165 + $0x1108] sm:$0xff]
      %v725 = vld [vmem:[%s165 + $0x1110] sm:$0xff]
      %v726 = vld [vmem:[%s165 + $0x1118] sm:$0xff]
      %v727 = vld [vmem:[%s165 + $0x1120] sm:$0xff]
      %v728 = vld [vmem:[%s165 + $0x1128] sm:$0xff]
      %v729 = vld [vmem:[%s165 + $0x1130] sm:$0xff]
      %v730 = vld [vmem:[%s165 + $0x1138] sm:$0xff]
      %v731 = vld [vmem:[%s165 + $0x1140] sm:$0xff]
      %v732 = vld [vmem:[%s165 + $0x1148] sm:$0xff]
      %v733 = vld [vmem:[%s165 + $0x1150] sm:$0xff]
      %v734 = vld [vmem:[%s165 + $0x1158] sm:$0xff]
      %v735 = vld [vmem:[%s165 + $0x1160] sm:$0xff]
      %v736 = vld [vmem:[%s165 + $0x1168] sm:$0xff]
      %v737 = vld [vmem:[%s165 + $0x1170] sm:$0xff]
      %v738 = vld [vmem:[%s165 + $0x1178] sm:$0xff]
      %v739 = vld [vmem:[%s165 + $0x1180] sm:$0xff]
      %v740 = vld [vmem:[%s165 + $0x1188] sm:$0xff]
      %v741 = vld [vmem:[%s165 + $0x1190] sm:$0xff]
      %v742 = vld [vmem:[%s165 + $0x1198] sm:$0xff]
      %v743 = vld [vmem:[%s165 + $0x11a0] sm:$0xff]
      %v744 = vld [vmem:[%s165 + $0x11a8] sm:$0xff]
      %v745 = vld [vmem:[%s165 + $0x11b0] sm:$0xff]
      %v746 = vld [vmem:[%s165 + $0x11b8] sm:$0xff]
      %v747 = vld [vmem:[%s165 + $0x11c0] sm:$0xff]
      %v748 = vld [vmem:[%s165 + $0x11c8] sm:$0xff]
      %v749 = vld [vmem:[%s165 + $0x11d0] sm:$0xff]
      %v750 = vld [vmem:[%s165 + $0x11d8] sm:$0xff]
      %v751 = vld [vmem:[%s165 + $0x11e0] sm:$0xff]
      %v752 = vld [vmem:[%s165 + $0x11e8] sm:$0xff]
      %v753 = vld [vmem:[%s165 + $0x11f0] sm:$0xff]
      %v754 = vld [vmem:[%s165 + $0x11f8] sm:$0xff]
      %v755 = vld [vmem:[%s165 + $0x1200] sm:$0xff]
      %v756 = vld [vmem:[%s165 + $0x1208] sm:$0xff]
      %v757 = vld [vmem:[%s165 + $0x1210] sm:$0xff]
      %v758 = vld [vmem:[%s165 + $0x1218] sm:$0xff]
      %v759 = vld [vmem:[%s165 + $0x1220] sm:$0xff]
      %v760 = vld [vmem:[%s165 + $0x1228] sm:$0xff]
      %v761 = vld [vmem:[%s165 + $0x1230] sm:$0xff]
      %v762 = vld [vmem:[%s165 + $0x1238] sm:$0xff]
      %v763 = vld [vmem:[%s165 + $0x1240] sm:$0xff]
      %v764 = vld [vmem:[%s165 + $0x1248] sm:$0xff]
      %v765 = vld [vmem:[%s165 + $0x1250] sm:$0xff]
      %v766 = vld [vmem:[%s165 + $0x1258] sm:$0xff]
      %v767 = vld [vmem:[%s165 + $0x1260] sm:$0xff]
      %v768 = vld [vmem:[%s165 + $0x1268] sm:$0xff]
      %v769 = vld [vmem:[%s165 + $0x1270] sm:$0xff]
      %v770 = vld [vmem:[%s165 + $0x1278] sm:$0xff]
      %v771 = vld [vmem:[%s165 + $0x1280] sm:$0xff]
      %v772 = vld [vmem:[%s165 + $0x1288] sm:$0xff]
      %v773 = vld [vmem:[%s165 + $0x1290] sm:$0xff]
      %v774 = vld [vmem:[%s165 + $0x1298] sm:$0xff]
      %v775 = vld [vmem:[%s165 + $0x12a0] sm:$0xff]
      %v776 = vld [vmem:[%s165 + $0x12a8] sm:$0xff]
      %v777 = vld [vmem:[%s165 + $0x12b0] sm:$0xff]
      %v778 = vld [vmem:[%s165 + $0x12b8] sm:$0xff]
      %v779 = vld [vmem:[%s165 + $0x12c0] sm:$0xff]
      %v780 = vld [vmem:[%s165 + $0x12c8] sm:$0xff]
      %v781 = vld [vmem:[%s165 + $0x12d0] sm:$0xff]
      %v782 = vld [vmem:[%s165 + $0x12d8] sm:$0xff]
      %v783 = vld [vmem:[%s165 + $0x12e0] sm:$0xff]
      %v784 = vld [vmem:[%s165 + $0x12e8] sm:$0xff]
      %v785 = vld [vmem:[%s165 + $0x12f0] sm:$0xff]
      %v786 = vld [vmem:[%s165 + $0x12f8] sm:$0xff]
      %v787 = vld [vmem:[%s165 + $0x1300] sm:$0xff]
      %v788 = vld [vmem:[%s165 + $0x1308] sm:$0xff]
      %v789 = vld [vmem:[%s165 + $0x1310] sm:$0xff]
      %v790 = vld [vmem:[%s165 + $0x1318] sm:$0xff]
      %v791 = vld [vmem:[%s165 + $0x1320] sm:$0xff]
      %v792 = vld [vmem:[%s165 + $0x1328] sm:$0xff]
      %v793 = vld [vmem:[%s165 + $0x1330] sm:$0xff]
      %v794 = vld [vmem:[%s165 + $0x1338] sm:$0xff]
      %v795 = vld [vmem:[%s165 + $0x1340] sm:$0xff]
      %v796 = vld [vmem:[%s165 + $0x1348] sm:$0xff]
      %v797 = vld [vmem:[%s165 + $0x1350] sm:$0xff]
      %v798 = vld [vmem:[%s165 + $0x1358] sm:$0xff]
      %v799 = vld [vmem:[%s165 + $0x1360] sm:$0xff]
      %v800 = vld [vmem:[%s165 + $0x1368] sm:$0xff]
      %v801 = vld [vmem:[%s165 + $0x1370] sm:$0xff]
      %v802 = vld [vmem:[%s165 + $0x1378] sm:$0xff]
      %v803 = vld [vmem:[%s165 + $0x1380] sm:$0xff]
      %v804 = vld [vmem:[%s165 + $0x1388] sm:$0xff]
      %v805 = vld [vmem:[%s165 + $0x1390] sm:$0xff]
      %v806 = vld [vmem:[%s165 + $0x1398] sm:$0xff]
      %v807 = vld [vmem:[%s165 + $0x13a0] sm:$0xff]
      %v808 = vld [vmem:[%s165 + $0x13a8] sm:$0xff]
      %v809 = vld [vmem:[%s165 + $0x13b0] sm:$0xff]
      %v810 = vld [vmem:[%s165 + $0x13b8] sm:$0xff]
      %v811 = vld [vmem:[%s165 + $0x13c0] sm:$0xff]
      %v812 = vld [vmem:[%s165 + $0x13c8] sm:$0xff]
      %v813 = vld [vmem:[%s165 + $0x13d0] sm:$0xff]
      %v814 = vld [vmem:[%s165 + $0x13d8] sm:$0xff]
      %v815 = vld [vmem:[%s165 + $0x13e0] sm:$0xff]
      %v816 = vld [vmem:[%s165 + $0x13e8] sm:$0xff]
      %v817 = vld [vmem:[%s165 + $0x13f0] sm:$0xff]
      %v818 = vld [vmem:[%s165 + $0x13f8] sm:$0xff]
      %v819 = vld [vmem:[%s165 + $0x1400] sm:$0xff]
      %v820 = vld [vmem:[%s165 + $0x1408] sm:$0xff]
      %v821 = vld [vmem:[%s165 + $0x1410] sm:$0xff]
      %v822 = vld [vmem:[%s165 + $0x1418] sm:$0xff]
      %v823 = vld [vmem:[%s165 + $0x1420] sm:$0xff]
      %v824 = vld [vmem:[%s165 + $0x1428] sm:$0xff]
      %v825 = vld [vmem:[%s165 + $0x1430] sm:$0xff]
      %v826 = vld [vmem:[%s165 + $0x1438] sm:$0xff]
      %v827 = vld [vmem:[%s165 + $0x1440] sm:$0xff]
      %v828 = vld [vmem:[%s165 + $0x1448] sm:$0xff]
      %v829 = vld [vmem:[%s165 + $0x1450] sm:$0xff]
      %v830 = vld [vmem:[%s165 + $0x1458] sm:$0xff]
      %v831 = vld [vmem:[%s165 + $0x1460] sm:$0xff]
      %v832 = vld [vmem:[%s165 + $0x1468] sm:$0xff]
      %v833 = vld [vmem:[%s165 + $0x1470] sm:$0xff]
      %v834 = vld [vmem:[%s165 + $0x1478] sm:$0xff]
      %v835 = vld [vmem:[%s165 + $0x1480] sm:$0xff]
      %v836 = vld [vmem:[%s165 + $0x1488] sm:$0xff]
      %v837 = vld [vmem:[%s165 + $0x1490] sm:$0xff]
      %v838 = vld [vmem:[%s165 + $0x1498] sm:$0xff]
      %v839 = vld [vmem:[%s165 + $0x14a0] sm:$0xff]
      %v840 = vld [vmem:[%s165 + $0x14a8] sm:$0xff]
      %v841 = vld [vmem:[%s165 + $0x14b0] sm:$0xff]
      %v842 = vld [vmem:[%s165 + $0x14b8] sm:$0xff]
      %v843 = vld [vmem:[%s165 + $0x14c0] sm:$0xff]
      %v844 = vld [vmem:[%s165 + $0x14c8] sm:$0xff]
      %v845 = vld [vmem:[%s165 + $0x14d0] sm:$0xff]
      %v846 = vld [vmem:[%s165 + $0x14d8] sm:$0xff]
      %v847 = vld [vmem:[%s165 + $0x14e0] sm:$0xff]
      %v848 = vld [vmem:[%s165 + $0x14e8] sm:$0xff]
      %v849 = vld [vmem:[%s165 + $0x14f0] sm:$0xff]
      %v850 = vld [vmem:[%s165 + $0x14f8] sm:$0xff]
      %v851 = vld [vmem:[%s165 + $0x1500] sm:$0xff]
      %v852 = vld [vmem:[%s165 + $0x1508] sm:$0xff]
      %v853 = vld [vmem:[%s165 + $0x1510] sm:$0xff]
      %v854 = vld [vmem:[%s165 + $0x1518] sm:$0xff]
      %v855 = vld [vmem:[%s165 + $0x1520] sm:$0xff]
      %v856 = vld [vmem:[%s165 + $0x1528] sm:$0xff]
      %v857 = vld [vmem:[%s165 + $0x1530] sm:$0xff]
      %v858 = vld [vmem:[%s165 + $0x1538] sm:$0xff]
      %v859 = vld [vmem:[%s165 + $0x1540] sm:$0xff]
      %v860 = vld [vmem:[%s165 + $0x1548] sm:$0xff]
      %v861 = vld [vmem:[%s165 + $0x1550] sm:$0xff]
      %v862 = vld [vmem:[%s165 + $0x1558] sm:$0xff]
      %v863 = vld [vmem:[%s165 + $0x1560] sm:$0xff]
      %v864 = vld [vmem:[%s165 + $0x1568] sm:$0xff]
      %v865 = vld [vmem:[%s165 + $0x1570] sm:$0xff]
      %v866 = vld [vmem:[%s165 + $0x1578] sm:$0xff]
      %v867 = vld [vmem:[%s165 + $0x1580] sm:$0xff]
      %v868 = vld [vmem:[%s165 + $0x1588] sm:$0xff]
      %v869 = vld [vmem:[%s165 + $0x1590] sm:$0xff]
      %v870 = vld [vmem:[%s165 + $0x1598] sm:$0xff]
      %v871 = vld [vmem:[%s165 + $0x15a0] sm:$0xff]
      %v872 = vld [vmem:[%s165 + $0x15a8] sm:$0xff]
      %v873 = vld [vmem:[%s165 + $0x15b0] sm:$0xff]
      %v874 = vld [vmem:[%s165 + $0x15b8] sm:$0xff]
      %v875 = vld [vmem:[%s165 + $0x15c0] sm:$0xff]
      %v876 = vld [vmem:[%s165 + $0x15c8] sm:$0xff]
      %v877 = vld [vmem:[%s165 + $0x15d0] sm:$0xff]
      %v878 = vld [vmem:[%s165 + $0x15d8] sm:$0xff]
      %v879 = vld [vmem:[%s165 + $0x15e0] sm:$0xff]
      %v880 = vld [vmem:[%s165 + $0x15e8] sm:$0xff]
      %v881 = vld [vmem:[%s165 + $0x15f0] sm:$0xff]
      %v882 = vld [vmem:[%s165 + $0x15f8] sm:$0xff]
      %v883 = vld [vmem:[%s165 + $0x1600] sm:$0xff]
      %v884 = vld [vmem:[%s165 + $0x1608] sm:$0xff]
      %v885 = vld [vmem:[%s165 + $0x1610] sm:$0xff]
      %v886 = vld [vmem:[%s165 + $0x1618] sm:$0xff]
      %v887 = vld [vmem:[%s165 + $0x1620] sm:$0xff]
      %v888 = vld [vmem:[%s165 + $0x1628] sm:$0xff]
      %v889 = vld [vmem:[%s165 + $0x1630] sm:$0xff]
      %v890 = vld [vmem:[%s165 + $0x1638] sm:$0xff]
      %v891 = vld [vmem:[%s165 + $0x1640] sm:$0xff]
      %v892 = vld [vmem:[%s165 + $0x1648] sm:$0xff]
      %v893 = vld [vmem:[%s165 + $0x1650] sm:$0xff]
      %v894 = vld [vmem:[%s165 + $0x1658] sm:$0xff]
      %v895 = vld [vmem:[%s165 + $0x1660] sm:$0xff]
      %v896 = vld [vmem:[%s165 + $0x1668] sm:$0xff]
      %v897 = vld [vmem:[%s165 + $0x1670] sm:$0xff]
      %v898 = vld [vmem:[%s165 + $0x1678] sm:$0xff]
      %v899 = vld [vmem:[%s165 + $0x1680] sm:$0xff]
      %v900 = vld [vmem:[%s165 + $0x1688] sm:$0xff]
      %v901 = vld [vmem:[%s165 + $0x1690] sm:$0xff]
      %v902 = vld [vmem:[%s165 + $0x1698] sm:$0xff]
      %v903 = vld [vmem:[%s165 + $0x16a0] sm:$0xff]
      %v904 = vld [vmem:[%s165 + $0x16a8] sm:$0xff]
      %v905 = vld [vmem:[%s165 + $0x16b0] sm:$0xff]
      %v906 = vld [vmem:[%s165 + $0x16b8] sm:$0xff]
      %v907 = vld [vmem:[%s165 + $0x16c0] sm:$0xff]
      %v908 = vld [vmem:[%s165 + $0x16c8] sm:$0xff]
      %v909 = vld [vmem:[%s165 + $0x16d0] sm:$0xff]
      %v910 = vld [vmem:[%s165 + $0x16d8] sm:$0xff]
      %v911 = vld [vmem:[%s165 + $0x16e0] sm:$0xff]
      %v912 = vld [vmem:[%s165 + $0x16e8] sm:$0xff]
      %v913 = vld [vmem:[%s165 + $0x16f0] sm:$0xff]
      %v914 = vld [vmem:[%s165 + $0x16f8] sm:$0xff]
      %v915 = vld [vmem:[%s165 + $0x1700] sm:$0xff]
      %v916 = vld [vmem:[%s165 + $0x1708] sm:$0xff]
      %v917 = vld [vmem:[%s165 + $0x1710] sm:$0xff]
      %v918 = vld [vmem:[%s165 + $0x1718] sm:$0xff]
      %v919 = vld [vmem:[%s165 + $0x1720] sm:$0xff]
      %v920 = vld [vmem:[%s165 + $0x1728] sm:$0xff]
      %v921 = vld [vmem:[%s165 + $0x1730] sm:$0xff]
      %v922 = vld [vmem:[%s165 + $0x1738] sm:$0xff]
      %v923 = vld [vmem:[%s165 + $0x1740] sm:$0xff]
      %v924 = vld [vmem:[%s165 + $0x1748] sm:$0xff]
      %v925 = vld [vmem:[%s165 + $0x1750] sm:$0xff]
      %v926 = vld [vmem:[%s165 + $0x1758] sm:$0xff]
      %v927 = vld [vmem:[%s165 + $0x1760] sm:$0xff]
      %v928 = vld [vmem:[%s165 + $0x1768] sm:$0xff]
      %v929 = vld [vmem:[%s165 + $0x1770] sm:$0xff]
      %v930 = vld [vmem:[%s165 + $0x1778] sm:$0xff]
      %v931 = vld [vmem:[%s165 + $0x1780] sm:$0xff]
      %v932 = vld [vmem:[%s165 + $0x1788] sm:$0xff]
      %v933 = vld [vmem:[%s165 + $0x1790] sm:$0xff]
      %v934 = vld [vmem:[%s165 + $0x1798] sm:$0xff]
      %v935 = vld [vmem:[%s165 + $0x17a0] sm:$0xff]
      %v936 = vld [vmem:[%s165 + $0x17a8] sm:$0xff]
      %v937 = vld [vmem:[%s165 + $0x17b0] sm:$0xff]
      %v938 = vld [vmem:[%s165 + $0x17b8] sm:$0xff]
      %v939 = vld [vmem:[%s165 + $0x17c0] sm:$0xff]
      %v940 = vld [vmem:[%s165 + $0x17c8] sm:$0xff]
      %v941 = vld [vmem:[%s165 + $0x17d0] sm:$0xff]
      %v942 = vld [vmem:[%s165 + $0x17d8] sm:$0xff]
      %v943 = vld [vmem:[%s165 + $0x17e0] sm:$0xff]
      %v944 = vld [vmem:[%s165 + $0x17e8] sm:$0xff]
      %v945 = vld [vmem:[%s165 + $0x17f0] sm:$0xff]
      %v946 = vld [vmem:[%s165 + $0x17f8] sm:$0xff]
      %v947 = vld [vmem:[%s165 + $0x1800] sm:$0xff]
      %v948 = vld [vmem:[%s165 + $0x1808] sm:$0xff]
      %v949 = vld [vmem:[%s165 + $0x1810] sm:$0xff]
      %v950 = vld [vmem:[%s165 + $0x1818] sm:$0xff]
      %v951 = vld [vmem:[%s165 + $0x1820] sm:$0xff]
      %v952 = vld [vmem:[%s165 + $0x1828] sm:$0xff]
      %v953 = vld [vmem:[%s165 + $0x1830] sm:$0xff]
      %v954 = vld [vmem:[%s165 + $0x1838] sm:$0xff]
      %v955 = vld [vmem:[%s165 + $0x1840] sm:$0xff]
      %v956 = vld [vmem:[%s165 + $0x1848] sm:$0xff]
      %v957 = vld [vmem:[%s165 + $0x1850] sm:$0xff]
      %v958 = vld [vmem:[%s165 + $0x1858] sm:$0xff]
      %v959 = vld [vmem:[%s165 + $0x1860] sm:$0xff]
      %v960 = vld [vmem:[%s165 + $0x1868] sm:$0xff]
      %v961 = vld [vmem:[%s165 + $0x1870] sm:$0xff]
      %v962 = vld [vmem:[%s165 + $0x1878] sm:$0xff]
      %v963 = vld [vmem:[%s2] sm:$0xff]
      %965 = vset.pattern.permute.xlu0 0
      %966 = vperm.xlu0 %965, %v963
      %v967 = vpop.permute.xlu0 %966
      %v976 = vunpack.c.l.b16 %v172
      %v977 = vunpack.c.h.b16 %v172
      %v978 = vunpack.c.l.b16 %v173
      %v979 = vunpack.c.h.b16 %v173
      %v980 = vunpack.c.l.b16 %v174
      %v981 = vunpack.c.h.b16 %v174
      %v982 = vunpack.c.l.b16 %v175
      %v983 = vunpack.c.h.b16 %v175
      %v984 = vunpack.c.l.b16 %v176
      %v985 = vunpack.c.h.b16 %v176
      %v986 = vunpack.c.l.b16 %v177
      %v987 = vunpack.c.h.b16 %v177
      %v988 = vunpack.c.l.b16 %v178
      %v989 = vpack.c.b16 %v976, %v976
      %v990 = vpack.c.b16 %v977, %v977
      %v991 = vpack.c.b16 %v978, %v978
      %v992 = vpack.c.b16 %v979, %v979
      %v993 = vpack.c.b16 %v980, %v980
      %v994 = vpack.c.b16 %v981, %v981
      %v995 = vpack.c.b16 %v982, %v982
      %v996 = vpack.c.b16 %v983, %v983
      %v997 = vpack.c.b16 %v984, %v984
      %v998 = vpack.c.b16 %v985, %v985
      %v999 = vpack.c.b16 %v986, %v986
      %v1000 = vpack.c.b16 %v987, %v987
      %v1001 = vpack.c.b16 %v988, %v988
      %v1798 = vunpack.c.l.b16 %v179
      %v1799 = vunpack.c.h.b16 %v179
      %v1800 = vunpack.c.l.b16 %v180
      %v1801 = vunpack.c.h.b16 %v180
      %v1802 = vunpack.c.l.b16 %v181
      %v1803 = vunpack.c.h.b16 %v181
      %v1804 = vunpack.c.l.b16 %v182
      %v1805 = vunpack.c.h.b16 %v182
      %v1806 = vunpack.c.l.b16 %v183
      %v1807 = vunpack.c.h.b16 %v183
      %v1808 = vunpack.c.l.b16 %v184
      %v1809 = vunpack.c.h.b16 %v184
      %v1810 = vunpack.c.l.b16 %v185
      %v1811 = vunpack.c.h.b16 %v185
      %v1812 = vunpack.c.l.b16 %v186
      %v1813 = vunpack.c.h.b16 %v186
      %v1814 = vunpack.c.l.b16 %v187
      %v1815 = vunpack.c.h.b16 %v187
      %v1816 = vunpack.c.l.b16 %v188
      %v1817 = vunpack.c.h.b16 %v188
      %v1818 = vunpack.c.l.b16 %v189
      %v1819 = vunpack.c.h.b16 %v189
      %v1820 = vunpack.c.l.b16 %v190
      %v1821 = vunpack.c.h.b16 %v190
      %v1822 = vunpack.c.l.b16 %v191
      %v1823 = vunpack.c.h.b16 %v191
      %v1824 = vunpack.c.l.b16 %v192
      %v1825 = vunpack.c.h.b16 %v192
      %v1826 = vunpack.c.l.b16 %v193
      %v1827 = vunpack.c.h.b16 %v193
      %v1828 = vunpack.c.l.b16 %v194
      %v1829 = vunpack.c.h.b16 %v194
      %v1830 = vunpack.c.l.b16 %v195
      %v1831 = vunpack.c.h.b16 %v195
      %v1832 = vunpack.c.l.b16 %v196
      %v1833 = vunpack.c.h.b16 %v196
      %v1834 = vunpack.c.l.b16 %v197
      %v1835 = vunpack.c.h.b16 %v197
      %v1836 = vunpack.c.l.b16 %v198
      %v1837 = vunpack.c.h.b16 %v198
      %v1838 = vunpack.c.l.b16 %v199
      %v1839 = vunpack.c.h.b16 %v199
      %v1840 = vunpack.c.l.b16 %v200
      %v1841 = vunpack.c.h.b16 %v200
      %v1842 = vunpack.c.l.b16 %v201
      %v1843 = vunpack.c.h.b16 %v201
      %v1844 = vunpack.c.l.b16 %v202
      %v1845 = vunpack.c.h.b16 %v202
      %v1846 = vunpack.c.l.b16 %v203
      %v1847 = vunpack.c.h.b16 %v203
      %v1848 = vunpack.c.l.b16 %v204
      %v1849 = vunpack.c.h.b16 %v204
      %v1850 = vunpack.c.l.b16 %v205
      %v1851 = vunpack.c.h.b16 %v205
      %v1852 = vunpack.c.l.b16 %v206
      %v1853 = vunpack.c.h.b16 %v206
      %v1854 = vunpack.c.l.b16 %v207
      %v1855 = vunpack.c.h.b16 %v207
      %v1856 = vunpack.c.l.b16 %v208
      %v1857 = vunpack.c.h.b16 %v208
      %v1858 = vunpack.c.l.b16 %v209
      %v1859 = vunpack.c.h.b16 %v209
      %v1860 = vunpack.c.l.b16 %v210
      %v1861 = vunpack.c.h.b16 %v210
      %v1862 = vunpack.c.l.b16 %v211
      %v1863 = vunpack.c.h.b16 %v211
      %v1864 = vunpack.c.l.b16 %v212
      %v1865 = vunpack.c.h.b16 %v212
      %v1866 = vunpack.c.l.b16 %v213
      %v1867 = vunpack.c.h.b16 %v213
      %v1868 = vunpack.c.l.b16 %v214
      %v1869 = vunpack.c.h.b16 %v214
      %v1870 = vunpack.c.l.b16 %v215
      %v1871 = vunpack.c.h.b16 %v215
      %v1872 = vunpack.c.l.b16 %v216
      %v1873 = vunpack.c.h.b16 %v216
      %v1874 = vunpack.c.l.b16 %v217
      %v1875 = vunpack.c.h.b16 %v217
      %v1876 = vunpack.c.l.b16 %v218
      %v1877 = vunpack.c.h.b16 %v218
      %v1878 = vunpack.c.l.b16 %v219
      %v1879 = vunpack.c.h.b16 %v219
      %v1880 = vunpack.c.l.b16 %v220
      %v1881 = vunpack.c.h.b16 %v220
      %v1882 = vunpack.c.l.b16 %v221
      %v1883 = vunpack.c.h.b16 %v221
      %v1884 = vunpack.c.l.b16 %v222
      %v1885 = vunpack.c.h.b16 %v222
      %v1886 = vunpack.c.l.b16 %v223
      %v1887 = vunpack.c.h.b16 %v223
      %v1888 = vunpack.c.l.b16 %v224
      %v1889 = vunpack.c.h.b16 %v224
      %v1890 = vunpack.c.l.b16 %v225
      %v1891 = vunpack.c.h.b16 %v225
      %v1892 = vunpack.c.l.b16 %v226
      %v1893 = vunpack.c.h.b16 %v226
      %v1894 = vunpack.c.l.b16 %v227
      %v1895 = vunpack.c.h.b16 %v227
      %v1896 = vunpack.c.l.b16 %v228
      %v1897 = vunpack.c.h.b16 %v228
      %v1898 = vunpack.c.l.b16 %v229
      %v1899 = vunpack.c.h.b16 %v229
      %v1900 = vunpack.c.l.b16 %v230
      %v1901 = vunpack.c.h.b16 %v230
      %v1902 = vunpack.c.l.b16 %v231
      %v1903 = vunpack.c.h.b16 %v231
      %v1904 = vunpack.c.l.b16 %v232
      %v1905 = vunpack.c.h.b16 %v232
      %v1906 = vunpack.c.l.b16 %v233
      %v1907 = vunpack.c.h.b16 %v233
      %v1908 = vunpack.c.l.b16 %v234
      %v1909 = vunpack.c.h.b16 %v234
      %v1910 = vunpack.c.l.b16 %v235
      %v1911 = vunpack.c.h.b16 %v235
      %v1912 = vunpack.c.l.b16 %v236
      %v1913 = vunpack.c.h.b16 %v236
      %v1914 = vunpack.c.l.b16 %v237
      %v1915 = vunpack.c.h.b16 %v237
      %v1916 = vunpack.c.l.b16 %v238
      %v1917 = vunpack.c.h.b16 %v238
      %v1918 = vunpack.c.l.b16 %v239
      %v1919 = vunpack.c.h.b16 %v239
      %v1920 = vunpack.c.l.b16 %v240
      %v1921 = vunpack.c.h.b16 %v240
      %v1922 = vunpack.c.l.b16 %v241
      %v1923 = vunpack.c.h.b16 %v241
      %v1924 = vunpack.c.l.b16 %v242
      %v1925 = vunpack.c.h.b16 %v242
      %v1926 = vunpack.c.l.b16 %v243
      %v1927 = vunpack.c.h.b16 %v243
      %v1928 = vunpack.c.l.b16 %v244
      %v1929 = vunpack.c.h.b16 %v244
      %v1930 = vunpack.c.l.b16 %v245
      %v1931 = vunpack.c.h.b16 %v245
      %v1932 = vunpack.c.l.b16 %v246
      %v1933 = vunpack.c.h.b16 %v246
      %v1934 = vunpack.c.l.b16 %v247
      %v1935 = vunpack.c.h.b16 %v247
      %v1936 = vunpack.c.l.b16 %v248
      %v1937 = vunpack.c.h.b16 %v248
      %v1938 = vunpack.c.l.b16 %v249
      %v1939 = vunpack.c.h.b16 %v249
      %v1940 = vunpack.c.l.b16 %v250
      %v1941 = vunpack.c.h.b16 %v250
      %v1942 = vunpack.c.l.b16 %v251
      %v1943 = vunpack.c.h.b16 %v251
      %v1944 = vunpack.c.l.b16 %v252
      %v1945 = vunpack.c.h.b16 %v252
      %v1946 = vunpack.c.l.b16 %v253
      %v1947 = vunpack.c.h.b16 %v253
      %v1948 = vunpack.c.l.b16 %v254
      %v1949 = vunpack.c.h.b16 %v254
      %v1950 = vunpack.c.l.b16 %v255
      %v1951 = vunpack.c.h.b16 %v255
      %v1952 = vunpack.c.l.b16 %v256
      %v1953 = vunpack.c.h.b16 %v256
      %v1954 = vunpack.c.l.b16 %v257
      %v1955 = vunpack.c.h.b16 %v257
      %v1956 = vunpack.c.l.b16 %v258
      %v1957 = vunpack.c.h.b16 %v258
      %v1958 = vunpack.c.l.b16 %v259
      %v1959 = vunpack.c.h.b16 %v259
      %v1960 = vunpack.c.l.b16 %v260
      %v1961 = vunpack.c.h.b16 %v260
      %v1962 = vunpack.c.l.b16 %v261
      %v1963 = vunpack.c.h.b16 %v261
      %v1964 = vunpack.c.l.b16 %v262
      %v1965 = vunpack.c.h.b16 %v262
      %v1966 = vunpack.c.l.b16 %v263
      %v1967 = vunpack.c.h.b16 %v263
      %v1968 = vunpack.c.l.b16 %v264
      %v1969 = vunpack.c.h.b16 %v264
      %v1970 = vunpack.c.l.b16 %v265
      %v1971 = vunpack.c.h.b16 %v265
      %v1972 = vunpack.c.l.b16 %v266
      %v1973 = vunpack.c.h.b16 %v266
      %v1974 = vunpack.c.l.b16 %v267
      %v1975 = vunpack.c.h.b16 %v267
      %v1976 = vunpack.c.l.b16 %v268
      %v1977 = vunpack.c.h.b16 %v268
      %v1978 = vunpack.c.l.b16 %v269
      %v1979 = vunpack.c.h.b16 %v269
      %v1980 = vunpack.c.l.b16 %v270
      %v1981 = vunpack.c.h.b16 %v270
      %v1982 = vunpack.c.l.b16 %v271
      %v1983 = vunpack.c.h.b16 %v271
      %v1984 = vunpack.c.l.b16 %v272
      %v1985 = vunpack.c.h.b16 %v272
      %v1986 = vunpack.c.l.b16 %v273
      %v1987 = vunpack.c.h.b16 %v273
      %v1988 = vunpack.c.l.b16 %v274
      %v1989 = vunpack.c.h.b16 %v274
      %v1990 = vunpack.c.l.b16 %v275
      %v1991 = vunpack.c.h.b16 %v275
      %v1992 = vunpack.c.l.b16 %v276
      %v1993 = vunpack.c.h.b16 %v276
      %v1994 = vunpack.c.l.b16 %v277
      %v1995 = vunpack.c.h.b16 %v277
      %v1996 = vunpack.c.l.b16 %v278
      %v1997 = vunpack.c.h.b16 %v278
      %v1998 = vunpack.c.l.b16 %v279
      %v1999 = vunpack.c.h.b16 %v279
      %v2000 = vunpack.c.l.b16 %v280
      %v2001 = vunpack.c.h.b16 %v280
      %v2002 = vunpack.c.l.b16 %v281
      %v2003 = vunpack.c.h.b16 %v281
      %v2004 = vunpack.c.l.b16 %v282
      %v2005 = vunpack.c.h.b16 %v282
      %v2006 = vunpack.c.l.b16 %v283
      %v2007 = vunpack.c.h.b16 %v283
      %v2008 = vunpack.c.l.b16 %v284
      %v2009 = vunpack.c.h.b16 %v284
      %v2010 = vunpack.c.l.b16 %v285
      %v2011 = vunpack.c.h.b16 %v285
      %v2012 = vunpack.c.l.b16 %v286
      %v2013 = vunpack.c.h.b16 %v286
      %v2014 = vunpack.c.l.b16 %v287
      %v2015 = vunpack.c.h.b16 %v287
      %v2016 = vunpack.c.l.b16 %v288
      %v2017 = vunpack.c.h.b16 %v288
      %v2018 = vunpack.c.l.b16 %v289
      %v2019 = vunpack.c.h.b16 %v289
      %v2020 = vunpack.c.l.b16 %v290
      %v2021 = vunpack.c.h.b16 %v290
      %v2022 = vunpack.c.l.b16 %v291
      %v2023 = vunpack.c.h.b16 %v291
      %v2024 = vunpack.c.l.b16 %v292
      %v2025 = vunpack.c.h.b16 %v292
      %v2026 = vunpack.c.l.b16 %v293
      %v2027 = vunpack.c.h.b16 %v293
      %v2028 = vunpack.c.l.b16 %v294
      %v2029 = vunpack.c.h.b16 %v294
      %v2030 = vunpack.c.l.b16 %v295
      %v2031 = vunpack.c.h.b16 %v295
      %v2032 = vunpack.c.l.b16 %v296
      %v2033 = vunpack.c.h.b16 %v296
      %v2034 = vunpack.c.l.b16 %v297
      %v2035 = vunpack.c.h.b16 %v297
      %v2036 = vunpack.c.l.b16 %v298
      %v2037 = vunpack.c.h.b16 %v298
      %v2038 = vunpack.c.l.b16 %v299
      %v2039 = vunpack.c.h.b16 %v299
      %v2040 = vunpack.c.l.b16 %v300
      %v2041 = vunpack.c.h.b16 %v300
      %v2042 = vunpack.c.l.b16 %v301
      %v2043 = vunpack.c.h.b16 %v301
      %v2044 = vunpack.c.l.b16 %v302
      %v2045 = vunpack.c.h.b16 %v302
      %v2046 = vunpack.c.l.b16 %v303
      %v2047 = vunpack.c.h.b16 %v303
      %v2048 = vunpack.c.l.b16 %v304
      %v2049 = vunpack.c.h.b16 %v304
      %v2050 = vunpack.c.l.b16 %v305
      %v2051 = vunpack.c.h.b16 %v305
      %v2052 = vunpack.c.l.b16 %v306
      %v2053 = vunpack.c.h.b16 %v306
      %v2054 = vunpack.c.l.b16 %v307
      %v2055 = vunpack.c.h.b16 %v307
      %v2056 = vunpack.c.l.b16 %v308
      %v2057 = vunpack.c.h.b16 %v308
      %v2058 = vunpack.c.l.b16 %v309
      %v2059 = vunpack.c.h.b16 %v309
      %v2060 = vunpack.c.l.b16 %v310
      %v2061 = vunpack.c.h.b16 %v310
      %v2062 = vunpack.c.l.b16 %v311
      %v2063 = vunpack.c.h.b16 %v311
      %v2064 = vunpack.c.l.b16 %v312
      %v2065 = vunpack.c.h.b16 %v312
      %v2066 = vunpack.c.l.b16 %v313
      %v2067 = vunpack.c.h.b16 %v313
      %v2068 = vunpack.c.l.b16 %v314
      %v2069 = vunpack.c.h.b16 %v314
      %v2070 = vunpack.c.l.b16 %v315
      %v2071 = vunpack.c.h.b16 %v315
      %v2072 = vunpack.c.l.b16 %v316
      %v2073 = vunpack.c.h.b16 %v316
      %v2074 = vunpack.c.l.b16 %v317
      %v2075 = vunpack.c.h.b16 %v317
      %v2076 = vunpack.c.l.b16 %v318
      %v2077 = vunpack.c.h.b16 %v318
      %v2078 = vunpack.c.l.b16 %v319
      %v2079 = vunpack.c.h.b16 %v319
      %v2080 = vunpack.c.l.b16 %v320
      %v2081 = vunpack.c.h.b16 %v320
      %v2082 = vunpack.c.l.b16 %v321
      %v2083 = vunpack.c.h.b16 %v321
      %v2084 = vunpack.c.l.b16 %v322
      %v2085 = vunpack.c.h.b16 %v322
      %v2086 = vunpack.c.l.b16 %v323
      %v2087 = vunpack.c.h.b16 %v323
      %v2088 = vunpack.c.l.b16 %v324
      %v2089 = vunpack.c.h.b16 %v324
      %v2090 = vunpack.c.l.b16 %v325
      %v2091 = vunpack.c.h.b16 %v325
      %v2092 = vunpack.c.l.b16 %v326
      %v2093 = vunpack.c.h.b16 %v326
      %v2094 = vunpack.c.l.b16 %v327
      %v2095 = vunpack.c.h.b16 %v327
      %v2096 = vunpack.c.l.b16 %v328
      %v2097 = vunpack.c.h.b16 %v328
      %v2098 = vunpack.c.l.b16 %v329
      %v2099 = vunpack.c.h.b16 %v329
      %v2100 = vunpack.c.l.b16 %v330
      %v2101 = vunpack.c.h.b16 %v330
      %v2102 = vunpack.c.l.b16 %v331
      %v2103 = vunpack.c.h.b16 %v331
      %v2104 = vunpack.c.l.b16 %v332
      %v2105 = vunpack.c.h.b16 %v332
      %v2106 = vunpack.c.l.b16 %v333
      %v2107 = vunpack.c.h.b16 %v333
      %v2108 = vunpack.c.l.b16 %v334
      %v2109 = vunpack.c.h.b16 %v334
      %v2110 = vunpack.c.l.b16 %v335
      %v2111 = vunpack.c.h.b16 %v335
      %v2112 = vunpack.c.l.b16 %v336
      %v2113 = vunpack.c.h.b16 %v336
      %v2114 = vunpack.c.l.b16 %v337
      %v2115 = vunpack.c.h.b16 %v337
      %v2116 = vunpack.c.l.b16 %v338
      %v2117 = vunpack.c.h.b16 %v338
      %v2118 = vunpack.c.l.b16 %v339
      %v2119 = vunpack.c.h.b16 %v339
      %v2120 = vunpack.c.l.b16 %v340
      %v2121 = vunpack.c.h.b16 %v340
      %v2122 = vunpack.c.l.b16 %v341
      %v2123 = vunpack.c.h.b16 %v341
      %v2124 = vunpack.c.l.b16 %v342
      %v2125 = vunpack.c.h.b16 %v342
      %v2126 = vunpack.c.l.b16 %v343
      %v2127 = vunpack.c.h.b16 %v343
      %v2128 = vunpack.c.l.b16 %v344
      %v2129 = vunpack.c.h.b16 %v344
      %v2130 = vunpack.c.l.b16 %v345
      %v2131 = vunpack.c.h.b16 %v345
      %v2132 = vunpack.c.l.b16 %v346
      %v2133 = vunpack.c.h.b16 %v346
      %v2134 = vunpack.c.l.b16 %v347
      %v2135 = vunpack.c.h.b16 %v347
      %v2136 = vunpack.c.l.b16 %v348
      %v2137 = vunpack.c.h.b16 %v348
      %v2138 = vunpack.c.l.b16 %v349
      %v2139 = vunpack.c.h.b16 %v349
      %v2140 = vunpack.c.l.b16 %v350
      %v2141 = vunpack.c.h.b16 %v350
      %v2142 = vunpack.c.l.b16 %v351
      %v2143 = vunpack.c.h.b16 %v351
      %v2144 = vunpack.c.l.b16 %v352
      %v2145 = vunpack.c.h.b16 %v352
      %v2146 = vunpack.c.l.b16 %v353
      %v2147 = vunpack.c.h.b16 %v353
      %v2148 = vunpack.c.l.b16 %v354
      %v2149 = vunpack.c.h.b16 %v354
      %v2150 = vunpack.c.l.b16 %v355
      %v2151 = vunpack.c.h.b16 %v355
      %v2152 = vunpack.c.l.b16 %v356
      %v2153 = vunpack.c.h.b16 %v356
      %v2154 = vunpack.c.l.b16 %v357
      %v2155 = vunpack.c.h.b16 %v357
      %v2156 = vunpack.c.l.b16 %v358
      %v2157 = vunpack.c.h.b16 %v358
      %v2158 = vunpack.c.l.b16 %v359
      %v2159 = vunpack.c.h.b16 %v359
      %v2160 = vunpack.c.l.b16 %v360
      %v2161 = vunpack.c.h.b16 %v360
      %v2162 = vunpack.c.l.b16 %v361
      %v2163 = vunpack.c.h.b16 %v361
      %v2164 = vunpack.c.l.b16 %v362
      %v2165 = vunpack.c.h.b16 %v362
      %v2166 = vunpack.c.l.b16 %v363
      %v2167 = vunpack.c.h.b16 %v363
      %v2168 = vunpack.c.l.b16 %v364
      %v2169 = vunpack.c.h.b16 %v364
      %v2170 = vunpack.c.l.b16 %v365
      %v2171 = vunpack.c.h.b16 %v365
      %v2172 = vunpack.c.l.b16 %v366
      %v2173 = vunpack.c.h.b16 %v366
      %v2174 = vunpack.c.l.b16 %v367
      %v2175 = vunpack.c.h.b16 %v367
      %v2176 = vunpack.c.l.b16 %v368
      %v2177 = vunpack.c.h.b16 %v368
      %v2178 = vunpack.c.l.b16 %v369
      %v2179 = vunpack.c.h.b16 %v369
      %v2180 = vunpack.c.l.b16 %v370
      %v2181 = vunpack.c.h.b16 %v370
      %v2182 = vunpack.c.l.b16 %v371
      %v2183 = vunpack.c.h.b16 %v371
      %v2184 = vunpack.c.l.b16 %v372
      %v2185 = vunpack.c.h.b16 %v372
      %v2186 = vunpack.c.l.b16 %v373
      %v2187 = vunpack.c.h.b16 %v373
      %v2188 = vunpack.c.l.b16 %v374
      %v2189 = vunpack.c.h.b16 %v374
      %v2190 = vunpack.c.l.b16 %v375
      %v2191 = vunpack.c.h.b16 %v375
      %v2192 = vunpack.c.l.b16 %v376
      %v2193 = vunpack.c.h.b16 %v376
      %v2194 = vunpack.c.l.b16 %v377
      %v2195 = vunpack.c.h.b16 %v377
      %v2196 = vunpack.c.l.b16 %v378
      %v2197 = vunpack.c.h.b16 %v378
      %v2198 = vunpack.c.l.b16 %v379
      %v2199 = vunpack.c.h.b16 %v379
      %v2200 = vunpack.c.l.b16 %v380
      %v2201 = vunpack.c.h.b16 %v380
      %v2202 = vunpack.c.l.b16 %v381
      %v2203 = vunpack.c.h.b16 %v381
      %v2204 = vunpack.c.l.b16 %v382
      %v2205 = vunpack.c.h.b16 %v382
      %v2206 = vunpack.c.l.b16 %v383
      %v2207 = vunpack.c.h.b16 %v383
      %v2208 = vunpack.c.l.b16 %v384
      %v2209 = vunpack.c.h.b16 %v384
      %v2210 = vunpack.c.l.b16 %v385
      %v2211 = vunpack.c.h.b16 %v385
      %v2212 = vunpack.c.l.b16 %v386
      %v2213 = vunpack.c.h.b16 %v386
      %v2214 = vunpack.c.l.b16 %v387
      %v2215 = vunpack.c.h.b16 %v387
      %v2216 = vunpack.c.l.b16 %v388
      %v2217 = vunpack.c.h.b16 %v388
      %v2218 = vunpack.c.l.b16 %v389
      %v2219 = vunpack.c.h.b16 %v389
      %v2220 = vunpack.c.l.b16 %v390
      %v2221 = vunpack.c.h.b16 %v390
      %v2222 = vunpack.c.l.b16 %v391
      %v2223 = vunpack.c.h.b16 %v391
      %v2224 = vunpack.c.l.b16 %v392
      %v2225 = vunpack.c.h.b16 %v392
      %v2226 = vunpack.c.l.b16 %v393
      %v2227 = vunpack.c.h.b16 %v393
      %v2228 = vunpack.c.l.b16 %v394
      %v2229 = vunpack.c.h.b16 %v394
      %v2230 = vunpack.c.l.b16 %v395
      %v2231 = vunpack.c.h.b16 %v395
      %v2232 = vunpack.c.l.b16 %v396
      %v2233 = vunpack.c.h.b16 %v396
      %v2234 = vunpack.c.l.b16 %v397
      %v2235 = vunpack.c.h.b16 %v397
      %v2236 = vunpack.c.l.b16 %v398
      %v2237 = vunpack.c.h.b16 %v398
      %v2238 = vunpack.c.l.b16 %v399
      %v2239 = vunpack.c.h.b16 %v399
      %v2240 = vunpack.c.l.b16 %v400
      %v2241 = vunpack.c.h.b16 %v400
      %v2242 = vunpack.c.l.b16 %v401
      %v2243 = vunpack.c.h.b16 %v401
      %v2244 = vunpack.c.l.b16 %v402
      %v2245 = vunpack.c.h.b16 %v402
      %v2246 = vunpack.c.l.b16 %v403
      %v2247 = vunpack.c.h.b16 %v403
      %v2248 = vunpack.c.l.b16 %v404
      %v2249 = vunpack.c.h.b16 %v404
      %v2250 = vunpack.c.l.b16 %v405
      %v2251 = vunpack.c.h.b16 %v405
      %v2252 = vunpack.c.l.b16 %v406
      %v2253 = vunpack.c.h.b16 %v406
      %v2254 = vunpack.c.l.b16 %v407
      %v2255 = vunpack.c.h.b16 %v407
      %v2256 = vunpack.c.l.b16 %v408
      %v2257 = vunpack.c.h.b16 %v408
      %v2258 = vunpack.c.l.b16 %v409
      %v2259 = vunpack.c.h.b16 %v409
      %v2260 = vunpack.c.l.b16 %v410
      %v2261 = vunpack.c.h.b16 %v410
      %v2262 = vunpack.c.l.b16 %v411
      %v2263 = vunpack.c.h.b16 %v411
      %v2264 = vunpack.c.l.b16 %v412
      %v2265 = vunpack.c.h.b16 %v412
      %v2266 = vunpack.c.l.b16 %v413
      %v2267 = vunpack.c.h.b16 %v413
      %v2268 = vunpack.c.l.b16 %v414
      %v2269 = vunpack.c.h.b16 %v414
      %v2270 = vunpack.c.l.b16 %v415
      %v2271 = vunpack.c.h.b16 %v415
      %v2272 = vunpack.c.l.b16 %v416
      %v2273 = vunpack.c.h.b16 %v416
      %v2274 = vunpack.c.l.b16 %v417
      %v2275 = vunpack.c.h.b16 %v417
      %v2276 = vunpack.c.l.b16 %v418
      %v2277 = vunpack.c.h.b16 %v418
      %v2278 = vunpack.c.l.b16 %v419
      %v2279 = vunpack.c.h.b16 %v419
      %v2280 = vunpack.c.l.b16 %v420
      %v2281 = vunpack.c.h.b16 %v420
      %v2282 = vunpack.c.l.b16 %v421
      %v2283 = vunpack.c.h.b16 %v421
      %v2284 = vunpack.c.l.b16 %v422
      %v2285 = vunpack.c.h.b16 %v422
      %v2286 = vunpack.c.l.b16 %v423
      %v2287 = vunpack.c.h.b16 %v423
      %v2288 = vunpack.c.l.b16 %v424
      %v2289 = vunpack.c.h.b16 %v424
      %v2290 = vunpack.c.l.b16 %v425
      %v2291 = vunpack.c.h.b16 %v425
      %v2292 = vunpack.c.l.b16 %v426
      %v2293 = vunpack.c.h.b16 %v426
      %v2294 = vunpack.c.l.b16 %v427
      %v2295 = vunpack.c.h.b16 %v427
      %v2296 = vunpack.c.l.b16 %v428
      %v2297 = vunpack.c.h.b16 %v428
      %v2298 = vunpack.c.l.b16 %v429
      %v2299 = vunpack.c.h.b16 %v429
      %v2300 = vunpack.c.l.b16 %v430
      %v2301 = vunpack.c.h.b16 %v430
      %v2302 = vunpack.c.l.b16 %v431
      %v2303 = vunpack.c.h.b16 %v431
      %v2304 = vunpack.c.l.b16 %v432
      %v2305 = vunpack.c.h.b16 %v432
      %v2306 = vunpack.c.l.b16 %v433
      %v2307 = vunpack.c.h.b16 %v433
      %v2308 = vunpack.c.l.b16 %v434
      %v2309 = vunpack.c.h.b16 %v434
      %v2310 = vunpack.c.l.b16 %v435
      %v2311 = vunpack.c.h.b16 %v435
      %v2312 = vunpack.c.l.b16 %v436
      %v2313 = vunpack.c.h.b16 %v436
      %v2314 = vunpack.c.l.b16 %v437
      %v2315 = vunpack.c.h.b16 %v437
      %v2316 = vunpack.c.l.b16 %v438
      %v2317 = vunpack.c.h.b16 %v438
      %v2318 = vunpack.c.l.b16 %v439
      %v2319 = vunpack.c.h.b16 %v439
      %v2320 = vunpack.c.l.b16 %v440
      %v2321 = vunpack.c.h.b16 %v440
      %v2322 = vunpack.c.l.b16 %v441
      %v2323 = vunpack.c.h.b16 %v441
      %v2324 = vunpack.c.l.b16 %v442
      %v2325 = vunpack.c.h.b16 %v442
      %v2326 = vunpack.c.l.b16 %v443
      %v2327 = vunpack.c.h.b16 %v443
      %v2328 = vunpack.c.l.b16 %v444
      %v2329 = vunpack.c.h.b16 %v444
      %v2330 = vunpack.c.l.b16 %v445
      %v2331 = vunpack.c.h.b16 %v445
      %v2332 = vunpack.c.l.b16 %v446
      %v2333 = vunpack.c.h.b16 %v446
      %v2334 = vunpack.c.l.b16 %v447
      %v2335 = vunpack.c.h.b16 %v447
      %v2336 = vunpack.c.l.b16 %v448
      %v2337 = vunpack.c.h.b16 %v448
      %v2338 = vunpack.c.l.b16 %v449
      %v2339 = vunpack.c.h.b16 %v449
      %v2340 = vunpack.c.l.b16 %v450
      %v2341 = vunpack.c.h.b16 %v450
      %v2342 = vunpack.c.l.b16 %v451
      %v2343 = vunpack.c.h.b16 %v451
      %v2344 = vunpack.c.l.b16 %v452
      %v2345 = vunpack.c.h.b16 %v452
      %v2346 = vunpack.c.l.b16 %v453
      %v2347 = vunpack.c.h.b16 %v453
      %v2348 = vunpack.c.l.b16 %v454
      %v2349 = vunpack.c.h.b16 %v454
      %v2350 = vunpack.c.l.b16 %v455
      %v2351 = vunpack.c.h.b16 %v455
      %v2352 = vunpack.c.l.b16 %v456
      %v2353 = vunpack.c.h.b16 %v456
      %v2354 = vunpack.c.l.b16 %v457
      %v2355 = vunpack.c.h.b16 %v457
      %v2356 = vunpack.c.l.b16 %v458
      %v2357 = vunpack.c.h.b16 %v458
      %v2358 = vunpack.c.l.b16 %v459
      %v2359 = vunpack.c.h.b16 %v459
      %v2360 = vunpack.c.l.b16 %v460
      %v2361 = vunpack.c.h.b16 %v460
      %v2362 = vunpack.c.l.b16 %v461
      %v2363 = vunpack.c.h.b16 %v461
      %v2364 = vunpack.c.l.b16 %v462
      %v2365 = vunpack.c.h.b16 %v462
      %v2366 = vunpack.c.l.b16 %v463
      %v2367 = vunpack.c.h.b16 %v463
      %v2368 = vunpack.c.l.b16 %v464
      %v2369 = vunpack.c.h.b16 %v464
      %v2370 = vunpack.c.l.b16 %v465
      %v2371 = vunpack.c.h.b16 %v465
      %v2372 = vunpack.c.l.b16 %v466
      %v2373 = vunpack.c.h.b16 %v466
      %v2374 = vunpack.c.l.b16 %v467
      %v2375 = vunpack.c.h.b16 %v467
      %v2376 = vunpack.c.l.b16 %v468
      %v2377 = vunpack.c.h.b16 %v468
      %v2378 = vunpack.c.l.b16 %v469
      %v2379 = vunpack.c.h.b16 %v469
      %v2380 = vunpack.c.l.b16 %v470
      %v2381 = vunpack.c.h.b16 %v470
      %v2382 = vunpack.c.l.b16 %v471
      %v2383 = vunpack.c.h.b16 %v471
      %v2384 = vunpack.c.l.b16 %v472
      %v2385 = vunpack.c.h.b16 %v472
      %v2386 = vunpack.c.l.b16 %v473
      %v2387 = vunpack.c.h.b16 %v473
      %v2388 = vunpack.c.l.b16 %v474
      %v2389 = vunpack.c.h.b16 %v474
      %v2390 = vunpack.c.l.b16 %v475
      %v2391 = vunpack.c.h.b16 %v475
      %v2392 = vunpack.c.l.b16 %v476
      %v2393 = vunpack.c.h.b16 %v476
      %v2394 = vunpack.c.l.b16 %v477
      %v2395 = vunpack.c.h.b16 %v477
      %v2396 = vunpack.c.l.b16 %v478
      %v2397 = vunpack.c.h.b16 %v478
      %v2398 = vunpack.c.l.b16 %v479
      %v2399 = vunpack.c.h.b16 %v479
      %v2400 = vunpack.c.l.b16 %v480
      %v2401 = vunpack.c.h.b16 %v480
      %v2402 = vunpack.c.l.b16 %v481
      %v2403 = vunpack.c.h.b16 %v481
      %v2404 = vunpack.c.l.b16 %v482
      %v2405 = vunpack.c.h.b16 %v482
      %v2406 = vunpack.c.l.b16 %v483
      %v2407 = vunpack.c.h.b16 %v483
      %v2408 = vunpack.c.l.b16 %v484
      %v2409 = vunpack.c.h.b16 %v484
      %v2410 = vunpack.c.l.b16 %v485
      %v2411 = vunpack.c.h.b16 %v485
      %v2412 = vunpack.c.l.b16 %v486
      %v2413 = vunpack.c.h.b16 %v486
      %v2414 = vunpack.c.l.b16 %v487
      %v2415 = vunpack.c.h.b16 %v487
      %v2416 = vunpack.c.l.b16 %v488
      %v2417 = vunpack.c.h.b16 %v488
      %v2418 = vunpack.c.l.b16 %v489
      %v2419 = vunpack.c.h.b16 %v489
      %v2420 = vunpack.c.l.b16 %v490
      %v2421 = vunpack.c.h.b16 %v490
      %v2422 = vunpack.c.l.b16 %v491
      %v2423 = vunpack.c.h.b16 %v491
      %v2424 = vunpack.c.l.b16 %v492
      %v2425 = vunpack.c.h.b16 %v492
      %v2426 = vunpack.c.l.b16 %v493
      %v2427 = vunpack.c.h.b16 %v493
      %v2428 = vunpack.c.l.b16 %v494
      %v2429 = vunpack.c.h.b16 %v494
      %v2430 = vunpack.c.l.b16 %v495
      %v2431 = vunpack.c.h.b16 %v495
      %v2432 = vunpack.c.l.b16 %v496
      %v2433 = vunpack.c.h.b16 %v496
      %v2434 = vunpack.c.l.b16 %v497
      %v2435 = vunpack.c.h.b16 %v497
      %v2436 = vunpack.c.l.b16 %v498
      %v2437 = vunpack.c.h.b16 %v498
      %v2438 = vunpack.c.l.b16 %v499
      %v2439 = vunpack.c.h.b16 %v499
      %v2440 = vunpack.c.l.b16 %v500
      %v2441 = vunpack.c.h.b16 %v500
      %v2442 = vunpack.c.l.b16 %v501
      %v2443 = vunpack.c.h.b16 %v501
      %v2444 = vunpack.c.l.b16 %v502
      %v2445 = vunpack.c.h.b16 %v502
      %v2446 = vunpack.c.l.b16 %v503
      %v2447 = vunpack.c.h.b16 %v503
      %v2448 = vunpack.c.l.b16 %v504
      %v2449 = vunpack.c.h.b16 %v504
      %v2450 = vunpack.c.l.b16 %v505
      %v2451 = vunpack.c.h.b16 %v505
      %v2452 = vunpack.c.l.b16 %v506
      %v2453 = vunpack.c.h.b16 %v506
      %v2454 = vunpack.c.l.b16 %v507
      %v2455 = vunpack.c.h.b16 %v507
      %v2456 = vunpack.c.l.b16 %v508
      %v2457 = vunpack.c.h.b16 %v508
      %v2458 = vunpack.c.l.b16 %v509
      %v2459 = vunpack.c.h.b16 %v509
      %v2460 = vunpack.c.l.b16 %v510
      %v2461 = vunpack.c.h.b16 %v510
      %v2462 = vunpack.c.l.b16 %v511
      %v2463 = vunpack.c.h.b16 %v511
      %v2464 = vunpack.c.l.b16 %v512
      %v2465 = vunpack.c.h.b16 %v512
      %v2466 = vunpack.c.l.b16 %v513
      %v2467 = vunpack.c.h.b16 %v513
      %v2468 = vunpack.c.l.b16 %v514
      %v2469 = vunpack.c.h.b16 %v514
      %v2470 = vunpack.c.l.b16 %v515
      %v2471 = vunpack.c.h.b16 %v515
      %v2472 = vunpack.c.l.b16 %v516
      %v2473 = vunpack.c.h.b16 %v516
      %v2474 = vunpack.c.l.b16 %v517
      %v2475 = vunpack.c.h.b16 %v517
      %v2476 = vunpack.c.l.b16 %v518
      %v2477 = vunpack.c.h.b16 %v518
      %v2478 = vunpack.c.l.b16 %v519
      %v2479 = vunpack.c.h.b16 %v519
      %v2480 = vunpack.c.l.b16 %v520
      %v2481 = vunpack.c.h.b16 %v520
      %v2482 = vunpack.c.l.b16 %v521
      %v2483 = vunpack.c.h.b16 %v521
      %v2484 = vunpack.c.l.b16 %v522
      %v2485 = vunpack.c.h.b16 %v522
      %v2486 = vunpack.c.l.b16 %v523
      %v2487 = vunpack.c.h.b16 %v523
      %v2488 = vunpack.c.l.b16 %v524
      %v2489 = vunpack.c.h.b16 %v524
      %v2490 = vunpack.c.l.b16 %v525
      %v2491 = vunpack.c.h.b16 %v525
      %v2492 = vunpack.c.l.b16 %v526
      %v2493 = vunpack.c.h.b16 %v526
      %v2494 = vunpack.c.l.b16 %v527
      %v2495 = vunpack.c.h.b16 %v527
      %v2496 = vunpack.c.l.b16 %v528
      %v2497 = vunpack.c.h.b16 %v528
      %v2498 = vunpack.c.l.b16 %v529
      %v2499 = vunpack.c.h.b16 %v529
      %v2500 = vunpack.c.l.b16 %v530
      %v2501 = vunpack.c.h.b16 %v530
      %v2502 = vunpack.c.l.b16 %v531
      %v2503 = vunpack.c.h.b16 %v531
      %v2504 = vunpack.c.l.b16 %v532
      %v2505 = vunpack.c.h.b16 %v532
      %v2506 = vunpack.c.l.b16 %v533
      %v2507 = vunpack.c.h.b16 %v533
      %v2508 = vunpack.c.l.b16 %v534
      %v2509 = vunpack.c.h.b16 %v534
      %v2510 = vunpack.c.l.b16 %v535
      %v2511 = vunpack.c.h.b16 %v535
      %v2512 = vunpack.c.l.b16 %v536
      %v2513 = vunpack.c.h.b16 %v536
      %v2514 = vunpack.c.l.b16 %v537
      %v2515 = vunpack.c.h.b16 %v537
      %v2516 = vunpack.c.l.b16 %v538
      %v2517 = vunpack.c.h.b16 %v538
      %v2518 = vunpack.c.l.b16 %v539
      %v2519 = vunpack.c.h.b16 %v539
      %v2520 = vunpack.c.l.b16 %v540
      %v2521 = vunpack.c.h.b16 %v540
      %v2522 = vunpack.c.l.b16 %v541
      %v2523 = vunpack.c.h.b16 %v541
      %v2524 = vunpack.c.l.b16 %v542
      %v2525 = vunpack.c.h.b16 %v542
      %v2526 = vunpack.c.l.b16 %v543
      %v2527 = vunpack.c.h.b16 %v543
      %v2528 = vunpack.c.l.b16 %v544
      %v2529 = vunpack.c.h.b16 %v544
      %v2530 = vunpack.c.l.b16 %v545
      %v2531 = vunpack.c.h.b16 %v545
      %v2532 = vunpack.c.l.b16 %v546
      %v2533 = vunpack.c.h.b16 %v546
      %v2534 = vunpack.c.l.b16 %v547
      %v2535 = vunpack.c.h.b16 %v547
      %v2536 = vunpack.c.l.b16 %v548
      %v2537 = vunpack.c.h.b16 %v548
      %v2538 = vunpack.c.l.b16 %v549
      %v2539 = vunpack.c.h.b16 %v549
      %v2540 = vunpack.c.l.b16 %v550
      %v2541 = vunpack.c.h.b16 %v550
      %v2542 = vunpack.c.l.b16 %v551
      %v2543 = vunpack.c.h.b16 %v551
      %v2544 = vunpack.c.l.b16 %v552
      %v2545 = vunpack.c.h.b16 %v552
      %v2546 = vunpack.c.l.b16 %v553
      %v2547 = vunpack.c.h.b16 %v553
      %v2548 = vunpack.c.l.b16 %v554
      %v2549 = vunpack.c.h.b16 %v554
      %v2550 = vunpack.c.l.b16 %v555
      %v2551 = vunpack.c.h.b16 %v555
      %v2552 = vunpack.c.l.b16 %v556
      %v2553 = vunpack.c.h.b16 %v556
      %v2554 = vunpack.c.l.b16 %v557
      %v2555 = vunpack.c.h.b16 %v557
      %v2556 = vunpack.c.l.b16 %v558
      %v2557 = vunpack.c.h.b16 %v558
      %v2558 = vunpack.c.l.b16 %v559
      %v2559 = vunpack.c.h.b16 %v559
      %v2560 = vunpack.c.l.b16 %v560
      %v2561 = vunpack.c.h.b16 %v560
      %v2562 = vunpack.c.l.b16 %v561
      %v2563 = vunpack.c.h.b16 %v561
      %v2564 = vunpack.c.l.b16 %v562
      %v2565 = vunpack.c.h.b16 %v562
      %v2566 = vunpack.c.l.b16 %v563
      %v2567 = vunpack.c.h.b16 %v563
      %v2568 = vunpack.c.l.b16 %v564
      %v2569 = vunpack.c.h.b16 %v564
      %v2570 = vunpack.c.l.b16 %v565
      %v2571 = vunpack.c.h.b16 %v565
      %v2572 = vunpack.c.l.b16 %v566
      %v2573 = vunpack.c.h.b16 %v566
      %v2574 = vunpack.c.l.b16 %v567
      %v2575 = vunpack.c.h.b16 %v567
      %v2576 = vunpack.c.l.b16 %v568
      %v2577 = vunpack.c.h.b16 %v568
      %v2578 = vunpack.c.l.b16 %v569
      %v2579 = vunpack.c.h.b16 %v569
      %v2580 = vunpack.c.l.b16 %v570
      %v2581 = vunpack.c.h.b16 %v570
      %v2582 = vunpack.c.l.b16 %v571
      %v2583 = vunpack.c.h.b16 %v571
      %v2584 = vunpack.c.l.b16 %v572
      %v2585 = vunpack.c.h.b16 %v572
      %v2586 = vunpack.c.l.b16 %v573
      %v2587 = vunpack.c.h.b16 %v573
      %v2588 = vunpack.c.l.b16 %v574
      %v2589 = vunpack.c.h.b16 %v574
      %v2590 = vunpack.c.l.b16 %v575
      %v2591 = vunpack.c.h.b16 %v575
      %v2592 = vunpack.c.l.b16 %v576
      %v2593 = vunpack.c.h.b16 %v576
      %v2594 = vunpack.c.l.b16 %v577
      %v2595 = vunpack.c.h.b16 %v577
      %v2596 = vunpack.c.l.b16 %v578
      %v2597 = vunpack.c.h.b16 %v578
      %v2598 = vunpack.c.l.b16 %v579
      %v2599 = vunpack.c.h.b16 %v579
      %v2600 = vunpack.c.l.b16 %v580
      %v2601 = vunpack.c.h.b16 %v580
      %v2602 = vunpack.c.l.b16 %v581
      %v2603 = vunpack.c.h.b16 %v581
      %v2604 = vunpack.c.l.b16 %v582
      %v2605 = vunpack.c.h.b16 %v582
      %v2606 = vunpack.c.l.b16 %v583
      %v2607 = vunpack.c.h.b16 %v583
      %v2608 = vunpack.c.l.b16 %v584
      %v2609 = vunpack.c.h.b16 %v584
      %v2610 = vunpack.c.l.b16 %v585
      %v2611 = vunpack.c.h.b16 %v585
      %v2612 = vunpack.c.l.b16 %v586
      %v2613 = vunpack.c.h.b16 %v586
      %v2614 = vunpack.c.l.b16 %v587
      %v2615 = vunpack.c.h.b16 %v587
      %v2616 = vunpack.c.l.b16 %v588
      %v2617 = vunpack.c.h.b16 %v588
      %v2618 = vunpack.c.l.b16 %v589
      %v2619 = vunpack.c.h.b16 %v589
      %v2620 = vunpack.c.l.b16 %v590
      %v2621 = vunpack.c.h.b16 %v590
      %v2622 = vunpack.c.l.b16 %v591
      %v2623 = vunpack.c.h.b16 %v591
      %v2624 = vunpack.c.l.b16 %v592
      %v2625 = vunpack.c.h.b16 %v592
      %v2626 = vunpack.c.l.b16 %v593
      %v2627 = vunpack.c.h.b16 %v593
      %v2628 = vunpack.c.l.b16 %v594
      %v2629 = vunpack.c.h.b16 %v594
      %v2630 = vunpack.c.l.b16 %v595
      %v2631 = vunpack.c.h.b16 %v595
      %v2632 = vunpack.c.l.b16 %v596
      %v2633 = vunpack.c.h.b16 %v596
      %v2634 = vunpack.c.l.b16 %v597
      %v2635 = vunpack.c.h.b16 %v597
      %v2636 = vunpack.c.l.b16 %v598
      %v2637 = vunpack.c.h.b16 %v598
      %v2638 = vunpack.c.l.b16 %v599
      %v2639 = vunpack.c.h.b16 %v599
      %v2640 = vunpack.c.l.b16 %v600
      %v2641 = vunpack.c.h.b16 %v600
      %v2642 = vunpack.c.l.b16 %v601
      %v2643 = vunpack.c.h.b16 %v601
      %v2644 = vunpack.c.l.b16 %v602
      %v2645 = vunpack.c.h.b16 %v602
      %v2646 = vunpack.c.l.b16 %v603
      %v2647 = vunpack.c.h.b16 %v603
      %v2648 = vunpack.c.l.b16 %v604
      %v2649 = vunpack.c.h.b16 %v604
      %v2650 = vunpack.c.l.b16 %v605
      %v2651 = vunpack.c.h.b16 %v605
      %v2652 = vunpack.c.l.b16 %v606
      %v2653 = vunpack.c.h.b16 %v606
      %v2654 = vunpack.c.l.b16 %v607
      %v2655 = vunpack.c.h.b16 %v607
      %v2656 = vunpack.c.l.b16 %v608
      %v2657 = vunpack.c.h.b16 %v608
      %v2658 = vunpack.c.l.b16 %v609
      %v2659 = vunpack.c.h.b16 %v609
      %v2660 = vunpack.c.l.b16 %v610
      %v2661 = vunpack.c.h.b16 %v610
      %v2662 = vunpack.c.l.b16 %v611
      %v2663 = vunpack.c.h.b16 %v611
      %v2664 = vunpack.c.l.b16 %v612
      %v2665 = vunpack.c.h.b16 %v612
      %v2666 = vunpack.c.l.b16 %v613
      %v2667 = vunpack.c.h.b16 %v613
      %v2668 = vunpack.c.l.b16 %v614
      %v2669 = vunpack.c.h.b16 %v614
      %v2670 = vunpack.c.l.b16 %v615
      %v2671 = vunpack.c.h.b16 %v615
      %v2672 = vunpack.c.l.b16 %v616
      %v2673 = vunpack.c.h.b16 %v616
      %v2674 = vunpack.c.l.b16 %v617
      %v2675 = vunpack.c.h.b16 %v617
      %v2676 = vunpack.c.l.b16 %v618
      %v2677 = vunpack.c.h.b16 %v618
      %v2678 = vunpack.c.l.b16 %v619
      %v2679 = vunpack.c.h.b16 %v619
      %v2680 = vunpack.c.l.b16 %v620
      %v2681 = vunpack.c.h.b16 %v620
      %v2682 = vunpack.c.l.b16 %v621
      %v2683 = vunpack.c.h.b16 %v621
      %v2684 = vunpack.c.l.b16 %v622
      %v2685 = vunpack.c.h.b16 %v622
      %v2686 = vunpack.c.l.b16 %v623
      %v2687 = vunpack.c.h.b16 %v623
      %v2688 = vunpack.c.l.b16 %v624
      %v2689 = vunpack.c.h.b16 %v624
      %v2690 = vunpack.c.l.b16 %v625
      %v2691 = vunpack.c.h.b16 %v625
      %v2692 = vunpack.c.l.b16 %v626
      %v2693 = vunpack.c.h.b16 %v626
      %v2694 = vunpack.c.l.b16 %v627
      %v2695 = vunpack.c.h.b16 %v627
      %v2696 = vunpack.c.l.b16 %v628
      %v2697 = vunpack.c.h.b16 %v628
      %v2698 = vunpack.c.l.b16 %v629
      %v2699 = vunpack.c.h.b16 %v629
      %v2700 = vunpack.c.l.b16 %v630
      %v2701 = vunpack.c.h.b16 %v630
      %v2702 = vunpack.c.l.b16 %v631
      %v2703 = vunpack.c.h.b16 %v631
      %v2704 = vunpack.c.l.b16 %v632
      %v2705 = vunpack.c.h.b16 %v632
      %v2706 = vunpack.c.l.b16 %v633
      %v2707 = vunpack.c.h.b16 %v633
      %v2708 = vunpack.c.l.b16 %v634
      %v2709 = vunpack.c.h.b16 %v634
      %v2710 = vunpack.c.l.b16 %v635
      %v2711 = vunpack.c.h.b16 %v635
      %v2712 = vunpack.c.l.b16 %v636
      %v2713 = vunpack.c.h.b16 %v636
      %v2714 = vunpack.c.l.b16 %v637
      %v2715 = vunpack.c.h.b16 %v637
      %v2716 = vunpack.c.l.b16 %v638
      %v2717 = vunpack.c.h.b16 %v638
      %v2718 = vunpack.c.l.b16 %v639
      %v2719 = vunpack.c.h.b16 %v639
      %v2720 = vunpack.c.l.b16 %v640
      %v2721 = vunpack.c.h.b16 %v640
      %v2722 = vunpack.c.l.b16 %v641
      %v2723 = vunpack.c.h.b16 %v641
      %v2724 = vunpack.c.l.b16 %v642
      %v2725 = vunpack.c.h.b16 %v642
      %v2726 = vunpack.c.l.b16 %v643
      %v2727 = vunpack.c.h.b16 %v643
      %v2728 = vunpack.c.l.b16 %v644
      %v2729 = vunpack.c.h.b16 %v644
      %v2730 = vunpack.c.l.b16 %v645
      %v2731 = vunpack.c.h.b16 %v645
      %v2732 = vunpack.c.l.b16 %v646
      %v2733 = vunpack.c.h.b16 %v646
      %v2734 = vunpack.c.l.b16 %v647
      %v2735 = vunpack.c.h.b16 %v647
      %v2736 = vunpack.c.l.b16 %v648
      %v2737 = vunpack.c.h.b16 %v648
      %v2738 = vunpack.c.l.b16 %v649
      %v2739 = vunpack.c.h.b16 %v649
      %v2740 = vunpack.c.l.b16 %v650
      %v2741 = vunpack.c.h.b16 %v650
      %v2742 = vunpack.c.l.b16 %v651
      %v2743 = vunpack.c.h.b16 %v651
      %v2744 = vunpack.c.l.b16 %v652
      %v2745 = vunpack.c.h.b16 %v652
      %v2746 = vunpack.c.l.b16 %v653
      %v2747 = vunpack.c.h.b16 %v653
      %v2748 = vunpack.c.l.b16 %v654
      %v2749 = vunpack.c.h.b16 %v654
      %v2750 = vunpack.c.l.b16 %v655
      %v2751 = vunpack.c.h.b16 %v655
      %v2752 = vunpack.c.l.b16 %v656
      %v2753 = vunpack.c.h.b16 %v656
      %v2754 = vunpack.c.l.b16 %v657
      %v2755 = vunpack.c.h.b16 %v657
      %v2756 = vunpack.c.l.b16 %v658
      %v2757 = vunpack.c.h.b16 %v658
      %v2758 = vunpack.c.l.b16 %v659
      %v2759 = vunpack.c.h.b16 %v659
      %v2760 = vunpack.c.l.b16 %v660
      %v2761 = vunpack.c.h.b16 %v660
      %v2762 = vunpack.c.l.b16 %v661
      %v2763 = vunpack.c.h.b16 %v661
      %v2764 = vunpack.c.l.b16 %v662
      %v2765 = vunpack.c.h.b16 %v662
      %v2766 = vunpack.c.l.b16 %v663
      %v2767 = vunpack.c.h.b16 %v663
      %v2768 = vunpack.c.l.b16 %v664
      %v2769 = vunpack.c.h.b16 %v664
      %v2770 = vunpack.c.l.b16 %v665
      %v2771 = vunpack.c.h.b16 %v665
      %v2772 = vunpack.c.l.b16 %v666
      %v2773 = vunpack.c.h.b16 %v666
      %v2774 = vunpack.c.l.b16 %v667
      %v2775 = vunpack.c.h.b16 %v667
      %v2776 = vunpack.c.l.b16 %v668
      %v2777 = vunpack.c.h.b16 %v668
      %v2778 = vunpack.c.l.b16 %v669
      %v2779 = vunpack.c.h.b16 %v669
      %v2780 = vunpack.c.l.b16 %v670
      %v2781 = vunpack.c.h.b16 %v670
      %v2782 = vunpack.c.l.b16 %v671
      %v2783 = vunpack.c.h.b16 %v671
      %v2784 = vunpack.c.l.b16 %v672
      %v2785 = vunpack.c.h.b16 %v672
      %v2786 = vunpack.c.l.b16 %v673
      %v2787 = vunpack.c.h.b16 %v673
      %v2788 = vunpack.c.l.b16 %v674
      %v2789 = vunpack.c.h.b16 %v674
      %v2790 = vunpack.c.l.b16 %v675
      %v2791 = vunpack.c.h.b16 %v675
      %v2792 = vunpack.c.l.b16 %v676
      %v2793 = vunpack.c.h.b16 %v676
      %v2794 = vunpack.c.l.b16 %v677
      %v2795 = vunpack.c.h.b16 %v677
      %v2796 = vunpack.c.l.b16 %v678
      %v2797 = vunpack.c.h.b16 %v678
      %v2798 = vunpack.c.l.b16 %v679
      %v2799 = vunpack.c.h.b16 %v679
      %v2800 = vunpack.c.l.b16 %v680
      %v2801 = vunpack.c.h.b16 %v680
      %v2802 = vunpack.c.l.b16 %v681
      %v2803 = vunpack.c.h.b16 %v681
      %v2804 = vunpack.c.l.b16 %v682
      %v2805 = vunpack.c.h.b16 %v682
      %v2806 = vunpack.c.l.b16 %v683
      %v2807 = vunpack.c.h.b16 %v683
      %v2808 = vunpack.c.l.b16 %v684
      %v2809 = vunpack.c.h.b16 %v684
      %v2810 = vunpack.c.l.b16 %v685
      %v2811 = vunpack.c.h.b16 %v685
      %v2812 = vunpack.c.l.b16 %v686
      %v2813 = vunpack.c.h.b16 %v686
      %v2814 = vunpack.c.l.b16 %v687
      %v2815 = vunpack.c.h.b16 %v687
      %v2816 = vunpack.c.l.b16 %v688
      %v2817 = vunpack.c.h.b16 %v688
      %v2818 = vunpack.c.l.b16 %v689
      %v2819 = vunpack.c.h.b16 %v689
      %v2820 = vunpack.c.l.b16 %v690
      %v2821 = vunpack.c.h.b16 %v690
      %v2822 = vunpack.c.l.b16 %v691
      %v2823 = vunpack.c.h.b16 %v691
      %v2824 = vunpack.c.l.b16 %v692
      %v2825 = vunpack.c.h.b16 %v692
      %v2826 = vunpack.c.l.b16 %v693
      %v2827 = vunpack.c.h.b16 %v693
      %v2828 = vunpack.c.l.b16 %v694
      %v2829 = vunpack.c.h.b16 %v694
      %v2830 = vunpack.c.l.b16 %v695
      %v2831 = vunpack.c.h.b16 %v695
      %v2832 = vunpack.c.l.b16 %v696
      %v2833 = vunpack.c.h.b16 %v696
      %v2834 = vunpack.c.l.b16 %v697
      %v2835 = vunpack.c.h.b16 %v697
      %v2836 = vunpack.c.l.b16 %v698
      %v2837 = vunpack.c.h.b16 %v698
      %v2838 = vunpack.c.l.b16 %v699
      %v2839 = vunpack.c.h.b16 %v699
      %v2840 = vunpack.c.l.b16 %v700
      %v2841 = vunpack.c.h.b16 %v700
      %v2842 = vunpack.c.l.b16 %v701
      %v2843 = vunpack.c.h.b16 %v701
      %v2844 = vunpack.c.l.b16 %v702
      %v2845 = vunpack.c.h.b16 %v702
      %v2846 = vunpack.c.l.b16 %v703
      %v2847 = vunpack.c.h.b16 %v703
      %v2848 = vunpack.c.l.b16 %v704
      %v2849 = vunpack.c.h.b16 %v704
      %v2850 = vunpack.c.l.b16 %v705
      %v2851 = vunpack.c.h.b16 %v705
      %v2852 = vunpack.c.l.b16 %v706
      %v2853 = vunpack.c.h.b16 %v706
      %v2854 = vunpack.c.l.b16 %v707
      %v2855 = vunpack.c.h.b16 %v707
      %v2856 = vunpack.c.l.b16 %v708
      %v2857 = vunpack.c.h.b16 %v708
      %v2858 = vunpack.c.l.b16 %v709
      %v2859 = vunpack.c.h.b16 %v709
      %v2860 = vunpack.c.l.b16 %v710
      %v2861 = vunpack.c.h.b16 %v710
      %v2862 = vunpack.c.l.b16 %v711
      %v2863 = vunpack.c.h.b16 %v711
      %v2864 = vunpack.c.l.b16 %v712
      %v2865 = vunpack.c.h.b16 %v712
      %v2866 = vunpack.c.l.b16 %v713
      %v2867 = vunpack.c.h.b16 %v713
      %v2868 = vunpack.c.l.b16 %v714
      %v2869 = vunpack.c.h.b16 %v714
      %v2870 = vunpack.c.l.b16 %v715
      %v2871 = vunpack.c.h.b16 %v715
      %v2872 = vunpack.c.l.b16 %v716
      %v2873 = vunpack.c.h.b16 %v716
      %v2874 = vunpack.c.l.b16 %v717
      %v2875 = vunpack.c.h.b16 %v717
      %v2876 = vunpack.c.l.b16 %v718
      %v2877 = vunpack.c.h.b16 %v718
      %v2878 = vunpack.c.l.b16 %v719
      %v2879 = vunpack.c.h.b16 %v719
      %v2880 = vunpack.c.l.b16 %v720
      %v2881 = vunpack.c.h.b16 %v720
      %v2882 = vunpack.c.l.b16 %v721
      %v2883 = vunpack.c.h.b16 %v721
      %v2884 = vunpack.c.l.b16 %v722
      %v2885 = vunpack.c.h.b16 %v722
      %v2886 = vunpack.c.l.b16 %v723
      %v2887 = vunpack.c.h.b16 %v723
      %v2888 = vunpack.c.l.b16 %v724
      %v2889 = vunpack.c.h.b16 %v724
      %v2890 = vunpack.c.l.b16 %v725
      %v2891 = vunpack.c.h.b16 %v725
      %v2892 = vunpack.c.l.b16 %v726
      %v2893 = vunpack.c.h.b16 %v726
      %v2894 = vunpack.c.l.b16 %v727
      %v2895 = vunpack.c.h.b16 %v727
      %v2896 = vunpack.c.l.b16 %v728
      %v2897 = vunpack.c.h.b16 %v728
      %v2898 = vunpack.c.l.b16 %v729
      %v2899 = vunpack.c.h.b16 %v729
      %v2900 = vunpack.c.l.b16 %v730
      %v2901 = vunpack.c.h.b16 %v730
      %v2902 = vunpack.c.l.b16 %v731
      %v2903 = vunpack.c.h.b16 %v731
      %v2904 = vunpack.c.l.b16 %v732
      %v2905 = vunpack.c.h.b16 %v732
      %v2906 = vunpack.c.l.b16 %v733
      %v2907 = vunpack.c.h.b16 %v733
      %v2908 = vunpack.c.l.b16 %v734
      %v2909 = vunpack.c.h.b16 %v734
      %v2910 = vunpack.c.l.b16 %v735
      %v2911 = vunpack.c.h.b16 %v735
      %v2912 = vunpack.c.l.b16 %v736
      %v2913 = vunpack.c.h.b16 %v736
      %v2914 = vunpack.c.l.b16 %v737
      %v2915 = vunpack.c.h.b16 %v737
      %v2916 = vunpack.c.l.b16 %v738
      %v2917 = vunpack.c.h.b16 %v738
      %v2918 = vunpack.c.l.b16 %v739
      %v2919 = vunpack.c.h.b16 %v739
      %v2920 = vunpack.c.l.b16 %v740
      %v2921 = vunpack.c.h.b16 %v740
      %v2922 = vunpack.c.l.b16 %v741
      %v2923 = vunpack.c.h.b16 %v741
      %v2924 = vunpack.c.l.b16 %v742
      %v2925 = vunpack.c.h.b16 %v742
      %v2926 = vunpack.c.l.b16 %v743
      %v2927 = vunpack.c.h.b16 %v743
      %v2928 = vunpack.c.l.b16 %v744
      %v2929 = vunpack.c.h.b16 %v744
      %v2930 = vunpack.c.l.b16 %v745
      %v2931 = vunpack.c.h.b16 %v745
      %v2932 = vunpack.c.l.b16 %v746
      %v2933 = vunpack.c.h.b16 %v746
      %v2934 = vunpack.c.l.b16 %v747
      %v2935 = vunpack.c.h.b16 %v747
      %v2936 = vunpack.c.l.b16 %v748
      %v2937 = vunpack.c.h.b16 %v748
      %v2938 = vunpack.c.l.b16 %v749
      %v2939 = vunpack.c.h.b16 %v749
      %v2940 = vunpack.c.l.b16 %v750
      %v2941 = vunpack.c.h.b16 %v750
      %v2942 = vunpack.c.l.b16 %v751
      %v2943 = vunpack.c.h.b16 %v751
      %v2944 = vunpack.c.l.b16 %v752
      %v2945 = vunpack.c.h.b16 %v752
      %v2946 = vunpack.c.l.b16 %v753
      %v2947 = vunpack.c.h.b16 %v753
      %v2948 = vunpack.c.l.b16 %v754
      %v2949 = vunpack.c.h.b16 %v754
      %v2950 = vunpack.c.l.b16 %v755
      %v2951 = vunpack.c.h.b16 %v755
      %v2952 = vunpack.c.l.b16 %v756
      %v2953 = vunpack.c.h.b16 %v756
      %v2954 = vunpack.c.l.b16 %v757
      %v2955 = vunpack.c.h.b16 %v757
      %v2956 = vunpack.c.l.b16 %v758
      %v2957 = vunpack.c.h.b16 %v758
      %v2958 = vunpack.c.l.b16 %v759
      %v2959 = vunpack.c.h.b16 %v759
      %v2960 = vunpack.c.l.b16 %v760
      %v2961 = vunpack.c.h.b16 %v760
      %v2962 = vunpack.c.l.b16 %v761
      %v2963 = vunpack.c.h.b16 %v761
      %v2964 = vunpack.c.l.b16 %v762
      %v2965 = vunpack.c.h.b16 %v762
      %v2966 = vunpack.c.l.b16 %v763
      %v2967 = vunpack.c.h.b16 %v763
      %v2968 = vunpack.c.l.b16 %v764
      %v2969 = vunpack.c.h.b16 %v764
      %v2970 = vunpack.c.l.b16 %v765
      %v2971 = vunpack.c.h.b16 %v765
      %v2972 = vunpack.c.l.b16 %v766
      %v2973 = vunpack.c.h.b16 %v766
      %v2974 = vunpack.c.l.b16 %v767
      %v2975 = vunpack.c.h.b16 %v767
      %v2976 = vunpack.c.l.b16 %v768
      %v2977 = vunpack.c.h.b16 %v768
      %v2978 = vunpack.c.l.b16 %v769
      %v2979 = vunpack.c.h.b16 %v769
      %v2980 = vunpack.c.l.b16 %v770
      %v2981 = vunpack.c.h.b16 %v770
      %v2982 = vunpack.c.l.b16 %v771
      %v2983 = vunpack.c.h.b16 %v771
      %v2984 = vunpack.c.l.b16 %v772
      %v2985 = vunpack.c.h.b16 %v772
      %v2986 = vunpack.c.l.b16 %v773
      %v2987 = vunpack.c.h.b16 %v773
      %v2988 = vunpack.c.l.b16 %v774
      %v2989 = vunpack.c.h.b16 %v774
      %v2990 = vunpack.c.l.b16 %v775
      %v2991 = vunpack.c.h.b16 %v775
      %v2992 = vunpack.c.l.b16 %v776
      %v2993 = vunpack.c.h.b16 %v776
      %v2994 = vunpack.c.l.b16 %v777
      %v2995 = vunpack.c.h.b16 %v777
      %v2996 = vunpack.c.l.b16 %v778
      %v2997 = vunpack.c.h.b16 %v778
      %v2998 = vunpack.c.l.b16 %v779
      %v2999 = vunpack.c.h.b16 %v779
      %v3000 = vunpack.c.l.b16 %v780
      %v3001 = vunpack.c.h.b16 %v780
      %v3002 = vunpack.c.l.b16 %v781
      %v3003 = vunpack.c.h.b16 %v781
      %v3004 = vunpack.c.l.b16 %v782
      %v3005 = vunpack.c.h.b16 %v782
      %v3006 = vunpack.c.l.b16 %v783
      %v3007 = vunpack.c.h.b16 %v783
      %v3008 = vunpack.c.l.b16 %v784
      %v3009 = vunpack.c.h.b16 %v784
      %v3010 = vunpack.c.l.b16 %v785
      %v3011 = vunpack.c.h.b16 %v785
      %v3012 = vunpack.c.l.b16 %v786
      %v3013 = vunpack.c.h.b16 %v786
      %v3014 = vunpack.c.l.b16 %v787
      %v3015 = vunpack.c.h.b16 %v787
      %v3016 = vunpack.c.l.b16 %v788
      %v3017 = vunpack.c.h.b16 %v788
      %v3018 = vunpack.c.l.b16 %v789
      %v3019 = vunpack.c.h.b16 %v789
      %v3020 = vunpack.c.l.b16 %v790
      %v3021 = vunpack.c.h.b16 %v790
      %v3022 = vunpack.c.l.b16 %v791
      %v3023 = vunpack.c.h.b16 %v791
      %v3024 = vunpack.c.l.b16 %v792
      %v3025 = vunpack.c.h.b16 %v792
      %v3026 = vunpack.c.l.b16 %v793
      %v3027 = vunpack.c.h.b16 %v793
      %v3028 = vunpack.c.l.b16 %v794
      %v3029 = vunpack.c.h.b16 %v794
      %v3030 = vunpack.c.l.b16 %v795
      %v3031 = vunpack.c.h.b16 %v795
      %v3032 = vunpack.c.l.b16 %v796
      %v3033 = vunpack.c.h.b16 %v796
      %v3034 = vunpack.c.l.b16 %v797
      %v3035 = vunpack.c.h.b16 %v797
      %v3036 = vunpack.c.l.b16 %v798
      %v3037 = vunpack.c.h.b16 %v798
      %v3038 = vunpack.c.l.b16 %v799
      %v3039 = vunpack.c.h.b16 %v799
      %v3040 = vunpack.c.l.b16 %v800
      %v3041 = vunpack.c.h.b16 %v800
      %v3042 = vunpack.c.l.b16 %v801
      %v3043 = vunpack.c.h.b16 %v801
      %v3044 = vunpack.c.l.b16 %v802
      %v3045 = vunpack.c.h.b16 %v802
      %v3046 = vunpack.c.l.b16 %v803
      %v3047 = vunpack.c.h.b16 %v803
      %v3048 = vunpack.c.l.b16 %v804
      %v3049 = vunpack.c.h.b16 %v804
      %v3050 = vunpack.c.l.b16 %v805
      %v3051 = vunpack.c.h.b16 %v805
      %v3052 = vunpack.c.l.b16 %v806
      %v3053 = vunpack.c.h.b16 %v806
      %v3054 = vunpack.c.l.b16 %v807
      %v3055 = vunpack.c.h.b16 %v807
      %v3056 = vunpack.c.l.b16 %v808
      %v3057 = vunpack.c.h.b16 %v808
      %v3058 = vunpack.c.l.b16 %v809
      %v3059 = vunpack.c.h.b16 %v809
      %v3060 = vunpack.c.l.b16 %v810
      %v3061 = vunpack.c.h.b16 %v810
      %v3062 = vunpack.c.l.b16 %v811
      %v3063 = vunpack.c.h.b16 %v811
      %v3064 = vunpack.c.l.b16 %v812
      %v3065 = vunpack.c.h.b16 %v812
      %v3066 = vunpack.c.l.b16 %v813
      %v3067 = vunpack.c.h.b16 %v813
      %v3068 = vunpack.c.l.b16 %v814
      %v3069 = vunpack.c.h.b16 %v814
      %v3070 = vunpack.c.l.b16 %v815
      %v3071 = vunpack.c.h.b16 %v815
      %v3072 = vunpack.c.l.b16 %v816
      %v3073 = vunpack.c.h.b16 %v816
      %v3074 = vunpack.c.l.b16 %v817
      %v3075 = vunpack.c.h.b16 %v817
      %v3076 = vunpack.c.l.b16 %v818
      %v3077 = vunpack.c.h.b16 %v818
      %v3078 = vunpack.c.l.b16 %v819
      %v3079 = vunpack.c.h.b16 %v819
      %v3080 = vunpack.c.l.b16 %v820
      %v3081 = vunpack.c.h.b16 %v820
      %v3082 = vunpack.c.l.b16 %v821
      %v3083 = vunpack.c.h.b16 %v821
      %v3084 = vunpack.c.l.b16 %v822
      %v3085 = vunpack.c.h.b16 %v822
      %v3086 = vunpack.c.l.b16 %v823
      %v3087 = vunpack.c.h.b16 %v823
      %v3088 = vunpack.c.l.b16 %v824
      %v3089 = vunpack.c.h.b16 %v824
      %v3090 = vunpack.c.l.b16 %v825
      %v3091 = vunpack.c.h.b16 %v825
      %v3092 = vunpack.c.l.b16 %v826
      %v3093 = vunpack.c.h.b16 %v826
      %v3094 = vunpack.c.l.b16 %v827
      %v3095 = vunpack.c.h.b16 %v827
      %v3096 = vunpack.c.l.b16 %v828
      %v3097 = vunpack.c.h.b16 %v828
      %v3098 = vunpack.c.l.b16 %v829
      %v3099 = vunpack.c.h.b16 %v829
      %v3100 = vunpack.c.l.b16 %v830
      %v3101 = vunpack.c.h.b16 %v830
      %v3102 = vunpack.c.l.b16 %v831
      %v3103 = vunpack.c.h.b16 %v831
      %v3104 = vunpack.c.l.b16 %v832
      %v3105 = vunpack.c.h.b16 %v832
      %v3106 = vunpack.c.l.b16 %v833
      %v3107 = vunpack.c.h.b16 %v833
      %v3108 = vunpack.c.l.b16 %v834
      %v3109 = vunpack.c.h.b16 %v834
      %v3110 = vunpack.c.l.b16 %v835
      %v3111 = vunpack.c.h.b16 %v835
      %v3112 = vunpack.c.l.b16 %v836
      %v3113 = vunpack.c.h.b16 %v836
      %v3114 = vunpack.c.l.b16 %v837
      %v3115 = vunpack.c.h.b16 %v837
      %v3116 = vunpack.c.l.b16 %v838
      %v3117 = vunpack.c.h.b16 %v838
      %v3118 = vunpack.c.l.b16 %v839
      %v3119 = vunpack.c.h.b16 %v839
      %v3120 = vunpack.c.l.b16 %v840
      %v3121 = vunpack.c.h.b16 %v840
      %v3122 = vunpack.c.l.b16 %v841
      %v3123 = vunpack.c.h.b16 %v841
      %v3124 = vunpack.c.l.b16 %v842
      %v3125 = vunpack.c.h.b16 %v842
      %v3126 = vunpack.c.l.b16 %v843
      %v3127 = vunpack.c.h.b16 %v843
      %v3128 = vunpack.c.l.b16 %v844
      %v3129 = vunpack.c.h.b16 %v844
      %v3130 = vunpack.c.l.b16 %v845
      %v3131 = vunpack.c.h.b16 %v845
      %v3132 = vunpack.c.l.b16 %v846
      %v3133 = vunpack.c.h.b16 %v846
      %v3134 = vunpack.c.l.b16 %v847
      %v3135 = vunpack.c.h.b16 %v847
      %v3136 = vunpack.c.l.b16 %v848
      %v3137 = vunpack.c.h.b16 %v848
      %v3138 = vunpack.c.l.b16 %v849
      %v3139 = vunpack.c.h.b16 %v849
      %v3140 = vunpack.c.l.b16 %v850
      %v3141 = vunpack.c.h.b16 %v850
      %v3142 = vunpack.c.l.b16 %v851
      %v3143 = vunpack.c.h.b16 %v851
      %v3144 = vunpack.c.l.b16 %v852
      %v3145 = vunpack.c.h.b16 %v852
      %v3146 = vunpack.c.l.b16 %v853
      %v3147 = vunpack.c.h.b16 %v853
      %v3148 = vunpack.c.l.b16 %v854
      %v3149 = vunpack.c.h.b16 %v854
      %v3150 = vunpack.c.l.b16 %v855
      %v3151 = vunpack.c.h.b16 %v855
      %v3152 = vunpack.c.l.b16 %v856
      %v3153 = vunpack.c.h.b16 %v856
      %v3154 = vunpack.c.l.b16 %v857
      %v3155 = vunpack.c.h.b16 %v857
      %v3156 = vunpack.c.l.b16 %v858
      %v3157 = vunpack.c.h.b16 %v858
      %v3158 = vunpack.c.l.b16 %v859
      %v3159 = vunpack.c.h.b16 %v859
      %v3160 = vunpack.c.l.b16 %v860
      %v3161 = vunpack.c.h.b16 %v860
      %v3162 = vunpack.c.l.b16 %v861
      %v3163 = vunpack.c.h.b16 %v861
      %v3164 = vunpack.c.l.b16 %v862
      %v3165 = vunpack.c.h.b16 %v862
      %v3166 = vunpack.c.l.b16 %v863
      %v3167 = vunpack.c.h.b16 %v863
      %v3168 = vunpack.c.l.b16 %v864
      %v3169 = vunpack.c.h.b16 %v864
      %v3170 = vunpack.c.l.b16 %v865
      %v3171 = vunpack.c.h.b16 %v865
      %v3172 = vunpack.c.l.b16 %v866
      %v3173 = vunpack.c.h.b16 %v866
      %v3174 = vunpack.c.l.b16 %v867
      %v3175 = vunpack.c.h.b16 %v867
      %v3176 = vunpack.c.l.b16 %v868
      %v3177 = vunpack.c.h.b16 %v868
      %v3178 = vunpack.c.l.b16 %v869
      %v3179 = vunpack.c.h.b16 %v869
      %v3180 = vunpack.c.l.b16 %v870
      %v3181 = vunpack.c.h.b16 %v870
      %v3182 = vunpack.c.l.b16 %v871
      %v3183 = vunpack.c.h.b16 %v871
      %v3184 = vunpack.c.l.b16 %v872
      %v3185 = vunpack.c.h.b16 %v872
      %v3186 = vunpack.c.l.b16 %v873
      %v3187 = vunpack.c.h.b16 %v873
      %v3188 = vunpack.c.l.b16 %v874
      %v3189 = vunpack.c.h.b16 %v874
      %v3190 = vunpack.c.l.b16 %v875
      %v3191 = vunpack.c.h.b16 %v875
      %v3192 = vunpack.c.l.b16 %v876
      %v3193 = vunpack.c.h.b16 %v876
      %v3194 = vunpack.c.l.b16 %v877
      %v3195 = vunpack.c.h.b16 %v877
      %v3196 = vunpack.c.l.b16 %v878
      %v3197 = vunpack.c.h.b16 %v878
      %v3198 = vunpack.c.l.b16 %v879
      %v3199 = vunpack.c.h.b16 %v879
      %v3200 = vunpack.c.l.b16 %v880
      %v3201 = vunpack.c.h.b16 %v880
      %v3202 = vunpack.c.l.b16 %v881
      %v3203 = vunpack.c.h.b16 %v881
      %v3204 = vunpack.c.l.b16 %v882
      %v3205 = vunpack.c.h.b16 %v882
      %v3206 = vunpack.c.l.b16 %v883
      %v3207 = vunpack.c.h.b16 %v883
      %v3208 = vunpack.c.l.b16 %v884
      %v3209 = vunpack.c.h.b16 %v884
      %v3210 = vunpack.c.l.b16 %v885
      %v3211 = vunpack.c.h.b16 %v885
      %v3212 = vunpack.c.l.b16 %v886
      %v3213 = vunpack.c.h.b16 %v886
      %v3214 = vunpack.c.l.b16 %v887
      %v3215 = vunpack.c.h.b16 %v887
      %v3216 = vunpack.c.l.b16 %v888
      %v3217 = vunpack.c.h.b16 %v888
      %v3218 = vunpack.c.l.b16 %v889
      %v3219 = vunpack.c.h.b16 %v889
      %v3220 = vunpack.c.l.b16 %v890
      %v3221 = vunpack.c.h.b16 %v890
      %v3222 = vunpack.c.l.b16 %v891
      %v3223 = vunpack.c.h.b16 %v891
      %v3224 = vunpack.c.l.b16 %v892
      %v3225 = vunpack.c.h.b16 %v892
      %v3226 = vunpack.c.l.b16 %v893
      %v3227 = vunpack.c.h.b16 %v893
      %v3228 = vunpack.c.l.b16 %v894
      %v3229 = vunpack.c.h.b16 %v894
      %v3230 = vunpack.c.l.b16 %v895
      %v3231 = vunpack.c.h.b16 %v895
      %v3232 = vunpack.c.l.b16 %v896
      %v3233 = vunpack.c.h.b16 %v896
      %v3234 = vunpack.c.l.b16 %v897
      %v3235 = vunpack.c.h.b16 %v897
      %v3236 = vunpack.c.l.b16 %v898
      %v3237 = vunpack.c.h.b16 %v898
      %v3238 = vunpack.c.l.b16 %v899
      %v3239 = vunpack.c.h.b16 %v899
      %v3240 = vunpack.c.l.b16 %v900
      %v3241 = vunpack.c.h.b16 %v900
      %v3242 = vunpack.c.l.b16 %v901
      %v3243 = vunpack.c.h.b16 %v901
      %v3244 = vunpack.c.l.b16 %v902
      %v3245 = vunpack.c.h.b16 %v902
      %v3246 = vunpack.c.l.b16 %v903
      %v3247 = vunpack.c.h.b16 %v903
      %v3248 = vunpack.c.l.b16 %v904
      %v3249 = vunpack.c.h.b16 %v904
      %v3250 = vunpack.c.l.b16 %v905
      %v3251 = vunpack.c.h.b16 %v905
      %v3252 = vunpack.c.l.b16 %v906
      %v3253 = vunpack.c.h.b16 %v906
      %v3254 = vunpack.c.l.b16 %v907
      %v3255 = vunpack.c.h.b16 %v907
      %v3256 = vunpack.c.l.b16 %v908
      %v3257 = vunpack.c.h.b16 %v908
      %v3258 = vunpack.c.l.b16 %v909
      %v3259 = vunpack.c.h.b16 %v909
      %v3260 = vunpack.c.l.b16 %v910
      %v3261 = vunpack.c.h.b16 %v910
      %v3262 = vunpack.c.l.b16 %v911
      %v3263 = vunpack.c.h.b16 %v911
      %v3264 = vunpack.c.l.b16 %v912
      %v3265 = vunpack.c.h.b16 %v912
      %v3266 = vunpack.c.l.b16 %v913
      %v3267 = vunpack.c.h.b16 %v913
      %v3268 = vunpack.c.l.b16 %v914
      %v3269 = vunpack.c.h.b16 %v914
      %v3270 = vunpack.c.l.b16 %v915
      %v3271 = vunpack.c.h.b16 %v915
      %v3272 = vunpack.c.l.b16 %v916
      %v3273 = vunpack.c.h.b16 %v916
      %v3274 = vunpack.c.l.b16 %v917
      %v3275 = vunpack.c.h.b16 %v917
      %v3276 = vunpack.c.l.b16 %v918
      %v3277 = vunpack.c.h.b16 %v918
      %v3278 = vunpack.c.l.b16 %v919
      %v3279 = vunpack.c.h.b16 %v919
      %v3280 = vunpack.c.l.b16 %v920
      %v3281 = vunpack.c.h.b16 %v920
      %v3282 = vunpack.c.l.b16 %v921
      %v3283 = vunpack.c.h.b16 %v921
      %v3284 = vunpack.c.l.b16 %v922
      %v3285 = vunpack.c.h.b16 %v922
      %v3286 = vunpack.c.l.b16 %v923
      %v3287 = vunpack.c.h.b16 %v923
      %v3288 = vunpack.c.l.b16 %v924
      %v3289 = vunpack.c.h.b16 %v924
      %v3290 = vunpack.c.l.b16 %v925
      %v3291 = vunpack.c.h.b16 %v925
      %v3292 = vunpack.c.l.b16 %v926
      %v3293 = vunpack.c.h.b16 %v926
      %v3294 = vunpack.c.l.b16 %v927
      %v3295 = vunpack.c.h.b16 %v927
      %v3296 = vunpack.c.l.b16 %v928
      %v3297 = vunpack.c.h.b16 %v928
      %v3298 = vunpack.c.l.b16 %v929
      %v3299 = vunpack.c.h.b16 %v929
      %v3300 = vunpack.c.l.b16 %v930
      %v3301 = vunpack.c.h.b16 %v930
      %v3302 = vunpack.c.l.b16 %v931
      %v3303 = vunpack.c.h.b16 %v931
      %v3304 = vunpack.c.l.b16 %v932
      %v3305 = vunpack.c.h.b16 %v932
      %v3306 = vunpack.c.l.b16 %v933
      %v3307 = vunpack.c.h.b16 %v933
      %v3308 = vunpack.c.l.b16 %v934
      %v3309 = vunpack.c.h.b16 %v934
      %v3310 = vunpack.c.l.b16 %v935
      %v3311 = vunpack.c.h.b16 %v935
      %v3312 = vunpack.c.l.b16 %v936
      %v3313 = vunpack.c.h.b16 %v936
      %v3314 = vunpack.c.l.b16 %v937
      %v3315 = vunpack.c.h.b16 %v937
      %v3316 = vunpack.c.l.b16 %v938
      %v3317 = vunpack.c.h.b16 %v938
      %v3318 = vunpack.c.l.b16 %v939
      %v3319 = vunpack.c.h.b16 %v939
      %v3320 = vunpack.c.l.b16 %v940
      %v3321 = vunpack.c.h.b16 %v940
      %v3322 = vunpack.c.l.b16 %v941
      %v3323 = vunpack.c.h.b16 %v941
      %v3324 = vunpack.c.l.b16 %v942
      %v3325 = vunpack.c.h.b16 %v942
      %v3326 = vunpack.c.l.b16 %v943
      %v3327 = vunpack.c.h.b16 %v943
      %v3328 = vunpack.c.l.b16 %v944
      %v3329 = vunpack.c.h.b16 %v944
      %v3330 = vunpack.c.l.b16 %v945
      %v3331 = vunpack.c.h.b16 %v945
      %v3332 = vunpack.c.l.b16 %v946
      %v3333 = vunpack.c.h.b16 %v946
      %v3334 = vunpack.c.l.b16 %v947
      %v3335 = vunpack.c.h.b16 %v947
      %v3336 = vunpack.c.l.b16 %v948
      %v3337 = vunpack.c.h.b16 %v948
      %v3338 = vunpack.c.l.b16 %v949
      %v3339 = vunpack.c.h.b16 %v949
      %v3340 = vunpack.c.l.b16 %v950
      %v3341 = vunpack.c.h.b16 %v950
      %v3342 = vunpack.c.l.b16 %v951
      %v3343 = vunpack.c.h.b16 %v951
      %v3344 = vunpack.c.l.b16 %v952
      %v3345 = vunpack.c.h.b16 %v952
      %v3346 = vunpack.c.l.b16 %v953
      %v3347 = vunpack.c.h.b16 %v953
      %v3348 = vunpack.c.l.b16 %v954
      %v3349 = vunpack.c.h.b16 %v954
      %v3350 = vunpack.c.l.b16 %v955
      %v3351 = vunpack.c.h.b16 %v955
      %v3352 = vunpack.c.l.b16 %v956
      %v3353 = vunpack.c.h.b16 %v956
      %v3354 = vunpack.c.l.b16 %v957
      %v3355 = vunpack.c.h.b16 %v957
      %v3356 = vunpack.c.l.b16 %v958
      %v3357 = vunpack.c.h.b16 %v958
      %v3358 = vunpack.c.l.b16 %v959
      %v3359 = vunpack.c.h.b16 %v959
      %v3360 = vunpack.c.l.b16 %v960
      %v3361 = vunpack.c.h.b16 %v960
      %v3362 = vunpack.c.l.b16 %v961
      %v3363 = vunpack.c.h.b16 %v961
      %v3364 = vunpack.c.l.b16 %v962
      %v3365 = vunpack.c.h.b16 %v962
      %v3366 = vpack.c.b16 %v1806, %v1798
      %v3367 = vpack.c.b16 %v1807, %v1799
      %v3368 = vpack.c.b16 %v1808, %v1800
      %v3369 = vpack.c.b16 %v1809, %v1801
      %v3370 = vpack.c.b16 %v1810, %v1802
      %v3371 = vpack.c.b16 %v1811, %v1803
      %v3372 = vpack.c.b16 %v1812, %v1804
      %v3373 = vpack.c.b16 %v1813, %v1805
      %v3374 = vpack.c.b16 %v1822, %v1814
      %v3375 = vpack.c.b16 %v1823, %v1815
      %v3376 = vpack.c.b16 %v1824, %v1816
      %v3377 = vpack.c.b16 %v1825, %v1817
      %v3378 = vpack.c.b16 %v1826, %v1818
      %v3379 = vpack.c.b16 %v1827, %v1819
      %v3380 = vpack.c.b16 %v1828, %v1820
      %v3381 = vpack.c.b16 %v1829, %v1821
      %v3382 = vpack.c.b16 %v1838, %v1830
      %v3383 = vpack.c.b16 %v1839, %v1831
      %v3384 = vpack.c.b16 %v1840, %v1832
      %v3385 = vpack.c.b16 %v1841, %v1833
      %v3386 = vpack.c.b16 %v1842, %v1834
      %v3387 = vpack.c.b16 %v1843, %v1835
      %v3388 = vpack.c.b16 %v1844, %v1836
      %v3389 = vpack.c.b16 %v1845, %v1837
      %v3390 = vpack.c.b16 %v1854, %v1846
      %v3391 = vpack.c.b16 %v1855, %v1847
      %v3392 = vpack.c.b16 %v1856, %v1848
      %v3393 = vpack.c.b16 %v1857, %v1849
      %v3394 = vpack.c.b16 %v1858, %v1850
      %v3395 = vpack.c.b16 %v1859, %v1851
      %v3396 = vpack.c.b16 %v1860, %v1852
      %v3397 = vpack.c.b16 %v1861, %v1853
      %v3398 = vpack.c.b16 %v1870, %v1862
      %v3399 = vpack.c.b16 %v1871, %v1863
      %v3400 = vpack.c.b16 %v1872, %v1864
      %v3401 = vpack.c.b16 %v1873, %v1865
      %v3402 = vpack.c.b16 %v1874, %v1866
      %v3403 = vpack.c.b16 %v1875, %v1867
      %v3404 = vpack.c.b16 %v1876, %v1868
      %v3405 = vpack.c.b16 %v1877, %v1869
      %v3406 = vpack.c.b16 %v1886, %v1878
      %v3407 = vpack.c.b16 %v1887, %v1879
      %v3408 = vpack.c.b16 %v1888, %v1880
      %v3409 = vpack.c.b16 %v1889, %v1881
      %v3410 = vpack.c.b16 %v1890, %v1882
      %v3411 = vpack.c.b16 %v1891, %v1883
      %v3412 = vpack.c.b16 %v1892, %v1884
      %v3413 = vpack.c.b16 %v1893, %v1885
      %v3414 = vpack.c.b16 %v1902, %v1894
      %v3415 = vpack.c.b16 %v1903, %v1895
      %v3416 = vpack.c.b16 %v1904, %v1896
      %v3417 = vpack.c.b16 %v1905, %v1897
      %v3418 = vpack.c.b16 %v1906, %v1898
      %v3419 = vpack.c.b16 %v1907, %v1899
      %v3420 = vpack.c.b16 %v1908, %v1900
      %v3421 = vpack.c.b16 %v1909, %v1901
      %v3422 = vpack.c.b16 %v1918, %v1910
      %v3423 = vpack.c.b16 %v1919, %v1911
      %v3424 = vpack.c.b16 %v1920, %v1912
      %v3425 = vpack.c.b16 %v1921, %v1913
      %v3426 = vpack.c.b16 %v1922, %v1914
      %v3427 = vpack.c.b16 %v1923, %v1915
      %v3428 = vpack.c.b16 %v1924, %v1916
      %v3429 = vpack.c.b16 %v1925, %v1917
      %v3430 = vpack.c.b16 %v1934, %v1926
      %v3431 = vpack.c.b16 %v1935, %v1927
      %v3432 = vpack.c.b16 %v1936, %v1928
      %v3433 = vpack.c.b16 %v1937, %v1929
      %v3434 = vpack.c.b16 %v1938, %v1930
      %v3435 = vpack.c.b16 %v1939, %v1931
      %v3436 = vpack.c.b16 %v1940, %v1932
      %v3437 = vpack.c.b16 %v1941, %v1933
      %v3438 = vpack.c.b16 %v1950, %v1942
      %v3439 = vpack.c.b16 %v1951, %v1943
      %v3440 = vpack.c.b16 %v1952, %v1944
      %v3441 = vpack.c.b16 %v1953, %v1945
      %v3442 = vpack.c.b16 %v1954, %v1946
      %v3443 = vpack.c.b16 %v1955, %v1947
      %v3444 = vpack.c.b16 %v1956, %v1948
      %v3445 = vpack.c.b16 %v1957, %v1949
      %v3446 = vpack.c.b16 %v1966, %v1958
      %v3447 = vpack.c.b16 %v1967, %v1959
      %v3448 = vpack.c.b16 %v1968, %v1960
      %v3449 = vpack.c.b16 %v1969, %v1961
      %v3450 = vpack.c.b16 %v1970, %v1962
      %v3451 = vpack.c.b16 %v1971, %v1963
      %v3452 = vpack.c.b16 %v1972, %v1964
      %v3453 = vpack.c.b16 %v1973, %v1965
      %v3454 = vpack.c.b16 %v1982, %v1974
      %v3455 = vpack.c.b16 %v1983, %v1975
      %v3456 = vpack.c.b16 %v1984, %v1976
      %v3457 = vpack.c.b16 %v1985, %v1977
      %v3458 = vpack.c.b16 %v1986, %v1978
      %v3459 = vpack.c.b16 %v1987, %v1979
      %v3460 = vpack.c.b16 %v1988, %v1980
      %v3461 = vpack.c.b16 %v1989, %v1981
      %v3462 = vpack.c.b16 %v1998, %v1990
      %v3463 = vpack.c.b16 %v1999, %v1991
      %v3464 = vpack.c.b16 %v2000, %v1992
      %v3465 = vpack.c.b16 %v2001, %v1993
      %v3466 = vpack.c.b16 %v2002, %v1994
      %v3467 = vpack.c.b16 %v2003, %v1995
      %v3468 = vpack.c.b16 %v2004, %v1996
      %v3469 = vpack.c.b16 %v2005, %v1997
      %v3470 = vpack.c.b16 %v2014, %v2006
      %v3471 = vpack.c.b16 %v2015, %v2007
      %v3472 = vpack.c.b16 %v2016, %v2008
      %v3473 = vpack.c.b16 %v2017, %v2009
      %v3474 = vpack.c.b16 %v2018, %v2010
      %v3475 = vpack.c.b16 %v2019, %v2011
      %v3476 = vpack.c.b16 %v2020, %v2012
      %v3477 = vpack.c.b16 %v2021, %v2013
      %v3478 = vpack.c.b16 %v2030, %v2022
      %v3479 = vpack.c.b16 %v2031, %v2023
      %v3480 = vpack.c.b16 %v2032, %v2024
      %v3481 = vpack.c.b16 %v2033, %v2025
      %v3482 = vpack.c.b16 %v2034, %v2026
      %v3483 = vpack.c.b16 %v2035, %v2027
      %v3484 = vpack.c.b16 %v2036, %v2028
      %v3485 = vpack.c.b16 %v2037, %v2029
      %v3486 = vpack.c.b16 %v2046, %v2038
      %v3487 = vpack.c.b16 %v2047, %v2039
      %v3488 = vpack.c.b16 %v2048, %v2040
      %v3489 = vpack.c.b16 %v2049, %v2041
      %v3490 = vpack.c.b16 %v2050, %v2042
      %v3491 = vpack.c.b16 %v2051, %v2043
      %v3492 = vpack.c.b16 %v2052, %v2044
      %v3493 = vpack.c.b16 %v2053, %v2045
      %v3494 = vpack.c.b16 %v2062, %v2054
      %v3495 = vpack.c.b16 %v2063, %v2055
      %v3496 = vpack.c.b16 %v2064, %v2056
      %v3497 = vpack.c.b16 %v2065, %v2057
      %v3498 = vpack.c.b16 %v2066, %v2058
      %v3499 = vpack.c.b16 %v2067, %v2059
      %v3500 = vpack.c.b16 %v2068, %v2060
      %v3501 = vpack.c.b16 %v2069, %v2061
      %v3502 = vpack.c.b16 %v2078, %v2070
      %v3503 = vpack.c.b16 %v2079, %v2071
      %v3504 = vpack.c.b16 %v2080, %v2072
      %v3505 = vpack.c.b16 %v2081, %v2073
      %v3506 = vpack.c.b16 %v2082, %v2074
      %v3507 = vpack.c.b16 %v2083, %v2075
      %v3508 = vpack.c.b16 %v2084, %v2076
      %v3509 = vpack.c.b16 %v2085, %v2077
      %v3510 = vpack.c.b16 %v2094, %v2086
      %v3511 = vpack.c.b16 %v2095, %v2087
      %v3512 = vpack.c.b16 %v2096, %v2088
      %v3513 = vpack.c.b16 %v2097, %v2089
      %v3514 = vpack.c.b16 %v2098, %v2090
      %v3515 = vpack.c.b16 %v2099, %v2091
      %v3516 = vpack.c.b16 %v2100, %v2092
      %v3517 = vpack.c.b16 %v2101, %v2093
      %v3518 = vpack.c.b16 %v2110, %v2102
      %v3519 = vpack.c.b16 %v2111, %v2103
      %v3520 = vpack.c.b16 %v2112, %v2104
      %v3521 = vpack.c.b16 %v2113, %v2105
      %v3522 = vpack.c.b16 %v2114, %v2106
      %v3523 = vpack.c.b16 %v2115, %v2107
      %v3524 = vpack.c.b16 %v2116, %v2108
      %v3525 = vpack.c.b16 %v2117, %v2109
      %v3526 = vpack.c.b16 %v2126, %v2118
      %v3527 = vpack.c.b16 %v2127, %v2119
      %v3528 = vpack.c.b16 %v2128, %v2120
      %v3529 = vpack.c.b16 %v2129, %v2121
      %v3530 = vpack.c.b16 %v2130, %v2122
      %v3531 = vpack.c.b16 %v2131, %v2123
      %v3532 = vpack.c.b16 %v2132, %v2124
      %v3533 = vpack.c.b16 %v2133, %v2125
      %v3534 = vpack.c.b16 %v2142, %v2134
      %v3535 = vpack.c.b16 %v2143, %v2135
      %v3536 = vpack.c.b16 %v2144, %v2136
      %v3537 = vpack.c.b16 %v2145, %v2137
      %v3538 = vpack.c.b16 %v2146, %v2138
      %v3539 = vpack.c.b16 %v2147, %v2139
      %v3540 = vpack.c.b16 %v2148, %v2140
      %v3541 = vpack.c.b16 %v2149, %v2141
      %v3542 = vpack.c.b16 %v2158, %v2150
      %v3543 = vpack.c.b16 %v2159, %v2151
      %v3544 = vpack.c.b16 %v2160, %v2152
      %v3545 = vpack.c.b16 %v2161, %v2153
      %v3546 = vpack.c.b16 %v2162, %v2154
      %v3547 = vpack.c.b16 %v2163, %v2155
      %v3548 = vpack.c.b16 %v2164, %v2156
      %v3549 = vpack.c.b16 %v2165, %v2157
      %v3550 = vpack.c.b16 %v2174, %v2166
      %v3551 = vpack.c.b16 %v2175, %v2167
      %v3552 = vpack.c.b16 %v2176, %v2168
      %v3553 = vpack.c.b16 %v2177, %v2169
      %v3554 = vpack.c.b16 %v2178, %v2170
      %v3555 = vpack.c.b16 %v2179, %v2171
      %v3556 = vpack.c.b16 %v2180, %v2172
      %v3557 = vpack.c.b16 %v2181, %v2173
      %v3558 = vpack.c.b16 %v2190, %v2182
      %v3559 = vpack.c.b16 %v2191, %v2183
      %v3560 = vpack.c.b16 %v2192, %v2184
      %v3561 = vpack.c.b16 %v2193, %v2185
      %v3562 = vpack.c.b16 %v2194, %v2186
      %v3563 = vpack.c.b16 %v2195, %v2187
      %v3564 = vpack.c.b16 %v2196, %v2188
      %v3565 = vpack.c.b16 %v2197, %v2189
      %v3566 = vpack.c.b16 %v2206, %v2198
      %v3567 = vpack.c.b16 %v2207, %v2199
      %v3568 = vpack.c.b16 %v2208, %v2200
      %v3569 = vpack.c.b16 %v2209, %v2201
      %v3570 = vpack.c.b16 %v2210, %v2202
      %v3571 = vpack.c.b16 %v2211, %v2203
      %v3572 = vpack.c.b16 %v2212, %v2204
      %v3573 = vpack.c.b16 %v2213, %v2205
      %v3574 = vpack.c.b16 %v2222, %v2214
      %v3575 = vpack.c.b16 %v2223, %v2215
      %v3576 = vpack.c.b16 %v2224, %v2216
      %v3577 = vpack.c.b16 %v2225, %v2217
      %v3578 = vpack.c.b16 %v2226, %v2218
      %v3579 = vpack.c.b16 %v2227, %v2219
      %v3580 = vpack.c.b16 %v2228, %v2220
      %v3581 = vpack.c.b16 %v2229, %v2221
      %v3582 = vpack.c.b16 %v2238, %v2230
      %v3583 = vpack.c.b16 %v2239, %v2231
      %v3584 = vpack.c.b16 %v2240, %v2232
      %v3585 = vpack.c.b16 %v2241, %v2233
      %v3586 = vpack.c.b16 %v2242, %v2234
      %v3587 = vpack.c.b16 %v2243, %v2235
      %v3588 = vpack.c.b16 %v2244, %v2236
      %v3589 = vpack.c.b16 %v2245, %v2237
      %v3590 = vpack.c.b16 %v2254, %v2246
      %v3591 = vpack.c.b16 %v2255, %v2247
      %v3592 = vpack.c.b16 %v2256, %v2248
      %v3593 = vpack.c.b16 %v2257, %v2249
      %v3594 = vpack.c.b16 %v2258, %v2250
      %v3595 = vpack.c.b16 %v2259, %v2251
      %v3596 = vpack.c.b16 %v2260, %v2252
      %v3597 = vpack.c.b16 %v2261, %v2253
      %v3598 = vpack.c.b16 %v2270, %v2262
      %v3599 = vpack.c.b16 %v2271, %v2263
      %v3600 = vpack.c.b16 %v2272, %v2264
      %v3601 = vpack.c.b16 %v2273, %v2265
      %v3602 = vpack.c.b16 %v2274, %v2266
      %v3603 = vpack.c.b16 %v2275, %v2267
      %v3604 = vpack.c.b16 %v2276, %v2268
      %v3605 = vpack.c.b16 %v2277, %v2269
      %v3606 = vpack.c.b16 %v2286, %v2278
      %v3607 = vpack.c.b16 %v2287, %v2279
      %v3608 = vpack.c.b16 %v2288, %v2280
      %v3609 = vpack.c.b16 %v2289, %v2281
      %v3610 = vpack.c.b16 %v2290, %v2282
      %v3611 = vpack.c.b16 %v2291, %v2283
      %v3612 = vpack.c.b16 %v2292, %v2284
      %v3613 = vpack.c.b16 %v2293, %v2285
      %v3614 = vpack.c.b16 %v2302, %v2294
      %v3615 = vpack.c.b16 %v2303, %v2295
      %v3616 = vpack.c.b16 %v2304, %v2296
      %v3617 = vpack.c.b16 %v2305, %v2297
      %v3618 = vpack.c.b16 %v2306, %v2298
      %v3619 = vpack.c.b16 %v2307, %v2299
      %v3620 = vpack.c.b16 %v2308, %v2300
      %v3621 = vpack.c.b16 %v2309, %v2301
      %v3622 = vpack.c.b16 %v2318, %v2310
      %v3623 = vpack.c.b16 %v2319, %v2311
      %v3624 = vpack.c.b16 %v2320, %v2312
      %v3625 = vpack.c.b16 %v2321, %v2313
      %v3626 = vpack.c.b16 %v2322, %v2314
      %v3627 = vpack.c.b16 %v2323, %v2315
      %v3628 = vpack.c.b16 %v2324, %v2316
      %v3629 = vpack.c.b16 %v2325, %v2317
      %v3630 = vpack.c.b16 %v2334, %v2326
      %v3631 = vpack.c.b16 %v2335, %v2327
      %v3632 = vpack.c.b16 %v2336, %v2328
      %v3633 = vpack.c.b16 %v2337, %v2329
      %v3634 = vpack.c.b16 %v2338, %v2330
      %v3635 = vpack.c.b16 %v2339, %v2331
      %v3636 = vpack.c.b16 %v2340, %v2332
      %v3637 = vpack.c.b16 %v2341, %v2333
      %v3638 = vpack.c.b16 %v2350, %v2342
      %v3639 = vpack.c.b16 %v2351, %v2343
      %v3640 = vpack.c.b16 %v2352, %v2344
      %v3641 = vpack.c.b16 %v2353, %v2345
      %v3642 = vpack.c.b16 %v2354, %v2346
      %v3643 = vpack.c.b16 %v2355, %v2347
      %v3644 = vpack.c.b16 %v2356, %v2348
      %v3645 = vpack.c.b16 %v2357, %v2349
      %v3646 = vpack.c.b16 %v2366, %v2358
      %v3647 = vpack.c.b16 %v2367, %v2359
      %v3648 = vpack.c.b16 %v2368, %v2360
      %v3649 = vpack.c.b16 %v2369, %v2361
      %v3650 = vpack.c.b16 %v2370, %v2362
      %v3651 = vpack.c.b16 %v2371, %v2363
      %v3652 = vpack.c.b16 %v2372, %v2364
      %v3653 = vpack.c.b16 %v2373, %v2365
      %v3654 = vpack.c.b16 %v2382, %v2374
      %v3655 = vpack.c.b16 %v2383, %v2375
      %v3656 = vpack.c.b16 %v2384, %v2376
      %v3657 = vpack.c.b16 %v2385, %v2377
      %v3658 = vpack.c.b16 %v2386, %v2378
      %v3659 = vpack.c.b16 %v2387, %v2379
      %v3660 = vpack.c.b16 %v2388, %v2380
      %v3661 = vpack.c.b16 %v2389, %v2381
      %v3662 = vpack.c.b16 %v2398, %v2390
      %v3663 = vpack.c.b16 %v2399, %v2391
      %v3664 = vpack.c.b16 %v2400, %v2392
      %v3665 = vpack.c.b16 %v2401, %v2393
      %v3666 = vpack.c.b16 %v2402, %v2394
      %v3667 = vpack.c.b16 %v2403, %v2395
      %v3668 = vpack.c.b16 %v2404, %v2396
      %v3669 = vpack.c.b16 %v2405, %v2397
      %v3670 = vpack.c.b16 %v2414, %v2406
      %v3671 = vpack.c.b16 %v2415, %v2407
      %v3672 = vpack.c.b16 %v2416, %v2408
      %v3673 = vpack.c.b16 %v2417, %v2409
      %v3674 = vpack.c.b16 %v2418, %v2410
      %v3675 = vpack.c.b16 %v2419, %v2411
      %v3676 = vpack.c.b16 %v2420, %v2412
      %v3677 = vpack.c.b16 %v2421, %v2413
      %v3678 = vpack.c.b16 %v2430, %v2422
      %v3679 = vpack.c.b16 %v2431, %v2423
      %v3680 = vpack.c.b16 %v2432, %v2424
      %v3681 = vpack.c.b16 %v2433, %v2425
      %v3682 = vpack.c.b16 %v2434, %v2426
      %v3683 = vpack.c.b16 %v2435, %v2427
      %v3684 = vpack.c.b16 %v2436, %v2428
      %v3685 = vpack.c.b16 %v2437, %v2429
      %v3686 = vpack.c.b16 %v2446, %v2438
      %v3687 = vpack.c.b16 %v2447, %v2439
      %v3688 = vpack.c.b16 %v2448, %v2440
      %v3689 = vpack.c.b16 %v2449, %v2441
      %v3690 = vpack.c.b16 %v2450, %v2442
      %v3691 = vpack.c.b16 %v2451, %v2443
      %v3692 = vpack.c.b16 %v2452, %v2444
      %v3693 = vpack.c.b16 %v2453, %v2445
      %v3694 = vpack.c.b16 %v2462, %v2454
      %v3695 = vpack.c.b16 %v2463, %v2455
      %v3696 = vpack.c.b16 %v2464, %v2456
      %v3697 = vpack.c.b16 %v2465, %v2457
      %v3698 = vpack.c.b16 %v2466, %v2458
      %v3699 = vpack.c.b16 %v2467, %v2459
      %v3700 = vpack.c.b16 %v2468, %v2460
      %v3701 = vpack.c.b16 %v2469, %v2461
      %v3702 = vpack.c.b16 %v2478, %v2470
      %v3703 = vpack.c.b16 %v2479, %v2471
      %v3704 = vpack.c.b16 %v2480, %v2472
      %v3705 = vpack.c.b16 %v2481, %v2473
      %v3706 = vpack.c.b16 %v2482, %v2474
      %v3707 = vpack.c.b16 %v2483, %v2475
      %v3708 = vpack.c.b16 %v2484, %v2476
      %v3709 = vpack.c.b16 %v2485, %v2477
      %v3710 = vpack.c.b16 %v2494, %v2486
      %v3711 = vpack.c.b16 %v2495, %v2487
      %v3712 = vpack.c.b16 %v2496, %v2488
      %v3713 = vpack.c.b16 %v2497, %v2489
      %v3714 = vpack.c.b16 %v2498, %v2490
      %v3715 = vpack.c.b16 %v2499, %v2491
      %v3716 = vpack.c.b16 %v2500, %v2492
      %v3717 = vpack.c.b16 %v2501, %v2493
      %v3718 = vpack.c.b16 %v2510, %v2502
      %v3719 = vpack.c.b16 %v2511, %v2503
      %v3720 = vpack.c.b16 %v2512, %v2504
      %v3721 = vpack.c.b16 %v2513, %v2505
      %v3722 = vpack.c.b16 %v2514, %v2506
      %v3723 = vpack.c.b16 %v2515, %v2507
      %v3724 = vpack.c.b16 %v2516, %v2508
      %v3725 = vpack.c.b16 %v2517, %v2509
      %v3726 = vpack.c.b16 %v2526, %v2518
      %v3727 = vpack.c.b16 %v2527, %v2519
      %v3728 = vpack.c.b16 %v2528, %v2520
      %v3729 = vpack.c.b16 %v2529, %v2521
      %v3730 = vpack.c.b16 %v2530, %v2522
      %v3731 = vpack.c.b16 %v2531, %v2523
      %v3732 = vpack.c.b16 %v2532, %v2524
      %v3733 = vpack.c.b16 %v2533, %v2525
      %v3734 = vpack.c.b16 %v2542, %v2534
      %v3735 = vpack.c.b16 %v2543, %v2535
      %v3736 = vpack.c.b16 %v2544, %v2536
      %v3737 = vpack.c.b16 %v2545, %v2537
      %v3738 = vpack.c.b16 %v2546, %v2538
      %v3739 = vpack.c.b16 %v2547, %v2539
      %v3740 = vpack.c.b16 %v2548, %v2540
      %v3741 = vpack.c.b16 %v2549, %v2541
      %v3742 = vpack.c.b16 %v2558, %v2550
      %v3743 = vpack.c.b16 %v2559, %v2551
      %v3744 = vpack.c.b16 %v2560, %v2552
      %v3745 = vpack.c.b16 %v2561, %v2553
      %v3746 = vpack.c.b16 %v2562, %v2554
      %v3747 = vpack.c.b16 %v2563, %v2555
      %v3748 = vpack.c.b16 %v2564, %v2556
      %v3749 = vpack.c.b16 %v2565, %v2557
      %v3750 = vpack.c.b16 %v2574, %v2566
      %v3751 = vpack.c.b16 %v2575, %v2567
      %v3752 = vpack.c.b16 %v2576, %v2568
      %v3753 = vpack.c.b16 %v2577, %v2569
      %v3754 = vpack.c.b16 %v2578, %v2570
      %v3755 = vpack.c.b16 %v2579, %v2571
      %v3756 = vpack.c.b16 %v2580, %v2572
      %v3757 = vpack.c.b16 %v2581, %v2573
      %v3758 = vpack.c.b16 %v2590, %v2582
      %v3759 = vpack.c.b16 %v2591, %v2583
      %v3760 = vpack.c.b16 %v2592, %v2584
      %v3761 = vpack.c.b16 %v2593, %v2585
      %v3762 = vpack.c.b16 %v2594, %v2586
      %v3763 = vpack.c.b16 %v2595, %v2587
      %v3764 = vpack.c.b16 %v2596, %v2588
      %v3765 = vpack.c.b16 %v2597, %v2589
      %v3766 = vpack.c.b16 %v2606, %v2598
      %v3767 = vpack.c.b16 %v2607, %v2599
      %v3768 = vpack.c.b16 %v2608, %v2600
      %v3769 = vpack.c.b16 %v2609, %v2601
      %v3770 = vpack.c.b16 %v2610, %v2602
      %v3771 = vpack.c.b16 %v2611, %v2603
      %v3772 = vpack.c.b16 %v2612, %v2604
      %v3773 = vpack.c.b16 %v2613, %v2605
      %v3774 = vpack.c.b16 %v2622, %v2614
      %v3775 = vpack.c.b16 %v2623, %v2615
      %v3776 = vpack.c.b16 %v2624, %v2616
      %v3777 = vpack.c.b16 %v2625, %v2617
      %v3778 = vpack.c.b16 %v2626, %v2618
      %v3779 = vpack.c.b16 %v2627, %v2619
      %v3780 = vpack.c.b16 %v2628, %v2620
      %v3781 = vpack.c.b16 %v2629, %v2621
      %v3782 = vpack.c.b16 %v2638, %v2630
      %v3783 = vpack.c.b16 %v2639, %v2631
      %v3784 = vpack.c.b16 %v2640, %v2632
      %v3785 = vpack.c.b16 %v2641, %v2633
      %v3786 = vpack.c.b16 %v2642, %v2634
      %v3787 = vpack.c.b16 %v2643, %v2635
      %v3788 = vpack.c.b16 %v2644, %v2636
      %v3789 = vpack.c.b16 %v2645, %v2637
      %v3790 = vpack.c.b16 %v2654, %v2646
      %v3791 = vpack.c.b16 %v2655, %v2647
      %v3792 = vpack.c.b16 %v2656, %v2648
      %v3793 = vpack.c.b16 %v2657, %v2649
      %v3794 = vpack.c.b16 %v2658, %v2650
      %v3795 = vpack.c.b16 %v2659, %v2651
      %v3796 = vpack.c.b16 %v2660, %v2652
      %v3797 = vpack.c.b16 %v2661, %v2653
      %v3798 = vpack.c.b16 %v2670, %v2662
      %v3799 = vpack.c.b16 %v2671, %v2663
      %v3800 = vpack.c.b16 %v2672, %v2664
      %v3801 = vpack.c.b16 %v2673, %v2665
      %v3802 = vpack.c.b16 %v2674, %v2666
      %v3803 = vpack.c.b16 %v2675, %v2667
      %v3804 = vpack.c.b16 %v2676, %v2668
      %v3805 = vpack.c.b16 %v2677, %v2669
      %v3806 = vpack.c.b16 %v2686, %v2678
      %v3807 = vpack.c.b16 %v2687, %v2679
      %v3808 = vpack.c.b16 %v2688, %v2680
      %v3809 = vpack.c.b16 %v2689, %v2681
      %v3810 = vpack.c.b16 %v2690, %v2682
      %v3811 = vpack.c.b16 %v2691, %v2683
      %v3812 = vpack.c.b16 %v2692, %v2684
      %v3813 = vpack.c.b16 %v2693, %v2685
      %v3814 = vpack.c.b16 %v2702, %v2694
      %v3815 = vpack.c.b16 %v2703, %v2695
      %v3816 = vpack.c.b16 %v2704, %v2696
      %v3817 = vpack.c.b16 %v2705, %v2697
      %v3818 = vpack.c.b16 %v2706, %v2698
      %v3819 = vpack.c.b16 %v2707, %v2699
      %v3820 = vpack.c.b16 %v2708, %v2700
      %v3821 = vpack.c.b16 %v2709, %v2701
      %v3822 = vpack.c.b16 %v2718, %v2710
      %v3823 = vpack.c.b16 %v2719, %v2711
      %v3824 = vpack.c.b16 %v2720, %v2712
      %v3825 = vpack.c.b16 %v2721, %v2713
      %v3826 = vpack.c.b16 %v2722, %v2714
      %v3827 = vpack.c.b16 %v2723, %v2715
      %v3828 = vpack.c.b16 %v2724, %v2716
      %v3829 = vpack.c.b16 %v2725, %v2717
      %v3830 = vpack.c.b16 %v2734, %v2726
      %v3831 = vpack.c.b16 %v2735, %v2727
      %v3832 = vpack.c.b16 %v2736, %v2728
      %v3833 = vpack.c.b16 %v2737, %v2729
      %v3834 = vpack.c.b16 %v2738, %v2730
      %v3835 = vpack.c.b16 %v2739, %v2731
      %v3836 = vpack.c.b16 %v2740, %v2732
      %v3837 = vpack.c.b16 %v2741, %v2733
      %v3838 = vpack.c.b16 %v2750, %v2742
      %v3839 = vpack.c.b16 %v2751, %v2743
      %v3840 = vpack.c.b16 %v2752, %v2744
      %v3841 = vpack.c.b16 %v2753, %v2745
      %v3842 = vpack.c.b16 %v2754, %v2746
      %v3843 = vpack.c.b16 %v2755, %v2747
      %v3844 = vpack.c.b16 %v2756, %v2748
      %v3845 = vpack.c.b16 %v2757, %v2749
      %v3846 = vpack.c.b16 %v2766, %v2758
      %v3847 = vpack.c.b16 %v2767, %v2759
      %v3848 = vpack.c.b16 %v2768, %v2760
      %v3849 = vpack.c.b16 %v2769, %v2761
      %v3850 = vpack.c.b16 %v2770, %v2762
      %v3851 = vpack.c.b16 %v2771, %v2763
      %v3852 = vpack.c.b16 %v2772, %v2764
      %v3853 = vpack.c.b16 %v2773, %v2765
      %v3854 = vpack.c.b16 %v2782, %v2774
      %v3855 = vpack.c.b16 %v2783, %v2775
      %v3856 = vpack.c.b16 %v2784, %v2776
      %v3857 = vpack.c.b16 %v2785, %v2777
      %v3858 = vpack.c.b16 %v2786, %v2778
      %v3859 = vpack.c.b16 %v2787, %v2779
      %v3860 = vpack.c.b16 %v2788, %v2780
      %v3861 = vpack.c.b16 %v2789, %v2781
      %v3862 = vpack.c.b16 %v2798, %v2790
      %v3863 = vpack.c.b16 %v2799, %v2791
      %v3864 = vpack.c.b16 %v2800, %v2792
      %v3865 = vpack.c.b16 %v2801, %v2793
      %v3866 = vpack.c.b16 %v2802, %v2794
      %v3867 = vpack.c.b16 %v2803, %v2795
      %v3868 = vpack.c.b16 %v2804, %v2796
      %v3869 = vpack.c.b16 %v2805, %v2797
      %v3870 = vpack.c.b16 %v2814, %v2806
      %v3871 = vpack.c.b16 %v2815, %v2807
      %v3872 = vpack.c.b16 %v2816, %v2808
      %v3873 = vpack.c.b16 %v2817, %v2809
      %v3874 = vpack.c.b16 %v2818, %v2810
      %v3875 = vpack.c.b16 %v2819, %v2811
      %v3876 = vpack.c.b16 %v2820, %v2812
      %v3877 = vpack.c.b16 %v2821, %v2813
      %v3878 = vpack.c.b16 %v2830, %v2822
      %v3879 = vpack.c.b16 %v2831, %v2823
      %v3880 = vpack.c.b16 %v2832, %v2824
      %v3881 = vpack.c.b16 %v2833, %v2825
      %v3882 = vpack.c.b16 %v2834, %v2826
      %v3883 = vpack.c.b16 %v2835, %v2827
      %v3884 = vpack.c.b16 %v2836, %v2828
      %v3885 = vpack.c.b16 %v2837, %v2829
      %v3886 = vpack.c.b16 %v2846, %v2838
      %v3887 = vpack.c.b16 %v2847, %v2839
      %v3888 = vpack.c.b16 %v2848, %v2840
      %v3889 = vpack.c.b16 %v2849, %v2841
      %v3890 = vpack.c.b16 %v2850, %v2842
      %v3891 = vpack.c.b16 %v2851, %v2843
      %v3892 = vpack.c.b16 %v2852, %v2844
      %v3893 = vpack.c.b16 %v2853, %v2845
      %v3894 = vpack.c.b16 %v2862, %v2854
      %v3895 = vpack.c.b16 %v2863, %v2855
      %v3896 = vpack.c.b16 %v2864, %v2856
      %v3897 = vpack.c.b16 %v2865, %v2857
      %v3898 = vpack.c.b16 %v2866, %v2858
      %v3899 = vpack.c.b16 %v2867, %v2859
      %v3900 = vpack.c.b16 %v2868, %v2860
      %v3901 = vpack.c.b16 %v2869, %v2861
      %v3902 = vpack.c.b16 %v2878, %v2870
      %v3903 = vpack.c.b16 %v2879, %v2871
      %v3904 = vpack.c.b16 %v2880, %v2872
      %v3905 = vpack.c.b16 %v2881, %v2873
      %v3906 = vpack.c.b16 %v2882, %v2874
      %v3907 = vpack.c.b16 %v2883, %v2875
      %v3908 = vpack.c.b16 %v2884, %v2876
      %v3909 = vpack.c.b16 %v2885, %v2877
      %v3910 = vpack.c.b16 %v2894, %v2886
      %v3911 = vpack.c.b16 %v2895, %v2887
      %v3912 = vpack.c.b16 %v2896, %v2888
      %v3913 = vpack.c.b16 %v2897, %v2889
      %v3914 = vpack.c.b16 %v2898, %v2890
      %v3915 = vpack.c.b16 %v2899, %v2891
      %v3916 = vpack.c.b16 %v2900, %v2892
      %v3917 = vpack.c.b16 %v2901, %v2893
      %v3918 = vpack.c.b16 %v2910, %v2902
      %v3919 = vpack.c.b16 %v2911, %v2903
      %v3920 = vpack.c.b16 %v2912, %v2904
      %v3921 = vpack.c.b16 %v2913, %v2905
      %v3922 = vpack.c.b16 %v2914, %v2906
      %v3923 = vpack.c.b16 %v2915, %v2907
      %v3924 = vpack.c.b16 %v2916, %v2908
      %v3925 = vpack.c.b16 %v2917, %v2909
      %v3926 = vpack.c.b16 %v2926, %v2918
      %v3927 = vpack.c.b16 %v2927, %v2919
      %v3928 = vpack.c.b16 %v2928, %v2920
      %v3929 = vpack.c.b16 %v2929, %v2921
      %v3930 = vpack.c.b16 %v2930, %v2922
      %v3931 = vpack.c.b16 %v2931, %v2923
      %v3932 = vpack.c.b16 %v2932, %v2924
      %v3933 = vpack.c.b16 %v2933, %v2925
      %v3934 = vpack.c.b16 %v2942, %v2934
      %v3935 = vpack.c.b16 %v2943, %v2935
      %v3936 = vpack.c.b16 %v2944, %v2936
      %v3937 = vpack.c.b16 %v2945, %v2937
      %v3938 = vpack.c.b16 %v2946, %v2938
      %v3939 = vpack.c.b16 %v2947, %v2939
      %v3940 = vpack.c.b16 %v2948, %v2940
      %v3941 = vpack.c.b16 %v2949, %v2941
      %v3942 = vpack.c.b16 %v2958, %v2950
      %v3943 = vpack.c.b16 %v2959, %v2951
      %v3944 = vpack.c.b16 %v2960, %v2952
      %v3945 = vpack.c.b16 %v2961, %v2953
      %v3946 = vpack.c.b16 %v2962, %v2954
      %v3947 = vpack.c.b16 %v2963, %v2955
      %v3948 = vpack.c.b16 %v2964, %v2956
      %v3949 = vpack.c.b16 %v2965, %v2957
      %v3950 = vpack.c.b16 %v2974, %v2966
      %v3951 = vpack.c.b16 %v2975, %v2967
      %v3952 = vpack.c.b16 %v2976, %v2968
      %v3953 = vpack.c.b16 %v2977, %v2969
      %v3954 = vpack.c.b16 %v2978, %v2970
      %v3955 = vpack.c.b16 %v2979, %v2971
      %v3956 = vpack.c.b16 %v2980, %v2972
      %v3957 = vpack.c.b16 %v2981, %v2973
      %v3958 = vpack.c.b16 %v2990, %v2982
      %v3959 = vpack.c.b16 %v2991, %v2983
      %v3960 = vpack.c.b16 %v2992, %v2984
      %v3961 = vpack.c.b16 %v2993, %v2985
      %v3962 = vpack.c.b16 %v2994, %v2986
      %v3963 = vpack.c.b16 %v2995, %v2987
      %v3964 = vpack.c.b16 %v2996, %v2988
      %v3965 = vpack.c.b16 %v2997, %v2989
      %v3966 = vpack.c.b16 %v3006, %v2998
      %v3967 = vpack.c.b16 %v3007, %v2999
      %v3968 = vpack.c.b16 %v3008, %v3000
      %v3969 = vpack.c.b16 %v3009, %v3001
      %v3970 = vpack.c.b16 %v3010, %v3002
      %v3971 = vpack.c.b16 %v3011, %v3003
      %v3972 = vpack.c.b16 %v3012, %v3004
      %v3973 = vpack.c.b16 %v3013, %v3005
      %v3974 = vpack.c.b16 %v3022, %v3014
      %v3975 = vpack.c.b16 %v3023, %v3015
      %v3976 = vpack.c.b16 %v3024, %v3016
      %v3977 = vpack.c.b16 %v3025, %v3017
      %v3978 = vpack.c.b16 %v3026, %v3018
      %v3979 = vpack.c.b16 %v3027, %v3019
      %v3980 = vpack.c.b16 %v3028, %v3020
      %v3981 = vpack.c.b16 %v3029, %v3021
      %v3982 = vpack.c.b16 %v3038, %v3030
      %v3983 = vpack.c.b16 %v3039, %v3031
      %v3984 = vpack.c.b16 %v3040, %v3032
      %v3985 = vpack.c.b16 %v3041, %v3033
      %v3986 = vpack.c.b16 %v3042, %v3034
      %v3987 = vpack.c.b16 %v3043, %v3035
      %v3988 = vpack.c.b16 %v3044, %v3036
      %v3989 = vpack.c.b16 %v3045, %v3037
      %v3990 = vpack.c.b16 %v3054, %v3046
      %v3991 = vpack.c.b16 %v3055, %v3047
      %v3992 = vpack.c.b16 %v3056, %v3048
      %v3993 = vpack.c.b16 %v3057, %v3049
      %v3994 = vpack.c.b16 %v3058, %v3050
      %v3995 = vpack.c.b16 %v3059, %v3051
      %v3996 = vpack.c.b16 %v3060, %v3052
      %v3997 = vpack.c.b16 %v3061, %v3053
      %v3998 = vpack.c.b16 %v3070, %v3062
      %v3999 = vpack.c.b16 %v3071, %v3063
      %v4000 = vpack.c.b16 %v3072, %v3064
      %v4001 = vpack.c.b16 %v3073, %v3065
      %v4002 = vpack.c.b16 %v3074, %v3066
      %v4003 = vpack.c.b16 %v3075, %v3067
      %v4004 = vpack.c.b16 %v3076, %v3068
      %v4005 = vpack.c.b16 %v3077, %v3069
      %v4006 = vpack.c.b16 %v3086, %v3078
      %v4007 = vpack.c.b16 %v3087, %v3079
      %v4008 = vpack.c.b16 %v3088, %v3080
      %v4009 = vpack.c.b16 %v3089, %v3081
      %v4010 = vpack.c.b16 %v3090, %v3082
      %v4011 = vpack.c.b16 %v3091, %v3083
      %v4012 = vpack.c.b16 %v3092, %v3084
      %v4013 = vpack.c.b16 %v3093, %v3085
      %v4014 = vpack.c.b16 %v3102, %v3094
      %v4015 = vpack.c.b16 %v3103, %v3095
      %v4016 = vpack.c.b16 %v3104, %v3096
      %v4017 = vpack.c.b16 %v3105, %v3097
      %v4018 = vpack.c.b16 %v3106, %v3098
      %v4019 = vpack.c.b16 %v3107, %v3099
      %v4020 = vpack.c.b16 %v3108, %v3100
      %v4021 = vpack.c.b16 %v3109, %v3101
      %v4022 = vpack.c.b16 %v3118, %v3110
      %v4023 = vpack.c.b16 %v3119, %v3111
      %v4024 = vpack.c.b16 %v3120, %v3112
      %v4025 = vpack.c.b16 %v3121, %v3113
      %v4026 = vpack.c.b16 %v3122, %v3114
      %v4027 = vpack.c.b16 %v3123, %v3115
      %v4028 = vpack.c.b16 %v3124, %v3116
      %v4029 = vpack.c.b16 %v3125, %v3117
      %v4030 = vpack.c.b16 %v3134, %v3126
      %v4031 = vpack.c.b16 %v3135, %v3127
      %v4032 = vpack.c.b16 %v3136, %v3128
      %v4033 = vpack.c.b16 %v3137, %v3129
      %v4034 = vpack.c.b16 %v3138, %v3130
      %v4035 = vpack.c.b16 %v3139, %v3131
      %v4036 = vpack.c.b16 %v3140, %v3132
      %v4037 = vpack.c.b16 %v3141, %v3133
      %v4038 = vpack.c.b16 %v3150, %v3142
      %v4039 = vpack.c.b16 %v3151, %v3143
      %v4040 = vpack.c.b16 %v3152, %v3144
      %v4041 = vpack.c.b16 %v3153, %v3145
      %v4042 = vpack.c.b16 %v3154, %v3146
      %v4043 = vpack.c.b16 %v3155, %v3147
      %v4044 = vpack.c.b16 %v3156, %v3148
      %v4045 = vpack.c.b16 %v3157, %v3149
      %v4046 = vpack.c.b16 %v3166, %v3158
      %v4047 = vpack.c.b16 %v3167, %v3159
      %v4048 = vpack.c.b16 %v3168, %v3160
      %v4049 = vpack.c.b16 %v3169, %v3161
      %v4050 = vpack.c.b16 %v3170, %v3162
      %v4051 = vpack.c.b16 %v3171, %v3163
      %v4052 = vpack.c.b16 %v3172, %v3164
      %v4053 = vpack.c.b16 %v3173, %v3165
      %v4054 = vpack.c.b16 %v3182, %v3174
      %v4055 = vpack.c.b16 %v3183, %v3175
      %v4056 = vpack.c.b16 %v3184, %v3176
      %v4057 = vpack.c.b16 %v3185, %v3177
      %v4058 = vpack.c.b16 %v3186, %v3178
      %v4059 = vpack.c.b16 %v3187, %v3179
      %v4060 = vpack.c.b16 %v3188, %v3180
      %v4061 = vpack.c.b16 %v3189, %v3181
      %v4062 = vpack.c.b16 %v3198, %v3190
      %v4063 = vpack.c.b16 %v3199, %v3191
      %v4064 = vpack.c.b16 %v3200, %v3192
      %v4065 = vpack.c.b16 %v3201, %v3193
      %v4066 = vpack.c.b16 %v3202, %v3194
      %v4067 = vpack.c.b16 %v3203, %v3195
      %v4068 = vpack.c.b16 %v3204, %v3196
      %v4069 = vpack.c.b16 %v3205, %v3197
      %v4070 = vpack.c.b16 %v3214, %v3206
      %v4071 = vpack.c.b16 %v3215, %v3207
      %v4072 = vpack.c.b16 %v3216, %v3208
      %v4073 = vpack.c.b16 %v3217, %v3209
      %v4074 = vpack.c.b16 %v3218, %v3210
      %v4075 = vpack.c.b16 %v3219, %v3211
      %v4076 = vpack.c.b16 %v3220, %v3212
      %v4077 = vpack.c.b16 %v3221, %v3213
      %v4078 = vpack.c.b16 %v3230, %v3222
      %v4079 = vpack.c.b16 %v3231, %v3223
      %v4080 = vpack.c.b16 %v3232, %v3224
      %v4081 = vpack.c.b16 %v3233, %v3225
      %v4082 = vpack.c.b16 %v3234, %v3226
      %v4083 = vpack.c.b16 %v3235, %v3227
      %v4084 = vpack.c.b16 %v3236, %v3228
      %v4085 = vpack.c.b16 %v3237, %v3229
      %v4086 = vpack.c.b16 %v3246, %v3238
      %v4087 = vpack.c.b16 %v3247, %v3239
      %v4088 = vpack.c.b16 %v3248, %v3240
      %v4089 = vpack.c.b16 %v3249, %v3241
      %v4090 = vpack.c.b16 %v3250, %v3242
      %v4091 = vpack.c.b16 %v3251, %v3243
      %v4092 = vpack.c.b16 %v3252, %v3244
      %v4093 = vpack.c.b16 %v3253, %v3245
      %v4094 = vpack.c.b16 %v3262, %v3254
      %v4095 = vpack.c.b16 %v3263, %v3255
      %v4096 = vpack.c.b16 %v3264, %v3256
      %v4097 = vpack.c.b16 %v3265, %v3257
      %v4098 = vpack.c.b16 %v3266, %v3258
      %v4099 = vpack.c.b16 %v3267, %v3259
      %v4100 = vpack.c.b16 %v3268, %v3260
      %v4101 = vpack.c.b16 %v3269, %v3261
      %v4102 = vpack.c.b16 %v3278, %v3270
      %v4103 = vpack.c.b16 %v3279, %v3271
      %v4104 = vpack.c.b16 %v3280, %v3272
      %v4105 = vpack.c.b16 %v3281, %v3273
      %v4106 = vpack.c.b16 %v3282, %v3274
      %v4107 = vpack.c.b16 %v3283, %v3275
      %v4108 = vpack.c.b16 %v3284, %v3276
      %v4109 = vpack.c.b16 %v3285, %v3277
      %v4110 = vpack.c.b16 %v3294, %v3286
      %v4111 = vpack.c.b16 %v3295, %v3287
      %v4112 = vpack.c.b16 %v3296, %v3288
      %v4113 = vpack.c.b16 %v3297, %v3289
      %v4114 = vpack.c.b16 %v3298, %v3290
      %v4115 = vpack.c.b16 %v3299, %v3291
      %v4116 = vpack.c.b16 %v3300, %v3292
      %v4117 = vpack.c.b16 %v3301, %v3293
      %v4118 = vpack.c.b16 %v3310, %v3302
      %v4119 = vpack.c.b16 %v3311, %v3303
      %v4120 = vpack.c.b16 %v3312, %v3304
      %v4121 = vpack.c.b16 %v3313, %v3305
      %v4122 = vpack.c.b16 %v3314, %v3306
      %v4123 = vpack.c.b16 %v3315, %v3307
      %v4124 = vpack.c.b16 %v3316, %v3308
      %v4125 = vpack.c.b16 %v3317, %v3309
      %v4126 = vpack.c.b16 %v3326, %v3318
      %v4127 = vpack.c.b16 %v3327, %v3319
      %v4128 = vpack.c.b16 %v3328, %v3320
      %v4129 = vpack.c.b16 %v3329, %v3321
      %v4130 = vpack.c.b16 %v3330, %v3322
      %v4131 = vpack.c.b16 %v3331, %v3323
      %v4132 = vpack.c.b16 %v3332, %v3324
      %v4133 = vpack.c.b16 %v3333, %v3325
      %v4134 = vpack.c.b16 %v3342, %v3334
      %v4135 = vpack.c.b16 %v3343, %v3335
      %v4136 = vpack.c.b16 %v3344, %v3336
      %v4137 = vpack.c.b16 %v3345, %v3337
      %v4138 = vpack.c.b16 %v3346, %v3338
      %v4139 = vpack.c.b16 %v3347, %v3339
      %v4140 = vpack.c.b16 %v3348, %v3340
      %v4141 = vpack.c.b16 %v3349, %v3341
      %v4142 = vpack.c.b16 %v3358, %v3350
      %v4143 = vpack.c.b16 %v3359, %v3351
      %v4144 = vpack.c.b16 %v3360, %v3352
      %v4145 = vpack.c.b16 %v3361, %v3353
      %v4146 = vpack.c.b16 %v3362, %v3354
      %v4147 = vpack.c.b16 %v3363, %v3355
      %v4148 = vpack.c.b16 %v3364, %v3356
      %v4149 = vpack.c.b16 %v3365, %v3357
      %vm4934 = vcmask 261120
      %v4936 = vsel %vm4934, %v1001, 0
      %4938 = vmatpush.bf16.msra.mxu0 %v3422
      %4939 = vmatpush.bf16.msra.mxu0 %v3414
      %4940 = vmatpush.bf16.msra.mxu0 %v3406
      %4941 = vmatpush.bf16.msra.mxu0 %v3398
      %4942 = vmatpush.bf16.msra.mxu0 %v3390
      %4943 = vmatpush.bf16.msra.mxu0 %v3382
      %4944 = vmatpush.bf16.msra.mxu0 %v3374
      %4945 = vmatpush.bf16.msra.mxu0 %v3366
      %4946 = vmatmul.bf16.gmra.mxu0 %v989
      %v4947 = vpop.f32.mrf.mxu0
      %v4948 = vadd.f32 %v967, %v4947
      %v4949 = vpop.f32.mrf.mxu0
      %4950 = vdwg.mxu0
      %4951 = vmatpush.bf16.msra.mxu0 %v3486
      %4952 = vmatpush.bf16.msra.mxu0 %v3478
      %4953 = vmatpush.bf16.msra.mxu0 %v3470
      %4954 = vmatpush.bf16.msra.mxu0 %v3462
      %4955 = vmatpush.bf16.msra.mxu0 %v3454
      %4956 = vmatpush.bf16.msra.mxu0 %v3446
      %4957 = vmatpush.bf16.msra.mxu0 %v3438
      %4958 = vmatpush.bf16.msra.mxu0 %v3430
      %4959 = vmatmul.bf16.gmra.mxu0 %v990
      %v4960 = vpop.f32.mrf.mxu0
      %v4961 = vadd.f32 %v4948, %v4960
      %v4962 = vpop.f32.mrf.mxu0
      %4963 = vdwg.mxu0
      %4964 = vmatpush.bf16.msra.mxu0 %v3550
      %4965 = vmatpush.bf16.msra.mxu0 %v3542
      %4966 = vmatpush.bf16.msra.mxu0 %v3534
      %4967 = vmatpush.bf16.msra.mxu0 %v3526
      %4968 = vmatpush.bf16.msra.mxu0 %v3518
      %4969 = vmatpush.bf16.msra.mxu0 %v3510
      %4970 = vmatpush.bf16.msra.mxu0 %v3502
      %4971 = vmatpush.bf16.msra.mxu0 %v3494
      %4972 = vmatmul.bf16.gmra.mxu0 %v991
      %v4973 = vpop.f32.mrf.mxu0
      %v4974 = vadd.f32 %v4961, %v4973
      %v4975 = vpop.f32.mrf.mxu0
      %4976 = vdwg.mxu0
      %4977 = vmatpush.bf16.msra.mxu0 %v3614
      %4978 = vmatpush.bf16.msra.mxu0 %v3606
      %4979 = vmatpush.bf16.msra.mxu0 %v3598
      %4980 = vmatpush.bf16.msra.mxu0 %v3590
      %4981 = vmatpush.bf16.msra.mxu0 %v3582
      %4982 = vmatpush.bf16.msra.mxu0 %v3574
      %4983 = vmatpush.bf16.msra.mxu0 %v3566
      %4984 = vmatpush.bf16.msra.mxu0 %v3558
      %4985 = vmatmul.bf16.gmra.mxu0 %v992
      %v4986 = vpop.f32.mrf.mxu0
      %v4987 = vadd.f32 %v4974, %v4986
      %v4988 = vpop.f32.mrf.mxu0
      %4989 = vdwg.mxu0
      %4990 = vmatpush.bf16.msra.mxu0 %v3678
      %4991 = vmatpush.bf16.msra.mxu0 %v3670
      %4992 = vmatpush.bf16.msra.mxu0 %v3662
      %4993 = vmatpush.bf16.msra.mxu0 %v3654
      %4994 = vmatpush.bf16.msra.mxu0 %v3646
      %4995 = vmatpush.bf16.msra.mxu0 %v3638
      %4996 = vmatpush.bf16.msra.mxu0 %v3630
      %4997 = vmatpush.bf16.msra.mxu0 %v3622
      %4998 = vmatmul.bf16.gmra.mxu0 %v993
      %v4999 = vpop.f32.mrf.mxu0
      %v5000 = vadd.f32 %v4987, %v4999
      %v5001 = vpop.f32.mrf.mxu0
      %5002 = vdwg.mxu0
      %5003 = vmatpush.bf16.msra.mxu0 %v3742
      %5004 = vmatpush.bf16.msra.mxu0 %v3734
      %5005 = vmatpush.bf16.msra.mxu0 %v3726
      %5006 = vmatpush.bf16.msra.mxu0 %v3718
      %5007 = vmatpush.bf16.msra.mxu0 %v3710
      %5008 = vmatpush.bf16.msra.mxu0 %v3702
      %5009 = vmatpush.bf16.msra.mxu0 %v3694
      %5010 = vmatpush.bf16.msra.mxu0 %v3686
      %5011 = vmatmul.bf16.gmra.mxu0 %v994
      %v5012 = vpop.f32.mrf.mxu0
      %v5013 = vadd.f32 %v5000, %v5012
      %v5014 = vpop.f32.mrf.mxu0
      %5015 = vdwg.mxu0
      %5016 = vmatpush.bf16.msra.mxu0 %v3806
      %5017 = vmatpush.bf16.msra.mxu0 %v3798
      %5018 = vmatpush.bf16.msra.mxu0 %v3790
      %5019 = vmatpush.bf16.msra.mxu0 %v3782
      %5020 = vmatpush.bf16.msra.mxu0 %v3774
      %5021 = vmatpush.bf16.msra.mxu0 %v3766
      %5022 = vmatpush.bf16.msra.mxu0 %v3758
      %5023 = vmatpush.bf16.msra.mxu0 %v3750
      %5024 = vmatmul.bf16.gmra.mxu0 %v995
      %v5025 = vpop.f32.mrf.mxu0
      %v5026 = vadd.f32 %v5013, %v5025
      %v5027 = vpop.f32.mrf.mxu0
      %5028 = vdwg.mxu0
      %5029 = vmatpush.bf16.msra.mxu0 %v3870
      %5030 = vmatpush.bf16.msra.mxu0 %v3862
      %5031 = vmatpush.bf16.msra.mxu0 %v3854
      %5032 = vmatpush.bf16.msra.mxu0 %v3846
      %5033 = vmatpush.bf16.msra.mxu0 %v3838
      %5034 = vmatpush.bf16.msra.mxu0 %v3830
      %5035 = vmatpush.bf16.msra.mxu0 %v3822
      %5036 = vmatpush.bf16.msra.mxu0 %v3814
      %5037 = vmatmul.bf16.gmra.mxu0 %v996
      %v5038 = vpop.f32.mrf.mxu0
      %v5039 = vadd.f32 %v5026, %v5038
      %v5040 = vpop.f32.mrf.mxu0
      %5041 = vdwg.mxu0
      %5042 = vmatpush.bf16.msra.mxu0 %v3934
      %5043 = vmatpush.bf16.msra.mxu0 %v3926
      %5044 = vmatpush.bf16.msra.mxu0 %v3918
      %5045 = vmatpush.bf16.msra.mxu0 %v3910
      %5046 = vmatpush.bf16.msra.mxu0 %v3902
      %5047 = vmatpush.bf16.msra.mxu0 %v3894
      %5048 = vmatpush.bf16.msra.mxu0 %v3886
      %5049 = vmatpush.bf16.msra.mxu0 %v3878
      %5050 = vmatmul.bf16.gmra.mxu0 %v997
      %v5051 = vpop.f32.mrf.mxu0
      %v5052 = vadd.f32 %v5039, %v5051
      %v5053 = vpop.f32.mrf.mxu0
      %5054 = vdwg.mxu0
      %5055 = vmatpush.bf16.msra.mxu0 %v3998
      %5056 = vmatpush.bf16.msra.mxu0 %v3990
      %5057 = vmatpush.bf16.msra.mxu0 %v3982
      %5058 = vmatpush.bf16.msra.mxu0 %v3974
      %5059 = vmatpush.bf16.msra.mxu0 %v3966
      %5060 = vmatpush.bf16.msra.mxu0 %v3958
      %5061 = vmatpush.bf16.msra.mxu0 %v3950
      %5062 = vmatpush.bf16.msra.mxu0 %v3942
      %5063 = vmatmul.bf16.gmra.mxu0 %v998
      %v5064 = vpop.f32.mrf.mxu0
      %v5065 = vadd.f32 %v5052, %v5064
      %v5066 = vpop.f32.mrf.mxu0
      %5067 = vdwg.mxu0
      %5068 = vmatpush.bf16.msra.mxu0 %v4062
      %5069 = vmatpush.bf16.msra.mxu0 %v4054
      %5070 = vmatpush.bf16.msra.mxu0 %v4046
      %5071 = vmatpush.bf16.msra.mxu0 %v4038
      %5072 = vmatpush.bf16.msra.mxu0 %v4030
      %5073 = vmatpush.bf16.msra.mxu0 %v4022
      %5074 = vmatpush.bf16.msra.mxu0 %v4014
      %5075 = vmatpush.bf16.msra.mxu0 %v4006
      %5076 = vmatmul.bf16.gmra.mxu0 %v999
      %v5077 = vpop.f32.mrf.mxu0
      %v5078 = vadd.f32 %v5065, %v5077
      %v5079 = vpop.f32.mrf.mxu0
      %5080 = vdwg.mxu0
      %5081 = vmatpush.bf16.msra.mxu0 %v4126
      %5082 = vmatpush.bf16.msra.mxu0 %v4118
      %5083 = vmatpush.bf16.msra.mxu0 %v4110
      %5084 = vmatpush.bf16.msra.mxu0 %v4102
      %5085 = vmatpush.bf16.msra.mxu0 %v4094
      %5086 = vmatpush.bf16.msra.mxu0 %v4086
      %5087 = vmatpush.bf16.msra.mxu0 %v4078
      %5088 = vmatpush.bf16.msra.mxu0 %v4070
      %5089 = vmatmul.bf16.gmra.mxu0 %v1000
      %v5090 = vpop.f32.mrf.mxu0
      %v5091 = vadd.f32 %v5078, %v5090
      %v5092 = vpop.f32.mrf.mxu0
      %5093 = vdwg.mxu0
      %5094 = vmatpush.bf16.msra.mxu0 0
      %5095 = vmatpush.bf16.msra.mxu0 0
      %5096 = vmatpush.bf16.msra.mxu0 0
      %5097 = vmatpush.bf16.msra.mxu0 0
      %5098 = vmatpush.bf16.msra.mxu0 0
      %5099 = vmatpush.bf16.msra.mxu0 0
      %5100 = vmatpush.bf16.msra.mxu0 %v4142
      %5101 = vmatpush.bf16.msra.mxu0 %v4134
      %5102 = vmatmul.bf16.gmra.mxu0 %v4936
      %v5103 = vpop.f32.mrf.mxu0
      %v5104 = vadd.f32 %v5091, %v5103
      %v5105 = vpop.f32.mrf.mxu0
      %5106 = vdwg.mxu0
      %5107 = vmatpush.bf16.msra.mxu0 %v3423
      %5108 = vmatpush.bf16.msra.mxu0 %v3415
      %5109 = vmatpush.bf16.msra.mxu0 %v3407
      %5110 = vmatpush.bf16.msra.mxu0 %v3399
      %5111 = vmatpush.bf16.msra.mxu0 %v3391
      %5112 = vmatpush.bf16.msra.mxu0 %v3383
      %5113 = vmatpush.bf16.msra.mxu0 %v3375
      %5114 = vmatpush.bf16.msra.mxu0 %v3367
      %5115 = vmatmul.bf16.gmra.mxu0 %v989
      %v5116 = vpop.f32.mrf.mxu0
      %v5117 = vadd.f32 %v967, %v5116
      %v5118 = vpop.f32.mrf.mxu0
      %5119 = vdwg.mxu0
      %5120 = vmatpush.bf16.msra.mxu0 %v3487
      %5121 = vmatpush.bf16.msra.mxu0 %v3479
      %5122 = vmatpush.bf16.msra.mxu0 %v3471
      %5123 = vmatpush.bf16.msra.mxu0 %v3463
      %5124 = vmatpush.bf16.msra.mxu0 %v3455
      %5125 = vmatpush.bf16.msra.mxu0 %v3447
      %5126 = vmatpush.bf16.msra.mxu0 %v3439
      %5127 = vmatpush.bf16.msra.mxu0 %v3431
      %5128 = vmatmul.bf16.gmra.mxu0 %v990
      %v5129 = vpop.f32.mrf.mxu0
      %v5130 = vadd.f32 %v5117, %v5129
      %v5131 = vpop.f32.mrf.mxu0
      %5132 = vdwg.mxu0
      %5133 = vmatpush.bf16.msra.mxu0 %v3551
      %5134 = vmatpush.bf16.msra.mxu0 %v3543
      %5135 = vmatpush.bf16.msra.mxu0 %v3535
      %5136 = vmatpush.bf16.msra.mxu0 %v3527
      %5137 = vmatpush.bf16.msra.mxu0 %v3519
      %5138 = vmatpush.bf16.msra.mxu0 %v3511
      %5139 = vmatpush.bf16.msra.mxu0 %v3503
      %5140 = vmatpush.bf16.msra.mxu0 %v3495
      %5141 = vmatmul.bf16.gmra.mxu0 %v991
      %v5142 = vpop.f32.mrf.mxu0
      %v5143 = vadd.f32 %v5130, %v5142
      %v5144 = vpop.f32.mrf.mxu0
      %5145 = vdwg.mxu0
      %5146 = vmatpush.bf16.msra.mxu0 %v3615
      %5147 = vmatpush.bf16.msra.mxu0 %v3607
      %5148 = vmatpush.bf16.msra.mxu0 %v3599
      %5149 = vmatpush.bf16.msra.mxu0 %v3591
      %5150 = vmatpush.bf16.msra.mxu0 %v3583
      %5151 = vmatpush.bf16.msra.mxu0 %v3575
      %5152 = vmatpush.bf16.msra.mxu0 %v3567
      %5153 = vmatpush.bf16.msra.mxu0 %v3559
      %5154 = vmatmul.bf16.gmra.mxu0 %v992
      %v5155 = vpop.f32.mrf.mxu0
      %v5156 = vadd.f32 %v5143, %v5155
      %v5157 = vpop.f32.mrf.mxu0
      %5158 = vdwg.mxu0
      %5159 = vmatpush.bf16.msra.mxu0 %v3679
      %5160 = vmatpush.bf16.msra.mxu0 %v3671
      %5161 = vmatpush.bf16.msra.mxu0 %v3663
      %5162 = vmatpush.bf16.msra.mxu0 %v3655
      %5163 = vmatpush.bf16.msra.mxu0 %v3647
      %5164 = vmatpush.bf16.msra.mxu0 %v3639
      %5165 = vmatpush.bf16.msra.mxu0 %v3631
      %5166 = vmatpush.bf16.msra.mxu0 %v3623
      %5167 = vmatmul.bf16.gmra.mxu0 %v993
      %v5168 = vpop.f32.mrf.mxu0
      %v5169 = vadd.f32 %v5156, %v5168
      %v5170 = vpop.f32.mrf.mxu0
      %5171 = vdwg.mxu0
      %5172 = vmatpush.bf16.msra.mxu0 %v3743
      %5173 = vmatpush.bf16.msra.mxu0 %v3735
      %5174 = vmatpush.bf16.msra.mxu0 %v3727
      %5175 = vmatpush.bf16.msra.mxu0 %v3719
      %5176 = vmatpush.bf16.msra.mxu0 %v3711
      %5177 = vmatpush.bf16.msra.mxu0 %v3703
      %5178 = vmatpush.bf16.msra.mxu0 %v3695
      %5179 = vmatpush.bf16.msra.mxu0 %v3687
      %5180 = vmatmul.bf16.gmra.mxu0 %v994
      %v5181 = vpop.f32.mrf.mxu0
      %v5182 = vadd.f32 %v5169, %v5181
      %v5183 = vpop.f32.mrf.mxu0
      %5184 = vdwg.mxu0
      %5185 = vmatpush.bf16.msra.mxu0 %v3807
      %5186 = vmatpush.bf16.msra.mxu0 %v3799
      %5187 = vmatpush.bf16.msra.mxu0 %v3791
      %5188 = vmatpush.bf16.msra.mxu0 %v3783
      %5189 = vmatpush.bf16.msra.mxu0 %v3775
      %5190 = vmatpush.bf16.msra.mxu0 %v3767
      %5191 = vmatpush.bf16.msra.mxu0 %v3759
      %5192 = vmatpush.bf16.msra.mxu0 %v3751
      %5193 = vmatmul.bf16.gmra.mxu0 %v995
      %v5194 = vpop.f32.mrf.mxu0
      %v5195 = vadd.f32 %v5182, %v5194
      %v5196 = vpop.f32.mrf.mxu0
      %5197 = vdwg.mxu0
      %5198 = vmatpush.bf16.msra.mxu0 %v3871
      %5199 = vmatpush.bf16.msra.mxu0 %v3863
      %5200 = vmatpush.bf16.msra.mxu0 %v3855
      %5201 = vmatpush.bf16.msra.mxu0 %v3847
      %5202 = vmatpush.bf16.msra.mxu0 %v3839
      %5203 = vmatpush.bf16.msra.mxu0 %v3831
      %5204 = vmatpush.bf16.msra.mxu0 %v3823
      %5205 = vmatpush.bf16.msra.mxu0 %v3815
      %5206 = vmatmul.bf16.gmra.mxu0 %v996
      %v5207 = vpop.f32.mrf.mxu0
      %v5208 = vadd.f32 %v5195, %v5207
      %v5209 = vpop.f32.mrf.mxu0
      %5210 = vdwg.mxu0
      %5211 = vmatpush.bf16.msra.mxu0 %v3935
      %5212 = vmatpush.bf16.msra.mxu0 %v3927
      %5213 = vmatpush.bf16.msra.mxu0 %v3919
      %5214 = vmatpush.bf16.msra.mxu0 %v3911
      %5215 = vmatpush.bf16.msra.mxu0 %v3903
      %5216 = vmatpush.bf16.msra.mxu0 %v3895
      %5217 = vmatpush.bf16.msra.mxu0 %v3887
      %5218 = vmatpush.bf16.msra.mxu0 %v3879
      %5219 = vmatmul.bf16.gmra.mxu0 %v997
      %v5220 = vpop.f32.mrf.mxu0
      %v5221 = vadd.f32 %v5208, %v5220
      %v5222 = vpop.f32.mrf.mxu0
      %5223 = vdwg.mxu0
      %5224 = vmatpush.bf16.msra.mxu0 %v3999
      %5225 = vmatpush.bf16.msra.mxu0 %v3991
      %5226 = vmatpush.bf16.msra.mxu0 %v3983
      %5227 = vmatpush.bf16.msra.mxu0 %v3975
      %5228 = vmatpush.bf16.msra.mxu0 %v3967
      %5229 = vmatpush.bf16.msra.mxu0 %v3959
      %5230 = vmatpush.bf16.msra.mxu0 %v3951
      %5231 = vmatpush.bf16.msra.mxu0 %v3943
      %5232 = vmatmul.bf16.gmra.mxu0 %v998
      %v5233 = vpop.f32.mrf.mxu0
      %v5234 = vadd.f32 %v5221, %v5233
      %v5235 = vpop.f32.mrf.mxu0
      %5236 = vdwg.mxu0
      %5237 = vmatpush.bf16.msra.mxu0 %v4063
      %5238 = vmatpush.bf16.msra.mxu0 %v4055
      %5239 = vmatpush.bf16.msra.mxu0 %v4047
      %5240 = vmatpush.bf16.msra.mxu0 %v4039
      %5241 = vmatpush.bf16.msra.mxu0 %v4031
      %5242 = vmatpush.bf16.msra.mxu0 %v4023
      %5243 = vmatpush.bf16.msra.mxu0 %v4015
      %5244 = vmatpush.bf16.msra.mxu0 %v4007
      %5245 = vmatmul.bf16.gmra.mxu0 %v999
      %v5246 = vpop.f32.mrf.mxu0
      %v5247 = vadd.f32 %v5234, %v5246
      %v5248 = vpop.f32.mrf.mxu0
      %5249 = vdwg.mxu0
      %5250 = vmatpush.bf16.msra.mxu0 %v4127
      %5251 = vmatpush.bf16.msra.mxu0 %v4119
      %5252 = vmatpush.bf16.msra.mxu0 %v4111
      %5253 = vmatpush.bf16.msra.mxu0 %v4103
      %5254 = vmatpush.bf16.msra.mxu0 %v4095
      %5255 = vmatpush.bf16.msra.mxu0 %v4087
      %5256 = vmatpush.bf16.msra.mxu0 %v4079
      %5257 = vmatpush.bf16.msra.mxu0 %v4071
      %5258 = vmatmul.bf16.gmra.mxu0 %v1000
      %v5259 = vpop.f32.mrf.mxu0
      %v5260 = vadd.f32 %v5247, %v5259
      %v5261 = vpop.f32.mrf.mxu0
      %5262 = vdwg.mxu0
      %5263 = vmatpush.bf16.msra.mxu0 0
      %5264 = vmatpush.bf16.msra.mxu0 0
      %5265 = vmatpush.bf16.msra.mxu0 0
      %5266 = vmatpush.bf16.msra.mxu0 0
      %5267 = vmatpush.bf16.msra.mxu0 0
      %5268 = vmatpush.bf16.msra.mxu0 0
      %5269 = vmatpush.bf16.msra.mxu0 %v4143
      %5270 = vmatpush.bf16.msra.mxu0 %v4135
      %5271 = vmatmul.bf16.gmra.mxu0 %v4936
      %v5272 = vpop.f32.mrf.mxu0
      %v5273 = vadd.f32 %v5260, %v5272
      %v5274 = vpop.f32.mrf.mxu0
      %5275 = vdwg.mxu0
      %5276 = vmatpush.bf16.msra.mxu0 %v3424
      %5277 = vmatpush.bf16.msra.mxu0 %v3416
      %5278 = vmatpush.bf16.msra.mxu0 %v3408
      %5279 = vmatpush.bf16.msra.mxu0 %v3400
      %5280 = vmatpush.bf16.msra.mxu0 %v3392
      %5281 = vmatpush.bf16.msra.mxu0 %v3384
      %5282 = vmatpush.bf16.msra.mxu0 %v3376
      %5283 = vmatpush.bf16.msra.mxu0 %v3368
      %5284 = vmatmul.bf16.gmra.mxu0 %v989
      %v5285 = vpop.f32.mrf.mxu0
      %v5286 = vadd.f32 %v967, %v5285
      %v5287 = vpop.f32.mrf.mxu0
      %5288 = vdwg.mxu0
      %5289 = vmatpush.bf16.msra.mxu0 %v3488
      %5290 = vmatpush.bf16.msra.mxu0 %v3480
      %5291 = vmatpush.bf16.msra.mxu0 %v3472
      %5292 = vmatpush.bf16.msra.mxu0 %v3464
      %5293 = vmatpush.bf16.msra.mxu0 %v3456
      %5294 = vmatpush.bf16.msra.mxu0 %v3448
      %5295 = vmatpush.bf16.msra.mxu0 %v3440
      %5296 = vmatpush.bf16.msra.mxu0 %v3432
      %5297 = vmatmul.bf16.gmra.mxu0 %v990
      %v5298 = vpop.f32.mrf.mxu0
      %v5299 = vadd.f32 %v5286, %v5298
      %v5300 = vpop.f32.mrf.mxu0
      %5301 = vdwg.mxu0
      %5302 = vmatpush.bf16.msra.mxu0 %v3552
      %5303 = vmatpush.bf16.msra.mxu0 %v3544
      %5304 = vmatpush.bf16.msra.mxu0 %v3536
      %5305 = vmatpush.bf16.msra.mxu0 %v3528
      %5306 = vmatpush.bf16.msra.mxu0 %v3520
      %5307 = vmatpush.bf16.msra.mxu0 %v3512
      %5308 = vmatpush.bf16.msra.mxu0 %v3504
      %5309 = vmatpush.bf16.msra.mxu0 %v3496
      %5310 = vmatmul.bf16.gmra.mxu0 %v991
      %v5311 = vpop.f32.mrf.mxu0
      %v5312 = vadd.f32 %v5299, %v5311
      %v5313 = vpop.f32.mrf.mxu0
      %5314 = vdwg.mxu0
      %5315 = vmatpush.bf16.msra.mxu0 %v3616
      %5316 = vmatpush.bf16.msra.mxu0 %v3608
      %5317 = vmatpush.bf16.msra.mxu0 %v3600
      %5318 = vmatpush.bf16.msra.mxu0 %v3592
      %5319 = vmatpush.bf16.msra.mxu0 %v3584
      %5320 = vmatpush.bf16.msra.mxu0 %v3576
      %5321 = vmatpush.bf16.msra.mxu0 %v3568
      %5322 = vmatpush.bf16.msra.mxu0 %v3560
      %5323 = vmatmul.bf16.gmra.mxu0 %v992
      %v5324 = vpop.f32.mrf.mxu0
      %v5325 = vadd.f32 %v5312, %v5324
      %v5326 = vpop.f32.mrf.mxu0
      %5327 = vdwg.mxu0
      %5328 = vmatpush.bf16.msra.mxu0 %v3680
      %5329 = vmatpush.bf16.msra.mxu0 %v3672
      %5330 = vmatpush.bf16.msra.mxu0 %v3664
      %5331 = vmatpush.bf16.msra.mxu0 %v3656
      %5332 = vmatpush.bf16.msra.mxu0 %v3648
      %5333 = vmatpush.bf16.msra.mxu0 %v3640
      %5334 = vmatpush.bf16.msra.mxu0 %v3632
      %5335 = vmatpush.bf16.msra.mxu0 %v3624
      %5336 = vmatmul.bf16.gmra.mxu0 %v993
      %v5337 = vpop.f32.mrf.mxu0
      %v5338 = vadd.f32 %v5325, %v5337
      %v5339 = vpop.f32.mrf.mxu0
      %5340 = vdwg.mxu0
      %5341 = vmatpush.bf16.msra.mxu0 %v3744
      %5342 = vmatpush.bf16.msra.mxu0 %v3736
      %5343 = vmatpush.bf16.msra.mxu0 %v3728
      %5344 = vmatpush.bf16.msra.mxu0 %v3720
      %5345 = vmatpush.bf16.msra.mxu0 %v3712
      %5346 = vmatpush.bf16.msra.mxu0 %v3704
      %5347 = vmatpush.bf16.msra.mxu0 %v3696
      %5348 = vmatpush.bf16.msra.mxu0 %v3688
      %5349 = vmatmul.bf16.gmra.mxu0 %v994
      %v5350 = vpop.f32.mrf.mxu0
      %v5351 = vadd.f32 %v5338, %v5350
      %v5352 = vpop.f32.mrf.mxu0
      %5353 = vdwg.mxu0
      %5354 = vmatpush.bf16.msra.mxu0 %v3808
      %5355 = vmatpush.bf16.msra.mxu0 %v3800
      %5356 = vmatpush.bf16.msra.mxu0 %v3792
      %5357 = vmatpush.bf16.msra.mxu0 %v3784
      %5358 = vmatpush.bf16.msra.mxu0 %v3776
      %5359 = vmatpush.bf16.msra.mxu0 %v3768
      %5360 = vmatpush.bf16.msra.mxu0 %v3760
      %5361 = vmatpush.bf16.msra.mxu0 %v3752
      %5362 = vmatmul.bf16.gmra.mxu0 %v995
      %v5363 = vpop.f32.mrf.mxu0
      %v5364 = vadd.f32 %v5351, %v5363
      %v5365 = vpop.f32.mrf.mxu0
      %5366 = vdwg.mxu0
      %5367 = vmatpush.bf16.msra.mxu0 %v3872
      %5368 = vmatpush.bf16.msra.mxu0 %v3864
      %5369 = vmatpush.bf16.msra.mxu0 %v3856
      %5370 = vmatpush.bf16.msra.mxu0 %v3848
      %5371 = vmatpush.bf16.msra.mxu0 %v3840
      %5372 = vmatpush.bf16.msra.mxu0 %v3832
      %5373 = vmatpush.bf16.msra.mxu0 %v3824
      %5374 = vmatpush.bf16.msra.mxu0 %v3816
      %5375 = vmatmul.bf16.gmra.mxu0 %v996
      %v5376 = vpop.f32.mrf.mxu0
      %v5377 = vadd.f32 %v5364, %v5376
      %v5378 = vpop.f32.mrf.mxu0
      %5379 = vdwg.mxu0
      %5380 = vmatpush.bf16.msra.mxu0 %v3936
      %5381 = vmatpush.bf16.msra.mxu0 %v3928
      %5382 = vmatpush.bf16.msra.mxu0 %v3920
      %5383 = vmatpush.bf16.msra.mxu0 %v3912
      %5384 = vmatpush.bf16.msra.mxu0 %v3904
      %5385 = vmatpush.bf16.msra.mxu0 %v3896
      %5386 = vmatpush.bf16.msra.mxu0 %v3888
      %5387 = vmatpush.bf16.msra.mxu0 %v3880
      %5388 = vmatmul.bf16.gmra.mxu0 %v997
      %v5389 = vpop.f32.mrf.mxu0
      %v5390 = vadd.f32 %v5377, %v5389
      %v5391 = vpop.f32.mrf.mxu0
      %5392 = vdwg.mxu0
      %5393 = vmatpush.bf16.msra.mxu0 %v4000
      %5394 = vmatpush.bf16.msra.mxu0 %v3992
      %5395 = vmatpush.bf16.msra.mxu0 %v3984
      %5396 = vmatpush.bf16.msra.mxu0 %v3976
      %5397 = vmatpush.bf16.msra.mxu0 %v3968
      %5398 = vmatpush.bf16.msra.mxu0 %v3960
      %5399 = vmatpush.bf16.msra.mxu0 %v3952
      %5400 = vmatpush.bf16.msra.mxu0 %v3944
      %5401 = vmatmul.bf16.gmra.mxu0 %v998
      %v5402 = vpop.f32.mrf.mxu0
      %v5403 = vadd.f32 %v5390, %v5402
      %v5404 = vpop.f32.mrf.mxu0
      %5405 = vdwg.mxu0
      %5406 = vmatpush.bf16.msra.mxu0 %v4064
      %5407 = vmatpush.bf16.msra.mxu0 %v4056
      %5408 = vmatpush.bf16.msra.mxu0 %v4048
      %5409 = vmatpush.bf16.msra.mxu0 %v4040
      %5410 = vmatpush.bf16.msra.mxu0 %v4032
      %5411 = vmatpush.bf16.msra.mxu0 %v4024
      %5412 = vmatpush.bf16.msra.mxu0 %v4016
      %5413 = vmatpush.bf16.msra.mxu0 %v4008
      %5414 = vmatmul.bf16.gmra.mxu0 %v999
      %v5415 = vpop.f32.mrf.mxu0
      %v5416 = vadd.f32 %v5403, %v5415
      %v5417 = vpop.f32.mrf.mxu0
      %5418 = vdwg.mxu0
      %5419 = vmatpush.bf16.msra.mxu0 %v4128
      %5420 = vmatpush.bf16.msra.mxu0 %v4120
      %5421 = vmatpush.bf16.msra.mxu0 %v4112
      %5422 = vmatpush.bf16.msra.mxu0 %v4104
      %5423 = vmatpush.bf16.msra.mxu0 %v4096
      %5424 = vmatpush.bf16.msra.mxu0 %v4088
      %5425 = vmatpush.bf16.msra.mxu0 %v4080
      %5426 = vmatpush.bf16.msra.mxu0 %v4072
      %5427 = vmatmul.bf16.gmra.mxu0 %v1000
      %v5428 = vpop.f32.mrf.mxu0
      %v5429 = vadd.f32 %v5416, %v5428
      %v5430 = vpop.f32.mrf.mxu0
      %5431 = vdwg.mxu0
      %5432 = vmatpush.bf16.msra.mxu0 0
      %5433 = vmatpush.bf16.msra.mxu0 0
      %5434 = vmatpush.bf16.msra.mxu0 0
      %5435 = vmatpush.bf16.msra.mxu0 0
      %5436 = vmatpush.bf16.msra.mxu0 0
      %5437 = vmatpush.bf16.msra.mxu0 0
      %5438 = vmatpush.bf16.msra.mxu0 %v4144
      %5439 = vmatpush.bf16.msra.mxu0 %v4136
      %5440 = vmatmul.bf16.gmra.mxu0 %v4936
      %v5441 = vpop.f32.mrf.mxu0
      %v5442 = vadd.f32 %v5429, %v5441
      %v5443 = vpop.f32.mrf.mxu0
      %5444 = vdwg.mxu0
      %5445 = vmatpush.bf16.msra.mxu0 %v3425
      %5446 = vmatpush.bf16.msra.mxu0 %v3417
      %5447 = vmatpush.bf16.msra.mxu0 %v3409
      %5448 = vmatpush.bf16.msra.mxu0 %v3401
      %5449 = vmatpush.bf16.msra.mxu0 %v3393
      %5450 = vmatpush.bf16.msra.mxu0 %v3385
      %5451 = vmatpush.bf16.msra.mxu0 %v3377
      %5452 = vmatpush.bf16.msra.mxu0 %v3369
      %5453 = vmatmul.bf16.gmra.mxu0 %v989
      %v5454 = vpop.f32.mrf.mxu0
      %v5455 = vadd.f32 %v967, %v5454
      %v5456 = vpop.f32.mrf.mxu0
      %5457 = vdwg.mxu0
      %5458 = vmatpush.bf16.msra.mxu0 %v3489
      %5459 = vmatpush.bf16.msra.mxu0 %v3481
      %5460 = vmatpush.bf16.msra.mxu0 %v3473
      %5461 = vmatpush.bf16.msra.mxu0 %v3465
      %5462 = vmatpush.bf16.msra.mxu0 %v3457
      %5463 = vmatpush.bf16.msra.mxu0 %v3449
      %5464 = vmatpush.bf16.msra.mxu0 %v3441
      %5465 = vmatpush.bf16.msra.mxu0 %v3433
      %5466 = vmatmul.bf16.gmra.mxu0 %v990
      %v5467 = vpop.f32.mrf.mxu0
      %v5468 = vadd.f32 %v5455, %v5467
      %v5469 = vpop.f32.mrf.mxu0
      %5470 = vdwg.mxu0
      %5471 = vmatpush.bf16.msra.mxu0 %v3553
      %5472 = vmatpush.bf16.msra.mxu0 %v3545
      %5473 = vmatpush.bf16.msra.mxu0 %v3537
      %5474 = vmatpush.bf16.msra.mxu0 %v3529
      %5475 = vmatpush.bf16.msra.mxu0 %v3521
      %5476 = vmatpush.bf16.msra.mxu0 %v3513
      %5477 = vmatpush.bf16.msra.mxu0 %v3505
      %5478 = vmatpush.bf16.msra.mxu0 %v3497
      %5479 = vmatmul.bf16.gmra.mxu0 %v991
      %v5480 = vpop.f32.mrf.mxu0
      %v5481 = vadd.f32 %v5468, %v5480
      %v5482 = vpop.f32.mrf.mxu0
      %5483 = vdwg.mxu0
      %5484 = vmatpush.bf16.msra.mxu0 %v3617
      %5485 = vmatpush.bf16.msra.mxu0 %v3609
      %5486 = vmatpush.bf16.msra.mxu0 %v3601
      %5487 = vmatpush.bf16.msra.mxu0 %v3593
      %5488 = vmatpush.bf16.msra.mxu0 %v3585
      %5489 = vmatpush.bf16.msra.mxu0 %v3577
      %5490 = vmatpush.bf16.msra.mxu0 %v3569
      %5491 = vmatpush.bf16.msra.mxu0 %v3561
      %5492 = vmatmul.bf16.gmra.mxu0 %v992
      %v5493 = vpop.f32.mrf.mxu0
      %v5494 = vadd.f32 %v5481, %v5493
      %v5495 = vpop.f32.mrf.mxu0
      %5496 = vdwg.mxu0
      %5497 = vmatpush.bf16.msra.mxu0 %v3681
      %5498 = vmatpush.bf16.msra.mxu0 %v3673
      %5499 = vmatpush.bf16.msra.mxu0 %v3665
      %5500 = vmatpush.bf16.msra.mxu0 %v3657
      %5501 = vmatpush.bf16.msra.mxu0 %v3649
      %5502 = vmatpush.bf16.msra.mxu0 %v3641
      %5503 = vmatpush.bf16.msra.mxu0 %v3633
      %5504 = vmatpush.bf16.msra.mxu0 %v3625
      %5505 = vmatmul.bf16.gmra.mxu0 %v993
      %v5506 = vpop.f32.mrf.mxu0
      %v5507 = vadd.f32 %v5494, %v5506
      %v5508 = vpop.f32.mrf.mxu0
      %5509 = vdwg.mxu0
      %5510 = vmatpush.bf16.msra.mxu0 %v3745
      %5511 = vmatpush.bf16.msra.mxu0 %v3737
      %5512 = vmatpush.bf16.msra.mxu0 %v3729
      %5513 = vmatpush.bf16.msra.mxu0 %v3721
      %5514 = vmatpush.bf16.msra.mxu0 %v3713
      %5515 = vmatpush.bf16.msra.mxu0 %v3705
      %5516 = vmatpush.bf16.msra.mxu0 %v3697
      %5517 = vmatpush.bf16.msra.mxu0 %v3689
      %5518 = vmatmul.bf16.gmra.mxu0 %v994
      %v5519 = vpop.f32.mrf.mxu0
      %v5520 = vadd.f32 %v5507, %v5519
      %v5521 = vpop.f32.mrf.mxu0
      %5522 = vdwg.mxu0
      %5523 = vmatpush.bf16.msra.mxu0 %v3809
      %5524 = vmatpush.bf16.msra.mxu0 %v3801
      %5525 = vmatpush.bf16.msra.mxu0 %v3793
      %5526 = vmatpush.bf16.msra.mxu0 %v3785
      %5527 = vmatpush.bf16.msra.mxu0 %v3777
      %5528 = vmatpush.bf16.msra.mxu0 %v3769
      %5529 = vmatpush.bf16.msra.mxu0 %v3761
      %5530 = vmatpush.bf16.msra.mxu0 %v3753
      %5531 = vmatmul.bf16.gmra.mxu0 %v995
      %v5532 = vpop.f32.mrf.mxu0
      %v5533 = vadd.f32 %v5520, %v5532
      %v5534 = vpop.f32.mrf.mxu0
      %5535 = vdwg.mxu0
      %5536 = vmatpush.bf16.msra.mxu0 %v3873
      %5537 = vmatpush.bf16.msra.mxu0 %v3865
      %5538 = vmatpush.bf16.msra.mxu0 %v3857
      %5539 = vmatpush.bf16.msra.mxu0 %v3849
      %5540 = vmatpush.bf16.msra.mxu0 %v3841
      %5541 = vmatpush.bf16.msra.mxu0 %v3833
      %5542 = vmatpush.bf16.msra.mxu0 %v3825
      %5543 = vmatpush.bf16.msra.mxu0 %v3817
      %5544 = vmatmul.bf16.gmra.mxu0 %v996
      %v5545 = vpop.f32.mrf.mxu0
      %v5546 = vadd.f32 %v5533, %v5545
      %v5547 = vpop.f32.mrf.mxu0
      %5548 = vdwg.mxu0
      %5549 = vmatpush.bf16.msra.mxu0 %v3937
      %5550 = vmatpush.bf16.msra.mxu0 %v3929
      %5551 = vmatpush.bf16.msra.mxu0 %v3921
      %5552 = vmatpush.bf16.msra.mxu0 %v3913
      %5553 = vmatpush.bf16.msra.mxu0 %v3905
      %5554 = vmatpush.bf16.msra.mxu0 %v3897
      %5555 = vmatpush.bf16.msra.mxu0 %v3889
      %5556 = vmatpush.bf16.msra.mxu0 %v3881
      %5557 = vmatmul.bf16.gmra.mxu0 %v997
      %v5558 = vpop.f32.mrf.mxu0
      %v5559 = vadd.f32 %v5546, %v5558
      %v5560 = vpop.f32.mrf.mxu0
      %5561 = vdwg.mxu0
      %5562 = vmatpush.bf16.msra.mxu0 %v4001
      %5563 = vmatpush.bf16.msra.mxu0 %v3993
      %5564 = vmatpush.bf16.msra.mxu0 %v3985
      %5565 = vmatpush.bf16.msra.mxu0 %v3977
      %5566 = vmatpush.bf16.msra.mxu0 %v3969
      %5567 = vmatpush.bf16.msra.mxu0 %v3961
      %5568 = vmatpush.bf16.msra.mxu0 %v3953
      %5569 = vmatpush.bf16.msra.mxu0 %v3945
      %5570 = vmatmul.bf16.gmra.mxu0 %v998
      %v5571 = vpop.f32.mrf.mxu0
      %v5572 = vadd.f32 %v5559, %v5571
      %v5573 = vpop.f32.mrf.mxu0
      %5574 = vdwg.mxu0
      %5575 = vmatpush.bf16.msra.mxu0 %v4065
      %5576 = vmatpush.bf16.msra.mxu0 %v4057
      %5577 = vmatpush.bf16.msra.mxu0 %v4049
      %5578 = vmatpush.bf16.msra.mxu0 %v4041
      %5579 = vmatpush.bf16.msra.mxu0 %v4033
      %5580 = vmatpush.bf16.msra.mxu0 %v4025
      %5581 = vmatpush.bf16.msra.mxu0 %v4017
      %5582 = vmatpush.bf16.msra.mxu0 %v4009
      %5583 = vmatmul.bf16.gmra.mxu0 %v999
      %v5584 = vpop.f32.mrf.mxu0
      %v5585 = vadd.f32 %v5572, %v5584
      %v5586 = vpop.f32.mrf.mxu0
      %5587 = vdwg.mxu0
      %5588 = vmatpush.bf16.msra.mxu0 %v4129
      %5589 = vmatpush.bf16.msra.mxu0 %v4121
      %5590 = vmatpush.bf16.msra.mxu0 %v4113
      %5591 = vmatpush.bf16.msra.mxu0 %v4105
      %5592 = vmatpush.bf16.msra.mxu0 %v4097
      %5593 = vmatpush.bf16.msra.mxu0 %v4089
      %5594 = vmatpush.bf16.msra.mxu0 %v4081
      %5595 = vmatpush.bf16.msra.mxu0 %v4073
      %5596 = vmatmul.bf16.gmra.mxu0 %v1000
      %v5597 = vpop.f32.mrf.mxu0
      %v5598 = vadd.f32 %v5585, %v5597
      %v5599 = vpop.f32.mrf.mxu0
      %5600 = vdwg.mxu0
      %5601 = vmatpush.bf16.msra.mxu0 0
      %5602 = vmatpush.bf16.msra.mxu0 0
      %5603 = vmatpush.bf16.msra.mxu0 0
      %5604 = vmatpush.bf16.msra.mxu0 0
      %5605 = vmatpush.bf16.msra.mxu0 0
      %5606 = vmatpush.bf16.msra.mxu0 0
      %5607 = vmatpush.bf16.msra.mxu0 %v4145
      %5608 = vmatpush.bf16.msra.mxu0 %v4137
      %5609 = vmatmul.bf16.gmra.mxu0 %v4936
      %v5610 = vpop.f32.mrf.mxu0
      %v5611 = vadd.f32 %v5598, %v5610
      %v5612 = vpop.f32.mrf.mxu0
      %5613 = vdwg.mxu0
      %5614 = vmatpush.bf16.msra.mxu0 %v3426
      %5615 = vmatpush.bf16.msra.mxu0 %v3418
      %5616 = vmatpush.bf16.msra.mxu0 %v3410
      %5617 = vmatpush.bf16.msra.mxu0 %v3402
      %5618 = vmatpush.bf16.msra.mxu0 %v3394
      %5619 = vmatpush.bf16.msra.mxu0 %v3386
      %5620 = vmatpush.bf16.msra.mxu0 %v3378
      %5621 = vmatpush.bf16.msra.mxu0 %v3370
      %5622 = vmatmul.bf16.gmra.mxu0 %v989
      %v5623 = vpop.f32.mrf.mxu0
      %v5624 = vadd.f32 %v967, %v5623
      %v5625 = vpop.f32.mrf.mxu0
      %5626 = vdwg.mxu0
      %5627 = vmatpush.bf16.msra.mxu0 %v3490
      %5628 = vmatpush.bf16.msra.mxu0 %v3482
      %5629 = vmatpush.bf16.msra.mxu0 %v3474
      %5630 = vmatpush.bf16.msra.mxu0 %v3466
      %5631 = vmatpush.bf16.msra.mxu0 %v3458
      %5632 = vmatpush.bf16.msra.mxu0 %v3450
      %5633 = vmatpush.bf16.msra.mxu0 %v3442
      %5634 = vmatpush.bf16.msra.mxu0 %v3434
      %5635 = vmatmul.bf16.gmra.mxu0 %v990
      %v5636 = vpop.f32.mrf.mxu0
      %v5637 = vadd.f32 %v5624, %v5636
      %v5638 = vpop.f32.mrf.mxu0
      %5639 = vdwg.mxu0
      %5640 = vmatpush.bf16.msra.mxu0 %v3554
      %5641 = vmatpush.bf16.msra.mxu0 %v3546
      %5642 = vmatpush.bf16.msra.mxu0 %v3538
      %5643 = vmatpush.bf16.msra.mxu0 %v3530
      %5644 = vmatpush.bf16.msra.mxu0 %v3522
      %5645 = vmatpush.bf16.msra.mxu0 %v3514
      %5646 = vmatpush.bf16.msra.mxu0 %v3506
      %5647 = vmatpush.bf16.msra.mxu0 %v3498
      %5648 = vmatmul.bf16.gmra.mxu0 %v991
      %v5649 = vpop.f32.mrf.mxu0
      %v5650 = vadd.f32 %v5637, %v5649
      %v5651 = vpop.f32.mrf.mxu0
      %5652 = vdwg.mxu0
      %5653 = vmatpush.bf16.msra.mxu0 %v3618
      %5654 = vmatpush.bf16.msra.mxu0 %v3610
      %5655 = vmatpush.bf16.msra.mxu0 %v3602
      %5656 = vmatpush.bf16.msra.mxu0 %v3594
      %5657 = vmatpush.bf16.msra.mxu0 %v3586
      %5658 = vmatpush.bf16.msra.mxu0 %v3578
      %5659 = vmatpush.bf16.msra.mxu0 %v3570
      %5660 = vmatpush.bf16.msra.mxu0 %v3562
      %5661 = vmatmul.bf16.gmra.mxu0 %v992
      %v5662 = vpop.f32.mrf.mxu0
      %v5663 = vadd.f32 %v5650, %v5662
      %v5664 = vpop.f32.mrf.mxu0
      %5665 = vdwg.mxu0
      %5666 = vmatpush.bf16.msra.mxu0 %v3682
      %5667 = vmatpush.bf16.msra.mxu0 %v3674
      %5668 = vmatpush.bf16.msra.mxu0 %v3666
      %5669 = vmatpush.bf16.msra.mxu0 %v3658
      %5670 = vmatpush.bf16.msra.mxu0 %v3650
      %5671 = vmatpush.bf16.msra.mxu0 %v3642
      %5672 = vmatpush.bf16.msra.mxu0 %v3634
      %5673 = vmatpush.bf16.msra.mxu0 %v3626
      %5674 = vmatmul.bf16.gmra.mxu0 %v993
      %v5675 = vpop.f32.mrf.mxu0
      %v5676 = vadd.f32 %v5663, %v5675
      %v5677 = vpop.f32.mrf.mxu0
      %5678 = vdwg.mxu0
      %5679 = vmatpush.bf16.msra.mxu0 %v3746
      %5680 = vmatpush.bf16.msra.mxu0 %v3738
      %5681 = vmatpush.bf16.msra.mxu0 %v3730
      %5682 = vmatpush.bf16.msra.mxu0 %v3722
      %5683 = vmatpush.bf16.msra.mxu0 %v3714
      %5684 = vmatpush.bf16.msra.mxu0 %v3706
      %5685 = vmatpush.bf16.msra.mxu0 %v3698
      %5686 = vmatpush.bf16.msra.mxu0 %v3690
      %5687 = vmatmul.bf16.gmra.mxu0 %v994
      %v5688 = vpop.f32.mrf.mxu0
      %v5689 = vadd.f32 %v5676, %v5688
      %v5690 = vpop.f32.mrf.mxu0
      %5691 = vdwg.mxu0
      %5692 = vmatpush.bf16.msra.mxu0 %v3810
      %5693 = vmatpush.bf16.msra.mxu0 %v3802
      %5694 = vmatpush.bf16.msra.mxu0 %v3794
      %5695 = vmatpush.bf16.msra.mxu0 %v3786
      %5696 = vmatpush.bf16.msra.mxu0 %v3778
      %5697 = vmatpush.bf16.msra.mxu0 %v3770
      %5698 = vmatpush.bf16.msra.mxu0 %v3762
      %5699 = vmatpush.bf16.msra.mxu0 %v3754
      %5700 = vmatmul.bf16.gmra.mxu0 %v995
      %v5701 = vpop.f32.mrf.mxu0
      %v5702 = vadd.f32 %v5689, %v5701
      %v5703 = vpop.f32.mrf.mxu0
      %5704 = vdwg.mxu0
      %5705 = vmatpush.bf16.msra.mxu0 %v3874
      %5706 = vmatpush.bf16.msra.mxu0 %v3866
      %5707 = vmatpush.bf16.msra.mxu0 %v3858
      %5708 = vmatpush.bf16.msra.mxu0 %v3850
      %5709 = vmatpush.bf16.msra.mxu0 %v3842
      %5710 = vmatpush.bf16.msra.mxu0 %v3834
      %5711 = vmatpush.bf16.msra.mxu0 %v3826
      %5712 = vmatpush.bf16.msra.mxu0 %v3818
      %5713 = vmatmul.bf16.gmra.mxu0 %v996
      %v5714 = vpop.f32.mrf.mxu0
      %v5715 = vadd.f32 %v5702, %v5714
      %v5716 = vpop.f32.mrf.mxu0
      %5717 = vdwg.mxu0
      %5718 = vmatpush.bf16.msra.mxu0 %v3938
      %5719 = vmatpush.bf16.msra.mxu0 %v3930
      %5720 = vmatpush.bf16.msra.mxu0 %v3922
      %5721 = vmatpush.bf16.msra.mxu0 %v3914
      %5722 = vmatpush.bf16.msra.mxu0 %v3906
      %5723 = vmatpush.bf16.msra.mxu0 %v3898
      %5724 = vmatpush.bf16.msra.mxu0 %v3890
      %5725 = vmatpush.bf16.msra.mxu0 %v3882
      %5726 = vmatmul.bf16.gmra.mxu0 %v997
      %v5727 = vpop.f32.mrf.mxu0
      %v5728 = vadd.f32 %v5715, %v5727
      %v5729 = vpop.f32.mrf.mxu0
      %5730 = vdwg.mxu0
      %5731 = vmatpush.bf16.msra.mxu0 %v4002
      %5732 = vmatpush.bf16.msra.mxu0 %v3994
      %5733 = vmatpush.bf16.msra.mxu0 %v3986
      %5734 = vmatpush.bf16.msra.mxu0 %v3978
      %5735 = vmatpush.bf16.msra.mxu0 %v3970
      %5736 = vmatpush.bf16.msra.mxu0 %v3962
      %5737 = vmatpush.bf16.msra.mxu0 %v3954
      %5738 = vmatpush.bf16.msra.mxu0 %v3946
      %5739 = vmatmul.bf16.gmra.mxu0 %v998
      %v5740 = vpop.f32.mrf.mxu0
      %v5741 = vadd.f32 %v5728, %v5740
      %v5742 = vpop.f32.mrf.mxu0
      %5743 = vdwg.mxu0
      %5744 = vmatpush.bf16.msra.mxu0 %v4066
      %5745 = vmatpush.bf16.msra.mxu0 %v4058
      %5746 = vmatpush.bf16.msra.mxu0 %v4050
      %5747 = vmatpush.bf16.msra.mxu0 %v4042
      %5748 = vmatpush.bf16.msra.mxu0 %v4034
      %5749 = vmatpush.bf16.msra.mxu0 %v4026
      %5750 = vmatpush.bf16.msra.mxu0 %v4018
      %5751 = vmatpush.bf16.msra.mxu0 %v4010
      %5752 = vmatmul.bf16.gmra.mxu0 %v999
      %v5753 = vpop.f32.mrf.mxu0
      %v5754 = vadd.f32 %v5741, %v5753
      %v5755 = vpop.f32.mrf.mxu0
      %5756 = vdwg.mxu0
      %5757 = vmatpush.bf16.msra.mxu0 %v4130
      %5758 = vmatpush.bf16.msra.mxu0 %v4122
      %5759 = vmatpush.bf16.msra.mxu0 %v4114
      %5760 = vmatpush.bf16.msra.mxu0 %v4106
      %5761 = vmatpush.bf16.msra.mxu0 %v4098
      %5762 = vmatpush.bf16.msra.mxu0 %v4090
      %5763 = vmatpush.bf16.msra.mxu0 %v4082
      %5764 = vmatpush.bf16.msra.mxu0 %v4074
      %5765 = vmatmul.bf16.gmra.mxu0 %v1000
      %v5766 = vpop.f32.mrf.mxu0
      %v5767 = vadd.f32 %v5754, %v5766
      %v5768 = vpop.f32.mrf.mxu0
      %5769 = vdwg.mxu0
      %5770 = vmatpush.bf16.msra.mxu0 0
      %5771 = vmatpush.bf16.msra.mxu0 0
      %5772 = vmatpush.bf16.msra.mxu0 0
      %5773 = vmatpush.bf16.msra.mxu0 0
      %5774 = vmatpush.bf16.msra.mxu0 0
      %5775 = vmatpush.bf16.msra.mxu0 0
      %5776 = vmatpush.bf16.msra.mxu0 %v4146
      %5777 = vmatpush.bf16.msra.mxu0 %v4138
      %5778 = vmatmul.bf16.gmra.mxu0 %v4936
      %v5779 = vpop.f32.mrf.mxu0
      %v5780 = vadd.f32 %v5767, %v5779
      %v5781 = vpop.f32.mrf.mxu0
      %5782 = vdwg.mxu0
      %5783 = vmatpush.bf16.msra.mxu0 %v3427
      %5784 = vmatpush.bf16.msra.mxu0 %v3419
      %5785 = vmatpush.bf16.msra.mxu0 %v3411
      %5786 = vmatpush.bf16.msra.mxu0 %v3403
      %5787 = vmatpush.bf16.msra.mxu0 %v3395
      %5788 = vmatpush.bf16.msra.mxu0 %v3387
      %5789 = vmatpush.bf16.msra.mxu0 %v3379
      %5790 = vmatpush.bf16.msra.mxu0 %v3371
      %5791 = vmatmul.bf16.gmra.mxu0 %v989
      %v5792 = vpop.f32.mrf.mxu0
      %v5793 = vadd.f32 %v967, %v5792
      %v5794 = vpop.f32.mrf.mxu0
      %5795 = vdwg.mxu0
      %5796 = vmatpush.bf16.msra.mxu0 %v3491
      %5797 = vmatpush.bf16.msra.mxu0 %v3483
      %5798 = vmatpush.bf16.msra.mxu0 %v3475
      %5799 = vmatpush.bf16.msra.mxu0 %v3467
      %5800 = vmatpush.bf16.msra.mxu0 %v3459
      %5801 = vmatpush.bf16.msra.mxu0 %v3451
      %5802 = vmatpush.bf16.msra.mxu0 %v3443
      %5803 = vmatpush.bf16.msra.mxu0 %v3435
      %5804 = vmatmul.bf16.gmra.mxu0 %v990
      %v5805 = vpop.f32.mrf.mxu0
      %v5806 = vadd.f32 %v5793, %v5805
      %v5807 = vpop.f32.mrf.mxu0
      %5808 = vdwg.mxu0
      %5809 = vmatpush.bf16.msra.mxu0 %v3555
      %5810 = vmatpush.bf16.msra.mxu0 %v3547
      %5811 = vmatpush.bf16.msra.mxu0 %v3539
      %5812 = vmatpush.bf16.msra.mxu0 %v3531
      %5813 = vmatpush.bf16.msra.mxu0 %v3523
      %5814 = vmatpush.bf16.msra.mxu0 %v3515
      %5815 = vmatpush.bf16.msra.mxu0 %v3507
      %5816 = vmatpush.bf16.msra.mxu0 %v3499
      %5817 = vmatmul.bf16.gmra.mxu0 %v991
      %v5818 = vpop.f32.mrf.mxu0
      %v5819 = vadd.f32 %v5806, %v5818
      %v5820 = vpop.f32.mrf.mxu0
      %5821 = vdwg.mxu0
      %5822 = vmatpush.bf16.msra.mxu0 %v3619
      %5823 = vmatpush.bf16.msra.mxu0 %v3611
      %5824 = vmatpush.bf16.msra.mxu0 %v3603
      %5825 = vmatpush.bf16.msra.mxu0 %v3595
      %5826 = vmatpush.bf16.msra.mxu0 %v3587
      %5827 = vmatpush.bf16.msra.mxu0 %v3579
      %5828 = vmatpush.bf16.msra.mxu0 %v3571
      %5829 = vmatpush.bf16.msra.mxu0 %v3563
      %5830 = vmatmul.bf16.gmra.mxu0 %v992
      %v5831 = vpop.f32.mrf.mxu0
      %v5832 = vadd.f32 %v5819, %v5831
      %v5833 = vpop.f32.mrf.mxu0
      %5834 = vdwg.mxu0
      %5835 = vmatpush.bf16.msra.mxu0 %v3683
      %5836 = vmatpush.bf16.msra.mxu0 %v3675
      %5837 = vmatpush.bf16.msra.mxu0 %v3667
      %5838 = vmatpush.bf16.msra.mxu0 %v3659
      %5839 = vmatpush.bf16.msra.mxu0 %v3651
      %5840 = vmatpush.bf16.msra.mxu0 %v3643
      %5841 = vmatpush.bf16.msra.mxu0 %v3635
      %5842 = vmatpush.bf16.msra.mxu0 %v3627
      %5843 = vmatmul.bf16.gmra.mxu0 %v993
      %v5844 = vpop.f32.mrf.mxu0
      %v5845 = vadd.f32 %v5832, %v5844
      %v5846 = vpop.f32.mrf.mxu0
      %5847 = vdwg.mxu0
      %5848 = vmatpush.bf16.msra.mxu0 %v3747
      %5849 = vmatpush.bf16.msra.mxu0 %v3739
      %5850 = vmatpush.bf16.msra.mxu0 %v3731
      %5851 = vmatpush.bf16.msra.mxu0 %v3723
      %5852 = vmatpush.bf16.msra.mxu0 %v3715
      %5853 = vmatpush.bf16.msra.mxu0 %v3707
      %5854 = vmatpush.bf16.msra.mxu0 %v3699
      %5855 = vmatpush.bf16.msra.mxu0 %v3691
      %5856 = vmatmul.bf16.gmra.mxu0 %v994
      %v5857 = vpop.f32.mrf.mxu0
      %v5858 = vadd.f32 %v5845, %v5857
      %v5859 = vpop.f32.mrf.mxu0
      %5860 = vdwg.mxu0
      %5861 = vmatpush.bf16.msra.mxu0 %v3811
      %5862 = vmatpush.bf16.msra.mxu0 %v3803
      %5863 = vmatpush.bf16.msra.mxu0 %v3795
      %5864 = vmatpush.bf16.msra.mxu0 %v3787
      %5865 = vmatpush.bf16.msra.mxu0 %v3779
      %5866 = vmatpush.bf16.msra.mxu0 %v3771
      %5867 = vmatpush.bf16.msra.mxu0 %v3763
      %5868 = vmatpush.bf16.msra.mxu0 %v3755
      %5869 = vmatmul.bf16.gmra.mxu0 %v995
      %v5870 = vpop.f32.mrf.mxu0
      %v5871 = vadd.f32 %v5858, %v5870
      %v5872 = vpop.f32.mrf.mxu0
      %5873 = vdwg.mxu0
      %5874 = vmatpush.bf16.msra.mxu0 %v3875
      %5875 = vmatpush.bf16.msra.mxu0 %v3867
      %5876 = vmatpush.bf16.msra.mxu0 %v3859
      %5877 = vmatpush.bf16.msra.mxu0 %v3851
      %5878 = vmatpush.bf16.msra.mxu0 %v3843
      %5879 = vmatpush.bf16.msra.mxu0 %v3835
      %5880 = vmatpush.bf16.msra.mxu0 %v3827
      %5881 = vmatpush.bf16.msra.mxu0 %v3819
      %5882 = vmatmul.bf16.gmra.mxu0 %v996
      %v5883 = vpop.f32.mrf.mxu0
      %v5884 = vadd.f32 %v5871, %v5883
      %v5885 = vpop.f32.mrf.mxu0
      %5886 = vdwg.mxu0
      %5887 = vmatpush.bf16.msra.mxu0 %v3939
      %5888 = vmatpush.bf16.msra.mxu0 %v3931
      %5889 = vmatpush.bf16.msra.mxu0 %v3923
      %5890 = vmatpush.bf16.msra.mxu0 %v3915
      %5891 = vmatpush.bf16.msra.mxu0 %v3907
      %5892 = vmatpush.bf16.msra.mxu0 %v3899
      %5893 = vmatpush.bf16.msra.mxu0 %v3891
      %5894 = vmatpush.bf16.msra.mxu0 %v3883
      %5895 = vmatmul.bf16.gmra.mxu0 %v997
      %v5896 = vpop.f32.mrf.mxu0
      %v5897 = vadd.f32 %v5884, %v5896
      %v5898 = vpop.f32.mrf.mxu0
      %5899 = vdwg.mxu0
      %5900 = vmatpush.bf16.msra.mxu0 %v4003
      %5901 = vmatpush.bf16.msra.mxu0 %v3995
      %5902 = vmatpush.bf16.msra.mxu0 %v3987
      %5903 = vmatpush.bf16.msra.mxu0 %v3979
      %5904 = vmatpush.bf16.msra.mxu0 %v3971
      %5905 = vmatpush.bf16.msra.mxu0 %v3963
      %5906 = vmatpush.bf16.msra.mxu0 %v3955
      %5907 = vmatpush.bf16.msra.mxu0 %v3947
      %5908 = vmatmul.bf16.gmra.mxu0 %v998
      %v5909 = vpop.f32.mrf.mxu0
      %v5910 = vadd.f32 %v5897, %v5909
      %v5911 = vpop.f32.mrf.mxu0
      %5912 = vdwg.mxu0
      %5913 = vmatpush.bf16.msra.mxu0 %v4067
      %5914 = vmatpush.bf16.msra.mxu0 %v4059
      %5915 = vmatpush.bf16.msra.mxu0 %v4051
      %5916 = vmatpush.bf16.msra.mxu0 %v4043
      %5917 = vmatpush.bf16.msra.mxu0 %v4035
      %5918 = vmatpush.bf16.msra.mxu0 %v4027
      %5919 = vmatpush.bf16.msra.mxu0 %v4019
      %5920 = vmatpush.bf16.msra.mxu0 %v4011
      %5921 = vmatmul.bf16.gmra.mxu0 %v999
      %v5922 = vpop.f32.mrf.mxu0
      %v5923 = vadd.f32 %v5910, %v5922
      %v5924 = vpop.f32.mrf.mxu0
      %5925 = vdwg.mxu0
      %5926 = vmatpush.bf16.msra.mxu0 %v4131
      %5927 = vmatpush.bf16.msra.mxu0 %v4123
      %5928 = vmatpush.bf16.msra.mxu0 %v4115
      %5929 = vmatpush.bf16.msra.mxu0 %v4107
      %5930 = vmatpush.bf16.msra.mxu0 %v4099
      %5931 = vmatpush.bf16.msra.mxu0 %v4091
      %5932 = vmatpush.bf16.msra.mxu0 %v4083
      %5933 = vmatpush.bf16.msra.mxu0 %v4075
      %5934 = vmatmul.bf16.gmra.mxu0 %v1000
      %v5935 = vpop.f32.mrf.mxu0
      %v5936 = vadd.f32 %v5923, %v5935
      %v5937 = vpop.f32.mrf.mxu0
      %5938 = vdwg.mxu0
      %5939 = vmatpush.bf16.msra.mxu0 0
      %5940 = vmatpush.bf16.msra.mxu0 0
      %5941 = vmatpush.bf16.msra.mxu0 0
      %5942 = vmatpush.bf16.msra.mxu0 0
      %5943 = vmatpush.bf16.msra.mxu0 0
      %5944 = vmatpush.bf16.msra.mxu0 0
      %5945 = vmatpush.bf16.msra.mxu0 %v4147
      %5946 = vmatpush.bf16.msra.mxu0 %v4139
      %5947 = vmatmul.bf16.gmra.mxu0 %v4936
      %v5948 = vpop.f32.mrf.mxu0
      %v5949 = vadd.f32 %v5936, %v5948
      %v5950 = vpop.f32.mrf.mxu0
      %5951 = vdwg.mxu0
      %5952 = vmatpush.bf16.msra.mxu0 %v3428
      %5953 = vmatpush.bf16.msra.mxu0 %v3420
      %5954 = vmatpush.bf16.msra.mxu0 %v3412
      %5955 = vmatpush.bf16.msra.mxu0 %v3404
      %5956 = vmatpush.bf16.msra.mxu0 %v3396
      %5957 = vmatpush.bf16.msra.mxu0 %v3388
      %5958 = vmatpush.bf16.msra.mxu0 %v3380
      %5959 = vmatpush.bf16.msra.mxu0 %v3372
      %5960 = vmatmul.bf16.gmra.mxu0 %v989
      %v5961 = vpop.f32.mrf.mxu0
      %v5962 = vadd.f32 %v967, %v5961
      %v5963 = vpop.f32.mrf.mxu0
      %5964 = vdwg.mxu0
      %5965 = vmatpush.bf16.msra.mxu0 %v3492
      %5966 = vmatpush.bf16.msra.mxu0 %v3484
      %5967 = vmatpush.bf16.msra.mxu0 %v3476
      %5968 = vmatpush.bf16.msra.mxu0 %v3468
      %5969 = vmatpush.bf16.msra.mxu0 %v3460
      %5970 = vmatpush.bf16.msra.mxu0 %v3452
      %5971 = vmatpush.bf16.msra.mxu0 %v3444
      %5972 = vmatpush.bf16.msra.mxu0 %v3436
      %5973 = vmatmul.bf16.gmra.mxu0 %v990
      %v5974 = vpop.f32.mrf.mxu0
      %v5975 = vadd.f32 %v5962, %v5974
      %v5976 = vpop.f32.mrf.mxu0
      %5977 = vdwg.mxu0
      %5978 = vmatpush.bf16.msra.mxu0 %v3556
      %5979 = vmatpush.bf16.msra.mxu0 %v3548
      %5980 = vmatpush.bf16.msra.mxu0 %v3540
      %5981 = vmatpush.bf16.msra.mxu0 %v3532
      %5982 = vmatpush.bf16.msra.mxu0 %v3524
      %5983 = vmatpush.bf16.msra.mxu0 %v3516
      %5984 = vmatpush.bf16.msra.mxu0 %v3508
      %5985 = vmatpush.bf16.msra.mxu0 %v3500
      %5986 = vmatmul.bf16.gmra.mxu0 %v991
      %v5987 = vpop.f32.mrf.mxu0
      %v5988 = vadd.f32 %v5975, %v5987
      %v5989 = vpop.f32.mrf.mxu0
      %5990 = vdwg.mxu0
      %5991 = vmatpush.bf16.msra.mxu0 %v3620
      %5992 = vmatpush.bf16.msra.mxu0 %v3612
      %5993 = vmatpush.bf16.msra.mxu0 %v3604
      %5994 = vmatpush.bf16.msra.mxu0 %v3596
      %5995 = vmatpush.bf16.msra.mxu0 %v3588
      %5996 = vmatpush.bf16.msra.mxu0 %v3580
      %5997 = vmatpush.bf16.msra.mxu0 %v3572
      %5998 = vmatpush.bf16.msra.mxu0 %v3564
      %5999 = vmatmul.bf16.gmra.mxu0 %v992
      %v6000 = vpop.f32.mrf.mxu0
      %v6001 = vadd.f32 %v5988, %v6000
      %v6002 = vpop.f32.mrf.mxu0
      %6003 = vdwg.mxu0
      %6004 = vmatpush.bf16.msra.mxu0 %v3684
      %6005 = vmatpush.bf16.msra.mxu0 %v3676
      %6006 = vmatpush.bf16.msra.mxu0 %v3668
      %6007 = vmatpush.bf16.msra.mxu0 %v3660
      %6008 = vmatpush.bf16.msra.mxu0 %v3652
      %6009 = vmatpush.bf16.msra.mxu0 %v3644
      %6010 = vmatpush.bf16.msra.mxu0 %v3636
      %6011 = vmatpush.bf16.msra.mxu0 %v3628
      %6012 = vmatmul.bf16.gmra.mxu0 %v993
      %v6013 = vpop.f32.mrf.mxu0
      %v6014 = vadd.f32 %v6001, %v6013
      %v6015 = vpop.f32.mrf.mxu0
      %6016 = vdwg.mxu0
      %6017 = vmatpush.bf16.msra.mxu0 %v3748
      %6018 = vmatpush.bf16.msra.mxu0 %v3740
      %6019 = vmatpush.bf16.msra.mxu0 %v3732
      %6020 = vmatpush.bf16.msra.mxu0 %v3724
      %6021 = vmatpush.bf16.msra.mxu0 %v3716
      %6022 = vmatpush.bf16.msra.mxu0 %v3708
      %6023 = vmatpush.bf16.msra.mxu0 %v3700
      %6024 = vmatpush.bf16.msra.mxu0 %v3692
      %6025 = vmatmul.bf16.gmra.mxu0 %v994
      %v6026 = vpop.f32.mrf.mxu0
      %v6027 = vadd.f32 %v6014, %v6026
      %v6028 = vpop.f32.mrf.mxu0
      %6029 = vdwg.mxu0
      %6030 = vmatpush.bf16.msra.mxu0 %v3812
      %6031 = vmatpush.bf16.msra.mxu0 %v3804
      %6032 = vmatpush.bf16.msra.mxu0 %v3796
      %6033 = vmatpush.bf16.msra.mxu0 %v3788
      %6034 = vmatpush.bf16.msra.mxu0 %v3780
      %6035 = vmatpush.bf16.msra.mxu0 %v3772
      %6036 = vmatpush.bf16.msra.mxu0 %v3764
      %6037 = vmatpush.bf16.msra.mxu0 %v3756
      %6038 = vmatmul.bf16.gmra.mxu0 %v995
      %v6039 = vpop.f32.mrf.mxu0
      %v6040 = vadd.f32 %v6027, %v6039
      %v6041 = vpop.f32.mrf.mxu0
      %6042 = vdwg.mxu0
      %6043 = vmatpush.bf16.msra.mxu0 %v3876
      %6044 = vmatpush.bf16.msra.mxu0 %v3868
      %6045 = vmatpush.bf16.msra.mxu0 %v3860
      %6046 = vmatpush.bf16.msra.mxu0 %v3852
      %6047 = vmatpush.bf16.msra.mxu0 %v3844
      %6048 = vmatpush.bf16.msra.mxu0 %v3836
      %6049 = vmatpush.bf16.msra.mxu0 %v3828
      %6050 = vmatpush.bf16.msra.mxu0 %v3820
      %6051 = vmatmul.bf16.gmra.mxu0 %v996
      %v6052 = vpop.f32.mrf.mxu0
      %v6053 = vadd.f32 %v6040, %v6052
      %v6054 = vpop.f32.mrf.mxu0
      %6055 = vdwg.mxu0
      %6056 = vmatpush.bf16.msra.mxu0 %v3940
      %6057 = vmatpush.bf16.msra.mxu0 %v3932
      %6058 = vmatpush.bf16.msra.mxu0 %v3924
      %6059 = vmatpush.bf16.msra.mxu0 %v3916
      %6060 = vmatpush.bf16.msra.mxu0 %v3908
      %6061 = vmatpush.bf16.msra.mxu0 %v3900
      %6062 = vmatpush.bf16.msra.mxu0 %v3892
      %6063 = vmatpush.bf16.msra.mxu0 %v3884
      %6064 = vmatmul.bf16.gmra.mxu0 %v997
      %v6065 = vpop.f32.mrf.mxu0
      %v6066 = vadd.f32 %v6053, %v6065
      %v6067 = vpop.f32.mrf.mxu0
      %6068 = vdwg.mxu0
      %6069 = vmatpush.bf16.msra.mxu0 %v4004
      %6070 = vmatpush.bf16.msra.mxu0 %v3996
      %6071 = vmatpush.bf16.msra.mxu0 %v3988
      %6072 = vmatpush.bf16.msra.mxu0 %v3980
      %6073 = vmatpush.bf16.msra.mxu0 %v3972
      %6074 = vmatpush.bf16.msra.mxu0 %v3964
      %6075 = vmatpush.bf16.msra.mxu0 %v3956
      %6076 = vmatpush.bf16.msra.mxu0 %v3948
      %6077 = vmatmul.bf16.gmra.mxu0 %v998
      %v6078 = vpop.f32.mrf.mxu0
      %v6079 = vadd.f32 %v6066, %v6078
      %v6080 = vpop.f32.mrf.mxu0
      %6081 = vdwg.mxu0
      %6082 = vmatpush.bf16.msra.mxu0 %v4068
      %6083 = vmatpush.bf16.msra.mxu0 %v4060
      %6084 = vmatpush.bf16.msra.mxu0 %v4052
      %6085 = vmatpush.bf16.msra.mxu0 %v4044
      %6086 = vmatpush.bf16.msra.mxu0 %v4036
      %6087 = vmatpush.bf16.msra.mxu0 %v4028
      %6088 = vmatpush.bf16.msra.mxu0 %v4020
      %6089 = vmatpush.bf16.msra.mxu0 %v4012
      %6090 = vmatmul.bf16.gmra.mxu0 %v999
      %v6091 = vpop.f32.mrf.mxu0
      %v6092 = vadd.f32 %v6079, %v6091
      %v6093 = vpop.f32.mrf.mxu0
      %6094 = vdwg.mxu0
      %6095 = vmatpush.bf16.msra.mxu0 %v4132
      %6096 = vmatpush.bf16.msra.mxu0 %v4124
      %6097 = vmatpush.bf16.msra.mxu0 %v4116
      %6098 = vmatpush.bf16.msra.mxu0 %v4108
      %6099 = vmatpush.bf16.msra.mxu0 %v4100
      %6100 = vmatpush.bf16.msra.mxu0 %v4092
      %6101 = vmatpush.bf16.msra.mxu0 %v4084
      %6102 = vmatpush.bf16.msra.mxu0 %v4076
      %6103 = vmatmul.bf16.gmra.mxu0 %v1000
      %v6104 = vpop.f32.mrf.mxu0
      %v6105 = vadd.f32 %v6092, %v6104
      %v6106 = vpop.f32.mrf.mxu0
      %6107 = vdwg.mxu0
      %6108 = vmatpush.bf16.msra.mxu0 0
      %6109 = vmatpush.bf16.msra.mxu0 0
      %6110 = vmatpush.bf16.msra.mxu0 0
      %6111 = vmatpush.bf16.msra.mxu0 0
      %6112 = vmatpush.bf16.msra.mxu0 0
      %6113 = vmatpush.bf16.msra.mxu0 0
      %6114 = vmatpush.bf16.msra.mxu0 %v4148
      %6115 = vmatpush.bf16.msra.mxu0 %v4140
      %6116 = vmatmul.bf16.gmra.mxu0 %v4936
      %v6117 = vpop.f32.mrf.mxu0
      %v6118 = vadd.f32 %v6105, %v6117
      %v6119 = vpop.f32.mrf.mxu0
      %6120 = vdwg.mxu0
      %6121 = vmatpush.bf16.msra.mxu0 %v3429
      %6122 = vmatpush.bf16.msra.mxu0 %v3421
      %6123 = vmatpush.bf16.msra.mxu0 %v3413
      %6124 = vmatpush.bf16.msra.mxu0 %v3405
      %6125 = vmatpush.bf16.msra.mxu0 %v3397
      %6126 = vmatpush.bf16.msra.mxu0 %v3389
      %6127 = vmatpush.bf16.msra.mxu0 %v3381
      %6128 = vmatpush.bf16.msra.mxu0 %v3373
      %6129 = vmatmul.bf16.gmra.mxu0 %v989
      %v6130 = vpop.f32.mrf.mxu0
      %v6131 = vadd.f32 %v967, %v6130
      %v6132 = vpop.f32.mrf.mxu0
      %6133 = vdwg.mxu0
      %6134 = vmatpush.bf16.msra.mxu0 %v3493
      %6135 = vmatpush.bf16.msra.mxu0 %v3485
      %6136 = vmatpush.bf16.msra.mxu0 %v3477
      %6137 = vmatpush.bf16.msra.mxu0 %v3469
      %6138 = vmatpush.bf16.msra.mxu0 %v3461
      %6139 = vmatpush.bf16.msra.mxu0 %v3453
      %6140 = vmatpush.bf16.msra.mxu0 %v3445
      %6141 = vmatpush.bf16.msra.mxu0 %v3437
      %6142 = vmatmul.bf16.gmra.mxu0 %v990
      %v6143 = vpop.f32.mrf.mxu0
      %v6144 = vadd.f32 %v6131, %v6143
      %v6145 = vpop.f32.mrf.mxu0
      %6146 = vdwg.mxu0
      %6147 = vmatpush.bf16.msra.mxu0 %v3557
      %6148 = vmatpush.bf16.msra.mxu0 %v3549
      %6149 = vmatpush.bf16.msra.mxu0 %v3541
      %6150 = vmatpush.bf16.msra.mxu0 %v3533
      %6151 = vmatpush.bf16.msra.mxu0 %v3525
      %6152 = vmatpush.bf16.msra.mxu0 %v3517
      %6153 = vmatpush.bf16.msra.mxu0 %v3509
      %6154 = vmatpush.bf16.msra.mxu0 %v3501
      %6155 = vmatmul.bf16.gmra.mxu0 %v991
      %v6156 = vpop.f32.mrf.mxu0
      %v6157 = vadd.f32 %v6144, %v6156
      %v6158 = vpop.f32.mrf.mxu0
      %6159 = vdwg.mxu0
      %6160 = vmatpush.bf16.msra.mxu0 %v3621
      %6161 = vmatpush.bf16.msra.mxu0 %v3613
      %6162 = vmatpush.bf16.msra.mxu0 %v3605
      %6163 = vmatpush.bf16.msra.mxu0 %v3597
      %6164 = vmatpush.bf16.msra.mxu0 %v3589
      %6165 = vmatpush.bf16.msra.mxu0 %v3581
      %6166 = vmatpush.bf16.msra.mxu0 %v3573
      %6167 = vmatpush.bf16.msra.mxu0 %v3565
      %6168 = vmatmul.bf16.gmra.mxu0 %v992
      %v6169 = vpop.f32.mrf.mxu0
      %v6170 = vadd.f32 %v6157, %v6169
      %v6171 = vpop.f32.mrf.mxu0
      %6172 = vdwg.mxu0
      %6173 = vmatpush.bf16.msra.mxu0 %v3685
      %6174 = vmatpush.bf16.msra.mxu0 %v3677
      %6175 = vmatpush.bf16.msra.mxu0 %v3669
      %6176 = vmatpush.bf16.msra.mxu0 %v3661
      %6177 = vmatpush.bf16.msra.mxu0 %v3653
      %6178 = vmatpush.bf16.msra.mxu0 %v3645
      %6179 = vmatpush.bf16.msra.mxu0 %v3637
      %6180 = vmatpush.bf16.msra.mxu0 %v3629
      %6181 = vmatmul.bf16.gmra.mxu0 %v993
      %v6182 = vpop.f32.mrf.mxu0
      %v6183 = vadd.f32 %v6170, %v6182
      %v6184 = vpop.f32.mrf.mxu0
      %6185 = vdwg.mxu0
      %6186 = vmatpush.bf16.msra.mxu0 %v3749
      %6187 = vmatpush.bf16.msra.mxu0 %v3741
      %6188 = vmatpush.bf16.msra.mxu0 %v3733
      %6189 = vmatpush.bf16.msra.mxu0 %v3725
      %6190 = vmatpush.bf16.msra.mxu0 %v3717
      %6191 = vmatpush.bf16.msra.mxu0 %v3709
      %6192 = vmatpush.bf16.msra.mxu0 %v3701
      %6193 = vmatpush.bf16.msra.mxu0 %v3693
      %6194 = vmatmul.bf16.gmra.mxu0 %v994
      %v6195 = vpop.f32.mrf.mxu0
      %v6196 = vadd.f32 %v6183, %v6195
      %v6197 = vpop.f32.mrf.mxu0
      %6198 = vdwg.mxu0
      %6199 = vmatpush.bf16.msra.mxu0 %v3813
      %6200 = vmatpush.bf16.msra.mxu0 %v3805
      %6201 = vmatpush.bf16.msra.mxu0 %v3797
      %6202 = vmatpush.bf16.msra.mxu0 %v3789
      %6203 = vmatpush.bf16.msra.mxu0 %v3781
      %6204 = vmatpush.bf16.msra.mxu0 %v3773
      %6205 = vmatpush.bf16.msra.mxu0 %v3765
      %6206 = vmatpush.bf16.msra.mxu0 %v3757
      %6207 = vmatmul.bf16.gmra.mxu0 %v995
      %v6208 = vpop.f32.mrf.mxu0
      %v6209 = vadd.f32 %v6196, %v6208
      %v6210 = vpop.f32.mrf.mxu0
      %6211 = vdwg.mxu0
      %6212 = vmatpush.bf16.msra.mxu0 %v3877
      %6213 = vmatpush.bf16.msra.mxu0 %v3869
      %6214 = vmatpush.bf16.msra.mxu0 %v3861
      %6215 = vmatpush.bf16.msra.mxu0 %v3853
      %6216 = vmatpush.bf16.msra.mxu0 %v3845
      %6217 = vmatpush.bf16.msra.mxu0 %v3837
      %6218 = vmatpush.bf16.msra.mxu0 %v3829
      %6219 = vmatpush.bf16.msra.mxu0 %v3821
      %6220 = vmatmul.bf16.gmra.mxu0 %v996
      %v6221 = vpop.f32.mrf.mxu0
      %v6222 = vadd.f32 %v6209, %v6221
      %v6223 = vpop.f32.mrf.mxu0
      %6224 = vdwg.mxu0
      %6225 = vmatpush.bf16.msra.mxu0 %v3941
      %6226 = vmatpush.bf16.msra.mxu0 %v3933
      %6227 = vmatpush.bf16.msra.mxu0 %v3925
      %6228 = vmatpush.bf16.msra.mxu0 %v3917
      %6229 = vmatpush.bf16.msra.mxu0 %v3909
      %6230 = vmatpush.bf16.msra.mxu0 %v3901
      %6231 = vmatpush.bf16.msra.mxu0 %v3893
      %6232 = vmatpush.bf16.msra.mxu0 %v3885
      %6233 = vmatmul.bf16.gmra.mxu0 %v997
      %v6234 = vpop.f32.mrf.mxu0
      %v6235 = vadd.f32 %v6222, %v6234
      %v6236 = vpop.f32.mrf.mxu0
      %6237 = vdwg.mxu0
      %6238 = vmatpush.bf16.msra.mxu0 %v4005
      %6239 = vmatpush.bf16.msra.mxu0 %v3997
      %6240 = vmatpush.bf16.msra.mxu0 %v3989
      %6241 = vmatpush.bf16.msra.mxu0 %v3981
      %6242 = vmatpush.bf16.msra.mxu0 %v3973
      %6243 = vmatpush.bf16.msra.mxu0 %v3965
      %6244 = vmatpush.bf16.msra.mxu0 %v3957
      %6245 = vmatpush.bf16.msra.mxu0 %v3949
      %6246 = vmatmul.bf16.gmra.mxu0 %v998
      %v6247 = vpop.f32.mrf.mxu0
      %v6248 = vadd.f32 %v6235, %v6247
      %v6249 = vpop.f32.mrf.mxu0
      %6250 = vdwg.mxu0
      %6251 = vmatpush.bf16.msra.mxu0 %v4069
      %6252 = vmatpush.bf16.msra.mxu0 %v4061
      %6253 = vmatpush.bf16.msra.mxu0 %v4053
      %6254 = vmatpush.bf16.msra.mxu0 %v4045
      %6255 = vmatpush.bf16.msra.mxu0 %v4037
      %6256 = vmatpush.bf16.msra.mxu0 %v4029
      %6257 = vmatpush.bf16.msra.mxu0 %v4021
      %6258 = vmatpush.bf16.msra.mxu0 %v4013
      %6259 = vmatmul.bf16.gmra.mxu0 %v999
      %v6260 = vpop.f32.mrf.mxu0
      %v6261 = vadd.f32 %v6248, %v6260
      %v6262 = vpop.f32.mrf.mxu0
      %6263 = vdwg.mxu0
      %6264 = vmatpush.bf16.msra.mxu0 %v4133
      %6265 = vmatpush.bf16.msra.mxu0 %v4125
      %6266 = vmatpush.bf16.msra.mxu0 %v4117
      %6267 = vmatpush.bf16.msra.mxu0 %v4109
      %6268 = vmatpush.bf16.msra.mxu0 %v4101
      %6269 = vmatpush.bf16.msra.mxu0 %v4093
      %6270 = vmatpush.bf16.msra.mxu0 %v4085
      %6271 = vmatpush.bf16.msra.mxu0 %v4077
      %6272 = vmatmul.bf16.gmra.mxu0 %v1000
      %v6273 = vpop.f32.mrf.mxu0
      %v6274 = vadd.f32 %v6261, %v6273
      %v6275 = vpop.f32.mrf.mxu0
      %6276 = vdwg.mxu0
      %6277 = vmatpush.bf16.msra.mxu0 0
      %6278 = vmatpush.bf16.msra.mxu0 0
      %6279 = vmatpush.bf16.msra.mxu0 0
      %6280 = vmatpush.bf16.msra.mxu0 0
      %6281 = vmatpush.bf16.msra.mxu0 0
      %6282 = vmatpush.bf16.msra.mxu0 0
      %6283 = vmatpush.bf16.msra.mxu0 %v4149
      %6284 = vmatpush.bf16.msra.mxu0 %v4141
      %6285 = vmatmul.bf16.gmra.mxu0 %v4936
      %v6286 = vpop.f32.mrf.mxu0
      %v6287 = vadd.f32 %v6274, %v6286
      %v6288 = vpop.f32.mrf.mxu0
      %6289 = vdwg.mxu0
      %v6290 = vtanh.pop %v5104
      %v6291 = vtanh.pop %v5273
      %v6292 = vtanh.pop %v5442
      %v6293 = vtanh.pop %v5611
      %v6294 = vtanh.pop %v5780
      %v6295 = vtanh.pop %v5949
      %v6296 = vtanh.pop %v6118
      %v6297 = vtanh.pop %v6287
      %6298 = vst [vmem:[%s170] sm:$0xff] %v6290
      %6299 = vst [vmem:[%s170 + $0x8] sm:$0xff] %v6291
      %6300 = vst [vmem:[%s170 + $0x10] sm:$0xff] %v6292
      %6301 = vst [vmem:[%s170 + $0x18] sm:$0xff] %v6293
      %6302 = vst [vmem:[%s170 + $0x20] sm:$0xff] %v6294
      %6303 = vst [vmem:[%s170 + $0x28] sm:$0xff] %v6295
      %6304 = vst [vmem:[%s170 + $0x30] sm:$0xff] %v6296
      %6305 = vst [vmem:[%s170 + $0x38] sm:$0xff] %v6297
      %p6306 = scmp.lt.s32.totalorder %s14, 1
      %s6307 = scalar_select %p6306, %s14, 1
      %s6308 = smul.addr %s6307, 8
      %s6309 = smul.addr %s6308, 8
      %s6310 = scalar_lea.vmem %s3, %s6309
      // Predicated region
      $region33: #{decoder_forward.5} parent=31 // pred_check
        %p6311 = pneg %p100
      $region34: #{decoder_forward.5} parent=31 // pred_check_branch
        %6313 = sbr.rel (%p6311) target = $region36
      $region35: #{decoder_forward.5} parent=31 // pred_region
        _
      $region36: #{decoder_forward.5} parent=31 // pred_fallthru
        _
    $region32: #{decoder_forward.5} parent=5 // pred_fallthru
      _
    %p6314 = scmp.le.s32.totalorder 2, %s9
    // Predicated region
    $region37: #{decoder_forward.5} parent=5 // pred_check
      %p6315 = pneg %p6314
    $region38: #{decoder_forward.5} parent=5 // pred_check_branch
      %6317 = sbr.rel (%p6315) target = $region40
    $region39: #{decoder_forward.5} parent=5 // pred_region
      %s6318 = ssub.s32 %s9, 2
      // Predicated region
      $region41: #{decoder_forward.5} parent=39 // pred_check
        %p6319 = pneg %p106
      $region42: #{decoder_forward.5} parent=39 // pred_check_branch
        %6321 = sbr.rel (%p6319) target = $region44
      $region43: #{decoder_forward.5} parent=39 // pred_region
        %p6322 = scmp.lt.s32.totalorder %s15, 1
        %s6323 = scalar_select %p6322, %s15, 1
        %s6324 = smul.addr %s6323, 8
        %s6325 = smul.addr %s6324, 8
        %s6326 = scalar_lea.vmem %s3, %s6325
      $region44: #{decoder_forward.5} parent=39 // pred_fallthru
        _
    $region40: #{decoder_forward.5} parent=5 // pred_fallthru
      _
  $region6: #{decoder_forward.5} parent=0 // loop_footer
    %s13 = sadd.s32 1, %s9
  $region7: #{decoder_forward.5} parent=0 // loop_footer_branch
    %8 = sbr.rel target = $region3
  $region8: #{decoder_forward.5} parent=0 // loop_exit
    _

</llo_original>
